<compile_context>
chip_gen: v6e
topology: v6e:2x2x1
jax: 0.10.0
libtpu: 0.0.40
codegen_flags: <defaults>
</compile_context>

<pallas_src>
import math

import numpy as np

import jax
import jax.numpy as jnp
from jax.experimental import pallas as pl
from jax.experimental.pallas import tpu as pltpu

# ------------------------------ configuration --------------------------------
BATCH = 2
IN_FEATURES = 4
CONV_CHANNELS = [8, 8, 8, 16, 16, 8, 8]
IN_SZ = [16, 16]
OUT_SZ = 3
ACTION_SZ = 4
LATENT_SZ = CONV_CHANNELS[3]


def _enc_sizes():
    s = IN_SZ[0]
    sizes = [s]
    for i in range(3):
        stride = 2 if i == 0 else 1
        s = (s - 3) // stride + 1
        sizes.append(s)
    return sizes


ENC_SZ = _enc_sizes()          # [16, 7, 5, 3]
DEC_SZ = [3, 6, 12]            # seed 3x3, two 2x bilinear upsamples

# ------------------------------------------------------------------------------
# GELU (exact, erf-based, as torch.nn.GELU default)
# ------------------------------------------------------------------------------
_SQRT_HALF = 0.7071067811865476


def _erf(z):
    # Abramowitz & Stegun 7.1.26 rational approximation (|err| < 1.5e-7, i.e. exact
    # at float32), built only from ops guaranteed to lower in Mosaic
    # (exp / mul / add / div / where).
    # TODO(synk): switch to jax.lax.erf once a Pallas-TPU erf lowering is guaranteed.
    a1, a2, a3, a4, a5 = 0.254829592, -0.284496736, 1.421413741, -1.453152027, 1.061405429
    p = 0.3275911
    az = jnp.where(z >= 0.0, z, -z)
    t = 1.0 / (1.0 + p * az)
    poly = ((((a5 * t + a4) * t + a3) * t + a2) * t + a1) * t
    e = 1.0 - poly * jnp.exp(-az * az)
    return jnp.where(z >= 0.0, e, -e)


def _gelu(x):
    return 0.5 * x * (1.0 + _erf(x * _SQRT_HALF))


# ------------------------------------------------------------------------------
# Constant gather matrices (numpy, built once from static shapes).
# Activations are stored channel-major as (C, B*H*W) with column = b*H*W + y*W + x,
# so  act @ g[t]  is the spatial gather for conv tap t = di*3 + dj.
# ------------------------------------------------------------------------------
def _bilinear_up2_matrix(h_in):
    # nn.Upsample(scale_factor=2, mode='bilinear'), align_corners=False
    h_out = 2 * h_in
    u = np.zeros((h_out, h_in), np.float32)
    for i in range(h_out):
        src = max((i + 0.5) * h_in / h_out - 0.5, 0.0)
        x0 = min(int(np.floor(src)), h_in - 1)
        x1 = min(x0 + 1, h_in - 1)
        lam = src - x0
        u[i, x0] += 1.0 - lam
        u[i, x1] += lam
    return u


def _conv_gather(hin, win, hout, wout, stride, pad, batch):
    """g[t] : (B*hin*win, B*hout*wout); picks input pixel (s*yo+di-pad, s*xo+dj-pad)
    for every output pixel (yo, xo), zero when out of bounds (zero padding)."""
    g = np.zeros((9, batch * hin * win, batch * hout * wout), np.float32)
    eye = np.eye(batch, dtype=np.float32)
    for di in range(3):
        for dj in range(3):
            gb = np.zeros((hin * win, hout * wout), np.float32)
            for yo in range(hout):
                yi = stride * yo + di - pad
                if not (0 <= yi < hin):
                    continue
                for xo in range(wout):
                    xi = stride * xo + dj - pad
                    if 0 <= xi < win:
                        gb[yi * win + xi, yo * wout + xo] = 1.0
            g[di * 3 + dj] = np.kron(eye, gb)
    return g


def _upconv_gather(hs, ws, batch):
    """2x bilinear upsample (align_corners=False) FOLDED with the following 3x3
    'same' conv patch extraction:  g[t] : (B*hs*ws, B*(2hs)*(2ws))."""
    hu, wu = 2 * hs, 2 * ws
    up = np.kron(_bilinear_up2_matrix(hs), _bilinear_up2_matrix(ws))   # (hu*wu, hs*ws)
    g = np.zeros((9, batch * hs * ws, batch * hu * wu), np.float32)
    eye = np.eye(batch, dtype=np.float32)
    for di in range(3):
        for dj in range(3):
            s = np.zeros((hu * wu, hu * wu), np.float32)
            for yo in range(hu):
                yi = yo + di - 1
                if not (0 <= yi < hu):
                    continue
                for xo in range(wu):
                    xi = xo + dj - 1
                    if 0 <= xi < wu:
                        s[yi * wu + xi, yo * wu + xo] = 1.0
            g[di * 3 + dj] = np.kron(eye, up.T @ s)
    return g


def _flatten_gather(batch, npos):
    """g[p] : (B*npos, B);  act(C, B*npos) @ g[p] -> column b holds act[:, b*npos+p].
    Row-stacking the npos results reproduces torch's NCHW flatten once the fc weight
    columns are permuted to (position, channel) order."""
    g = np.zeros((npos, batch * npos, batch), np.float32)
    for p in range(npos):
        for b in range(batch):
            g[p, b * npos + p, b] = 1.0
    return g


def _seed_repeat(batch, npos):
    """r : (B, B*npos);  latent(C, B) @ r  ==  unsqueeze+repeat(1,1,3,3) flattened."""
    r = np.zeros((batch, batch * npos), np.float32)
    for b in range(batch):
        r[b, b * npos:(b + 1) * npos] = 1.0
    return r


def build_constants(batch=BATCH):
    h0, h1, h2, h3 = ENC_SZ
    d0, d1 = DEC_SZ[0], DEC_SZ[1]
    gd1 = _upconv_gather(d0, d0, batch)                     # (9, B*9, B*36)
    rseed = _seed_repeat(batch, d0 * d0)                    # (B, B*9)
    gd1 = np.einsum("bk,tkm->tbm", rseed, gd1)              # fold latent->3x3 repeat
    return {
        "g1": jnp.asarray(_conv_gather(h0, h0, h1, h1, 2, 0, batch)),   # (9, 512, 98)
        "g2": jnp.asarray(_conv_gather(h1, h1, h2, h2, 1, 0, batch)),   # (9, 98, 50)
        "g3": jnp.asarray(_conv_gather(h2, h2, h3, h3, 1, 0, batch)),   # (9, 50, 18)
        "gfc": jnp.asarray(_flatten_gather(batch, h3 * h3)),            # (9, 18, B)
        "gd1": jnp.asarray(gd1.astype(np.float32)),                     # (9, B, 72)
        "gd2": jnp.asarray(_upconv_gather(d1, d1, batch)),              # (9, 72, 288)
    }


# ------------------------------------------------------------------------------
# The fused Pallas kernel: whole ConvED forward, everything resident in VMEM.
# ------------------------------------------------------------------------------
def _conv_ed_kernel(
    state_ref, act_ref,
    g1_ref, w1_ref, b1_ref,
    g2_ref, w2_ref, b2_ref,
    g3_ref, w3_ref, b3_ref,
    gfc_ref, wfc_ref, bfc_ref,
    wlina_ref, wlinb_ref, blin_ref,
    gd1_ref, wd1_ref, bd1_ref,
    gd2_ref, wd2_ref, bd2_ref,
    wend_ref, bend_ref,
    out_ref, lat_ref,
):
    def mm(a, b):
        return jnp.dot(a, b, preferred_element_type=jnp.float32)

    def conv(x, g_ref, w_ref, b_ref):
        # transposed im2col: 9 gather matmuls build the (9*Cin, Nout) patch matrix
        # (minor/lane dim = Nout, dense), then one (Cout, 9*Cin) weight matmul with
        # fused bias + GELU.  Row blocks are multiples of 8 -> aligned concat.
        patches = jnp.concatenate([mm(x, g_ref[t]) for t in range(9)], axis=0)
        return _gelu(mm(w_ref[...], patches) + b_ref[...])

    # ---------------- encoder ----------------
    x = state_ref[...]                                      # (4, B*16*16)
    y = b1_ref[...]                                         # conv1 (3x3, stride 2):
    for t in range(9):                                      # per-tap accumulate
        y = y + mm(w1_ref[t], mm(x, g1_ref[t]))             # (Cin=4 blocks are not
    a1 = _gelu(y)                                           # sublane aligned) -> (8, B*49)
    a2 = conv(a1, g2_ref, w2_ref, b2_ref)                   # (8, B*25)
    a3 = conv(a2, g3_ref, w3_ref, b3_ref)                   # (8, B*9)

    # ---- fc: NCHW flatten (folded permutation) + Linear + LayerNorm + GELU ----
    f = jnp.concatenate([mm(a3, gfc_ref[p]) for p in range(9)], axis=0)   # (72, B)
    z = mm(wfc_ref[...], f) + bfc_ref[...]                  # (16, B)
    mu = jnp.mean(z, axis=0, keepdims=True)                 # LayerNorm over the 16
    zc = z - mu                                             # features; gamma=1, beta=0
    var = jnp.mean(zc * zc, axis=0, keepdims=True)          # (module init), eps=1e-5
    lat = _gelu(zc * jax.lax.rsqrt(var + 1e-5))             # (16, B)  == latent x1
    lat_ref[...] = lat                                      # Dropout = identity (eval)

    # ---- lin_block: Linear(16+4 -> 16), no activation (no norm flags set) ----
    xl = mm(wlina_ref[...], lat) + mm(wlinb_ref[...], act_ref[...]) + blin_ref[...]

    # ---- decoder: latent->3x3 repeat and 2x bilinear upsample are both folded
    #      into the conv gather constants, so each stage is a plain fused conv ----
    d1 = conv(xl, gd1_ref, wd1_ref, bd1_ref)                # (8, B*36)
    d2 = conv(d1, gd2_ref, wd2_ref, bd2_ref)                # (8, B*144)

    # ---- end_conv (1x1) ----
    out_ref[...] = mm(wend_ref[...], d2) + bend_ref[...]    # (3, B*144)


# ------------------------------------------------------------------------------
# Wrapper: layout prep (channel-major inputs, weight repacking), one pallas_call.
# ------------------------------------------------------------------------------
def conv_ed_forward(params, consts, state, action):
    B, C, H, W = state.shape
    h3 = ENC_SZ[-1]
    dec_hw = DEC_SZ[-1]

    # channel-major / spatial-minor boundary layout (lane dim = B*H*W)
    state_t = state.transpose(1, 0, 2, 3).reshape(C, B * H * W)
    act_t = action.T

    def cat3x3(w):                     # (Cout, Cin, 3, 3) -> (Cout, 9*Cin), tap-major
        co, ci = w.shape[0], w.shape[1]
        return w.transpose(0, 2, 3, 1).reshape(co, 9 * ci)

    w1 = params["enc"][0]["w"].transpose(2, 3, 0, 1).reshape(9, CONV_CHANNELS[0], IN_FEATURES)
    w2 = cat3x3(params["enc"][1]["w"])
    w3 = cat3x3(params["enc"][2]["w"])
    # torch flatten order per batch is (channel, position); our patch rows are
    # (position, channel) -> permute fc weight columns accordingly.
    wfc = params["fc_w"].reshape(LATENT_SZ, CONV_CHANNELS[2], h3 * h3)
    wfc = wfc.transpose(0, 2, 1).reshape(LATENT_SZ, CONV_CHANNELS[2] * h3 * h3)
    wlin_a = params["lin_w"][:, :LATENT_SZ]
    wlin_b = params["lin_w"][:, LATENT_SZ:]
    wd1 = cat3x3(params["dec"][0]["w"])
    wd2 = cat3x3(params["dec"][1]["w"])
    wend = params["end_w"].reshape(OUT_SZ, CONV_CHANNELS[-1])

    col = lambda b: b.reshape(-1, 1)

    out_t, lat_t = pl.pallas_call(
        _conv_ed_kernel,
        out_shape=(
            jax.ShapeDtypeStruct((OUT_SZ, B * dec_hw * dec_hw), jnp.float32),
            jax.ShapeDtypeStruct((LATENT_SZ, B), jnp.float32),
        ),
        compiler_params=pltpu.CompilerParams(vmem_limit_bytes=32 * 1024 * 1024),
    )(
        state_t, act_t,
        consts["g1"], w1, col(params["enc"][0]["b"]),
        consts["g2"], w2, col(params["enc"][1]["b"]),
        consts["g3"], w3, col(params["enc"][2]["b"]),
        consts["gfc"], wfc, col(params["fc_b"]),
        wlin_a, wlin_b, col(params["lin_b"]),
        consts["gd1"], wd1, col(params["dec"][0]["b"]),
        consts["gd2"], wd2, col(params["dec"][1]["b"]),
        wend, col(params["end_b"]),
    )

    out = out_t.reshape(OUT_SZ, B, dec_hw, dec_hw).transpose(1, 0, 2, 3)
    return out, lat_t.T


# ------------------------------------------------------------------------------
# Pure-XLA reference of ConvED.forward (for in-script validation only).
# ------------------------------------------------------------------------------
def conv_ed_reference(params, state, action):
    hi = jax.lax.Precision.HIGHEST

    def conv(x, w, b, stride, pad):
        y = jax.lax.conv_general_dilated(
            x, w, window_strides=(stride, stride),
            padding=[(pad, pad), (pad, pad)],
            dimension_numbers=("NCHW", "OIHW", "NCHW"), precision=hi)
        return y + b.reshape(1, -1, 1, 1)

    x = _gelu(conv(state, params["enc"][0]["w"], params["enc"][0]["b"], 2, 0))
    x = _gelu(conv(x, params["enc"][1]["w"], params["enc"][1]["b"], 1, 0))
    x = _gelu(conv(x, params["enc"][2]["w"], params["enc"][2]["b"], 1, 0))
    B = x.shape[0]
    x = x.reshape(B, -1)
    z = jnp.dot(x, params["fc_w"].T, precision=hi) + params["fc_b"]
    mu = jnp.mean(z, axis=-1, keepdims=True)
    zc = z - mu
    var = jnp.mean(zc * zc, axis=-1, keepdims=True)
    x1 = _gelu(zc * jax.lax.rsqrt(var + 1e-5))
    x2 = jnp.concatenate([x1, action], axis=-1)
    xl = jnp.dot(x2, params["lin_w"].T, precision=hi) + params["lin_b"]
    x = jnp.broadcast_to(xl[:, :, None, None], (B, xl.shape[1], 3, 3))
    for layer in params["dec"]:
        uh = jnp.asarray(_bilinear_up2_matrix(x.shape[2]))
        uw = jnp.asarray(_bilinear_up2_matrix(x.shape[3]))
        x = jnp.einsum("ph,bchw->bcpw", uh, x, precision=hi)
        x = jnp.einsum("qw,bcpw->bcpq", uw, x, precision=hi)
        x = _gelu(conv(x, layer["w"], layer["b"], 1, 1))
    x = conv(x, params["end_w"], params["end_b"], 1, 0)
    return x, x1


# ------------------------------------------------------------------------------
# Deterministic parameter init (mirrors ConvED.__init__ shapes / kaiming init)
# ------------------------------------------------------------------------------
def _kaiming_conv(key, cout, cin, kh, kw):
    fan_out = cout * kh * kw
    std = math.sqrt(2.0 / fan_out)
    return std * jax.random.normal(key, (cout, cin, kh, kw), jnp.float32)


def _conv_bias(key, cin, kh, kw, cout):
    bound = 1.0 / math.sqrt(cin * kh * kw)
    return jax.random.uniform(key, (cout,), jnp.float32, -bound, bound)


def _linear(key, out_f, in_f):
    kw_, kb = jax.random.split(key)
    bound = 1.0 / math.sqrt(in_f)
    w = jax.random.uniform(kw_, (out_f, in_f), jnp.float32, -bound, bound)
    b = jax.random.uniform(kb, (out_f,), jnp.float32, -bound, bound)
    return w, b


def init_params(key):
    enc_channels = [IN_FEATURES] + CONV_CHANNELS[:3]
    dec_dims = CONV_CHANNELS[4:]
    p = {"enc": [], "dec": []}
    for i in range(len(enc_channels) - 1):
        key, k1, k2 = jax.random.split(key, 3)
        cin, cout = enc_channels[i], enc_channels[i + 1]
        p["enc"].append({"w": _kaiming_conv(k1, cout, cin, 3, 3),
                         "b": _conv_bias(k2, cin, 3, 3, cout)})
    key, k1 = jax.random.split(key)
    p["fc_w"], p["fc_b"] = _linear(k1, LATENT_SZ, enc_channels[-1] * ENC_SZ[-1] * ENC_SZ[-1])
    key, k1 = jax.random.split(key)
    p["lin_w"], p["lin_b"] = _linear(k1, CONV_CHANNELS[3], LATENT_SZ + ACTION_SZ)
    for i in range(len(dec_dims) - 1):
        key, k1, k2 = jax.random.split(key, 3)
        cin, cout = dec_dims[i], dec_dims[i + 1]
        p["dec"].append({"w": _kaiming_conv(k1, cout, cin, 3, 3),
                         "b": _conv_bias(k2, cin, 3, 3, cout)})
    key, k1, k2 = jax.random.split(key, 3)
    p["end_w"] = _kaiming_conv(k1, OUT_SZ, CONV_CHANNELS[-1], 1, 1)
    p["end_b"] = _conv_bias(k2, CONV_CHANNELS[-1], 1, 1, OUT_SZ)
    return p


# ------------------------------------------------------------------------------
if __name__ == "__main__":
    key = jax.random.PRNGKey(0)
    kp, ks, ka = jax.random.split(key, 3)
    params = init_params(kp)
    consts = build_constants(BATCH)
    state = jax.random.normal(ks, (BATCH, IN_FEATURES, IN_SZ[0], IN_SZ[1]), jnp.float32)
    action = jax.random.normal(ka, (BATCH, ACTION_SZ), jnp.float32)

    fwd = jax.jit(conv_ed_forward)
    out, latent = jax.block_until_ready(fwd(params, consts, state, action))

    assert out.shape == (BATCH, OUT_SZ, DEC_SZ[-1], DEC_SZ[-1]), out.shape
    assert latent.shape == (BATCH, LATENT_SZ), latent.shape
    assert bool(jnp.all(jnp.isfinite(out))) and bool(jnp.all(jnp.isfinite(latent)))

    # numerical check against a pure-XLA reference of the same module
    out_ref, lat_ref = jax.block_until_ready(jax.jit(conv_ed_reference)(params, state, action))
    err_out = float(jnp.max(jnp.abs(out - out_ref)))
    err_lat = float(jnp.max(jnp.abs(latent - lat_ref)))
    assert err_out < 2e-2, err_out
    assert err_lat < 2e-2, err_lat

    print("KERNEL_OK")
</pallas_src>

<mosaic_0001>
module attributes {stable_mosaic.version = 11 : i64} {
  func.func @_conv_ed_kernel(%arg0: memref<4x512xf32, #tpu.memory_space<vmem>>, %arg1: memref<4x2xf32, #tpu.memory_space<vmem>>, %arg2: memref<9x512x98xf32, #tpu.memory_space<vmem>>, %arg3: memref<9x8x4xf32, #tpu.memory_space<vmem>>, %arg4: memref<8x1xf32, #tpu.memory_space<vmem>>, %arg5: memref<9x98x50xf32, #tpu.memory_space<vmem>>, %arg6: memref<8x72xf32, #tpu.memory_space<vmem>>, %arg7: memref<8x1xf32, #tpu.memory_space<vmem>>, %arg8: memref<9x50x18xf32, #tpu.memory_space<vmem>>, %arg9: memref<8x72xf32, #tpu.memory_space<vmem>>, %arg10: memref<8x1xf32, #tpu.memory_space<vmem>>, %arg11: memref<9x18x2xf32, #tpu.memory_space<vmem>>, %arg12: memref<16x72xf32, #tpu.memory_space<vmem>>, %arg13: memref<16x1xf32, #tpu.memory_space<vmem>>, %arg14: memref<16x16xf32, #tpu.memory_space<vmem>>, %arg15: memref<16x4xf32, #tpu.memory_space<vmem>>, %arg16: memref<16x1xf32, #tpu.memory_space<vmem>>, %arg17: memref<9x2x72xf32, #tpu.memory_space<vmem>>, %arg18: memref<8x144xf32, #tpu.memory_space<vmem>>, %arg19: memref<8x1xf32, #tpu.memory_space<vmem>>, %arg20: memref<9x72x288xf32, #tpu.memory_space<vmem>>, %arg21: memref<8x72xf32, #tpu.memory_space<vmem>>, %arg22: memref<8x1xf32, #tpu.memory_space<vmem>>, %arg23: memref<3x8xf32, #tpu.memory_space<vmem>>, %arg24: memref<3x1xf32, #tpu.memory_space<vmem>>, %arg25: memref<3x288xf32, #tpu.memory_space<vmem>>, %arg26: memref<16x2xf32, #tpu.memory_space<vmem>>) attributes {dimension_semantics = [], scalar_prefetch = 0 : i64, scratch_operands = 0 : i64, tpu.core_type = #tpu.core_type<tc>} {
    %c0 = arith.constant 0 : index
    %c0_0 = arith.constant 0 : index
    %0 = vector.load %arg0[%c0, %c0_0] : memref<4x512xf32, #tpu.memory_space<vmem>>, vector<4x512xf32>
    %c0_1 = arith.constant 0 : index
    %c0_2 = arith.constant 0 : index
    %1 = vector.load %arg4[%c0_1, %c0_2] : memref<8x1xf32, #tpu.memory_space<vmem>>, vector<8x1xf32>
    %c0_3 = arith.constant 0 : index
    %c0_4 = arith.constant 0 : index
    %c0_5 = arith.constant 0 : index
    %2 = vector.load %arg3[%c0_3, %c0_4, %c0_5] : memref<9x8x4xf32, #tpu.memory_space<vmem>>, vector<1x8x4xf32>
    %3 = vector.shape_cast %2 : vector<1x8x4xf32> to vector<8x4xf32>
    %c0_6 = arith.constant 0 : index
    %c0_7 = arith.constant 0 : index
    %c0_8 = arith.constant 0 : index
    %4 = vector.load %arg2[%c0_6, %c0_7, %c0_8] : memref<9x512x98xf32, #tpu.memory_space<vmem>>, vector<1x512x98xf32>
    %5 = vector.shape_cast %4 : vector<1x512x98xf32> to vector<512x98xf32>
    %cst = arith.constant dense<0.000000e+00> : vector<4x98xf32>
    %6 = tpu.matmul %0, %5, %cst {dimension_numbers = #tpu.dot_dimension_numbers<[1], [0], [0], [1], [0, 0, 1, 1], [], []>} : vector<4x512xf32>, vector<512x98xf32>, vector<4x98xf32> -> vector<4x98xf32>
    %cst_9 = arith.constant dense<0.000000e+00> : vector<8x98xf32>
    %7 = tpu.matmul %3, %6, %cst_9 {dimension_numbers = #tpu.dot_dimension_numbers<[1], [0], [0], [1], [0, 0, 1, 1], [], []>} : vector<8x4xf32>, vector<4x98xf32>, vector<8x98xf32> -> vector<8x98xf32>
    %8 = vector.broadcast %1 : vector<8x1xf32> to vector<8x98xf32>
    %9 = arith.addf %8, %7 : vector<8x98xf32>
    %c1 = arith.constant 1 : index
    %c0_10 = arith.constant 0 : index
    %c0_11 = arith.constant 0 : index
    %10 = vector.load %arg3[%c1, %c0_10, %c0_11] : memref<9x8x4xf32, #tpu.memory_space<vmem>>, vector<1x8x4xf32>
    %11 = vector.shape_cast %10 : vector<1x8x4xf32> to vector<8x4xf32>
    %c1_12 = arith.constant 1 : index
    %c0_13 = arith.constant 0 : index
    %c0_14 = arith.constant 0 : index
    %12 = vector.load %arg2[%c1_12, %c0_13, %c0_14] : memref<9x512x98xf32, #tpu.memory_space<vmem>>, vector<1x512x98xf32>
    %13 = vector.shape_cast %12 : vector<1x512x98xf32> to vector<512x98xf32>
    %cst_15 = arith.constant dense<0.000000e+00> : vector<4x98xf32>
    %14 = tpu.matmul %0, %13, %cst_15 {dimension_numbers = #tpu.dot_dimension_numbers<[1], [0], [0], [1], [0, 0, 1, 1], [], []>} : vector<4x512xf32>, vector<512x98xf32>, vector<4x98xf32> -> vector<4x98xf32>
    %cst_16 = arith.constant dense<0.000000e+00> : vector<8x98xf32>
    %15 = tpu.matmul %11, %14, %cst_16 {dimension_numbers = #tpu.dot_dimension_numbers<[1], [0], [0], [1], [0, 0, 1, 1], [], []>} : vector<8x4xf32>, vector<4x98xf32>, vector<8x98xf32> -> vector<8x98xf32>
    %16 = arith.addf %9, %15 : vector<8x98xf32>
    %c2 = arith.constant 2 : index
    %c0_17 = arith.constant 0 : index
    %c0_18 = arith.constant 0 : index
    %17 = vector.load %arg3[%c2, %c0_17, %c0_18] : memref<9x8x4xf32, #tpu.memory_space<vmem>>, vector<1x8x4xf32>
    %18 = vector.shape_cast %17 : vector<1x8x4xf32> to vector<8x4xf32>
    %c2_19 = arith.constant 2 : index
    %c0_20 = arith.constant 0 : index
    %c0_21 = arith.constant 0 : index
    %19 = vector.load %arg2[%c2_19, %c0_20, %c0_21] : memref<9x512x98xf32, #tpu.memory_space<vmem>>, vector<1x512x98xf32>
    %20 = vector.shape_cast %19 : vector<1x512x98xf32> to vector<512x98xf32>
    %cst_22 = arith.constant dense<0.000000e+00> : vector<4x98xf32>
    %21 = tpu.matmul %0, %20, %cst_22 {dimension_numbers = #tpu.dot_dimension_numbers<[1], [0], [0], [1], [0, 0, 1, 1], [], []>} : vector<4x512xf32>, vector<512x98xf32>, vector<4x98xf32> -> vector<4x98xf32>
    %cst_23 = arith.constant dense<0.000000e+00> : vector<8x98xf32>
    %22 = tpu.matmul %18, %21, %cst_23 {dimension_numbers = #tpu.dot_dimension_numbers<[1], [0], [0], [1], [0, 0, 1, 1], [], []>} : vector<8x4xf32>, vector<4x98xf32>, vector<8x98xf32> -> vector<8x98xf32>
    %23 = arith.addf %16, %22 : vector<8x98xf32>
    %c3 = arith.constant 3 : index
    %c0_24 = arith.constant 0 : index
    %c0_25 = arith.constant 0 : index
    %24 = vector.load %arg3[%c3, %c0_24, %c0_25] : memref<9x8x4xf32, #tpu.memory_space<vmem>>, vector<1x8x4xf32>
    %25 = vector.shape_cast %24 : vector<1x8x4xf32> to vector<8x4xf32>
    %c3_26 = arith.constant 3 : index
    %c0_27 = arith.constant 0 : index
    %c0_28 = arith.constant 0 : index
    %26 = vector.load %arg2[%c3_26, %c0_27, %c0_28] : memref<9x512x98xf32, #tpu.memory_space<vmem>>, vector<1x512x98xf32>
    %27 = vector.shape_cast %26 : vector<1x512x98xf32> to vector<512x98xf32>
    %cst_29 = arith.constant dense<0.000000e+00> : vector<4x98xf32>
    %28 = tpu.matmul %0, %27, %cst_29 {dimension_numbers = #tpu.dot_dimension_numbers<[1], [0], [0], [1], [0, 0, 1, 1], [], []>} : vector<4x512xf32>, vector<512x98xf32>, vector<4x98xf32> -> vector<4x98xf32>
    %cst_30 = arith.constant dense<0.000000e+00> : vector<8x98xf32>
    %29 = tpu.matmul %25, %28, %cst_30 {dimension_numbers = #tpu.dot_dimension_numbers<[1], [0], [0], [1], [0, 0, 1, 1], [], []>} : vector<8x4xf32>, vector<4x98xf32>, vector<8x98xf32> -> vector<8x98xf32>
    %30 = arith.addf %23, %29 : vector<8x98xf32>
    %c4 = arith.constant 4 : index
    %c0_31 = arith.constant 0 : index
    %c0_32 = arith.constant 0 : index
    %31 = vector.load %arg3[%c4, %c0_31, %c0_32] : memref<9x8x4xf32, #tpu.memory_space<vmem>>, vector<1x8x4xf32>
    %32 = vector.shape_cast %31 : vector<1x8x4xf32> to vector<8x4xf32>
    %c4_33 = arith.constant 4 : index
    %c0_34 = arith.constant 0 : index
    %c0_35 = arith.constant 0 : index
    %33 = vector.load %arg2[%c4_33, %c0_34, %c0_35] : memref<9x512x98xf32, #tpu.memory_space<vmem>>, vector<1x512x98xf32>
    %34 = vector.shape_cast %33 : vector<1x512x98xf32> to vector<512x98xf32>
    %cst_36 = arith.constant dense<0.000000e+00> : vector<4x98xf32>
    %35 = tpu.matmul %0, %34, %cst_36 {dimension_numbers = #tpu.dot_dimension_numbers<[1], [0], [0], [1], [0, 0, 1, 1], [], []>} : vector<4x512xf32>, vector<512x98xf32>, vector<4x98xf32> -> vector<4x98xf32>
    %cst_37 = arith.constant dense<0.000000e+00> : vector<8x98xf32>
    %36 = tpu.matmul %32, %35, %cst_37 {dimension_numbers = #tpu.dot_dimension_numbers<[1], [0], [0], [1], [0, 0, 1, 1], [], []>} : vector<8x4xf32>, vector<4x98xf32>, vector<8x98xf32> -> vector<8x98xf32>
    %37 = arith.addf %30, %36 : vector<8x98xf32>
    %c5 = arith.constant 5 : index
    %c0_38 = arith.constant 0 : index
    %c0_39 = arith.constant 0 : index
    %38 = vector.load %arg3[%c5, %c0_38, %c0_39] : memref<9x8x4xf32, #tpu.memory_space<vmem>>, vector<1x8x4xf32>
    %39 = vector.shape_cast %38 : vector<1x8x4xf32> to vector<8x4xf32>
    %c5_40 = arith.constant 5 : index
    %c0_41 = arith.constant 0 : index
    %c0_42 = arith.constant 0 : index
    %40 = vector.load %arg2[%c5_40, %c0_41, %c0_42] : memref<9x512x98xf32, #tpu.memory_space<vmem>>, vector<1x512x98xf32>
    %41 = vector.shape_cast %40 : vector<1x512x98xf32> to vector<512x98xf32>
    %cst_43 = arith.constant dense<0.000000e+00> : vector<4x98xf32>
    %42 = tpu.matmul %0, %41, %cst_43 {dimension_numbers = #tpu.dot_dimension_numbers<[1], [0], [0], [1], [0, 0, 1, 1], [], []>} : vector<4x512xf32>, vector<512x98xf32>, vector<4x98xf32> -> vector<4x98xf32>
    %cst_44 = arith.constant dense<0.000000e+00> : vector<8x98xf32>
    %43 = tpu.matmul %39, %42, %cst_44 {dimension_numbers = #tpu.dot_dimension_numbers<[1], [0], [0], [1], [0, 0, 1, 1], [], []>} : vector<8x4xf32>, vector<4x98xf32>, vector<8x98xf32> -> vector<8x98xf32>
    %44 = arith.addf %37, %43 : vector<8x98xf32>
    %c6 = arith.constant 6 : index
    %c0_45 = arith.constant 0 : index
    %c0_46 = arith.constant 0 : index
    %45 = vector.load %arg3[%c6, %c0_45, %c0_46] : memref<9x8x4xf32, #tpu.memory_space<vmem>>, vector<1x8x4xf32>
    %46 = vector.shape_cast %45 : vector<1x8x4xf32> to vector<8x4xf32>
    %c6_47 = arith.constant 6 : index
    %c0_48 = arith.constant 0 : index
    %c0_49 = arith.constant 0 : index
    %47 = vector.load %arg2[%c6_47, %c0_48, %c0_49] : memref<9x512x98xf32, #tpu.memory_space<vmem>>, vector<1x512x98xf32>
    %48 = vector.shape_cast %47 : vector<1x512x98xf32> to vector<512x98xf32>
    %cst_50 = arith.constant dense<0.000000e+00> : vector<4x98xf32>
    %49 = tpu.matmul %0, %48, %cst_50 {dimension_numbers = #tpu.dot_dimension_numbers<[1], [0], [0], [1], [0, 0, 1, 1], [], []>} : vector<4x512xf32>, vector<512x98xf32>, vector<4x98xf32> -> vector<4x98xf32>
    %cst_51 = arith.constant dense<0.000000e+00> : vector<8x98xf32>
    %50 = tpu.matmul %46, %49, %cst_51 {dimension_numbers = #tpu.dot_dimension_numbers<[1], [0], [0], [1], [0, 0, 1, 1], [], []>} : vector<8x4xf32>, vector<4x98xf32>, vector<8x98xf32> -> vector<8x98xf32>
    %51 = arith.addf %44, %50 : vector<8x98xf32>
    %c7 = arith.constant 7 : index
    %c0_52 = arith.constant 0 : index
    %c0_53 = arith.constant 0 : index
    %52 = vector.load %arg3[%c7, %c0_52, %c0_53] : memref<9x8x4xf32, #tpu.memory_space<vmem>>, vector<1x8x4xf32>
    %53 = vector.shape_cast %52 : vector<1x8x4xf32> to vector<8x4xf32>
    %c7_54 = arith.constant 7 : index
    %c0_55 = arith.constant 0 : index
    %c0_56 = arith.constant 0 : index
    %54 = vector.load %arg2[%c7_54, %c0_55, %c0_56] : memref<9x512x98xf32, #tpu.memory_space<vmem>>, vector<1x512x98xf32>
    %55 = vector.shape_cast %54 : vector<1x512x98xf32> to vector<512x98xf32>
    %cst_57 = arith.constant dense<0.000000e+00> : vector<4x98xf32>
    %56 = tpu.matmul %0, %55, %cst_57 {dimension_numbers = #tpu.dot_dimension_numbers<[1], [0], [0], [1], [0, 0, 1, 1], [], []>} : vector<4x512xf32>, vector<512x98xf32>, vector<4x98xf32> -> vector<4x98xf32>
    %cst_58 = arith.constant dense<0.000000e+00> : vector<8x98xf32>
    %57 = tpu.matmul %53, %56, %cst_58 {dimension_numbers = #tpu.dot_dimension_numbers<[1], [0], [0], [1], [0, 0, 1, 1], [], []>} : vector<8x4xf32>, vector<4x98xf32>, vector<8x98xf32> -> vector<8x98xf32>
    %58 = arith.addf %51, %57 : vector<8x98xf32>
    %c8 = arith.constant 8 : index
    %c0_59 = arith.constant 0 : index
    %c0_60 = arith.constant 0 : index
    %59 = vector.load %arg3[%c8, %c0_59, %c0_60] : memref<9x8x4xf32, #tpu.memory_space<vmem>>, vector<1x8x4xf32>
    %60 = vector.shape_cast %59 : vector<1x8x4xf32> to vector<8x4xf32>
    %c8_61 = arith.constant 8 : index
    %c0_62 = arith.constant 0 : index
    %c0_63 = arith.constant 0 : index
    %61 = vector.load %arg2[%c8_61, %c0_62, %c0_63] : memref<9x512x98xf32, #tpu.memory_space<vmem>>, vector<1x512x98xf32>
    %62 = vector.shape_cast %61 : vector<1x512x98xf32> to vector<512x98xf32>
    %cst_64 = arith.constant dense<0.000000e+00> : vector<4x98xf32>
    %63 = tpu.matmul %0, %62, %cst_64 {dimension_numbers = #tpu.dot_dimension_numbers<[1], [0], [0], [1], [0, 0, 1, 1], [], []>} : vector<4x512xf32>, vector<512x98xf32>, vector<4x98xf32> -> vector<4x98xf32>
    %cst_65 = arith.constant dense<0.000000e+00> : vector<8x98xf32>
    %64 = tpu.matmul %60, %63, %cst_65 {dimension_numbers = #tpu.dot_dimension_numbers<[1], [0], [0], [1], [0, 0, 1, 1], [], []>} : vector<8x4xf32>, vector<4x98xf32>, vector<8x98xf32> -> vector<8x98xf32>
    %65 = arith.addf %58, %64 : vector<8x98xf32>
    %cst_66 = arith.constant 5.000000e-01 : f32
    %66 = vector.broadcast %cst_66 : f32 to vector<8x98xf32>
    %67 = arith.mulf %66, %65 : vector<8x98xf32>
    %cst_67 = arith.constant 0.707106769 : f32
    %68 = vector.broadcast %cst_67 : f32 to vector<8x98xf32>
    %69 = arith.mulf %65, %68 : vector<8x98xf32>
    %cst_68 = arith.constant 0.000000e+00 : f32
    %70 = vector.broadcast %cst_68 : f32 to vector<8x98xf32>
    %71 = arith.cmpf oge, %69, %70 : vector<8x98xf32>
    %cst_69 = arith.constant 0.000000e+00 : f32
    %72 = vector.broadcast %cst_69 : f32 to vector<8x98xf32>
    %73 = arith.subf %72, %69 : vector<8x98xf32>
    %74 = arith.select %71, %69, %73 : vector<8x98xi1>, vector<8x98xf32>
    %cst_70 = arith.constant 0.327591091 : f32
    %75 = vector.broadcast %cst_70 : f32 to vector<8x98xf32>
    %76 = arith.mulf %75, %74 : vector<8x98xf32>
    %cst_71 = arith.constant 1.000000e+00 : f32
    %77 = vector.broadcast %cst_71 : f32 to vector<8x98xf32>
    %78 = arith.addf %77, %76 : vector<8x98xf32>
    %cst_72 = arith.constant 1.000000e+00 : f32
    %79 = vector.broadcast %cst_72 : f32 to vector<8x98xf32>
    %80 = arith.divf %79, %78 : vector<8x98xf32>
    %cst_73 = arith.constant 1.06140542 : f32
    %81 = vector.broadcast %cst_73 : f32 to vector<8x98xf32>
    %82 = arith.mulf %81, %80 : vector<8x98xf32>
    %cst_74 = arith.constant -1.45315206 : f32
    %83 = vector.broadcast %cst_74 : f32 to vector<8x98xf32>
    %84 = arith.addf %82, %83 : vector<8x98xf32>
    %85 = arith.mulf %84, %80 : vector<8x98xf32>
    %cst_75 = arith.constant 1.42141378 : f32
    %86 = vector.broadcast %cst_75 : f32 to vector<8x98xf32>
    %87 = arith.addf %85, %86 : vector<8x98xf32>
    %88 = arith.mulf %87, %80 : vector<8x98xf32>
    %cst_76 = arith.constant -0.284496725 : f32
    %89 = vector.broadcast %cst_76 : f32 to vector<8x98xf32>
    %90 = arith.addf %88, %89 : vector<8x98xf32>
    %91 = arith.mulf %90, %80 : vector<8x98xf32>
    %cst_77 = arith.constant 0.254829586 : f32
    %92 = vector.broadcast %cst_77 : f32 to vector<8x98xf32>
    %93 = arith.addf %91, %92 : vector<8x98xf32>
    %94 = arith.mulf %93, %80 : vector<8x98xf32>
    %cst_78 = arith.constant 0.000000e+00 : f32
    %95 = vector.broadcast %cst_78 : f32 to vector<8x98xf32>
    %96 = arith.subf %95, %74 : vector<8x98xf32>
    %97 = arith.mulf %96, %74 : vector<8x98xf32>
    %98 = math.exp %97 : vector<8x98xf32>
    %99 = arith.mulf %94, %98 : vector<8x98xf32>
    %cst_79 = arith.constant 1.000000e+00 : f32
    %100 = vector.broadcast %cst_79 : f32 to vector<8x98xf32>
    %101 = arith.subf %100, %99 : vector<8x98xf32>
    %cst_80 = arith.constant 0.000000e+00 : f32
    %102 = vector.broadcast %cst_80 : f32 to vector<8x98xf32>
    %103 = arith.cmpf oge, %69, %102 : vector<8x98xf32>
    %cst_81 = arith.constant 0.000000e+00 : f32
    %104 = vector.broadcast %cst_81 : f32 to vector<8x98xf32>
    %105 = arith.subf %104, %101 : vector<8x98xf32>
    %106 = arith.select %103, %101, %105 : vector<8x98xi1>, vector<8x98xf32>
    %cst_82 = arith.constant 1.000000e+00 : f32
    %107 = vector.broadcast %cst_82 : f32 to vector<8x98xf32>
    %108 = arith.addf %107, %106 : vector<8x98xf32>
    %109 = arith.mulf %67, %108 : vector<8x98xf32>
    %c0_83 = arith.constant 0 : index
    %c0_84 = arith.constant 0 : index
    %c0_85 = arith.constant 0 : index
    %110 = vector.load %arg5[%c0_83, %c0_84, %c0_85] : memref<9x98x50xf32, #tpu.memory_space<vmem>>, vector<1x98x50xf32>
    %111 = vector.shape_cast %110 : vector<1x98x50xf32> to vector<98x50xf32>
    %cst_86 = arith.constant dense<0.000000e+00> : vector<8x50xf32>
    %112 = tpu.matmul %109, %111, %cst_86 {dimension_numbers = #tpu.dot_dimension_numbers<[1], [0], [0], [1], [0, 0, 1, 1], [], []>} : vector<8x98xf32>, vector<98x50xf32>, vector<8x50xf32> -> vector<8x50xf32>
    %c1_87 = arith.constant 1 : index
    %c0_88 = arith.constant 0 : index
    %c0_89 = arith.constant 0 : index
    %113 = vector.load %arg5[%c1_87, %c0_88, %c0_89] : memref<9x98x50xf32, #tpu.memory_space<vmem>>, vector<1x98x50xf32>
    %114 = vector.shape_cast %113 : vector<1x98x50xf32> to vector<98x50xf32>
    %cst_90 = arith.constant dense<0.000000e+00> : vector<8x50xf32>
    %115 = tpu.matmul %109, %114, %cst_90 {dimension_numbers = #tpu.dot_dimension_numbers<[1], [0], [0], [1], [0, 0, 1, 1], [], []>} : vector<8x98xf32>, vector<98x50xf32>, vector<8x50xf32> -> vector<8x50xf32>
    %c2_91 = arith.constant 2 : index
    %c0_92 = arith.constant 0 : index
    %c0_93 = arith.constant 0 : index
    %116 = vector.load %arg5[%c2_91, %c0_92, %c0_93] : memref<9x98x50xf32, #tpu.memory_space<vmem>>, vector<1x98x50xf32>
    %117 = vector.shape_cast %116 : vector<1x98x50xf32> to vector<98x50xf32>
    %cst_94 = arith.constant dense<0.000000e+00> : vector<8x50xf32>
    %118 = tpu.matmul %109, %117, %cst_94 {dimension_numbers = #tpu.dot_dimension_numbers<[1], [0], [0], [1], [0, 0, 1, 1], [], []>} : vector<8x98xf32>, vector<98x50xf32>, vector<8x50xf32> -> vector<8x50xf32>
    %c3_95 = arith.constant 3 : index
    %c0_96 = arith.constant 0 : index
    %c0_97 = arith.constant 0 : index
    %119 = vector.load %arg5[%c3_95, %c0_96, %c0_97] : memref<9x98x50xf32, #tpu.memory_space<vmem>>, vector<1x98x50xf32>
    %120 = vector.shape_cast %119 : vector<1x98x50xf32> to vector<98x50xf32>
    %cst_98 = arith.constant dense<0.000000e+00> : vector<8x50xf32>
    %121 = tpu.matmul %109, %120, %cst_98 {dimension_numbers = #tpu.dot_dimension_numbers<[1], [0], [0], [1], [0, 0, 1, 1], [], []>} : vector<8x98xf32>, vector<98x50xf32>, vector<8x50xf32> -> vector<8x50xf32>
    %c4_99 = arith.constant 4 : index
    %c0_100 = arith.constant 0 : index
    %c0_101 = arith.constant 0 : index
    %122 = vector.load %arg5[%c4_99, %c0_100, %c0_101] : memref<9x98x50xf32, #tpu.memory_space<vmem>>, vector<1x98x50xf32>
    %123 = vector.shape_cast %122 : vector<1x98x50xf32> to vector<98x50xf32>
    %cst_102 = arith.constant dense<0.000000e+00> : vector<8x50xf32>
    %124 = tpu.matmul %109, %123, %cst_102 {dimension_numbers = #tpu.dot_dimension_numbers<[1], [0], [0], [1], [0, 0, 1, 1], [], []>} : vector<8x98xf32>, vector<98x50xf32>, vector<8x50xf32> -> vector<8x50xf32>
    %c5_103 = arith.constant 5 : index
    %c0_104 = arith.constant 0 : index
    %c0_105 = arith.constant 0 : index
    %125 = vector.load %arg5[%c5_103, %c0_104, %c0_105] : memref<9x98x50xf32, #tpu.memory_space<vmem>>, vector<1x98x50xf32>
    %126 = vector.shape_cast %125 : vector<1x98x50xf32> to vector<98x50xf32>
    %cst_106 = arith.constant dense<0.000000e+00> : vector<8x50xf32>
    %127 = tpu.matmul %109, %126, %cst_106 {dimension_numbers = #tpu.dot_dimension_numbers<[1], [0], [0], [1], [0, 0, 1, 1], [], []>} : vector<8x98xf32>, vector<98x50xf32>, vector<8x50xf32> -> vector<8x50xf32>
    %c6_107 = arith.constant 6 : index
    %c0_108 = arith.constant 0 : index
    %c0_109 = arith.constant 0 : index
    %128 = vector.load %arg5[%c6_107, %c0_108, %c0_109] : memref<9x98x50xf32, #tpu.memory_space<vmem>>, vector<1x98x50xf32>
    %129 = vector.shape_cast %128 : vector<1x98x50xf32> to vector<98x50xf32>
    %cst_110 = arith.constant dense<0.000000e+00> : vector<8x50xf32>
    %130 = tpu.matmul %109, %129, %cst_110 {dimension_numbers = #tpu.dot_dimension_numbers<[1], [0], [0], [1], [0, 0, 1, 1], [], []>} : vector<8x98xf32>, vector<98x50xf32>, vector<8x50xf32> -> vector<8x50xf32>
    %c7_111 = arith.constant 7 : index
    %c0_112 = arith.constant 0 : index
    %c0_113 = arith.constant 0 : index
    %131 = vector.load %arg5[%c7_111, %c0_112, %c0_113] : memref<9x98x50xf32, #tpu.memory_space<vmem>>, vector<1x98x50xf32>
    %132 = vector.shape_cast %131 : vector<1x98x50xf32> to vector<98x50xf32>
    %cst_114 = arith.constant dense<0.000000e+00> : vector<8x50xf32>
    %133 = tpu.matmul %109, %132, %cst_114 {dimension_numbers = #tpu.dot_dimension_numbers<[1], [0], [0], [1], [0, 0, 1, 1], [], []>} : vector<8x98xf32>, vector<98x50xf32>, vector<8x50xf32> -> vector<8x50xf32>
    %c8_115 = arith.constant 8 : index
    %c0_116 = arith.constant 0 : index
    %c0_117 = arith.constant 0 : index
    %134 = vector.load %arg5[%c8_115, %c0_116, %c0_117] : memref<9x98x50xf32, #tpu.memory_space<vmem>>, vector<1x98x50xf32>
    %135 = vector.shape_cast %134 : vector<1x98x50xf32> to vector<98x50xf32>
    %cst_118 = arith.constant dense<0.000000e+00> : vector<8x50xf32>
    %136 = tpu.matmul %109, %135, %cst_118 {dimension_numbers = #tpu.dot_dimension_numbers<[1], [0], [0], [1], [0, 0, 1, 1], [], []>} : vector<8x98xf32>, vector<98x50xf32>, vector<8x50xf32> -> vector<8x50xf32>
    %137 = tpu.concatenate %112, %115, %118, %121, %124, %127, %130, %133, %136 in 0 : vector<8x50xf32>, vector<8x50xf32>, vector<8x50xf32>, vector<8x50xf32>, vector<8x50xf32>, vector<8x50xf32>, vector<8x50xf32>, vector<8x50xf32>, vector<8x50xf32> -> vector<72x50xf32>
    %c0_119 = arith.constant 0 : index
    %c0_120 = arith.constant 0 : index
    %138 = vector.load %arg6[%c0_119, %c0_120] : memref<8x72xf32, #tpu.memory_space<vmem>>, vector<8x72xf32>
    %cst_121 = arith.constant dense<0.000000e+00> : vector<8x50xf32>
    %139 = tpu.matmul %138, %137, %cst_121 {dimension_numbers = #tpu.dot_dimension_numbers<[1], [0], [0], [1], [0, 0, 1, 1], [], []>} : vector<8x72xf32>, vector<72x50xf32>, vector<8x50xf32> -> vector<8x50xf32>
    %c0_122 = arith.constant 0 : index
    %c0_123 = arith.constant 0 : index
    %140 = vector.load %arg7[%c0_122, %c0_123] : memref<8x1xf32, #tpu.memory_space<vmem>>, vector<8x1xf32>
    %141 = vector.broadcast %140 : vector<8x1xf32> to vector<8x50xf32>
    %142 = arith.addf %139, %141 : vector<8x50xf32>
    %cst_124 = arith.constant 5.000000e-01 : f32
    %143 = vector.broadcast %cst_124 : f32 to vector<8x50xf32>
    %144 = arith.mulf %143, %142 : vector<8x50xf32>
    %cst_125 = arith.constant 0.707106769 : f32
    %145 = vector.broadcast %cst_125 : f32 to vector<8x50xf32>
    %146 = arith.mulf %142, %145 : vector<8x50xf32>
    %cst_126 = arith.constant 0.000000e+00 : f32
    %147 = vector.broadcast %cst_126 : f32 to vector<8x50xf32>
    %148 = arith.cmpf oge, %146, %147 : vector<8x50xf32>
    %cst_127 = arith.constant 0.000000e+00 : f32
    %149 = vector.broadcast %cst_127 : f32 to vector<8x50xf32>
    %150 = arith.subf %149, %146 : vector<8x50xf32>
    %151 = arith.select %148, %146, %150 : vector<8x50xi1>, vector<8x50xf32>
    %cst_128 = arith.constant 0.327591091 : f32
    %152 = vector.broadcast %cst_128 : f32 to vector<8x50xf32>
    %153 = arith.mulf %152, %151 : vector<8x50xf32>
    %cst_129 = arith.constant 1.000000e+00 : f32
    %154 = vector.broadcast %cst_129 : f32 to vector<8x50xf32>
    %155 = arith.addf %154, %153 : vector<8x50xf32>
    %cst_130 = arith.constant 1.000000e+00 : f32
    %156 = vector.broadcast %cst_130 : f32 to vector<8x50xf32>
    %157 = arith.divf %156, %155 : vector<8x50xf32>
    %cst_131 = arith.constant 1.06140542 : f32
    %158 = vector.broadcast %cst_131 : f32 to vector<8x50xf32>
    %159 = arith.mulf %158, %157 : vector<8x50xf32>
    %cst_132 = arith.constant -1.45315206 : f32
    %160 = vector.broadcast %cst_132 : f32 to vector<8x50xf32>
    %161 = arith.addf %159, %160 : vector<8x50xf32>
    %162 = arith.mulf %161, %157 : vector<8x50xf32>
    %cst_133 = arith.constant 1.42141378 : f32
    %163 = vector.broadcast %cst_133 : f32 to vector<8x50xf32>
    %164 = arith.addf %162, %163 : vector<8x50xf32>
    %165 = arith.mulf %164, %157 : vector<8x50xf32>
    %cst_134 = arith.constant -0.284496725 : f32
    %166 = vector.broadcast %cst_134 : f32 to vector<8x50xf32>
    %167 = arith.addf %165, %166 : vector<8x50xf32>
    %168 = arith.mulf %167, %157 : vector<8x50xf32>
    %cst_135 = arith.constant 0.254829586 : f32
    %169 = vector.broadcast %cst_135 : f32 to vector<8x50xf32>
    %170 = arith.addf %168, %169 : vector<8x50xf32>
    %171 = arith.mulf %170, %157 : vector<8x50xf32>
    %cst_136 = arith.constant 0.000000e+00 : f32
    %172 = vector.broadcast %cst_136 : f32 to vector<8x50xf32>
    %173 = arith.subf %172, %151 : vector<8x50xf32>
    %174 = arith.mulf %173, %151 : vector<8x50xf32>
    %175 = math.exp %174 : vector<8x50xf32>
    %176 = arith.mulf %171, %175 : vector<8x50xf32>
    %cst_137 = arith.constant 1.000000e+00 : f32
    %177 = vector.broadcast %cst_137 : f32 to vector<8x50xf32>
    %178 = arith.subf %177, %176 : vector<8x50xf32>
    %cst_138 = arith.constant 0.000000e+00 : f32
    %179 = vector.broadcast %cst_138 : f32 to vector<8x50xf32>
    %180 = arith.cmpf oge, %146, %179 : vector<8x50xf32>
    %cst_139 = arith.constant 0.000000e+00 : f32
    %181 = vector.broadcast %cst_139 : f32 to vector<8x50xf32>
    %182 = arith.subf %181, %178 : vector<8x50xf32>
    %183 = arith.select %180, %178, %182 : vector<8x50xi1>, vector<8x50xf32>
    %cst_140 = arith.constant 1.000000e+00 : f32
    %184 = vector.broadcast %cst_140 : f32 to vector<8x50xf32>
    %185 = arith.addf %184, %183 : vector<8x50xf32>
    %186 = arith.mulf %144, %185 : vector<8x50xf32>
    %c0_141 = arith.constant 0 : index
    %c0_142 = arith.constant 0 : index
    %c0_143 = arith.constant 0 : index
    %187 = vector.load %arg8[%c0_141, %c0_142, %c0_143] : memref<9x50x18xf32, #tpu.memory_space<vmem>>, vector<1x50x18xf32>
    %188 = vector.shape_cast %187 : vector<1x50x18xf32> to vector<50x18xf32>
    %cst_144 = arith.constant dense<0.000000e+00> : vector<8x18xf32>
    %189 = tpu.matmul %186, %188, %cst_144 {dimension_numbers = #tpu.dot_dimension_numbers<[1], [0], [0], [1], [0, 0, 1, 1], [], []>} : vector<8x50xf32>, vector<50x18xf32>, vector<8x18xf32> -> vector<8x18xf32>
    %c1_145 = arith.constant 1 : index
    %c0_146 = arith.constant 0 : index
    %c0_147 = arith.constant 0 : index
    %190 = vector.load %arg8[%c1_145, %c0_146, %c0_147] : memref<9x50x18xf32, #tpu.memory_space<vmem>>, vector<1x50x18xf32>
    %191 = vector.shape_cast %190 : vector<1x50x18xf32> to vector<50x18xf32>
    %cst_148 = arith.constant dense<0.000000e+00> : vector<8x18xf32>
    %192 = tpu.matmul %186, %191, %cst_148 {dimension_numbers = #tpu.dot_dimension_numbers<[1], [0], [0], [1], [0, 0, 1, 1], [], []>} : vector<8x50xf32>, vector<50x18xf32>, vector<8x18xf32> -> vector<8x18xf32>
    %c2_149 = arith.constant 2 : index
    %c0_150 = arith.constant 0 : index
    %c0_151 = arith.constant 0 : index
    %193 = vector.load %arg8[%c2_149, %c0_150, %c0_151] : memref<9x50x18xf32, #tpu.memory_space<vmem>>, vector<1x50x18xf32>
    %194 = vector.shape_cast %193 : vector<1x50x18xf32> to vector<50x18xf32>
    %cst_152 = arith.constant dense<0.000000e+00> : vector<8x18xf32>
    %195 = tpu.matmul %186, %194, %cst_152 {dimension_numbers = #tpu.dot_dimension_numbers<[1], [0], [0], [1], [0, 0, 1, 1], [], []>} : vector<8x50xf32>, vector<50x18xf32>, vector<8x18xf32> -> vector<8x18xf32>
    %c3_153 = arith.constant 3 : index
    %c0_154 = arith.constant 0 : index
    %c0_155 = arith.constant 0 : index
    %196 = vector.load %arg8[%c3_153, %c0_154, %c0_155] : memref<9x50x18xf32, #tpu.memory_space<vmem>>, vector<1x50x18xf32>
    %197 = vector.shape_cast %196 : vector<1x50x18xf32> to vector<50x18xf32>
    %cst_156 = arith.constant dense<0.000000e+00> : vector<8x18xf32>
    %198 = tpu.matmul %186, %197, %cst_156 {dimension_numbers = #tpu.dot_dimension_numbers<[1], [0], [0], [1], [0, 0, 1, 1], [], []>} : vector<8x50xf32>, vector<50x18xf32>, vector<8x18xf32> -> vector<8x18xf32>
    %c4_157 = arith.constant 4 : index
    %c0_158 = arith.constant 0 : index
    %c0_159 = arith.constant 0 : index
    %199 = vector.load %arg8[%c4_157, %c0_158, %c0_159] : memref<9x50x18xf32, #tpu.memory_space<vmem>>, vector<1x50x18xf32>
    %200 = vector.shape_cast %199 : vector<1x50x18xf32> to vector<50x18xf32>
    %cst_160 = arith.constant dense<0.000000e+00> : vector<8x18xf32>
    %201 = tpu.matmul %186, %200, %cst_160 {dimension_numbers = #tpu.dot_dimension_numbers<[1], [0], [0], [1], [0, 0, 1, 1], [], []>} : vector<8x50xf32>, vector<50x18xf32>, vector<8x18xf32> -> vector<8x18xf32>
    %c5_161 = arith.constant 5 : index
    %c0_162 = arith.constant 0 : index
    %c0_163 = arith.constant 0 : index
    %202 = vector.load %arg8[%c5_161, %c0_162, %c0_163] : memref<9x50x18xf32, #tpu.memory_space<vmem>>, vector<1x50x18xf32>
    %203 = vector.shape_cast %202 : vector<1x50x18xf32> to vector<50x18xf32>
    %cst_164 = arith.constant dense<0.000000e+00> : vector<8x18xf32>
    %204 = tpu.matmul %186, %203, %cst_164 {dimension_numbers = #tpu.dot_dimension_numbers<[1], [0], [0], [1], [0, 0, 1, 1], [], []>} : vector<8x50xf32>, vector<50x18xf32>, vector<8x18xf32> -> vector<8x18xf32>
    %c6_165 = arith.constant 6 : index
    %c0_166 = arith.constant 0 : index
    %c0_167 = arith.constant 0 : index
    %205 = vector.load %arg8[%c6_165, %c0_166, %c0_167] : memref<9x50x18xf32, #tpu.memory_space<vmem>>, vector<1x50x18xf32>
    %206 = vector.shape_cast %205 : vector<1x50x18xf32> to vector<50x18xf32>
    %cst_168 = arith.constant dense<0.000000e+00> : vector<8x18xf32>
    %207 = tpu.matmul %186, %206, %cst_168 {dimension_numbers = #tpu.dot_dimension_numbers<[1], [0], [0], [1], [0, 0, 1, 1], [], []>} : vector<8x50xf32>, vector<50x18xf32>, vector<8x18xf32> -> vector<8x18xf32>
    %c7_169 = arith.constant 7 : index
    %c0_170 = arith.constant 0 : index
    %c0_171 = arith.constant 0 : index
    %208 = vector.load %arg8[%c7_169, %c0_170, %c0_171] : memref<9x50x18xf32, #tpu.memory_space<vmem>>, vector<1x50x18xf32>
    %209 = vector.shape_cast %208 : vector<1x50x18xf32> to vector<50x18xf32>
    %cst_172 = arith.constant dense<0.000000e+00> : vector<8x18xf32>
    %210 = tpu.matmul %186, %209, %cst_172 {dimension_numbers = #tpu.dot_dimension_numbers<[1], [0], [0], [1], [0, 0, 1, 1], [], []>} : vector<8x50xf32>, vector<50x18xf32>, vector<8x18xf32> -> vector<8x18xf32>
    %c8_173 = arith.constant 8 : index
    %c0_174 = arith.constant 0 : index
    %c0_175 = arith.constant 0 : index
    %211 = vector.load %arg8[%c8_173, %c0_174, %c0_175] : memref<9x50x18xf32, #tpu.memory_space<vmem>>, vector<1x50x18xf32>
    %212 = vector.shape_cast %211 : vector<1x50x18xf32> to vector<50x18xf32>
    %cst_176 = arith.constant dense<0.000000e+00> : vector<8x18xf32>
    %213 = tpu.matmul %186, %212, %cst_176 {dimension_numbers = #tpu.dot_dimension_numbers<[1], [0], [0], [1], [0, 0, 1, 1], [], []>} : vector<8x50xf32>, vector<50x18xf32>, vector<8x18xf32> -> vector<8x18xf32>
    %214 = tpu.concatenate %189, %192, %195, %198, %201, %204, %207, %210, %213 in 0 : vector<8x18xf32>, vector<8x18xf32>, vector<8x18xf32>, vector<8x18xf32>, vector<8x18xf32>, vector<8x18xf32>, vector<8x18xf32>, vector<8x18xf32>, vector<8x18xf32> -> vector<72x18xf32>
    %c0_177 = arith.constant 0 : index
    %c0_178 = arith.constant 0 : index
    %215 = vector.load %arg9[%c0_177, %c0_178] : memref<8x72xf32, #tpu.memory_space<vmem>>, vector<8x72xf32>
    %cst_179 = arith.constant dense<0.000000e+00> : vector<8x18xf32>
    %216 = tpu.matmul %215, %214, %cst_179 {dimension_numbers = #tpu.dot_dimension_numbers<[1], [0], [0], [1], [0, 0, 1, 1], [], []>} : vector<8x72xf32>, vector<72x18xf32>, vector<8x18xf32> -> vector<8x18xf32>
    %c0_180 = arith.constant 0 : index
    %c0_181 = arith.constant 0 : index
    %217 = vector.load %arg10[%c0_180, %c0_181] : memref<8x1xf32, #tpu.memory_space<vmem>>, vector<8x1xf32>
    %218 = vector.broadcast %217 : vector<8x1xf32> to vector<8x18xf32>
    %219 = arith.addf %216, %218 : vector<8x18xf32>
    %cst_182 = arith.constant 5.000000e-01 : f32
    %220 = vector.broadcast %cst_182 : f32 to vector<8x18xf32>
    %221 = arith.mulf %220, %219 : vector<8x18xf32>
    %cst_183 = arith.constant 0.707106769 : f32
    %222 = vector.broadcast %cst_183 : f32 to vector<8x18xf32>
    %223 = arith.mulf %219, %222 : vector<8x18xf32>
    %cst_184 = arith.constant 0.000000e+00 : f32
    %224 = vector.broadcast %cst_184 : f32 to vector<8x18xf32>
    %225 = arith.cmpf oge, %223, %224 : vector<8x18xf32>
    %cst_185 = arith.constant 0.000000e+00 : f32
    %226 = vector.broadcast %cst_185 : f32 to vector<8x18xf32>
    %227 = arith.subf %226, %223 : vector<8x18xf32>
    %228 = arith.select %225, %223, %227 : vector<8x18xi1>, vector<8x18xf32>
    %cst_186 = arith.constant 0.327591091 : f32
    %229 = vector.broadcast %cst_186 : f32 to vector<8x18xf32>
    %230 = arith.mulf %229, %228 : vector<8x18xf32>
    %cst_187 = arith.constant 1.000000e+00 : f32
    %231 = vector.broadcast %cst_187 : f32 to vector<8x18xf32>
    %232 = arith.addf %231, %230 : vector<8x18xf32>
    %cst_188 = arith.constant 1.000000e+00 : f32
    %233 = vector.broadcast %cst_188 : f32 to vector<8x18xf32>
    %234 = arith.divf %233, %232 : vector<8x18xf32>
    %cst_189 = arith.constant 1.06140542 : f32
    %235 = vector.broadcast %cst_189 : f32 to vector<8x18xf32>
    %236 = arith.mulf %235, %234 : vector<8x18xf32>
    %cst_190 = arith.constant -1.45315206 : f32
    %237 = vector.broadcast %cst_190 : f32 to vector<8x18xf32>
    %238 = arith.addf %236, %237 : vector<8x18xf32>
    %239 = arith.mulf %238, %234 : vector<8x18xf32>
    %cst_191 = arith.constant 1.42141378 : f32
    %240 = vector.broadcast %cst_191 : f32 to vector<8x18xf32>
    %241 = arith.addf %239, %240 : vector<8x18xf32>
    %242 = arith.mulf %241, %234 : vector<8x18xf32>
    %cst_192 = arith.constant -0.284496725 : f32
    %243 = vector.broadcast %cst_192 : f32 to vector<8x18xf32>
    %244 = arith.addf %242, %243 : vector<8x18xf32>
    %245 = arith.mulf %244, %234 : vector<8x18xf32>
    %cst_193 = arith.constant 0.254829586 : f32
    %246 = vector.broadcast %cst_193 : f32 to vector<8x18xf32>
    %247 = arith.addf %245, %246 : vector<8x18xf32>
    %248 = arith.mulf %247, %234 : vector<8x18xf32>
    %cst_194 = arith.constant 0.000000e+00 : f32
    %249 = vector.broadcast %cst_194 : f32 to vector<8x18xf32>
    %250 = arith.subf %249, %228 : vector<8x18xf32>
    %251 = arith.mulf %250, %228 : vector<8x18xf32>
    %252 = math.exp %251 : vector<8x18xf32>
    %253 = arith.mulf %248, %252 : vector<8x18xf32>
    %cst_195 = arith.constant 1.000000e+00 : f32
    %254 = vector.broadcast %cst_195 : f32 to vector<8x18xf32>
    %255 = arith.subf %254, %253 : vector<8x18xf32>
    %cst_196 = arith.constant 0.000000e+00 : f32
    %256 = vector.broadcast %cst_196 : f32 to vector<8x18xf32>
    %257 = arith.cmpf oge, %223, %256 : vector<8x18xf32>
    %cst_197 = arith.constant 0.000000e+00 : f32
    %258 = vector.broadcast %cst_197 : f32 to vector<8x18xf32>
    %259 = arith.subf %258, %255 : vector<8x18xf32>
    %260 = arith.select %257, %255, %259 : vector<8x18xi1>, vector<8x18xf32>
    %cst_198 = arith.constant 1.000000e+00 : f32
    %261 = vector.broadcast %cst_198 : f32 to vector<8x18xf32>
    %262 = arith.addf %261, %260 : vector<8x18xf32>
    %263 = arith.mulf %221, %262 : vector<8x18xf32>
    %c0_199 = arith.constant 0 : index
    %c0_200 = arith.constant 0 : index
    %c0_201 = arith.constant 0 : index
    %264 = vector.load %arg11[%c0_199, %c0_200, %c0_201] : memref<9x18x2xf32, #tpu.memory_space<vmem>>, vector<1x18x2xf32>
    %265 = vector.shape_cast %264 : vector<1x18x2xf32> to vector<18x2xf32>
    %cst_202 = arith.constant dense<0.000000e+00> : vector<8x2xf32>
    %266 = tpu.matmul %263, %265, %cst_202 {dimension_numbers = #tpu.dot_dimension_numbers<[1], [0], [0], [1], [0, 0, 1, 1], [], []>} : vector<8x18xf32>, vector<18x2xf32>, vector<8x2xf32> -> vector<8x2xf32>
    %c1_203 = arith.constant 1 : index
    %c0_204 = arith.constant 0 : index
    %c0_205 = arith.constant 0 : index
    %267 = vector.load %arg11[%c1_203, %c0_204, %c0_205] : memref<9x18x2xf32, #tpu.memory_space<vmem>>, vector<1x18x2xf32>
    %268 = vector.shape_cast %267 : vector<1x18x2xf32> to vector<18x2xf32>
    %cst_206 = arith.constant dense<0.000000e+00> : vector<8x2xf32>
    %269 = tpu.matmul %263, %268, %cst_206 {dimension_numbers = #tpu.dot_dimension_numbers<[1], [0], [0], [1], [0, 0, 1, 1], [], []>} : vector<8x18xf32>, vector<18x2xf32>, vector<8x2xf32> -> vector<8x2xf32>
    %c2_207 = arith.constant 2 : index
    %c0_208 = arith.constant 0 : index
    %c0_209 = arith.constant 0 : index
    %270 = vector.load %arg11[%c2_207, %c0_208, %c0_209] : memref<9x18x2xf32, #tpu.memory_space<vmem>>, vector<1x18x2xf32>
    %271 = vector.shape_cast %270 : vector<1x18x2xf32> to vector<18x2xf32>
    %cst_210 = arith.constant dense<0.000000e+00> : vector<8x2xf32>
    %272 = tpu.matmul %263, %271, %cst_210 {dimension_numbers = #tpu.dot_dimension_numbers<[1], [0], [0], [1], [0, 0, 1, 1], [], []>} : vector<8x18xf32>, vector<18x2xf32>, vector<8x2xf32> -> vector<8x2xf32>
    %c3_211 = arith.constant 3 : index
    %c0_212 = arith.constant 0 : index
    %c0_213 = arith.constant 0 : index
    %273 = vector.load %arg11[%c3_211, %c0_212, %c0_213] : memref<9x18x2xf32, #tpu.memory_space<vmem>>, vector<1x18x2xf32>
    %274 = vector.shape_cast %273 : vector<1x18x2xf32> to vector<18x2xf32>
    %cst_214 = arith.constant dense<0.000000e+00> : vector<8x2xf32>
    %275 = tpu.matmul %263, %274, %cst_214 {dimension_numbers = #tpu.dot_dimension_numbers<[1], [0], [0], [1], [0, 0, 1, 1], [], []>} : vector<8x18xf32>, vector<18x2xf32>, vector<8x2xf32> -> vector<8x2xf32>
    %c4_215 = arith.constant 4 : index
    %c0_216 = arith.constant 0 : index
    %c0_217 = arith.constant 0 : index
    %276 = vector.load %arg11[%c4_215, %c0_216, %c0_217] : memref<9x18x2xf32, #tpu.memory_space<vmem>>, vector<1x18x2xf32>
    %277 = vector.shape_cast %276 : vector<1x18x2xf32> to vector<18x2xf32>
    %cst_218 = arith.constant dense<0.000000e+00> : vector<8x2xf32>
    %278 = tpu.matmul %263, %277, %cst_218 {dimension_numbers = #tpu.dot_dimension_numbers<[1], [0], [0], [1], [0, 0, 1, 1], [], []>} : vector<8x18xf32>, vector<18x2xf32>, vector<8x2xf32> -> vector<8x2xf32>
    %c5_219 = arith.constant 5 : index
    %c0_220 = arith.constant 0 : index
    %c0_221 = arith.constant 0 : index
    %279 = vector.load %arg11[%c5_219, %c0_220, %c0_221] : memref<9x18x2xf32, #tpu.memory_space<vmem>>, vector<1x18x2xf32>
    %280 = vector.shape_cast %279 : vector<1x18x2xf32> to vector<18x2xf32>
    %cst_222 = arith.constant dense<0.000000e+00> : vector<8x2xf32>
    %281 = tpu.matmul %263, %280, %cst_222 {dimension_numbers = #tpu.dot_dimension_numbers<[1], [0], [0], [1], [0, 0, 1, 1], [], []>} : vector<8x18xf32>, vector<18x2xf32>, vector<8x2xf32> -> vector<8x2xf32>
    %c6_223 = arith.constant 6 : index
    %c0_224 = arith.constant 0 : index
    %c0_225 = arith.constant 0 : index
    %282 = vector.load %arg11[%c6_223, %c0_224, %c0_225] : memref<9x18x2xf32, #tpu.memory_space<vmem>>, vector<1x18x2xf32>
    %283 = vector.shape_cast %282 : vector<1x18x2xf32> to vector<18x2xf32>
    %cst_226 = arith.constant dense<0.000000e+00> : vector<8x2xf32>
    %284 = tpu.matmul %263, %283, %cst_226 {dimension_numbers = #tpu.dot_dimension_numbers<[1], [0], [0], [1], [0, 0, 1, 1], [], []>} : vector<8x18xf32>, vector<18x2xf32>, vector<8x2xf32> -> vector<8x2xf32>
    %c7_227 = arith.constant 7 : index
    %c0_228 = arith.constant 0 : index
    %c0_229 = arith.constant 0 : index
    %285 = vector.load %arg11[%c7_227, %c0_228, %c0_229] : memref<9x18x2xf32, #tpu.memory_space<vmem>>, vector<1x18x2xf32>
    %286 = vector.shape_cast %285 : vector<1x18x2xf32> to vector<18x2xf32>
    %cst_230 = arith.constant dense<0.000000e+00> : vector<8x2xf32>
    %287 = tpu.matmul %263, %286, %cst_230 {dimension_numbers = #tpu.dot_dimension_numbers<[1], [0], [0], [1], [0, 0, 1, 1], [], []>} : vector<8x18xf32>, vector<18x2xf32>, vector<8x2xf32> -> vector<8x2xf32>
    %c8_231 = arith.constant 8 : index
    %c0_232 = arith.constant 0 : index
    %c0_233 = arith.constant 0 : index
    %288 = vector.load %arg11[%c8_231, %c0_232, %c0_233] : memref<9x18x2xf32, #tpu.memory_space<vmem>>, vector<1x18x2xf32>
    %289 = vector.shape_cast %288 : vector<1x18x2xf32> to vector<18x2xf32>
    %cst_234 = arith.constant dense<0.000000e+00> : vector<8x2xf32>
    %290 = tpu.matmul %263, %289, %cst_234 {dimension_numbers = #tpu.dot_dimension_numbers<[1], [0], [0], [1], [0, 0, 1, 1], [], []>} : vector<8x18xf32>, vector<18x2xf32>, vector<8x2xf32> -> vector<8x2xf32>
    %291 = tpu.concatenate %266, %269, %272, %275, %278, %281, %284, %287, %290 in 0 : vector<8x2xf32>, vector<8x2xf32>, vector<8x2xf32>, vector<8x2xf32>, vector<8x2xf32>, vector<8x2xf32>, vector<8x2xf32>, vector<8x2xf32>, vector<8x2xf32> -> vector<72x2xf32>
    %c0_235 = arith.constant 0 : index
    %c0_236 = arith.constant 0 : index
    %292 = vector.load %arg12[%c0_235, %c0_236] : memref<16x72xf32, #tpu.memory_space<vmem>>, vector<16x72xf32>
    %cst_237 = arith.constant dense<0.000000e+00> : vector<16x2xf32>
    %293 = tpu.matmul %292, %291, %cst_237 {dimension_numbers = #tpu.dot_dimension_numbers<[1], [0], [0], [1], [0, 0, 1, 1], [], []>} : vector<16x72xf32>, vector<72x2xf32>, vector<16x2xf32> -> vector<16x2xf32>
    %c0_238 = arith.constant 0 : index
    %c0_239 = arith.constant 0 : index
    %294 = vector.load %arg13[%c0_238, %c0_239] : memref<16x1xf32, #tpu.memory_space<vmem>>, vector<16x1xf32>
    %295 = vector.broadcast %294 : vector<16x1xf32> to vector<16x2xf32>
    %296 = arith.addf %293, %295 : vector<16x2xf32>
    %cst_240 = arith.constant dense<0.000000e+00> : vector<2xf32>
    %297 = vector.multi_reduction <add>, %296, %cst_240 [0] : vector<16x2xf32> to vector<2xf32>
    %298 = vector.shape_cast %297 : vector<2xf32> to vector<1x2xf32>
    %cst_241 = arith.constant 1.600000e+01 : f32
    %299 = vector.broadcast %cst_241 : f32 to vector<1x2xf32>
    %300 = arith.divf %298, %299 : vector<1x2xf32>
    %301 = vector.broadcast %300 : vector<1x2xf32> to vector<16x2xf32>
    %302 = arith.subf %296, %301 : vector<16x2xf32>
    %303 = arith.mulf %302, %302 : vector<16x2xf32>
    %cst_242 = arith.constant dense<0.000000e+00> : vector<2xf32>
    %304 = vector.multi_reduction <add>, %303, %cst_242 [0] : vector<16x2xf32> to vector<2xf32>
    %305 = vector.shape_cast %304 : vector<2xf32> to vector<1x2xf32>
    %cst_243 = arith.constant 1.600000e+01 : f32
    %306 = vector.broadcast %cst_243 : f32 to vector<1x2xf32>
    %307 = arith.divf %305, %306 : vector<1x2xf32>
    %cst_244 = arith.constant 9.99999974E-6 : f32
    %308 = vector.broadcast %cst_244 : f32 to vector<1x2xf32>
    %309 = arith.addf %307, %308 : vector<1x2xf32>
    %310 = math.rsqrt %309 : vector<1x2xf32>
    %311 = vector.broadcast %310 : vector<1x2xf32> to vector<16x2xf32>
    %312 = arith.mulf %302, %311 : vector<16x2xf32>
    %cst_245 = arith.constant 5.000000e-01 : f32
    %313 = vector.broadcast %cst_245 : f32 to vector<16x2xf32>
    %314 = arith.mulf %313, %312 : vector<16x2xf32>
    %cst_246 = arith.constant 0.707106769 : f32
    %315 = vector.broadcast %cst_246 : f32 to vector<16x2xf32>
    %316 = arith.mulf %312, %315 : vector<16x2xf32>
    %cst_247 = arith.constant 0.000000e+00 : f32
    %317 = vector.broadcast %cst_247 : f32 to vector<16x2xf32>
    %318 = arith.cmpf oge, %316, %317 : vector<16x2xf32>
    %cst_248 = arith.constant 0.000000e+00 : f32
    %319 = vector.broadcast %cst_248 : f32 to vector<16x2xf32>
    %320 = arith.subf %319, %316 : vector<16x2xf32>
    %321 = arith.select %318, %316, %320 : vector<16x2xi1>, vector<16x2xf32>
    %cst_249 = arith.constant 0.327591091 : f32
    %322 = vector.broadcast %cst_249 : f32 to vector<16x2xf32>
    %323 = arith.mulf %322, %321 : vector<16x2xf32>
    %cst_250 = arith.constant 1.000000e+00 : f32
    %324 = vector.broadcast %cst_250 : f32 to vector<16x2xf32>
    %325 = arith.addf %324, %323 : vector<16x2xf32>
    %cst_251 = arith.constant 1.000000e+00 : f32
    %326 = vector.broadcast %cst_251 : f32 to vector<16x2xf32>
    %327 = arith.divf %326, %325 : vector<16x2xf32>
    %cst_252 = arith.constant 1.06140542 : f32
    %328 = vector.broadcast %cst_252 : f32 to vector<16x2xf32>
    %329 = arith.mulf %328, %327 : vector<16x2xf32>
    %cst_253 = arith.constant -1.45315206 : f32
    %330 = vector.broadcast %cst_253 : f32 to vector<16x2xf32>
    %331 = arith.addf %329, %330 : vector<16x2xf32>
    %332 = arith.mulf %331, %327 : vector<16x2xf32>
    %cst_254 = arith.constant 1.42141378 : f32
    %333 = vector.broadcast %cst_254 : f32 to vector<16x2xf32>
    %334 = arith.addf %332, %333 : vector<16x2xf32>
    %335 = arith.mulf %334, %327 : vector<16x2xf32>
    %cst_255 = arith.constant -0.284496725 : f32
    %336 = vector.broadcast %cst_255 : f32 to vector<16x2xf32>
    %337 = arith.addf %335, %336 : vector<16x2xf32>
    %338 = arith.mulf %337, %327 : vector<16x2xf32>
    %cst_256 = arith.constant 0.254829586 : f32
    %339 = vector.broadcast %cst_256 : f32 to vector<16x2xf32>
    %340 = arith.addf %338, %339 : vector<16x2xf32>
    %341 = arith.mulf %340, %327 : vector<16x2xf32>
    %cst_257 = arith.constant 0.000000e+00 : f32
    %342 = vector.broadcast %cst_257 : f32 to vector<16x2xf32>
    %343 = arith.subf %342, %321 : vector<16x2xf32>
    %344 = arith.mulf %343, %321 : vector<16x2xf32>
    %345 = math.exp %344 : vector<16x2xf32>
    %346 = arith.mulf %341, %345 : vector<16x2xf32>
    %cst_258 = arith.constant 1.000000e+00 : f32
    %347 = vector.broadcast %cst_258 : f32 to vector<16x2xf32>
    %348 = arith.subf %347, %346 : vector<16x2xf32>
    %cst_259 = arith.constant 0.000000e+00 : f32
    %349 = vector.broadcast %cst_259 : f32 to vector<16x2xf32>
    %350 = arith.cmpf oge, %316, %349 : vector<16x2xf32>
    %cst_260 = arith.constant 0.000000e+00 : f32
    %351 = vector.broadcast %cst_260 : f32 to vector<16x2xf32>
    %352 = arith.subf %351, %348 : vector<16x2xf32>
    %353 = arith.select %350, %348, %352 : vector<16x2xi1>, vector<16x2xf32>
    %cst_261 = arith.constant 1.000000e+00 : f32
    %354 = vector.broadcast %cst_261 : f32 to vector<16x2xf32>
    %355 = arith.addf %354, %353 : vector<16x2xf32>
    %356 = arith.mulf %314, %355 : vector<16x2xf32>
    %c0_262 = arith.constant 0 : index
    %c0_263 = arith.constant 0 : index
    %357 = vector.load %arg26[%c0_262, %c0_263] : memref<16x2xf32, #tpu.memory_space<vmem>>, vector<16x2xf32>
    tpu.vector_store %arg26[%c0_262, %c0_263], %356 {strides = array<i32>} : memref<16x2xf32, #tpu.memory_space<vmem>>, vector<16x2xf32>,
    %c0_264 = arith.constant 0 : index
    %c0_265 = arith.constant 0 : index
    %358 = vector.load %arg14[%c0_264, %c0_265] : memref<16x16xf32, #tpu.memory_space<vmem>>, vector<16x16xf32>
    %cst_266 = arith.constant dense<0.000000e+00> : vector<16x2xf32>
    %359 = tpu.matmul %358, %356, %cst_266 {dimension_numbers = #tpu.dot_dimension_numbers<[1], [0], [0], [1], [0, 0, 1, 1], [], []>} : vector<16x16xf32>, vector<16x2xf32>, vector<16x2xf32> -> vector<16x2xf32>
    %c0_267 = arith.constant 0 : index
    %c0_268 = arith.constant 0 : index
    %360 = vector.load %arg15[%c0_267, %c0_268] : memref<16x4xf32, #tpu.memory_space<vmem>>, vector<16x4xf32>
    %c0_269 = arith.constant 0 : index
    %c0_270 = arith.constant 0 : index
    %361 = vector.load %arg1[%c0_269, %c0_270] : memref<4x2xf32, #tpu.memory_space<vmem>>, vector<4x2xf32>
    %cst_271 = arith.constant dense<0.000000e+00> : vector<16x2xf32>
    %362 = tpu.matmul %360, %361, %cst_271 {dimension_numbers = #tpu.dot_dimension_numbers<[1], [0], [0], [1], [0, 0, 1, 1], [], []>} : vector<16x4xf32>, vector<4x2xf32>, vector<16x2xf32> -> vector<16x2xf32>
    %363 = arith.addf %359, %362 : vector<16x2xf32>
    %c0_272 = arith.constant 0 : index
    %c0_273 = arith.constant 0 : index
    %364 = vector.load %arg16[%c0_272, %c0_273] : memref<16x1xf32, #tpu.memory_space<vmem>>, vector<16x1xf32>
    %365 = vector.broadcast %364 : vector<16x1xf32> to vector<16x2xf32>
    %366 = arith.addf %363, %365 : vector<16x2xf32>
    %c0_274 = arith.constant 0 : index
    %c0_275 = arith.constant 0 : index
    %c0_276 = arith.constant 0 : index
    %367 = vector.load %arg17[%c0_274, %c0_275, %c0_276] : memref<9x2x72xf32, #tpu.memory_space<vmem>>, vector<1x2x72xf32>
    %368 = vector.shape_cast %367 : vector<1x2x72xf32> to vector<2x72xf32>
    %cst_277 = arith.constant dense<0.000000e+00> : vector<16x72xf32>
    %369 = tpu.matmul %366, %368, %cst_277 {dimension_numbers = #tpu.dot_dimension_numbers<[1], [0], [0], [1], [0, 0, 1, 1], [], []>} : vector<16x2xf32>, vector<2x72xf32>, vector<16x72xf32> -> vector<16x72xf32>
    %c1_278 = arith.constant 1 : index
    %c0_279 = arith.constant 0 : index
    %c0_280 = arith.constant 0 : index
    %370 = vector.load %arg17[%c1_278, %c0_279, %c0_280] : memref<9x2x72xf32, #tpu.memory_space<vmem>>, vector<1x2x72xf32>
    %371 = vector.shape_cast %370 : vector<1x2x72xf32> to vector<2x72xf32>
    %cst_281 = arith.constant dense<0.000000e+00> : vector<16x72xf32>
    %372 = tpu.matmul %366, %371, %cst_281 {dimension_numbers = #tpu.dot_dimension_numbers<[1], [0], [0], [1], [0, 0, 1, 1], [], []>} : vector<16x2xf32>, vector<2x72xf32>, vector<16x72xf32> -> vector<16x72xf32>
    %c2_282 = arith.constant 2 : index
    %c0_283 = arith.constant 0 : index
    %c0_284 = arith.constant 0 : index
    %373 = vector.load %arg17[%c2_282, %c0_283, %c0_284] : memref<9x2x72xf32, #tpu.memory_space<vmem>>, vector<1x2x72xf32>
    %374 = vector.shape_cast %373 : vector<1x2x72xf32> to vector<2x72xf32>
    %cst_285 = arith.constant dense<0.000000e+00> : vector<16x72xf32>
    %375 = tpu.matmul %366, %374, %cst_285 {dimension_numbers = #tpu.dot_dimension_numbers<[1], [0], [0], [1], [0, 0, 1, 1], [], []>} : vector<16x2xf32>, vector<2x72xf32>, vector<16x72xf32> -> vector<16x72xf32>
    %c3_286 = arith.constant 3 : index
    %c0_287 = arith.constant 0 : index
    %c0_288 = arith.constant 0 : index
    %376 = vector.load %arg17[%c3_286, %c0_287, %c0_288] : memref<9x2x72xf32, #tpu.memory_space<vmem>>, vector<1x2x72xf32>
    %377 = vector.shape_cast %376 : vector<1x2x72xf32> to vector<2x72xf32>
    %cst_289 = arith.constant dense<0.000000e+00> : vector<16x72xf32>
    %378 = tpu.matmul %366, %377, %cst_289 {dimension_numbers = #tpu.dot_dimension_numbers<[1], [0], [0], [1], [0, 0, 1, 1], [], []>} : vector<16x2xf32>, vector<2x72xf32>, vector<16x72xf32> -> vector<16x72xf32>
    %c4_290 = arith.constant 4 : index
    %c0_291 = arith.constant 0 : index
    %c0_292 = arith.constant 0 : index
    %379 = vector.load %arg17[%c4_290, %c0_291, %c0_292] : memref<9x2x72xf32, #tpu.memory_space<vmem>>, vector<1x2x72xf32>
    %380 = vector.shape_cast %379 : vector<1x2x72xf32> to vector<2x72xf32>
    %cst_293 = arith.constant dense<0.000000e+00> : vector<16x72xf32>
    %381 = tpu.matmul %366, %380, %cst_293 {dimension_numbers = #tpu.dot_dimension_numbers<[1], [0], [0], [1], [0, 0, 1, 1], [], []>} : vector<16x2xf32>, vector<2x72xf32>, vector<16x72xf32> -> vector<16x72xf32>
    %c5_294 = arith.constant 5 : index
    %c0_295 = arith.constant 0 : index
    %c0_296 = arith.constant 0 : index
    %382 = vector.load %arg17[%c5_294, %c0_295, %c0_296] : memref<9x2x72xf32, #tpu.memory_space<vmem>>, vector<1x2x72xf32>
    %383 = vector.shape_cast %382 : vector<1x2x72xf32> to vector<2x72xf32>
    %cst_297 = arith.constant dense<0.000000e+00> : vector<16x72xf32>
    %384 = tpu.matmul %366, %383, %cst_297 {dimension_numbers = #tpu.dot_dimension_numbers<[1], [0], [0], [1], [0, 0, 1, 1], [], []>} : vector<16x2xf32>, vector<2x72xf32>, vector<16x72xf32> -> vector<16x72xf32>
    %c6_298 = arith.constant 6 : index
    %c0_299 = arith.constant 0 : index
    %c0_300 = arith.constant 0 : index
    %385 = vector.load %arg17[%c6_298, %c0_299, %c0_300] : memref<9x2x72xf32, #tpu.memory_space<vmem>>, vector<1x2x72xf32>
    %386 = vector.shape_cast %385 : vector<1x2x72xf32> to vector<2x72xf32>
    %cst_301 = arith.constant dense<0.000000e+00> : vector<16x72xf32>
    %387 = tpu.matmul %366, %386, %cst_301 {dimension_numbers = #tpu.dot_dimension_numbers<[1], [0], [0], [1], [0, 0, 1, 1], [], []>} : vector<16x2xf32>, vector<2x72xf32>, vector<16x72xf32> -> vector<16x72xf32>
    %c7_302 = arith.constant 7 : index
    %c0_303 = arith.constant 0 : index
    %c0_304 = arith.constant 0 : index
    %388 = vector.load %arg17[%c7_302, %c0_303, %c0_304] : memref<9x2x72xf32, #tpu.memory_space<vmem>>, vector<1x2x72xf32>
    %389 = vector.shape_cast %388 : vector<1x2x72xf32> to vector<2x72xf32>
    %cst_305 = arith.constant dense<0.000000e+00> : vector<16x72xf32>
    %390 = tpu.matmul %366, %389, %cst_305 {dimension_numbers = #tpu.dot_dimension_numbers<[1], [0], [0], [1], [0, 0, 1, 1], [], []>} : vector<16x2xf32>, vector<2x72xf32>, vector<16x72xf32> -> vector<16x72xf32>
    %c8_306 = arith.constant 8 : index
    %c0_307 = arith.constant 0 : index
    %c0_308 = arith.constant 0 : index
    %391 = vector.load %arg17[%c8_306, %c0_307, %c0_308] : memref<9x2x72xf32, #tpu.memory_space<vmem>>, vector<1x2x72xf32>
    %392 = vector.shape_cast %391 : vector<1x2x72xf32> to vector<2x72xf32>
    %cst_309 = arith.constant dense<0.000000e+00> : vector<16x72xf32>
    %393 = tpu.matmul %366, %392, %cst_309 {dimension_numbers = #tpu.dot_dimension_numbers<[1], [0], [0], [1], [0, 0, 1, 1], [], []>} : vector<16x2xf32>, vector<2x72xf32>, vector<16x72xf32> -> vector<16x72xf32>
    %394 = tpu.concatenate %369, %372, %375, %378, %381, %384, %387, %390, %393 in 0 : vector<16x72xf32>, vector<16x72xf32>, vector<16x72xf32>, vector<16x72xf32>, vector<16x72xf32>, vector<16x72xf32>, vector<16x72xf32>, vector<16x72xf32>, vector<16x72xf32> -> vector<144x72xf32>
    %c0_310 = arith.constant 0 : index
    %c0_311 = arith.constant 0 : index
    %395 = vector.load %arg18[%c0_310, %c0_311] : memref<8x144xf32, #tpu.memory_space<vmem>>, vector<8x144xf32>
    %cst_312 = arith.constant dense<0.000000e+00> : vector<8x72xf32>
    %396 = tpu.matmul %395, %394, %cst_312 {dimension_numbers = #tpu.dot_dimension_numbers<[1], [0], [0], [1], [0, 0, 1, 1], [], []>} : vector<8x144xf32>, vector<144x72xf32>, vector<8x72xf32> -> vector<8x72xf32>
    %c0_313 = arith.constant 0 : index
    %c0_314 = arith.constant 0 : index
    %397 = vector.load %arg19[%c0_313, %c0_314] : memref<8x1xf32, #tpu.memory_space<vmem>>, vector<8x1xf32>
    %398 = vector.broadcast %397 : vector<8x1xf32> to vector<8x72xf32>
    %399 = arith.addf %396, %398 : vector<8x72xf32>
    %cst_315 = arith.constant 5.000000e-01 : f32
    %400 = vector.broadcast %cst_315 : f32 to vector<8x72xf32>
    %401 = arith.mulf %400, %399 : vector<8x72xf32>
    %cst_316 = arith.constant 0.707106769 : f32
    %402 = vector.broadcast %cst_316 : f32 to vector<8x72xf32>
    %403 = arith.mulf %399, %402 : vector<8x72xf32>
    %cst_317 = arith.constant 0.000000e+00 : f32
    %404 = vector.broadcast %cst_317 : f32 to vector<8x72xf32>
    %405 = arith.cmpf oge, %403, %404 : vector<8x72xf32>
    %cst_318 = arith.constant 0.000000e+00 : f32
    %406 = vector.broadcast %cst_318 : f32 to vector<8x72xf32>
    %407 = arith.subf %406, %403 : vector<8x72xf32>
    %408 = arith.select %405, %403, %407 : vector<8x72xi1>, vector<8x72xf32>
    %cst_319 = arith.constant 0.327591091 : f32
    %409 = vector.broadcast %cst_319 : f32 to vector<8x72xf32>
    %410 = arith.mulf %409, %408 : vector<8x72xf32>
    %cst_320 = arith.constant 1.000000e+00 : f32
    %411 = vector.broadcast %cst_320 : f32 to vector<8x72xf32>
    %412 = arith.addf %411, %410 : vector<8x72xf32>
    %cst_321 = arith.constant 1.000000e+00 : f32
    %413 = vector.broadcast %cst_321 : f32 to vector<8x72xf32>
    %414 = arith.divf %413, %412 : vector<8x72xf32>
    %cst_322 = arith.constant 1.06140542 : f32
    %415 = vector.broadcast %cst_322 : f32 to vector<8x72xf32>
    %416 = arith.mulf %415, %414 : vector<8x72xf32>
    %cst_323 = arith.constant -1.45315206 : f32
    %417 = vector.broadcast %cst_323 : f32 to vector<8x72xf32>
    %418 = arith.addf %416, %417 : vector<8x72xf32>
    %419 = arith.mulf %418, %414 : vector<8x72xf32>
    %cst_324 = arith.constant 1.42141378 : f32
    %420 = vector.broadcast %cst_324 : f32 to vector<8x72xf32>
    %421 = arith.addf %419, %420 : vector<8x72xf32>
    %422 = arith.mulf %421, %414 : vector<8x72xf32>
    %cst_325 = arith.constant -0.284496725 : f32
    %423 = vector.broadcast %cst_325 : f32 to vector<8x72xf32>
    %424 = arith.addf %422, %423 : vector<8x72xf32>
    %425 = arith.mulf %424, %414 : vector<8x72xf32>
    %cst_326 = arith.constant 0.254829586 : f32
    %426 = vector.broadcast %cst_326 : f32 to vector<8x72xf32>
    %427 = arith.addf %425, %426 : vector<8x72xf32>
    %428 = arith.mulf %427, %414 : vector<8x72xf32>
    %cst_327 = arith.constant 0.000000e+00 : f32
    %429 = vector.broadcast %cst_327 : f32 to vector<8x72xf32>
    %430 = arith.subf %429, %408 : vector<8x72xf32>
    %431 = arith.mulf %430, %408 : vector<8x72xf32>
    %432 = math.exp %431 : vector<8x72xf32>
    %433 = arith.mulf %428, %432 : vector<8x72xf32>
    %cst_328 = arith.constant 1.000000e+00 : f32
    %434 = vector.broadcast %cst_328 : f32 to vector<8x72xf32>
    %435 = arith.subf %434, %433 : vector<8x72xf32>
    %cst_329 = arith.constant 0.000000e+00 : f32
    %436 = vector.broadcast %cst_329 : f32 to vector<8x72xf32>
    %437 = arith.cmpf oge, %403, %436 : vector<8x72xf32>
    %cst_330 = arith.constant 0.000000e+00 : f32
    %438 = vector.broadcast %cst_330 : f32 to vector<8x72xf32>
    %439 = arith.subf %438, %435 : vector<8x72xf32>
    %440 = arith.select %437, %435, %439 : vector<8x72xi1>, vector<8x72xf32>
    %cst_331 = arith.constant 1.000000e+00 : f32
    %441 = vector.broadcast %cst_331 : f32 to vector<8x72xf32>
    %442 = arith.addf %441, %440 : vector<8x72xf32>
    %443 = arith.mulf %401, %442 : vector<8x72xf32>
    %c0_332 = arith.constant 0 : index
    %c0_333 = arith.constant 0 : index
    %c0_334 = arith.constant 0 : index
    %444 = vector.load %arg20[%c0_332, %c0_333, %c0_334] : memref<9x72x288xf32, #tpu.memory_space<vmem>>, vector<1x72x288xf32>
    %445 = vector.shape_cast %444 : vector<1x72x288xf32> to vector<72x288xf32>
    %cst_335 = arith.constant dense<0.000000e+00> : vector<8x288xf32>
    %446 = tpu.matmul %443, %445, %cst_335 {dimension_numbers = #tpu.dot_dimension_numbers<[1], [0], [0], [1], [0, 0, 1, 1], [], []>} : vector<8x72xf32>, vector<72x288xf32>, vector<8x288xf32> -> vector<8x288xf32>
    %c1_336 = arith.constant 1 : index
    %c0_337 = arith.constant 0 : index
    %c0_338 = arith.constant 0 : index
    %447 = vector.load %arg20[%c1_336, %c0_337, %c0_338] : memref<9x72x288xf32, #tpu.memory_space<vmem>>, vector<1x72x288xf32>
    %448 = vector.shape_cast %447 : vector<1x72x288xf32> to vector<72x288xf32>
    %cst_339 = arith.constant dense<0.000000e+00> : vector<8x288xf32>
    %449 = tpu.matmul %443, %448, %cst_339 {dimension_numbers = #tpu.dot_dimension_numbers<[1], [0], [0], [1], [0, 0, 1, 1], [], []>} : vector<8x72xf32>, vector<72x288xf32>, vector<8x288xf32> -> vector<8x288xf32>
    %c2_340 = arith.constant 2 : index
    %c0_341 = arith.constant 0 : index
    %c0_342 = arith.constant 0 : index
    %450 = vector.load %arg20[%c2_340, %c0_341, %c0_342] : memref<9x72x288xf32, #tpu.memory_space<vmem>>, vector<1x72x288xf32>
    %451 = vector.shape_cast %450 : vector<1x72x288xf32> to vector<72x288xf32>
    %cst_343 = arith.constant dense<0.000000e+00> : vector<8x288xf32>
    %452 = tpu.matmul %443, %451, %cst_343 {dimension_numbers = #tpu.dot_dimension_numbers<[1], [0], [0], [1], [0, 0, 1, 1], [], []>} : vector<8x72xf32>, vector<72x288xf32>, vector<8x288xf32> -> vector<8x288xf32>
    %c3_344 = arith.constant 3 : index
    %c0_345 = arith.constant 0 : index
    %c0_346 = arith.constant 0 : index
    %453 = vector.load %arg20[%c3_344, %c0_345, %c0_346] : memref<9x72x288xf32, #tpu.memory_space<vmem>>, vector<1x72x288xf32>
    %454 = vector.shape_cast %453 : vector<1x72x288xf32> to vector<72x288xf32>
    %cst_347 = arith.constant dense<0.000000e+00> : vector<8x288xf32>
    %455 = tpu.matmul %443, %454, %cst_347 {dimension_numbers = #tpu.dot_dimension_numbers<[1], [0], [0], [1], [0, 0, 1, 1], [], []>} : vector<8x72xf32>, vector<72x288xf32>, vector<8x288xf32> -> vector<8x288xf32>
    %c4_348 = arith.constant 4 : index
    %c0_349 = arith.constant 0 : index
    %c0_350 = arith.constant 0 : index
    %456 = vector.load %arg20[%c4_348, %c0_349, %c0_350] : memref<9x72x288xf32, #tpu.memory_space<vmem>>, vector<1x72x288xf32>
    %457 = vector.shape_cast %456 : vector<1x72x288xf32> to vector<72x288xf32>
    %cst_351 = arith.constant dense<0.000000e+00> : vector<8x288xf32>
    %458 = tpu.matmul %443, %457, %cst_351 {dimension_numbers = #tpu.dot_dimension_numbers<[1], [0], [0], [1], [0, 0, 1, 1], [], []>} : vector<8x72xf32>, vector<72x288xf32>, vector<8x288xf32> -> vector<8x288xf32>
    %c5_352 = arith.constant 5 : index
    %c0_353 = arith.constant 0 : index
    %c0_354 = arith.constant 0 : index
    %459 = vector.load %arg20[%c5_352, %c0_353, %c0_354] : memref<9x72x288xf32, #tpu.memory_space<vmem>>, vector<1x72x288xf32>
    %460 = vector.shape_cast %459 : vector<1x72x288xf32> to vector<72x288xf32>
    %cst_355 = arith.constant dense<0.000000e+00> : vector<8x288xf32>
    %461 = tpu.matmul %443, %460, %cst_355 {dimension_numbers = #tpu.dot_dimension_numbers<[1], [0], [0], [1], [0, 0, 1, 1], [], []>} : vector<8x72xf32>, vector<72x288xf32>, vector<8x288xf32> -> vector<8x288xf32>
    %c6_356 = arith.constant 6 : index
    %c0_357 = arith.constant 0 : index
    %c0_358 = arith.constant 0 : index
    %462 = vector.load %arg20[%c6_356, %c0_357, %c0_358] : memref<9x72x288xf32, #tpu.memory_space<vmem>>, vector<1x72x288xf32>
    %463 = vector.shape_cast %462 : vector<1x72x288xf32> to vector<72x288xf32>
    %cst_359 = arith.constant dense<0.000000e+00> : vector<8x288xf32>
    %464 = tpu.matmul %443, %463, %cst_359 {dimension_numbers = #tpu.dot_dimension_numbers<[1], [0], [0], [1], [0, 0, 1, 1], [], []>} : vector<8x72xf32>, vector<72x288xf32>, vector<8x288xf32> -> vector<8x288xf32>
    %c7_360 = arith.constant 7 : index
    %c0_361 = arith.constant 0 : index
    %c0_362 = arith.constant 0 : index
    %465 = vector.load %arg20[%c7_360, %c0_361, %c0_362] : memref<9x72x288xf32, #tpu.memory_space<vmem>>, vector<1x72x288xf32>
    %466 = vector.shape_cast %465 : vector<1x72x288xf32> to vector<72x288xf32>
    %cst_363 = arith.constant dense<0.000000e+00> : vector<8x288xf32>
    %467 = tpu.matmul %443, %466, %cst_363 {dimension_numbers = #tpu.dot_dimension_numbers<[1], [0], [0], [1], [0, 0, 1, 1], [], []>} : vector<8x72xf32>, vector<72x288xf32>, vector<8x288xf32> -> vector<8x288xf32>
    %c8_364 = arith.constant 8 : index
    %c0_365 = arith.constant 0 : index
    %c0_366 = arith.constant 0 : index
    %468 = vector.load %arg20[%c8_364, %c0_365, %c0_366] : memref<9x72x288xf32, #tpu.memory_space<vmem>>, vector<1x72x288xf32>
    %469 = vector.shape_cast %468 : vector<1x72x288xf32> to vector<72x288xf32>
    %cst_367 = arith.constant dense<0.000000e+00> : vector<8x288xf32>
    %470 = tpu.matmul %443, %469, %cst_367 {dimension_numbers = #tpu.dot_dimension_numbers<[1], [0], [0], [1], [0, 0, 1, 1], [], []>} : vector<8x72xf32>, vector<72x288xf32>, vector<8x288xf32> -> vector<8x288xf32>
    %471 = tpu.concatenate %446, %449, %452, %455, %458, %461, %464, %467, %470 in 0 : vector<8x288xf32>, vector<8x288xf32>, vector<8x288xf32>, vector<8x288xf32>, vector<8x288xf32>, vector<8x288xf32>, vector<8x288xf32>, vector<8x288xf32>, vector<8x288xf32> -> vector<72x288xf32>
    %c0_368 = arith.constant 0 : index
    %c0_369 = arith.constant 0 : index
    %472 = vector.load %arg21[%c0_368, %c0_369] : memref<8x72xf32, #tpu.memory_space<vmem>>, vector<8x72xf32>
    %cst_370 = arith.constant dense<0.000000e+00> : vector<8x288xf32>
    %473 = tpu.matmul %472, %471, %cst_370 {dimension_numbers = #tpu.dot_dimension_numbers<[1], [0], [0], [1], [0, 0, 1, 1], [], []>} : vector<8x72xf32>, vector<72x288xf32>, vector<8x288xf32> -> vector<8x288xf32>
    %c0_371 = arith.constant 0 : index
    %c0_372 = arith.constant 0 : index
    %474 = vector.load %arg22[%c0_371, %c0_372] : memref<8x1xf32, #tpu.memory_space<vmem>>, vector<8x1xf32>
    %475 = vector.broadcast %474 : vector<8x1xf32> to vector<8x288xf32>
    %476 = arith.addf %473, %475 : vector<8x288xf32>
    %cst_373 = arith.constant 5.000000e-01 : f32
    %477 = vector.broadcast %cst_373 : f32 to vector<8x288xf32>
    %478 = arith.mulf %477, %476 : vector<8x288xf32>
    %cst_374 = arith.constant 0.707106769 : f32
    %479 = vector.broadcast %cst_374 : f32 to vector<8x288xf32>
    %480 = arith.mulf %476, %479 : vector<8x288xf32>
    %cst_375 = arith.constant 0.000000e+00 : f32
    %481 = vector.broadcast %cst_375 : f32 to vector<8x288xf32>
    %482 = arith.cmpf oge, %480, %481 : vector<8x288xf32>
    %cst_376 = arith.constant 0.000000e+00 : f32
    %483 = vector.broadcast %cst_376 : f32 to vector<8x288xf32>
    %484 = arith.subf %483, %480 : vector<8x288xf32>
    %485 = arith.select %482, %480, %484 : vector<8x288xi1>, vector<8x288xf32>
    %cst_377 = arith.constant 0.327591091 : f32
    %486 = vector.broadcast %cst_377 : f32 to vector<8x288xf32>
    %487 = arith.mulf %486, %485 : vector<8x288xf32>
    %cst_378 = arith.constant 1.000000e+00 : f32
    %488 = vector.broadcast %cst_378 : f32 to vector<8x288xf32>
    %489 = arith.addf %488, %487 : vector<8x288xf32>
    %cst_379 = arith.constant 1.000000e+00 : f32
    %490 = vector.broadcast %cst_379 : f32 to vector<8x288xf32>
    %491 = arith.divf %490, %489 : vector<8x288xf32>
    %cst_380 = arith.constant 1.06140542 : f32
    %492 = vector.broadcast %cst_380 : f32 to vector<8x288xf32>
    %493 = arith.mulf %492, %491 : vector<8x288xf32>
    %cst_381 = arith.constant -1.45315206 : f32
    %494 = vector.broadcast %cst_381 : f32 to vector<8x288xf32>
    %495 = arith.addf %493, %494 : vector<8x288xf32>
    %496 = arith.mulf %495, %491 : vector<8x288xf32>
    %cst_382 = arith.constant 1.42141378 : f32
    %497 = vector.broadcast %cst_382 : f32 to vector<8x288xf32>
    %498 = arith.addf %496, %497 : vector<8x288xf32>
    %499 = arith.mulf %498, %491 : vector<8x288xf32>
    %cst_383 = arith.constant -0.284496725 : f32
    %500 = vector.broadcast %cst_383 : f32 to vector<8x288xf32>
    %501 = arith.addf %499, %500 : vector<8x288xf32>
    %502 = arith.mulf %501, %491 : vector<8x288xf32>
    %cst_384 = arith.constant 0.254829586 : f32
    %503 = vector.broadcast %cst_384 : f32 to vector<8x288xf32>
    %504 = arith.addf %502, %503 : vector<8x288xf32>
    %505 = arith.mulf %504, %491 : vector<8x288xf32>
    %cst_385 = arith.constant 0.000000e+00 : f32
    %506 = vector.broadcast %cst_385 : f32 to vector<8x288xf32>
    %507 = arith.subf %506, %485 : vector<8x288xf32>
    %508 = arith.mulf %507, %485 : vector<8x288xf32>
    %509 = math.exp %508 : vector<8x288xf32>
    %510 = arith.mulf %505, %509 : vector<8x288xf32>
    %cst_386 = arith.constant 1.000000e+00 : f32
    %511 = vector.broadcast %cst_386 : f32 to vector<8x288xf32>
    %512 = arith.subf %511, %510 : vector<8x288xf32>
    %cst_387 = arith.constant 0.000000e+00 : f32
    %513 = vector.broadcast %cst_387 : f32 to vector<8x288xf32>
    %514 = arith.cmpf oge, %480, %513 : vector<8x288xf32>
    %cst_388 = arith.constant 0.000000e+00 : f32
    %515 = vector.broadcast %cst_388 : f32 to vector<8x288xf32>
    %516 = arith.subf %515, %512 : vector<8x288xf32>
    %517 = arith.select %514, %512, %516 : vector<8x288xi1>, vector<8x288xf32>
    %cst_389 = arith.constant 1.000000e+00 : f32
    %518 = vector.broadcast %cst_389 : f32 to vector<8x288xf32>
    %519 = arith.addf %518, %517 : vector<8x288xf32>
    %520 = arith.mulf %478, %519 : vector<8x288xf32>
    %c0_390 = arith.constant 0 : index
    %c0_391 = arith.constant 0 : index
    %521 = vector.load %arg23[%c0_390, %c0_391] : memref<3x8xf32, #tpu.memory_space<vmem>>, vector<3x8xf32>
    %cst_392 = arith.constant dense<0.000000e+00> : vector<3x288xf32>
    %522 = tpu.matmul %521, %520, %cst_392 {dimension_numbers = #tpu.dot_dimension_numbers<[1], [0], [0], [1], [0, 0, 1, 1], [], []>} : vector<3x8xf32>, vector<8x288xf32>, vector<3x288xf32> -> vector<3x288xf32>
    %c0_393 = arith.constant 0 : index
    %c0_394 = arith.constant 0 : index
    %523 = vector.load %arg24[%c0_393, %c0_394] : memref<3x1xf32, #tpu.memory_space<vmem>>, vector<3x1xf32>
    %524 = vector.broadcast %523 : vector<3x1xf32> to vector<3x288xf32>
    %525 = arith.addf %522, %524 : vector<3x288xf32>
    %c0_395 = arith.constant 0 : index
    %c0_396 = arith.constant 0 : index
    %526 = vector.load %arg25[%c0_395, %c0_396] : memref<3x288xf32, #tpu.memory_space<vmem>>, vector<3x288xf32>
    tpu.vector_store %arg25[%c0_395, %c0_396], %525 {strides = array<i32>} : memref<3x288xf32, #tpu.memory_space<vmem>>, vector<3x288xf32>,
    return
  }
}

</mosaic_0001>

<llo_original>
// kernel: conv_ed_forward.1
$region0: #{conv_ed_forward.1}
  #allocation0 [shape = 'u32[]', space=smem, size = 0x4, offset = 0x4, fixed_abs, tag = 'smem constant byte address 0x4 - core index']
  #allocation1 [shape = 'u32[144,128]{1,0:T(1,128)}', space=vmem, size = 0x12000, scoped, tag = 'internal scratch']
  %s0 = inlined_call_operand.vmem [shape: f32[4,512], index: 0, kind: input, shape index: {}]
  %s1 = inlined_call_operand.vmem [shape: f32[4,2], index: 1, kind: input, shape index: {}]
  %s2 = inlined_call_operand.vmem [shape: f32[9,512,98], index: 2, kind: input, shape index: {}]
  %s3 = inlined_call_operand.vmem [shape: f32[9,8,4], index: 3, kind: input, shape index: {}]
  %s4 = inlined_call_operand.vmem [shape: f32[8,1], index: 4, kind: input, shape index: {}]
  %s5 = inlined_call_operand.vmem [shape: f32[9,98,50], index: 5, kind: input, shape index: {}]
  %s6 = inlined_call_operand.vmem [shape: f32[8,72], index: 6, kind: input, shape index: {}]
  %s7 = inlined_call_operand.vmem [shape: f32[8,1], index: 7, kind: input, shape index: {}]
  %s8 = inlined_call_operand.vmem [shape: f32[9,50,18], index: 8, kind: input, shape index: {}]
  %s9 = inlined_call_operand.vmem [shape: f32[8,72], index: 9, kind: input, shape index: {}]
  %s10 = inlined_call_operand.vmem [shape: f32[8,1], index: 10, kind: input, shape index: {}]
  %s11 = inlined_call_operand.vmem [shape: f32[9,18,2], index: 11, kind: input, shape index: {}]
  %s12 = inlined_call_operand.vmem [shape: f32[16,72], index: 12, kind: input, shape index: {}]
  %s13 = inlined_call_operand.vmem [shape: f32[16,1], index: 13, kind: input, shape index: {}]
  %s14 = inlined_call_operand.vmem [shape: f32[16,16], index: 14, kind: input, shape index: {}]
  %s15 = inlined_call_operand.vmem [shape: f32[16,4], index: 15, kind: input, shape index: {}]
  %s16 = inlined_call_operand.vmem [shape: f32[16,1], index: 16, kind: input, shape index: {}]
  %s17 = inlined_call_operand.vmem [shape: f32[9,2,72], index: 17, kind: input, shape index: {}]
  %s18 = inlined_call_operand.vmem [shape: f32[8,144], index: 18, kind: input, shape index: {}]
  %s19 = inlined_call_operand.vmem [shape: f32[8,1], index: 19, kind: input, shape index: {}]
  %s20 = inlined_call_operand.vmem [shape: f32[9,72,288], index: 20, kind: input, shape index: {}]
  %s21 = inlined_call_operand.vmem [shape: f32[8,72], index: 21, kind: input, shape index: {}]
  %s22 = inlined_call_operand.vmem [shape: f32[8,1], index: 22, kind: input, shape index: {}]
  %s23 = inlined_call_operand.vmem [shape: f32[3,8], index: 23, kind: input, shape index: {}]
  %s24 = inlined_call_operand.vmem [shape: f32[3,1], index: 24, kind: input, shape index: {}]
  %s25 = inlined_call_operand.vmem [shape: f32[3,288], index: 25, kind: output, shape index: {0}]
  %s26 = inlined_call_operand.vmem [shape: f32[16,2], index: 26, kind: output, shape index: {1}]
  %27 = xla_tuple %s25, %s26
  %s28 = sld [smem:[#allocation0]]
  $region118: #{conv_ed_forward.1} parent=0
    _
  %s30 = ssub.s32 1, %s28
  %s31 = scalar_select 0, %s30, %s28
  // Predicated region
  $region2: #{conv_ed_forward.1} parent=0 // pred_check
    _
  $region3: #{conv_ed_forward.1} parent=0 // pred_check_branch
    %33 = sbr.rel (0) target = $region5
  $region4: #{conv_ed_forward.1} parent=0 // pred_region
    _
  $region5: #{conv_ed_forward.1} parent=0 // pred_fallthru
    _
  // Predicated region
  $region6: #{conv_ed_forward.1} parent=0 // pred_check
    _
  $region7: #{conv_ed_forward.1} parent=0 // pred_check_branch
    %35 = sbr.rel (0) target = $region9
  $region8: #{conv_ed_forward.1} parent=0 // pred_region
    _
  $region9: #{conv_ed_forward.1} parent=0 // pred_fallthru
    _
  // Predicated region
  $region10: #{conv_ed_forward.1} parent=0 // pred_check
    _
  $region11: #{conv_ed_forward.1} parent=0 // pred_check_branch
    %37 = sbr.rel (0) target = $region13
  $region12: #{conv_ed_forward.1} parent=0 // pred_region
    _
  $region13: #{conv_ed_forward.1} parent=0 // pred_fallthru
    _
  // Predicated region
  $region14: #{conv_ed_forward.1} parent=0 // pred_check
    _
  $region15: #{conv_ed_forward.1} parent=0 // pred_check_branch
    %39 = sbr.rel (0) target = $region17
  $region16: #{conv_ed_forward.1} parent=0 // pred_region
    _
  $region17: #{conv_ed_forward.1} parent=0 // pred_fallthru
    _
  // Predicated region
  $region18: #{conv_ed_forward.1} parent=0 // pred_check
    _
  $region19: #{conv_ed_forward.1} parent=0 // pred_check_branch
    %41 = sbr.rel (0) target = $region21
  $region20: #{conv_ed_forward.1} parent=0 // pred_region
    _
  $region21: #{conv_ed_forward.1} parent=0 // pred_fallthru
    _
  // Predicated region
  $region22: #{conv_ed_forward.1} parent=0 // pred_check
    _
  $region23: #{conv_ed_forward.1} parent=0 // pred_check_branch
    %43 = sbr.rel (0) target = $region25
  $region24: #{conv_ed_forward.1} parent=0 // pred_region
    _
  $region25: #{conv_ed_forward.1} parent=0 // pred_fallthru
    _
  // Predicated region
  $region26: #{conv_ed_forward.1} parent=0 // pred_check
    _
  $region27: #{conv_ed_forward.1} parent=0 // pred_check_branch
    %45 = sbr.rel (0) target = $region29
  $region28: #{conv_ed_forward.1} parent=0 // pred_region
    _
  $region29: #{conv_ed_forward.1} parent=0 // pred_fallthru
    _
  // Predicated region
  $region30: #{conv_ed_forward.1} parent=0 // pred_check
    _
  $region31: #{conv_ed_forward.1} parent=0 // pred_check_branch
    %47 = sbr.rel (0) target = $region33
  $region32: #{conv_ed_forward.1} parent=0 // pred_region
    _
  $region33: #{conv_ed_forward.1} parent=0 // pred_fallthru
    _
  // Predicated region
  $region34: #{conv_ed_forward.1} parent=0 // pred_check
    _
  $region35: #{conv_ed_forward.1} parent=0 // pred_check_branch
    %49 = sbr.rel (0) target = $region37
  $region36: #{conv_ed_forward.1} parent=0 // pred_region
    _
  $region37: #{conv_ed_forward.1} parent=0 // pred_fallthru
    _
  // Predicated region
  $region38: #{conv_ed_forward.1} parent=0 // pred_check
    _
  $region39: #{conv_ed_forward.1} parent=0 // pred_check_branch
    %51 = sbr.rel (0) target = $region41
  $region40: #{conv_ed_forward.1} parent=0 // pred_region
    _
  $region41: #{conv_ed_forward.1} parent=0 // pred_fallthru
    _
  // Predicated region
  $region42: #{conv_ed_forward.1} parent=0 // pred_check
    _
  $region43: #{conv_ed_forward.1} parent=0 // pred_check_branch
    %53 = sbr.rel (0) target = $region45
  $region44: #{conv_ed_forward.1} parent=0 // pred_region
    _
  $region45: #{conv_ed_forward.1} parent=0 // pred_fallthru
    _
  // Predicated region
  $region46: #{conv_ed_forward.1} parent=0 // pred_check
    _
  $region47: #{conv_ed_forward.1} parent=0 // pred_check_branch
    %55 = sbr.rel (0) target = $region49
  $region48: #{conv_ed_forward.1} parent=0 // pred_region
    _
  $region49: #{conv_ed_forward.1} parent=0 // pred_fallthru
    _
  // Predicated region
  $region50: #{conv_ed_forward.1} parent=0 // pred_check
    _
  $region51: #{conv_ed_forward.1} parent=0 // pred_check_branch
    %57 = sbr.rel (0) target = $region53
  $region52: #{conv_ed_forward.1} parent=0 // pred_region
    _
  $region53: #{conv_ed_forward.1} parent=0 // pred_fallthru
    _
  // Predicated region
  $region54: #{conv_ed_forward.1} parent=0 // pred_check
    _
  $region55: #{conv_ed_forward.1} parent=0 // pred_check_branch
    %59 = sbr.rel (0) target = $region57
  $region56: #{conv_ed_forward.1} parent=0 // pred_region
    _
  $region57: #{conv_ed_forward.1} parent=0 // pred_fallthru
    _
  // Predicated region
  $region58: #{conv_ed_forward.1} parent=0 // pred_check
    _
  $region59: #{conv_ed_forward.1} parent=0 // pred_check_branch
    %61 = sbr.rel (0) target = $region61
  $region60: #{conv_ed_forward.1} parent=0 // pred_region
    _
  $region61: #{conv_ed_forward.1} parent=0 // pred_fallthru
    _
  // Predicated region
  $region62: #{conv_ed_forward.1} parent=0 // pred_check
    _
  $region63: #{conv_ed_forward.1} parent=0 // pred_check_branch
    %63 = sbr.rel (0) target = $region65
  $region64: #{conv_ed_forward.1} parent=0 // pred_region
    _
  $region65: #{conv_ed_forward.1} parent=0 // pred_fallthru
    _
  // Predicated region
  $region66: #{conv_ed_forward.1} parent=0 // pred_check
    _
  $region67: #{conv_ed_forward.1} parent=0 // pred_check_branch
    %65 = sbr.rel (0) target = $region69
  $region68: #{conv_ed_forward.1} parent=0 // pred_region
    _
  $region69: #{conv_ed_forward.1} parent=0 // pred_fallthru
    _
  // Predicated region
  $region70: #{conv_ed_forward.1} parent=0 // pred_check
    _
  $region71: #{conv_ed_forward.1} parent=0 // pred_check_branch
    %67 = sbr.rel (0) target = $region73
  $region72: #{conv_ed_forward.1} parent=0 // pred_region
    _
  $region73: #{conv_ed_forward.1} parent=0 // pred_fallthru
    _
  // Predicated region
  $region74: #{conv_ed_forward.1} parent=0 // pred_check
    _
  $region75: #{conv_ed_forward.1} parent=0 // pred_check_branch
    %69 = sbr.rel (0) target = $region77
  $region76: #{conv_ed_forward.1} parent=0 // pred_region
    _
  $region77: #{conv_ed_forward.1} parent=0 // pred_fallthru
    _
  // Predicated region
  $region78: #{conv_ed_forward.1} parent=0 // pred_check
    _
  $region79: #{conv_ed_forward.1} parent=0 // pred_check_branch
    %71 = sbr.rel (0) target = $region81
  $region80: #{conv_ed_forward.1} parent=0 // pred_region
    _
  $region81: #{conv_ed_forward.1} parent=0 // pred_fallthru
    _
  // Predicated region
  $region82: #{conv_ed_forward.1} parent=0 // pred_check
    _
  $region83: #{conv_ed_forward.1} parent=0 // pred_check_branch
    %73 = sbr.rel (0) target = $region85
  $region84: #{conv_ed_forward.1} parent=0 // pred_region
    _
  $region85: #{conv_ed_forward.1} parent=0 // pred_fallthru
    _
  // Predicated region
  $region86: #{conv_ed_forward.1} parent=0 // pred_check
    _
  $region87: #{conv_ed_forward.1} parent=0 // pred_check_branch
    %75 = sbr.rel (0) target = $region89
  $region88: #{conv_ed_forward.1} parent=0 // pred_region
    _
  $region89: #{conv_ed_forward.1} parent=0 // pred_fallthru
    _
  // Predicated region
  $region90: #{conv_ed_forward.1} parent=0 // pred_check
    _
  $region91: #{conv_ed_forward.1} parent=0 // pred_check_branch
    %77 = sbr.rel (0) target = $region93
  $region92: #{conv_ed_forward.1} parent=0 // pred_region
    _
  $region93: #{conv_ed_forward.1} parent=0 // pred_fallthru
    _
  // Predicated region
  $region94: #{conv_ed_forward.1} parent=0 // pred_check
    _
  $region95: #{conv_ed_forward.1} parent=0 // pred_check_branch
    %79 = sbr.rel (0) target = $region97
  $region96: #{conv_ed_forward.1} parent=0 // pred_region
    _
  $region97: #{conv_ed_forward.1} parent=0 // pred_fallthru
    _
  // Predicated region
  $region98: #{conv_ed_forward.1} parent=0 // pred_check
    _
  $region99: #{conv_ed_forward.1} parent=0 // pred_check_branch
    %81 = sbr.rel (0) target = $region101
  $region100: #{conv_ed_forward.1} parent=0 // pred_region
    _
  $region101: #{conv_ed_forward.1} parent=0 // pred_fallthru
    _
  %v82 = vld [vmem:[%s0] sm:$0xff]
  %v83 = vld [vmem:[%s0 + $0x8] sm:$0xff]
  %v84 = vld [vmem:[%s4] sm:$0xff]
  %v85 = vld [vmem:[%s3] sm:$0xff]
  %v86 = vld [vmem:[%s2] sm:$0xff]
  %v87 = vld [vmem:[%s2 + $0x8] sm:$0xff]
  %v88 = vld [vmem:[%s2 + $0x10] sm:$0xff]
  %v89 = vld [vmem:[%s2 + $0x18] sm:$0xff]
  %v90 = vld [vmem:[%s2 + $0x20] sm:$0xff]
  %v91 = vld [vmem:[%s2 + $0x28] sm:$0xff]
  %v92 = vld [vmem:[%s2 + $0x30] sm:$0xff]
  %v93 = vld [vmem:[%s2 + $0x38] sm:$0xff]
  %v94 = vld [vmem:[%s2 + $0x40] sm:$0xff]
  %v95 = vld [vmem:[%s2 + $0x48] sm:$0xff]
  %v96 = vld [vmem:[%s2 + $0x50] sm:$0xff]
  %v97 = vld [vmem:[%s2 + $0x58] sm:$0xff]
  %v98 = vld [vmem:[%s2 + $0x60] sm:$0xff]
  %v99 = vld [vmem:[%s2 + $0x68] sm:$0xff]
  %v100 = vld [vmem:[%s2 + $0x70] sm:$0xff]
  %v101 = vld [vmem:[%s2 + $0x78] sm:$0xff]
  %v102 = vld [vmem:[%s2 + $0x80] sm:$0xff]
  %v103 = vld [vmem:[%s2 + $0x88] sm:$0xff]
  %v104 = vld [vmem:[%s2 + $0x90] sm:$0xff]
  %v105 = vld [vmem:[%s2 + $0x98] sm:$0xff]
  %v106 = vld [vmem:[%s2 + $0xa0] sm:$0xff]
  %v107 = vld [vmem:[%s2 + $0xa8] sm:$0xff]
  %v108 = vld [vmem:[%s2 + $0xb0] sm:$0xff]
  %v109 = vld [vmem:[%s2 + $0xb8] sm:$0xff]
  %v110 = vld [vmem:[%s2 + $0xc0] sm:$0xff]
  %v111 = vld [vmem:[%s2 + $0xc8] sm:$0xff]
  %v112 = vld [vmem:[%s2 + $0xd0] sm:$0xff]
  %v113 = vld [vmem:[%s2 + $0xd8] sm:$0xff]
  %v114 = vld [vmem:[%s2 + $0xe0] sm:$0xff]
  %v115 = vld [vmem:[%s2 + $0xe8] sm:$0xff]
  %v116 = vld [vmem:[%s2 + $0xf0] sm:$0xff]
  %v117 = vld [vmem:[%s2 + $0xf8] sm:$0xff]
  %v118 = vld [vmem:[%s2 + $0x100] sm:$0xff]
  %v119 = vld [vmem:[%s2 + $0x108] sm:$0xff]
  %v120 = vld [vmem:[%s2 + $0x110] sm:$0xff]
  %v121 = vld [vmem:[%s2 + $0x118] sm:$0xff]
  %v122 = vld [vmem:[%s2 + $0x120] sm:$0xff]
  %v123 = vld [vmem:[%s2 + $0x128] sm:$0xff]
  %v124 = vld [vmem:[%s2 + $0x130] sm:$0xff]
  %v125 = vld [vmem:[%s2 + $0x138] sm:$0xff]
  %v126 = vld [vmem:[%s2 + $0x140] sm:$0xff]
  %v127 = vld [vmem:[%s2 + $0x148] sm:$0xff]
  %v128 = vld [vmem:[%s2 + $0x150] sm:$0xff]
  %v129 = vld [vmem:[%s2 + $0x158] sm:$0xff]
  %v130 = vld [vmem:[%s2 + $0x160] sm:$0xff]
  %v131 = vld [vmem:[%s2 + $0x168] sm:$0xff]
  %v132 = vld [vmem:[%s2 + $0x170] sm:$0xff]
  %v133 = vld [vmem:[%s2 + $0x178] sm:$0xff]
  %v134 = vld [vmem:[%s2 + $0x180] sm:$0xff]
  %v135 = vld [vmem:[%s2 + $0x188] sm:$0xff]
  %v136 = vld [vmem:[%s2 + $0x190] sm:$0xff]
  %v137 = vld [vmem:[%s2 + $0x198] sm:$0xff]
  %v138 = vld [vmem:[%s2 + $0x1a0] sm:$0xff]
  %v139 = vld [vmem:[%s2 + $0x1a8] sm:$0xff]
  %v140 = vld [vmem:[%s2 + $0x1b0] sm:$0xff]
  %v141 = vld [vmem:[%s2 + $0x1b8] sm:$0xff]
  %v142 = vld [vmem:[%s2 + $0x1c0] sm:$0xff]
  %v143 = vld [vmem:[%s2 + $0x1c8] sm:$0xff]
  %v144 = vld [vmem:[%s2 + $0x1d0] sm:$0xff]
  %v145 = vld [vmem:[%s2 + $0x1d8] sm:$0xff]
  %v146 = vld [vmem:[%s2 + $0x1e0] sm:$0xff]
  %v147 = vld [vmem:[%s2 + $0x1e8] sm:$0xff]
  %v148 = vld [vmem:[%s2 + $0x1f0] sm:$0xff]
  %v149 = vld [vmem:[%s2 + $0x1f8] sm:$0xff]
  %v152 = vcombine.high %v82, %v82
  %v153 = vcombine.high %v83, %v83
  %156 = vmatprep.subr.mxu0 0.0
  %157 = vmatpush1.msra.mxu0 %v101
  %158 = vmatprep.subr.mxu0 0.0
  %159 = vmatpush1.msra.mxu0 %v100
  %160 = vmatprep.subr.mxu0 0.0
  %161 = vmatpush1.msra.mxu0 %v99
  %162 = vmatprep.subr.mxu0 0.0
  %163 = vmatpush1.msra.mxu0 %v98
  %164 = vmatprep.subr.mxu0 0.0
  %165 = vmatpush1.msra.mxu0 %v97
  %166 = vmatprep.subr.mxu0 0.0
  %167 = vmatpush1.msra.mxu0 %v96
  %168 = vmatprep.subr.mxu0 0.0
  %169 = vmatpush1.msra.mxu0 %v95
  %170 = vmatprep.subr.mxu0 0.0
  %171 = vmatpush1.msra.mxu0 %v94
  %172 = vmatprep.subr.mxu0 0.0
  %173 = vmatpush1.msra.mxu0 %v93
  %174 = vmatprep.subr.mxu0 0.0
  %175 = vmatpush1.msra.mxu0 %v92
  %176 = vmatprep.subr.mxu0 0.0
  %177 = vmatpush1.msra.mxu0 %v91
  %178 = vmatprep.subr.mxu0 0.0
  %179 = vmatpush1.msra.mxu0 %v90
  %180 = vmatprep.subr.mxu0 0.0
  %181 = vmatpush1.msra.mxu0 %v89
  %182 = vmatprep.subr.mxu0 0.0
  %183 = vmatpush1.msra.mxu0 %v88
  %184 = vmatprep.subr.mxu0 0.0
  %185 = vmatpush1.msra.mxu0 %v87
  %186 = vmatprep.subr.mxu0 0.0
  %187 = vmatpush1.msra.mxu0 %v86
  %188 = vmatprep.subr.mxu0 0.0
  %189 = vmatpush2.msra.mxu0 %v117
  %190 = vmatprep.subr.mxu0 0.0
  %191 = vmatpush2.msra.mxu0 %v116
  %192 = vmatprep.subr.mxu0 0.0
  %193 = vmatpush2.msra.mxu0 %v115
  %194 = vmatprep.subr.mxu0 0.0
  %195 = vmatpush2.msra.mxu0 %v114
  %196 = vmatprep.subr.mxu0 0.0
  %197 = vmatpush2.msra.mxu0 %v113
  %198 = vmatprep.subr.mxu0 0.0
  %199 = vmatpush2.msra.mxu0 %v112
  %200 = vmatprep.subr.mxu0 0.0
  %201 = vmatpush2.msra.mxu0 %v111
  %202 = vmatprep.subr.mxu0 0.0
  %203 = vmatpush2.msra.mxu0 %v110
  %204 = vmatprep.subr.mxu0 0.0
  %205 = vmatpush2.msra.mxu0 %v109
  %206 = vmatprep.subr.mxu0 0.0
  %207 = vmatpush2.msra.mxu0 %v108
  %208 = vmatprep.subr.mxu0 0.0
  %209 = vmatpush2.msra.mxu0 %v107
  %210 = vmatprep.subr.mxu0 0.0
  %211 = vmatpush2.msra.mxu0 %v106
  %212 = vmatprep.subr.mxu0 0.0
  %213 = vmatpush2.msra.mxu0 %v105
  %214 = vmatprep.subr.mxu0 0.0
  %215 = vmatpush2.msra.mxu0 %v104
  %216 = vmatprep.subr.mxu0 0.0
  %217 = vmatpush2.msra.mxu0 %v103
  %218 = vmatprep.subr.mxu0 0.0
  %219 = vmatpush2.msra.mxu0 %v102
  %220 = vmatprep.mubr.f32.mxu0 %v152
  %221 = vmatmul.mubr.f32.gmra.mxu0 %v82
  %v222 = vpop.f32.mrf.mxu0
  %v223 = vadd.f32 0.0, %v222
  %v224 = vpop.f32.mrf.mxu0
  %225 = vdwg.mxu0
  %226 = vmatprep.subr.mxu0 0.0
  %227 = vmatpush1.msra.mxu0 %v133
  %228 = vmatprep.subr.mxu0 0.0
  %229 = vmatpush1.msra.mxu0 %v132
  %230 = vmatprep.subr.mxu0 0.0
  %231 = vmatpush1.msra.mxu0 %v131
  %232 = vmatprep.subr.mxu0 0.0
  %233 = vmatpush1.msra.mxu0 %v130
  %234 = vmatprep.subr.mxu0 0.0
  %235 = vmatpush1.msra.mxu0 %v129
  %236 = vmatprep.subr.mxu0 0.0
  %237 = vmatpush1.msra.mxu0 %v128
  %238 = vmatprep.subr.mxu0 0.0
  %239 = vmatpush1.msra.mxu0 %v127
  %240 = vmatprep.subr.mxu0 0.0
  %241 = vmatpush1.msra.mxu0 %v126
  %242 = vmatprep.subr.mxu0 0.0
  %243 = vmatpush1.msra.mxu0 %v125
  %244 = vmatprep.subr.mxu0 0.0
  %245 = vmatpush1.msra.mxu0 %v124
  %246 = vmatprep.subr.mxu0 0.0
  %247 = vmatpush1.msra.mxu0 %v123
  %248 = vmatprep.subr.mxu0 0.0
  %249 = vmatpush1.msra.mxu0 %v122
  %250 = vmatprep.subr.mxu0 0.0
  %251 = vmatpush1.msra.mxu0 %v121
  %252 = vmatprep.subr.mxu0 0.0
  %253 = vmatpush1.msra.mxu0 %v120
  %254 = vmatprep.subr.mxu0 0.0
  %255 = vmatpush1.msra.mxu0 %v119
  %256 = vmatprep.subr.mxu0 0.0
  %257 = vmatpush1.msra.mxu0 %v118
  %258 = vmatprep.subr.mxu0 0.0
  %259 = vmatpush2.msra.mxu0 %v149
  %260 = vmatprep.subr.mxu0 0.0
  %261 = vmatpush2.msra.mxu0 %v148
  %262 = vmatprep.subr.mxu0 0.0
  %263 = vmatpush2.msra.mxu0 %v147
  %264 = vmatprep.subr.mxu0 0.0
  %265 = vmatpush2.msra.mxu0 %v146
  %266 = vmatprep.subr.mxu0 0.0
  %267 = vmatpush2.msra.mxu0 %v145
  %268 = vmatprep.subr.mxu0 0.0
  %269 = vmatpush2.msra.mxu0 %v144
  %270 = vmatprep.subr.mxu0 0.0
  %271 = vmatpush2.msra.mxu0 %v143
  %272 = vmatprep.subr.mxu0 0.0
  %273 = vmatpush2.msra.mxu0 %v142
  %274 = vmatprep.subr.mxu0 0.0
  %275 = vmatpush2.msra.mxu0 %v141
  %276 = vmatprep.subr.mxu0 0.0
  %277 = vmatpush2.msra.mxu0 %v140
  %278 = vmatprep.subr.mxu0 0.0
  %279 = vmatpush2.msra.mxu0 %v139
  %280 = vmatprep.subr.mxu0 0.0
  %281 = vmatpush2.msra.mxu0 %v138
  %282 = vmatprep.subr.mxu0 0.0
  %283 = vmatpush2.msra.mxu0 %v137
  %284 = vmatprep.subr.mxu0 0.0
  %285 = vmatpush2.msra.mxu0 %v136
  %286 = vmatprep.subr.mxu0 0.0
  %287 = vmatpush2.msra.mxu0 %v135
  %288 = vmatprep.subr.mxu0 0.0
  %289 = vmatpush2.msra.mxu0 %v134
  %290 = vmatprep.mubr.f32.mxu0 %v153
  %291 = vmatmul.mubr.f32.gmra.mxu0 %v83
  %v292 = vpop.f32.mrf.mxu0
  %v293 = vadd.f32 %v223, %v292
  %v294 = vpop.f32.mrf.mxu0
  %295 = vdwg.mxu0
  %vm296 = vcmask 31744
  %v298 = vsel %vm296, %v85, 0
  %vm300 = vcmask 1043456
  %v302 = vsel %vm300, %v293, 0
  %304 = vmatprep.subr.mxu0 0.0
  %305 = vmatpush1.msra.mxu0 0.0
  %306 = vmatprep.subr.mxu0 0.0
  %307 = vmatpush1.msra.mxu0 0.0
  %308 = vmatprep.subr.mxu0 0.0
  %309 = vmatpush1.msra.mxu0 0.0
  %310 = vmatprep.subr.mxu0 0.0
  %311 = vmatpush1.msra.mxu0 0.0
  %312 = vmatprep.subr.mxu0 0.0
  %313 = vmatpush1.msra.mxu0 0.0
  %314 = vmatprep.subr.mxu0 0.0
  %315 = vmatpush1.msra.mxu0 0.0
  %316 = vmatprep.subr.mxu0 0.0
  %317 = vmatpush1.msra.mxu0 0.0
  %318 = vmatprep.subr.mxu0 0.0
  %319 = vmatpush1.msra.mxu0 0.0
  %320 = vmatprep.subr.mxu0 0.0
  %321 = vmatpush1.msra.mxu0 0.0
  %322 = vmatprep.subr.mxu0 0.0
  %323 = vmatpush1.msra.mxu0 0.0
  %324 = vmatprep.subr.mxu0 0.0
  %325 = vmatpush1.msra.mxu0 0.0
  %326 = vmatprep.subr.mxu0 0.0
  %327 = vmatpush1.msra.mxu0 0.0
  %328 = vmatprep.subr.mxu0 0.0
  %329 = vmatpush1.msra.mxu0 0.0
  %330 = vmatprep.subr.mxu0 0.0
  %331 = vmatpush1.msra.mxu0 0.0
  %332 = vmatprep.subr.mxu0 0.0
  %333 = vmatpush1.msra.mxu0 0.0
  %334 = vmatprep.subr.mxu0 0.0
  %335 = vmatpush1.msra.mxu0 %v302
  %336 = vmatprep.subr.mxu0 0.0
  %337 = vmatpush2.msra.mxu0 0.0
  %338 = vmatprep.subr.mxu0 0.0
  %339 = vmatpush2.msra.mxu0 0.0
  %340 = vmatprep.subr.mxu0 0.0
  %341 = vmatpush2.msra.mxu0 0.0
  %342 = vmatprep.subr.mxu0 0.0
  %343 = vmatpush2.msra.mxu0 0.0
  %344 = vmatprep.subr.mxu0 0.0
  %345 = vmatpush2.msra.mxu0 0.0
  %346 = vmatprep.subr.mxu0 0.0
  %347 = vmatpush2.msra.mxu0 0.0
  %348 = vmatprep.subr.mxu0 0.0
  %349 = vmatpush2.msra.mxu0 0.0
  %350 = vmatprep.subr.mxu0 0.0
  %351 = vmatpush2.msra.mxu0 0.0
  %352 = vmatprep.subr.mxu0 0.0
  %353 = vmatpush2.msra.mxu0 0.0
  %354 = vmatprep.subr.mxu0 0.0
  %355 = vmatpush2.msra.mxu0 0.0
  %356 = vmatprep.subr.mxu0 0.0
  %357 = vmatpush2.msra.mxu0 0.0
  %358 = vmatprep.subr.mxu0 0.0
  %359 = vmatpush2.msra.mxu0 0.0
  %360 = vmatprep.subr.mxu0 0.0
  %361 = vmatpush2.msra.mxu0 0.0
  %362 = vmatprep.subr.mxu0 0.0
  %363 = vmatpush2.msra.mxu0 0.0
  %364 = vmatprep.subr.mxu0 0.0
  %365 = vmatpush2.msra.mxu0 0.0
  %366 = vmatprep.subr.mxu0 0.0
  %367 = vmatpush2.msra.mxu0 0.0
  %368 = vmatprep.mubr.f32.mxu0 0.0
  %369 = vmatmul.mubr.f32.gmra.mxu0 %v298
  %v370 = vpop.f32.mrf.mxu0
  %v371 = vadd.f32 0.0, %v370
  %v372 = vpop.f32.mrf.mxu0
  %373 = vdwg.mxu0
  %375 = vset.pattern.permute.xlu0 0
  %376 = vperm.xlu0 %375, %v84
  %v377 = vpop.permute.xlu0 %376
  %v379 = vadd.f32 %v377, %v371
  %s380 = scalar_lea.vmem %s3, 8
  %v381 = vld [vmem:[%s380] sm:$0xff]
  %s382 = scalar_lea.vmem %s2, 512
  %v383 = vld [vmem:[%s382] sm:$0xff]
  %v384 = vld [vmem:[%s382 + $0x8] sm:$0xff]
  %v385 = vld [vmem:[%s382 + $0x10] sm:$0xff]
  %v386 = vld [vmem:[%s382 + $0x18] sm:$0xff]
  %v387 = vld [vmem:[%s382 + $0x20] sm:$0xff]
  %v388 = vld [vmem:[%s382 + $0x28] sm:$0xff]
  %v389 = vld [vmem:[%s382 + $0x30] sm:$0xff]
  %v390 = vld [vmem:[%s382 + $0x38] sm:$0xff]
  %v391 = vld [vmem:[%s382 + $0x40] sm:$0xff]
  %v392 = vld [vmem:[%s382 + $0x48] sm:$0xff]
  %v393 = vld [vmem:[%s382 + $0x50] sm:$0xff]
  %v394 = vld [vmem:[%s382 + $0x58] sm:$0xff]
  %v395 = vld [vmem:[%s382 + $0x60] sm:$0xff]
  %v396 = vld [vmem:[%s382 + $0x68] sm:$0xff]
  %v397 = vld [vmem:[%s382 + $0x70] sm:$0xff]
  %v398 = vld [vmem:[%s382 + $0x78] sm:$0xff]
  %v399 = vld [vmem:[%s382 + $0x80] sm:$0xff]
  %v400 = vld [vmem:[%s382 + $0x88] sm:$0xff]
  %v401 = vld [vmem:[%s382 + $0x90] sm:$0xff]
  %v402 = vld [vmem:[%s382 + $0x98] sm:$0xff]
  %v403 = vld [vmem:[%s382 + $0xa0] sm:$0xff]
  %v404 = vld [vmem:[%s382 + $0xa8] sm:$0xff]
  %v405 = vld [vmem:[%s382 + $0xb0] sm:$0xff]
  %v406 = vld [vmem:[%s382 + $0xb8] sm:$0xff]
  %v407 = vld [vmem:[%s382 + $0xc0] sm:$0xff]
  %v408 = vld [vmem:[%s382 + $0xc8] sm:$0xff]
  %v409 = vld [vmem:[%s382 + $0xd0] sm:$0xff]
  %v410 = vld [vmem:[%s382 + $0xd8] sm:$0xff]
  %v411 = vld [vmem:[%s382 + $0xe0] sm:$0xff]
  %v412 = vld [vmem:[%s382 + $0xe8] sm:$0xff]
  %v413 = vld [vmem:[%s382 + $0xf0] sm:$0xff]
  %v414 = vld [vmem:[%s382 + $0xf8] sm:$0xff]
  %v415 = vld [vmem:[%s382 + $0x100] sm:$0xff]
  %v416 = vld [vmem:[%s382 + $0x108] sm:$0xff]
  %v417 = vld [vmem:[%s382 + $0x110] sm:$0xff]
  %v418 = vld [vmem:[%s382 + $0x118] sm:$0xff]
  %v419 = vld [vmem:[%s382 + $0x120] sm:$0xff]
  %v420 = vld [vmem:[%s382 + $0x128] sm:$0xff]
  %v421 = vld [vmem:[%s382 + $0x130] sm:$0xff]
  %v422 = vld [vmem:[%s382 + $0x138] sm:$0xff]
  %v423 = vld [vmem:[%s382 + $0x140] sm:$0xff]
  %v424 = vld [vmem:[%s382 + $0x148] sm:$0xff]
  %v425 = vld [vmem:[%s382 + $0x150] sm:$0xff]
  %v426 = vld [vmem:[%s382 + $0x158] sm:$0xff]
  %v427 = vld [vmem:[%s382 + $0x160] sm:$0xff]
  %v428 = vld [vmem:[%s382 + $0x168] sm:$0xff]
  %v429 = vld [vmem:[%s382 + $0x170] sm:$0xff]
  %v430 = vld [vmem:[%s382 + $0x178] sm:$0xff]
  %v431 = vld [vmem:[%s382 + $0x180] sm:$0xff]
  %v432 = vld [vmem:[%s382 + $0x188] sm:$0xff]
  %v433 = vld [vmem:[%s382 + $0x190] sm:$0xff]
  %v434 = vld [vmem:[%s382 + $0x198] sm:$0xff]
  %v435 = vld [vmem:[%s382 + $0x1a0] sm:$0xff]
  %v436 = vld [vmem:[%s382 + $0x1a8] sm:$0xff]
  %v437 = vld [vmem:[%s382 + $0x1b0] sm:$0xff]
  %v438 = vld [vmem:[%s382 + $0x1b8] sm:$0xff]
  %v439 = vld [vmem:[%s382 + $0x1c0] sm:$0xff]
  %v440 = vld [vmem:[%s382 + $0x1c8] sm:$0xff]
  %v441 = vld [vmem:[%s382 + $0x1d0] sm:$0xff]
  %v442 = vld [vmem:[%s382 + $0x1d8] sm:$0xff]
  %v443 = vld [vmem:[%s382 + $0x1e0] sm:$0xff]
  %v444 = vld [vmem:[%s382 + $0x1e8] sm:$0xff]
  %v445 = vld [vmem:[%s382 + $0x1f0] sm:$0xff]
  %v446 = vld [vmem:[%s382 + $0x1f8] sm:$0xff]
  %447 = vmatprep.subr.mxu0 0.0
  %448 = vmatpush1.msra.mxu0 %v398
  %449 = vmatprep.subr.mxu0 0.0
  %450 = vmatpush1.msra.mxu0 %v397
  %451 = vmatprep.subr.mxu0 0.0
  %452 = vmatpush1.msra.mxu0 %v396
  %453 = vmatprep.subr.mxu0 0.0
  %454 = vmatpush1.msra.mxu0 %v395
  %455 = vmatprep.subr.mxu0 0.0
  %456 = vmatpush1.msra.mxu0 %v394
  %457 = vmatprep.subr.mxu0 0.0
  %458 = vmatpush1.msra.mxu0 %v393
  %459 = vmatprep.subr.mxu0 0.0
  %460 = vmatpush1.msra.mxu0 %v392
  %461 = vmatprep.subr.mxu0 0.0
  %462 = vmatpush1.msra.mxu0 %v391
  %463 = vmatprep.subr.mxu0 0.0
  %464 = vmatpush1.msra.mxu0 %v390
  %465 = vmatprep.subr.mxu0 0.0
  %466 = vmatpush1.msra.mxu0 %v389
  %467 = vmatprep.subr.mxu0 0.0
  %468 = vmatpush1.msra.mxu0 %v388
  %469 = vmatprep.subr.mxu0 0.0
  %470 = vmatpush1.msra.mxu0 %v387
  %471 = vmatprep.subr.mxu0 0.0
  %472 = vmatpush1.msra.mxu0 %v386
  %473 = vmatprep.subr.mxu0 0.0
  %474 = vmatpush1.msra.mxu0 %v385
  %475 = vmatprep.subr.mxu0 0.0
  %476 = vmatpush1.msra.mxu0 %v384
  %477 = vmatprep.subr.mxu0 0.0
  %478 = vmatpush1.msra.mxu0 %v383
  %479 = vmatprep.subr.mxu0 0.0
  %480 = vmatpush2.msra.mxu0 %v414
  %481 = vmatprep.subr.mxu0 0.0
  %482 = vmatpush2.msra.mxu0 %v413
  %483 = vmatprep.subr.mxu0 0.0
  %484 = vmatpush2.msra.mxu0 %v412
  %485 = vmatprep.subr.mxu0 0.0
  %486 = vmatpush2.msra.mxu0 %v411
  %487 = vmatprep.subr.mxu0 0.0
  %488 = vmatpush2.msra.mxu0 %v410
  %489 = vmatprep.subr.mxu0 0.0
  %490 = vmatpush2.msra.mxu0 %v409
  %491 = vmatprep.subr.mxu0 0.0
  %492 = vmatpush2.msra.mxu0 %v408
  %493 = vmatprep.subr.mxu0 0.0
  %494 = vmatpush2.msra.mxu0 %v407
  %495 = vmatprep.subr.mxu0 0.0
  %496 = vmatpush2.msra.mxu0 %v406
  %497 = vmatprep.subr.mxu0 0.0
  %498 = vmatpush2.msra.mxu0 %v405
  %499 = vmatprep.subr.mxu0 0.0
  %500 = vmatpush2.msra.mxu0 %v404
  %501 = vmatprep.subr.mxu0 0.0
  %502 = vmatpush2.msra.mxu0 %v403
  %503 = vmatprep.subr.mxu0 0.0
  %504 = vmatpush2.msra.mxu0 %v402
  %505 = vmatprep.subr.mxu0 0.0
  %506 = vmatpush2.msra.mxu0 %v401
  %507 = vmatprep.subr.mxu0 0.0
  %508 = vmatpush2.msra.mxu0 %v400
  %509 = vmatprep.subr.mxu0 0.0
  %510 = vmatpush2.msra.mxu0 %v399
  %511 = vmatprep.mubr.f32.mxu0 %v152
  %512 = vmatmul.mubr.f32.gmra.mxu0 %v82
  %v513 = vpop.f32.mrf.mxu0
  %v514 = vadd.f32 0.0, %v513
  %v515 = vpop.f32.mrf.mxu0
  %516 = vdwg.mxu0
  %517 = vmatprep.subr.mxu0 0.0
  %518 = vmatpush1.msra.mxu0 %v430
  %519 = vmatprep.subr.mxu0 0.0
  %520 = vmatpush1.msra.mxu0 %v429
  %521 = vmatprep.subr.mxu0 0.0
  %522 = vmatpush1.msra.mxu0 %v428
  %523 = vmatprep.subr.mxu0 0.0
  %524 = vmatpush1.msra.mxu0 %v427
  %525 = vmatprep.subr.mxu0 0.0
  %526 = vmatpush1.msra.mxu0 %v426
  %527 = vmatprep.subr.mxu0 0.0
  %528 = vmatpush1.msra.mxu0 %v425
  %529 = vmatprep.subr.mxu0 0.0
  %530 = vmatpush1.msra.mxu0 %v424
  %531 = vmatprep.subr.mxu0 0.0
  %532 = vmatpush1.msra.mxu0 %v423
  %533 = vmatprep.subr.mxu0 0.0
  %534 = vmatpush1.msra.mxu0 %v422
  %535 = vmatprep.subr.mxu0 0.0
  %536 = vmatpush1.msra.mxu0 %v421
  %537 = vmatprep.subr.mxu0 0.0
  %538 = vmatpush1.msra.mxu0 %v420
  %539 = vmatprep.subr.mxu0 0.0
  %540 = vmatpush1.msra.mxu0 %v419
  %541 = vmatprep.subr.mxu0 0.0
  %542 = vmatpush1.msra.mxu0 %v418
  %543 = vmatprep.subr.mxu0 0.0
  %544 = vmatpush1.msra.mxu0 %v417
  %545 = vmatprep.subr.mxu0 0.0
  %546 = vmatpush1.msra.mxu0 %v416
  %547 = vmatprep.subr.mxu0 0.0
  %548 = vmatpush1.msra.mxu0 %v415
  %549 = vmatprep.subr.mxu0 0.0
  %550 = vmatpush2.msra.mxu0 %v446
  %551 = vmatprep.subr.mxu0 0.0
  %552 = vmatpush2.msra.mxu0 %v445
  %553 = vmatprep.subr.mxu0 0.0
  %554 = vmatpush2.msra.mxu0 %v444
  %555 = vmatprep.subr.mxu0 0.0
  %556 = vmatpush2.msra.mxu0 %v443
  %557 = vmatprep.subr.mxu0 0.0
  %558 = vmatpush2.msra.mxu0 %v442
  %559 = vmatprep.subr.mxu0 0.0
  %560 = vmatpush2.msra.mxu0 %v441
  %561 = vmatprep.subr.mxu0 0.0
  %562 = vmatpush2.msra.mxu0 %v440
  %563 = vmatprep.subr.mxu0 0.0
  %564 = vmatpush2.msra.mxu0 %v439
  %565 = vmatprep.subr.mxu0 0.0
  %566 = vmatpush2.msra.mxu0 %v438
  %567 = vmatprep.subr.mxu0 0.0
  %568 = vmatpush2.msra.mxu0 %v437
  %569 = vmatprep.subr.mxu0 0.0
  %570 = vmatpush2.msra.mxu0 %v436
  %571 = vmatprep.subr.mxu0 0.0
  %572 = vmatpush2.msra.mxu0 %v435
  %573 = vmatprep.subr.mxu0 0.0
  %574 = vmatpush2.msra.mxu0 %v434
  %575 = vmatprep.subr.mxu0 0.0
  %576 = vmatpush2.msra.mxu0 %v433
  %577 = vmatprep.subr.mxu0 0.0
  %578 = vmatpush2.msra.mxu0 %v432
  %579 = vmatprep.subr.mxu0 0.0
  %580 = vmatpush2.msra.mxu0 %v431
  %581 = vmatprep.mubr.f32.mxu0 %v153
  %582 = vmatmul.mubr.f32.gmra.mxu0 %v83
  %v583 = vpop.f32.mrf.mxu0
  %v584 = vadd.f32 %v514, %v583
  %v585 = vpop.f32.mrf.mxu0
  %586 = vdwg.mxu0
  %v588 = vsel %vm296, %v381, 0
  %v591 = vsel %vm300, %v584, 0
  %593 = vmatprep.subr.mxu0 0.0
  %594 = vmatpush1.msra.mxu0 0.0
  %595 = vmatprep.subr.mxu0 0.0
  %596 = vmatpush1.msra.mxu0 0.0
  %597 = vmatprep.subr.mxu0 0.0
  %598 = vmatpush1.msra.mxu0 0.0
  %599 = vmatprep.subr.mxu0 0.0
  %600 = vmatpush1.msra.mxu0 0.0
  %601 = vmatprep.subr.mxu0 0.0
  %602 = vmatpush1.msra.mxu0 0.0
  %603 = vmatprep.subr.mxu0 0.0
  %604 = vmatpush1.msra.mxu0 0.0
  %605 = vmatprep.subr.mxu0 0.0
  %606 = vmatpush1.msra.mxu0 0.0
  %607 = vmatprep.subr.mxu0 0.0
  %608 = vmatpush1.msra.mxu0 0.0
  %609 = vmatprep.subr.mxu0 0.0
  %610 = vmatpush1.msra.mxu0 0.0
  %611 = vmatprep.subr.mxu0 0.0
  %612 = vmatpush1.msra.mxu0 0.0
  %613 = vmatprep.subr.mxu0 0.0
  %614 = vmatpush1.msra.mxu0 0.0
  %615 = vmatprep.subr.mxu0 0.0
  %616 = vmatpush1.msra.mxu0 0.0
  %617 = vmatprep.subr.mxu0 0.0
  %618 = vmatpush1.msra.mxu0 0.0
  %619 = vmatprep.subr.mxu0 0.0
  %620 = vmatpush1.msra.mxu0 0.0
  %621 = vmatprep.subr.mxu0 0.0
  %622 = vmatpush1.msra.mxu0 0.0
  %623 = vmatprep.subr.mxu0 0.0
  %624 = vmatpush1.msra.mxu0 %v591
  %625 = vmatprep.subr.mxu0 0.0
  %626 = vmatpush2.msra.mxu0 0.0
  %627 = vmatprep.subr.mxu0 0.0
  %628 = vmatpush2.msra.mxu0 0.0
  %629 = vmatprep.subr.mxu0 0.0
  %630 = vmatpush2.msra.mxu0 0.0
  %631 = vmatprep.subr.mxu0 0.0
  %632 = vmatpush2.msra.mxu0 0.0
  %633 = vmatprep.subr.mxu0 0.0
  %634 = vmatpush2.msra.mxu0 0.0
  %635 = vmatprep.subr.mxu0 0.0
  %636 = vmatpush2.msra.mxu0 0.0
  %637 = vmatprep.subr.mxu0 0.0
  %638 = vmatpush2.msra.mxu0 0.0
  %639 = vmatprep.subr.mxu0 0.0
  %640 = vmatpush2.msra.mxu0 0.0
  %641 = vmatprep.subr.mxu0 0.0
  %642 = vmatpush2.msra.mxu0 0.0
  %643 = vmatprep.subr.mxu0 0.0
  %644 = vmatpush2.msra.mxu0 0.0
  %645 = vmatprep.subr.mxu0 0.0
  %646 = vmatpush2.msra.mxu0 0.0
  %647 = vmatprep.subr.mxu0 0.0
  %648 = vmatpush2.msra.mxu0 0.0
  %649 = vmatprep.subr.mxu0 0.0
  %650 = vmatpush2.msra.mxu0 0.0
  %651 = vmatprep.subr.mxu0 0.0
  %652 = vmatpush2.msra.mxu0 0.0
  %653 = vmatprep.subr.mxu0 0.0
  %654 = vmatpush2.msra.mxu0 0.0
  %655 = vmatprep.subr.mxu0 0.0
  %656 = vmatpush2.msra.mxu0 0.0
  %657 = vmatprep.mubr.f32.mxu0 0.0
  %658 = vmatmul.mubr.f32.gmra.mxu0 %v588
  %v659 = vpop.f32.mrf.mxu0
  %v660 = vadd.f32 0.0, %v659
  %v661 = vpop.f32.mrf.mxu0
  %662 = vdwg.mxu0
  %v663 = vadd.f32 %v379, %v660
  %s664 = scalar_lea.vmem %s3, 16
  %v665 = vld [vmem:[%s664] sm:$0xff]
  %s666 = scalar_lea.vmem %s2, 1024
  %v667 = vld [vmem:[%s666] sm:$0xff]
  %v668 = vld [vmem:[%s666 + $0x8] sm:$0xff]
  %v669 = vld [vmem:[%s666 + $0x10] sm:$0xff]
  %v670 = vld [vmem:[%s666 + $0x18] sm:$0xff]
  %v671 = vld [vmem:[%s666 + $0x20] sm:$0xff]
  %v672 = vld [vmem:[%s666 + $0x28] sm:$0xff]
  %v673 = vld [vmem:[%s666 + $0x30] sm:$0xff]
  %v674 = vld [vmem:[%s666 + $0x38] sm:$0xff]
  %v675 = vld [vmem:[%s666 + $0x40] sm:$0xff]
  %v676 = vld [vmem:[%s666 + $0x48] sm:$0xff]
  %v677 = vld [vmem:[%s666 + $0x50] sm:$0xff]
  %v678 = vld [vmem:[%s666 + $0x58] sm:$0xff]
  %v679 = vld [vmem:[%s666 + $0x60] sm:$0xff]
  %v680 = vld [vmem:[%s666 + $0x68] sm:$0xff]
  %v681 = vld [vmem:[%s666 + $0x70] sm:$0xff]
  %v682 = vld [vmem:[%s666 + $0x78] sm:$0xff]
  %v683 = vld [vmem:[%s666 + $0x80] sm:$0xff]
  %v684 = vld [vmem:[%s666 + $0x88] sm:$0xff]
  %v685 = vld [vmem:[%s666 + $0x90] sm:$0xff]
  %v686 = vld [vmem:[%s666 + $0x98] sm:$0xff]
  %v687 = vld [vmem:[%s666 + $0xa0] sm:$0xff]
  %v688 = vld [vmem:[%s666 + $0xa8] sm:$0xff]
  %v689 = vld [vmem:[%s666 + $0xb0] sm:$0xff]
  %v690 = vld [vmem:[%s666 + $0xb8] sm:$0xff]
  %v691 = vld [vmem:[%s666 + $0xc0] sm:$0xff]
  %v692 = vld [vmem:[%s666 + $0xc8] sm:$0xff]
  %v693 = vld [vmem:[%s666 + $0xd0] sm:$0xff]
  %v694 = vld [vmem:[%s666 + $0xd8] sm:$0xff]
  %v695 = vld [vmem:[%s666 + $0xe0] sm:$0xff]
  %v696 = vld [vmem:[%s666 + $0xe8] sm:$0xff]
  %v697 = vld [vmem:[%s666 + $0xf0] sm:$0xff]
  %v698 = vld [vmem:[%s666 + $0xf8] sm:$0xff]
  %v699 = vld [vmem:[%s666 + $0x100] sm:$0xff]
  %v700 = vld [vmem:[%s666 + $0x108] sm:$0xff]
  %v701 = vld [vmem:[%s666 + $0x110] sm:$0xff]
  %v702 = vld [vmem:[%s666 + $0x118] sm:$0xff]
  %v703 = vld [vmem:[%s666 + $0x120] sm:$0xff]
  %v704 = vld [vmem:[%s666 + $0x128] sm:$0xff]
  %v705 = vld [vmem:[%s666 + $0x130] sm:$0xff]
  %v706 = vld [vmem:[%s666 + $0x138] sm:$0xff]
  %v707 = vld [vmem:[%s666 + $0x140] sm:$0xff]
  %v708 = vld [vmem:[%s666 + $0x148] sm:$0xff]
  %v709 = vld [vmem:[%s666 + $0x150] sm:$0xff]
  %v710 = vld [vmem:[%s666 + $0x158] sm:$0xff]
  %v711 = vld [vmem:[%s666 + $0x160] sm:$0xff]
  %v712 = vld [vmem:[%s666 + $0x168] sm:$0xff]
  %v713 = vld [vmem:[%s666 + $0x170] sm:$0xff]
  %v714 = vld [vmem:[%s666 + $0x178] sm:$0xff]
  %v715 = vld [vmem:[%s666 + $0x180] sm:$0xff]
  %v716 = vld [vmem:[%s666 + $0x188] sm:$0xff]
  %v717 = vld [vmem:[%s666 + $0x190] sm:$0xff]
  %v718 = vld [vmem:[%s666 + $0x198] sm:$0xff]
  %v719 = vld [vmem:[%s666 + $0x1a0] sm:$0xff]
  %v720 = vld [vmem:[%s666 + $0x1a8] sm:$0xff]
  %v721 = vld [vmem:[%s666 + $0x1b0] sm:$0xff]
  %v722 = vld [vmem:[%s666 + $0x1b8] sm:$0xff]
  %v723 = vld [vmem:[%s666 + $0x1c0] sm:$0xff]
  %v724 = vld [vmem:[%s666 + $0x1c8] sm:$0xff]
  %v725 = vld [vmem:[%s666 + $0x1d0] sm:$0xff]
  %v726 = vld [vmem:[%s666 + $0x1d8] sm:$0xff]
  %v727 = vld [vmem:[%s666 + $0x1e0] sm:$0xff]
  %v728 = vld [vmem:[%s666 + $0x1e8] sm:$0xff]
  %v729 = vld [vmem:[%s666 + $0x1f0] sm:$0xff]
  %v730 = vld [vmem:[%s666 + $0x1f8] sm:$0xff]
  %731 = vmatprep.subr.mxu0 0.0
  %732 = vmatpush1.msra.mxu0 %v682
  %733 = vmatprep.subr.mxu0 0.0
  %734 = vmatpush1.msra.mxu0 %v681
  %735 = vmatprep.subr.mxu0 0.0
  %736 = vmatpush1.msra.mxu0 %v680
  %737 = vmatprep.subr.mxu0 0.0
  %738 = vmatpush1.msra.mxu0 %v679
  %739 = vmatprep.subr.mxu0 0.0
  %740 = vmatpush1.msra.mxu0 %v678
  %741 = vmatprep.subr.mxu0 0.0
  %742 = vmatpush1.msra.mxu0 %v677
  %743 = vmatprep.subr.mxu0 0.0
  %744 = vmatpush1.msra.mxu0 %v676
  %745 = vmatprep.subr.mxu0 0.0
  %746 = vmatpush1.msra.mxu0 %v675
  %747 = vmatprep.subr.mxu0 0.0
  %748 = vmatpush1.msra.mxu0 %v674
  %749 = vmatprep.subr.mxu0 0.0
  %750 = vmatpush1.msra.mxu0 %v673
  %751 = vmatprep.subr.mxu0 0.0
  %752 = vmatpush1.msra.mxu0 %v672
  %753 = vmatprep.subr.mxu0 0.0
  %754 = vmatpush1.msra.mxu0 %v671
  %755 = vmatprep.subr.mxu0 0.0
  %756 = vmatpush1.msra.mxu0 %v670
  %757 = vmatprep.subr.mxu0 0.0
  %758 = vmatpush1.msra.mxu0 %v669
  %759 = vmatprep.subr.mxu0 0.0
  %760 = vmatpush1.msra.mxu0 %v668
  %761 = vmatprep.subr.mxu0 0.0
  %762 = vmatpush1.msra.mxu0 %v667
  %763 = vmatprep.subr.mxu0 0.0
  %764 = vmatpush2.msra.mxu0 %v698
  %765 = vmatprep.subr.mxu0 0.0
  %766 = vmatpush2.msra.mxu0 %v697
  %767 = vmatprep.subr.mxu0 0.0
  %768 = vmatpush2.msra.mxu0 %v696
  %769 = vmatprep.subr.mxu0 0.0
  %770 = vmatpush2.msra.mxu0 %v695
  %771 = vmatprep.subr.mxu0 0.0
  %772 = vmatpush2.msra.mxu0 %v694
  %773 = vmatprep.subr.mxu0 0.0
  %774 = vmatpush2.msra.mxu0 %v693
  %775 = vmatprep.subr.mxu0 0.0
  %776 = vmatpush2.msra.mxu0 %v692
  %777 = vmatprep.subr.mxu0 0.0
  %778 = vmatpush2.msra.mxu0 %v691
  %779 = vmatprep.subr.mxu0 0.0
  %780 = vmatpush2.msra.mxu0 %v690
  %781 = vmatprep.subr.mxu0 0.0
  %782 = vmatpush2.msra.mxu0 %v689
  %783 = vmatprep.subr.mxu0 0.0
  %784 = vmatpush2.msra.mxu0 %v688
  %785 = vmatprep.subr.mxu0 0.0
  %786 = vmatpush2.msra.mxu0 %v687
  %787 = vmatprep.subr.mxu0 0.0
  %788 = vmatpush2.msra.mxu0 %v686
  %789 = vmatprep.subr.mxu0 0.0
  %790 = vmatpush2.msra.mxu0 %v685
  %791 = vmatprep.subr.mxu0 0.0
  %792 = vmatpush2.msra.mxu0 %v684
  %793 = vmatprep.subr.mxu0 0.0
  %794 = vmatpush2.msra.mxu0 %v683
  %795 = vmatprep.mubr.f32.mxu0 %v152
  %796 = vmatmul.mubr.f32.gmra.mxu0 %v82
  %v797 = vpop.f32.mrf.mxu0
  %v798 = vadd.f32 0.0, %v797
  %v799 = vpop.f32.mrf.mxu0
  %800 = vdwg.mxu0
  %801 = vmatprep.subr.mxu0 0.0
  %802 = vmatpush1.msra.mxu0 %v714
  %803 = vmatprep.subr.mxu0 0.0
  %804 = vmatpush1.msra.mxu0 %v713
  %805 = vmatprep.subr.mxu0 0.0
  %806 = vmatpush1.msra.mxu0 %v712
  %807 = vmatprep.subr.mxu0 0.0
  %808 = vmatpush1.msra.mxu0 %v711
  %809 = vmatprep.subr.mxu0 0.0
  %810 = vmatpush1.msra.mxu0 %v710
  %811 = vmatprep.subr.mxu0 0.0
  %812 = vmatpush1.msra.mxu0 %v709
  %813 = vmatprep.subr.mxu0 0.0
  %814 = vmatpush1.msra.mxu0 %v708
  %815 = vmatprep.subr.mxu0 0.0
  %816 = vmatpush1.msra.mxu0 %v707
  %817 = vmatprep.subr.mxu0 0.0
  %818 = vmatpush1.msra.mxu0 %v706
  %819 = vmatprep.subr.mxu0 0.0
  %820 = vmatpush1.msra.mxu0 %v705
  %821 = vmatprep.subr.mxu0 0.0
  %822 = vmatpush1.msra.mxu0 %v704
  %823 = vmatprep.subr.mxu0 0.0
  %824 = vmatpush1.msra.mxu0 %v703
  %825 = vmatprep.subr.mxu0 0.0
  %826 = vmatpush1.msra.mxu0 %v702
  %827 = vmatprep.subr.mxu0 0.0
  %828 = vmatpush1.msra.mxu0 %v701
  %829 = vmatprep.subr.mxu0 0.0
  %830 = vmatpush1.msra.mxu0 %v700
  %831 = vmatprep.subr.mxu0 0.0
  %832 = vmatpush1.msra.mxu0 %v699
  %833 = vmatprep.subr.mxu0 0.0
  %834 = vmatpush2.msra.mxu0 %v730
  %835 = vmatprep.subr.mxu0 0.0
  %836 = vmatpush2.msra.mxu0 %v729
  %837 = vmatprep.subr.mxu0 0.0
  %838 = vmatpush2.msra.mxu0 %v728
  %839 = vmatprep.subr.mxu0 0.0
  %840 = vmatpush2.msra.mxu0 %v727
  %841 = vmatprep.subr.mxu0 0.0
  %842 = vmatpush2.msra.mxu0 %v726
  %843 = vmatprep.subr.mxu0 0.0
  %844 = vmatpush2.msra.mxu0 %v725
  %845 = vmatprep.subr.mxu0 0.0
  %846 = vmatpush2.msra.mxu0 %v724
  %847 = vmatprep.subr.mxu0 0.0
  %848 = vmatpush2.msra.mxu0 %v723
  %849 = vmatprep.subr.mxu0 0.0
  %850 = vmatpush2.msra.mxu0 %v722
  %851 = vmatprep.subr.mxu0 0.0
  %852 = vmatpush2.msra.mxu0 %v721
  %853 = vmatprep.subr.mxu0 0.0
  %854 = vmatpush2.msra.mxu0 %v720
  %855 = vmatprep.subr.mxu0 0.0
  %856 = vmatpush2.msra.mxu0 %v719
  %857 = vmatprep.subr.mxu0 0.0
  %858 = vmatpush2.msra.mxu0 %v718
  %859 = vmatprep.subr.mxu0 0.0
  %860 = vmatpush2.msra.mxu0 %v717
  %861 = vmatprep.subr.mxu0 0.0
  %862 = vmatpush2.msra.mxu0 %v716
  %863 = vmatprep.subr.mxu0 0.0
  %864 = vmatpush2.msra.mxu0 %v715
  %865 = vmatprep.mubr.f32.mxu0 %v153
  %866 = vmatmul.mubr.f32.gmra.mxu0 %v83
  %v867 = vpop.f32.mrf.mxu0
  %v868 = vadd.f32 %v798, %v867
  %v869 = vpop.f32.mrf.mxu0
  %870 = vdwg.mxu0
  %v872 = vsel %vm296, %v665, 0
  %v875 = vsel %vm300, %v868, 0
  %877 = vmatprep.subr.mxu0 0.0
  %878 = vmatpush1.msra.mxu0 0.0
  %879 = vmatprep.subr.mxu0 0.0
  %880 = vmatpush1.msra.mxu0 0.0
  %881 = vmatprep.subr.mxu0 0.0
  %882 = vmatpush1.msra.mxu0 0.0
  %883 = vmatprep.subr.mxu0 0.0
  %884 = vmatpush1.msra.mxu0 0.0
  %885 = vmatprep.subr.mxu0 0.0
  %886 = vmatpush1.msra.mxu0 0.0
  %887 = vmatprep.subr.mxu0 0.0
  %888 = vmatpush1.msra.mxu0 0.0
  %889 = vmatprep.subr.mxu0 0.0
  %890 = vmatpush1.msra.mxu0 0.0
  %891 = vmatprep.subr.mxu0 0.0
  %892 = vmatpush1.msra.mxu0 0.0
  %893 = vmatprep.subr.mxu0 0.0
  %894 = vmatpush1.msra.mxu0 0.0
  %895 = vmatprep.subr.mxu0 0.0
  %896 = vmatpush1.msra.mxu0 0.0
  %897 = vmatprep.subr.mxu0 0.0
  %898 = vmatpush1.msra.mxu0 0.0
  %899 = vmatprep.subr.mxu0 0.0
  %900 = vmatpush1.msra.mxu0 0.0
  %901 = vmatprep.subr.mxu0 0.0
  %902 = vmatpush1.msra.mxu0 0.0
  %903 = vmatprep.subr.mxu0 0.0
  %904 = vmatpush1.msra.mxu0 0.0
  %905 = vmatprep.subr.mxu0 0.0
  %906 = vmatpush1.msra.mxu0 0.0
  %907 = vmatprep.subr.mxu0 0.0
  %908 = vmatpush1.msra.mxu0 %v875
  %909 = vmatprep.subr.mxu0 0.0
  %910 = vmatpush2.msra.mxu0 0.0
  %911 = vmatprep.subr.mxu0 0.0
  %912 = vmatpush2.msra.mxu0 0.0
  %913 = vmatprep.subr.mxu0 0.0
  %914 = vmatpush2.msra.mxu0 0.0
  %915 = vmatprep.subr.mxu0 0.0
  %916 = vmatpush2.msra.mxu0 0.0
  %917 = vmatprep.subr.mxu0 0.0
  %918 = vmatpush2.msra.mxu0 0.0
  %919 = vmatprep.subr.mxu0 0.0
  %920 = vmatpush2.msra.mxu0 0.0
  %921 = vmatprep.subr.mxu0 0.0
  %922 = vmatpush2.msra.mxu0 0.0
  %923 = vmatprep.subr.mxu0 0.0
  %924 = vmatpush2.msra.mxu0 0.0
  %925 = vmatprep.subr.mxu0 0.0
  %926 = vmatpush2.msra.mxu0 0.0
  %927 = vmatprep.subr.mxu0 0.0
  %928 = vmatpush2.msra.mxu0 0.0
  %929 = vmatprep.subr.mxu0 0.0
  %930 = vmatpush2.msra.mxu0 0.0
  %931 = vmatprep.subr.mxu0 0.0
  %932 = vmatpush2.msra.mxu0 0.0
  %933 = vmatprep.subr.mxu0 0.0
  %934 = vmatpush2.msra.mxu0 0.0
  %935 = vmatprep.subr.mxu0 0.0
  %936 = vmatpush2.msra.mxu0 0.0
  %937 = vmatprep.subr.mxu0 0.0
  %938 = vmatpush2.msra.mxu0 0.0
  %939 = vmatprep.subr.mxu0 0.0
  %940 = vmatpush2.msra.mxu0 0.0
  %941 = vmatprep.mubr.f32.mxu0 0.0
  %942 = vmatmul.mubr.f32.gmra.mxu0 %v872
  %v943 = vpop.f32.mrf.mxu0
  %v944 = vadd.f32 0.0, %v943
  %v945 = vpop.f32.mrf.mxu0
  %946 = vdwg.mxu0
  %v947 = vadd.f32 %v663, %v944
  %s948 = scalar_lea.vmem %s3, 24
  %v949 = vld [vmem:[%s948] sm:$0xff]
  %s950 = scalar_lea.vmem %s2, 1536
  %v951 = vld [vmem:[%s950] sm:$0xff]
  %v952 = vld [vmem:[%s950 + $0x8] sm:$0xff]
  %v953 = vld [vmem:[%s950 + $0x10] sm:$0xff]
  %v954 = vld [vmem:[%s950 + $0x18] sm:$0xff]
  %v955 = vld [vmem:[%s950 + $0x20] sm:$0xff]
  %v956 = vld [vmem:[%s950 + $0x28] sm:$0xff]
  %v957 = vld [vmem:[%s950 + $0x30] sm:$0xff]
  %v958 = vld [vmem:[%s950 + $0x38] sm:$0xff]
  %v959 = vld [vmem:[%s950 + $0x40] sm:$0xff]
  %v960 = vld [vmem:[%s950 + $0x48] sm:$0xff]
  %v961 = vld [vmem:[%s950 + $0x50] sm:$0xff]
  %v962 = vld [vmem:[%s950 + $0x58] sm:$0xff]
  %v963 = vld [vmem:[%s950 + $0x60] sm:$0xff]
  %v964 = vld [vmem:[%s950 + $0x68] sm:$0xff]
  %v965 = vld [vmem:[%s950 + $0x70] sm:$0xff]
  %v966 = vld [vmem:[%s950 + $0x78] sm:$0xff]
  %v967 = vld [vmem:[%s950 + $0x80] sm:$0xff]
  %v968 = vld [vmem:[%s950 + $0x88] sm:$0xff]
  %v969 = vld [vmem:[%s950 + $0x90] sm:$0xff]
  %v970 = vld [vmem:[%s950 + $0x98] sm:$0xff]
  %v971 = vld [vmem:[%s950 + $0xa0] sm:$0xff]
  %v972 = vld [vmem:[%s950 + $0xa8] sm:$0xff]
  %v973 = vld [vmem:[%s950 + $0xb0] sm:$0xff]
  %v974 = vld [vmem:[%s950 + $0xb8] sm:$0xff]
  %v975 = vld [vmem:[%s950 + $0xc0] sm:$0xff]
  %v976 = vld [vmem:[%s950 + $0xc8] sm:$0xff]
  %v977 = vld [vmem:[%s950 + $0xd0] sm:$0xff]
  %v978 = vld [vmem:[%s950 + $0xd8] sm:$0xff]
  %v979 = vld [vmem:[%s950 + $0xe0] sm:$0xff]
  %v980 = vld [vmem:[%s950 + $0xe8] sm:$0xff]
  %v981 = vld [vmem:[%s950 + $0xf0] sm:$0xff]
  %v982 = vld [vmem:[%s950 + $0xf8] sm:$0xff]
  %v983 = vld [vmem:[%s950 + $0x100] sm:$0xff]
  %v984 = vld [vmem:[%s950 + $0x108] sm:$0xff]
  %v985 = vld [vmem:[%s950 + $0x110] sm:$0xff]
  %v986 = vld [vmem:[%s950 + $0x118] sm:$0xff]
  %v987 = vld [vmem:[%s950 + $0x120] sm:$0xff]
  %v988 = vld [vmem:[%s950 + $0x128] sm:$0xff]
  %v989 = vld [vmem:[%s950 + $0x130] sm:$0xff]
  %v990 = vld [vmem:[%s950 + $0x138] sm:$0xff]
  %v991 = vld [vmem:[%s950 + $0x140] sm:$0xff]
  %v992 = vld [vmem:[%s950 + $0x148] sm:$0xff]
  %v993 = vld [vmem:[%s950 + $0x150] sm:$0xff]
  %v994 = vld [vmem:[%s950 + $0x158] sm:$0xff]
  %v995 = vld [vmem:[%s950 + $0x160] sm:$0xff]
  %v996 = vld [vmem:[%s950 + $0x168] sm:$0xff]
  %v997 = vld [vmem:[%s950 + $0x170] sm:$0xff]
  %v998 = vld [vmem:[%s950 + $0x178] sm:$0xff]
  %v999 = vld [vmem:[%s950 + $0x180] sm:$0xff]
  %v1000 = vld [vmem:[%s950 + $0x188] sm:$0xff]
  %v1001 = vld [vmem:[%s950 + $0x190] sm:$0xff]
  %v1002 = vld [vmem:[%s950 + $0x198] sm:$0xff]
  %v1003 = vld [vmem:[%s950 + $0x1a0] sm:$0xff]
  %v1004 = vld [vmem:[%s950 + $0x1a8] sm:$0xff]
  %v1005 = vld [vmem:[%s950 + $0x1b0] sm:$0xff]
  %v1006 = vld [vmem:[%s950 + $0x1b8] sm:$0xff]
  %v1007 = vld [vmem:[%s950 + $0x1c0] sm:$0xff]
  %v1008 = vld [vmem:[%s950 + $0x1c8] sm:$0xff]
  %v1009 = vld [vmem:[%s950 + $0x1d0] sm:$0xff]
  %v1010 = vld [vmem:[%s950 + $0x1d8] sm:$0xff]
  %v1011 = vld [vmem:[%s950 + $0x1e0] sm:$0xff]
  %v1012 = vld [vmem:[%s950 + $0x1e8] sm:$0xff]
  %v1013 = vld [vmem:[%s950 + $0x1f0] sm:$0xff]
  %v1014 = vld [vmem:[%s950 + $0x1f8] sm:$0xff]
  %1015 = vmatprep.subr.mxu0 0.0
  %1016 = vmatpush1.msra.mxu0 %v966
  %1017 = vmatprep.subr.mxu0 0.0
  %1018 = vmatpush1.msra.mxu0 %v965
  %1019 = vmatprep.subr.mxu0 0.0
  %1020 = vmatpush1.msra.mxu0 %v964
  %1021 = vmatprep.subr.mxu0 0.0
  %1022 = vmatpush1.msra.mxu0 %v963
  %1023 = vmatprep.subr.mxu0 0.0
  %1024 = vmatpush1.msra.mxu0 %v962
  %1025 = vmatprep.subr.mxu0 0.0
  %1026 = vmatpush1.msra.mxu0 %v961
  %1027 = vmatprep.subr.mxu0 0.0
  %1028 = vmatpush1.msra.mxu0 %v960
  %1029 = vmatprep.subr.mxu0 0.0
  %1030 = vmatpush1.msra.mxu0 %v959
  %1031 = vmatprep.subr.mxu0 0.0
  %1032 = vmatpush1.msra.mxu0 %v958
  %1033 = vmatprep.subr.mxu0 0.0
  %1034 = vmatpush1.msra.mxu0 %v957
  %1035 = vmatprep.subr.mxu0 0.0
  %1036 = vmatpush1.msra.mxu0 %v956
  %1037 = vmatprep.subr.mxu0 0.0
  %1038 = vmatpush1.msra.mxu0 %v955
  %1039 = vmatprep.subr.mxu0 0.0
  %1040 = vmatpush1.msra.mxu0 %v954
  %1041 = vmatprep.subr.mxu0 0.0
  %1042 = vmatpush1.msra.mxu0 %v953
  %1043 = vmatprep.subr.mxu0 0.0
  %1044 = vmatpush1.msra.mxu0 %v952
  %1045 = vmatprep.subr.mxu0 0.0
  %1046 = vmatpush1.msra.mxu0 %v951
  %1047 = vmatprep.subr.mxu0 0.0
  %1048 = vmatpush2.msra.mxu0 %v982
  %1049 = vmatprep.subr.mxu0 0.0
  %1050 = vmatpush2.msra.mxu0 %v981
  %1051 = vmatprep.subr.mxu0 0.0
  %1052 = vmatpush2.msra.mxu0 %v980
  %1053 = vmatprep.subr.mxu0 0.0
  %1054 = vmatpush2.msra.mxu0 %v979
  %1055 = vmatprep.subr.mxu0 0.0
  %1056 = vmatpush2.msra.mxu0 %v978
  %1057 = vmatprep.subr.mxu0 0.0
  %1058 = vmatpush2.msra.mxu0 %v977
  %1059 = vmatprep.subr.mxu0 0.0
  %1060 = vmatpush2.msra.mxu0 %v976
  %1061 = vmatprep.subr.mxu0 0.0
  %1062 = vmatpush2.msra.mxu0 %v975
  %1063 = vmatprep.subr.mxu0 0.0
  %1064 = vmatpush2.msra.mxu0 %v974
  %1065 = vmatprep.subr.mxu0 0.0
  %1066 = vmatpush2.msra.mxu0 %v973
  %1067 = vmatprep.subr.mxu0 0.0
  %1068 = vmatpush2.msra.mxu0 %v972
  %1069 = vmatprep.subr.mxu0 0.0
  %1070 = vmatpush2.msra.mxu0 %v971
  %1071 = vmatprep.subr.mxu0 0.0
  %1072 = vmatpush2.msra.mxu0 %v970
  %1073 = vmatprep.subr.mxu0 0.0
  %1074 = vmatpush2.msra.mxu0 %v969
  %1075 = vmatprep.subr.mxu0 0.0
  %1076 = vmatpush2.msra.mxu0 %v968
  %1077 = vmatprep.subr.mxu0 0.0
  %1078 = vmatpush2.msra.mxu0 %v967
  %1079 = vmatprep.mubr.f32.mxu0 %v152
  %1080 = vmatmul.mubr.f32.gmra.mxu0 %v82
  %v1081 = vpop.f32.mrf.mxu0
  %v1082 = vadd.f32 0.0, %v1081
  %v1083 = vpop.f32.mrf.mxu0
  %1084 = vdwg.mxu0
  %1085 = vmatprep.subr.mxu0 0.0
  %1086 = vmatpush1.msra.mxu0 %v998
  %1087 = vmatprep.subr.mxu0 0.0
  %1088 = vmatpush1.msra.mxu0 %v997
  %1089 = vmatprep.subr.mxu0 0.0
  %1090 = vmatpush1.msra.mxu0 %v996
  %1091 = vmatprep.subr.mxu0 0.0
  %1092 = vmatpush1.msra.mxu0 %v995
  %1093 = vmatprep.subr.mxu0 0.0
  %1094 = vmatpush1.msra.mxu0 %v994
  %1095 = vmatprep.subr.mxu0 0.0
  %1096 = vmatpush1.msra.mxu0 %v993
  %1097 = vmatprep.subr.mxu0 0.0
  %1098 = vmatpush1.msra.mxu0 %v992
  %1099 = vmatprep.subr.mxu0 0.0
  %1100 = vmatpush1.msra.mxu0 %v991
  %1101 = vmatprep.subr.mxu0 0.0
  %1102 = vmatpush1.msra.mxu0 %v990
  %1103 = vmatprep.subr.mxu0 0.0
  %1104 = vmatpush1.msra.mxu0 %v989
  %1105 = vmatprep.subr.mxu0 0.0
  %1106 = vmatpush1.msra.mxu0 %v988
  %1107 = vmatprep.subr.mxu0 0.0
  %1108 = vmatpush1.msra.mxu0 %v987
  %1109 = vmatprep.subr.mxu0 0.0
  %1110 = vmatpush1.msra.mxu0 %v986
  %1111 = vmatprep.subr.mxu0 0.0
  %1112 = vmatpush1.msra.mxu0 %v985
  %1113 = vmatprep.subr.mxu0 0.0
  %1114 = vmatpush1.msra.mxu0 %v984
  %1115 = vmatprep.subr.mxu0 0.0
  %1116 = vmatpush1.msra.mxu0 %v983
  %1117 = vmatprep.subr.mxu0 0.0
  %1118 = vmatpush2.msra.mxu0 %v1014
  %1119 = vmatprep.subr.mxu0 0.0
  %1120 = vmatpush2.msra.mxu0 %v1013
  %1121 = vmatprep.subr.mxu0 0.0
  %1122 = vmatpush2.msra.mxu0 %v1012
  %1123 = vmatprep.subr.mxu0 0.0
  %1124 = vmatpush2.msra.mxu0 %v1011
  %1125 = vmatprep.subr.mxu0 0.0
  %1126 = vmatpush2.msra.mxu0 %v1010
  %1127 = vmatprep.subr.mxu0 0.0
  %1128 = vmatpush2.msra.mxu0 %v1009
  %1129 = vmatprep.subr.mxu0 0.0
  %1130 = vmatpush2.msra.mxu0 %v1008
  %1131 = vmatprep.subr.mxu0 0.0
  %1132 = vmatpush2.msra.mxu0 %v1007
  %1133 = vmatprep.subr.mxu0 0.0
  %1134 = vmatpush2.msra.mxu0 %v1006
  %1135 = vmatprep.subr.mxu0 0.0
  %1136 = vmatpush2.msra.mxu0 %v1005
  %1137 = vmatprep.subr.mxu0 0.0
  %1138 = vmatpush2.msra.mxu0 %v1004
  %1139 = vmatprep.subr.mxu0 0.0
  %1140 = vmatpush2.msra.mxu0 %v1003
  %1141 = vmatprep.subr.mxu0 0.0
  %1142 = vmatpush2.msra.mxu0 %v1002
  %1143 = vmatprep.subr.mxu0 0.0
  %1144 = vmatpush2.msra.mxu0 %v1001
  %1145 = vmatprep.subr.mxu0 0.0
  %1146 = vmatpush2.msra.mxu0 %v1000
  %1147 = vmatprep.subr.mxu0 0.0
  %1148 = vmatpush2.msra.mxu0 %v999
  %1149 = vmatprep.mubr.f32.mxu0 %v153
  %1150 = vmatmul.mubr.f32.gmra.mxu0 %v83
  %v1151 = vpop.f32.mrf.mxu0
  %v1152 = vadd.f32 %v1082, %v1151
  %v1153 = vpop.f32.mrf.mxu0
  %1154 = vdwg.mxu0
  %v1156 = vsel %vm296, %v949, 0
  %v1159 = vsel %vm300, %v1152, 0
  %1161 = vmatprep.subr.mxu0 0.0
  %1162 = vmatpush1.msra.mxu0 0.0
  %1163 = vmatprep.subr.mxu0 0.0
  %1164 = vmatpush1.msra.mxu0 0.0
  %1165 = vmatprep.subr.mxu0 0.0
  %1166 = vmatpush1.msra.mxu0 0.0
  %1167 = vmatprep.subr.mxu0 0.0
  %1168 = vmatpush1.msra.mxu0 0.0
  %1169 = vmatprep.subr.mxu0 0.0
  %1170 = vmatpush1.msra.mxu0 0.0
  %1171 = vmatprep.subr.mxu0 0.0
  %1172 = vmatpush1.msra.mxu0 0.0
  %1173 = vmatprep.subr.mxu0 0.0
  %1174 = vmatpush1.msra.mxu0 0.0
  %1175 = vmatprep.subr.mxu0 0.0
  %1176 = vmatpush1.msra.mxu0 0.0
  %1177 = vmatprep.subr.mxu0 0.0
  %1178 = vmatpush1.msra.mxu0 0.0
  %1179 = vmatprep.subr.mxu0 0.0
  %1180 = vmatpush1.msra.mxu0 0.0
  %1181 = vmatprep.subr.mxu0 0.0
  %1182 = vmatpush1.msra.mxu0 0.0
  %1183 = vmatprep.subr.mxu0 0.0
  %1184 = vmatpush1.msra.mxu0 0.0
  %1185 = vmatprep.subr.mxu0 0.0
  %1186 = vmatpush1.msra.mxu0 0.0
  %1187 = vmatprep.subr.mxu0 0.0
  %1188 = vmatpush1.msra.mxu0 0.0
  %1189 = vmatprep.subr.mxu0 0.0
  %1190 = vmatpush1.msra.mxu0 0.0
  %1191 = vmatprep.subr.mxu0 0.0
  %1192 = vmatpush1.msra.mxu0 %v1159
  %1193 = vmatprep.subr.mxu0 0.0
  %1194 = vmatpush2.msra.mxu0 0.0
  %1195 = vmatprep.subr.mxu0 0.0
  %1196 = vmatpush2.msra.mxu0 0.0
  %1197 = vmatprep.subr.mxu0 0.0
  %1198 = vmatpush2.msra.mxu0 0.0
  %1199 = vmatprep.subr.mxu0 0.0
  %1200 = vmatpush2.msra.mxu0 0.0
  %1201 = vmatprep.subr.mxu0 0.0
  %1202 = vmatpush2.msra.mxu0 0.0
  %1203 = vmatprep.subr.mxu0 0.0
  %1204 = vmatpush2.msra.mxu0 0.0
  %1205 = vmatprep.subr.mxu0 0.0
  %1206 = vmatpush2.msra.mxu0 0.0
  %1207 = vmatprep.subr.mxu0 0.0
  %1208 = vmatpush2.msra.mxu0 0.0
  %1209 = vmatprep.subr.mxu0 0.0
  %1210 = vmatpush2.msra.mxu0 0.0
  %1211 = vmatprep.subr.mxu0 0.0
  %1212 = vmatpush2.msra.mxu0 0.0
  %1213 = vmatprep.subr.mxu0 0.0
  %1214 = vmatpush2.msra.mxu0 0.0
  %1215 = vmatprep.subr.mxu0 0.0
  %1216 = vmatpush2.msra.mxu0 0.0
  %1217 = vmatprep.subr.mxu0 0.0
  %1218 = vmatpush2.msra.mxu0 0.0
  %1219 = vmatprep.subr.mxu0 0.0
  %1220 = vmatpush2.msra.mxu0 0.0
  %1221 = vmatprep.subr.mxu0 0.0
  %1222 = vmatpush2.msra.mxu0 0.0
  %1223 = vmatprep.subr.mxu0 0.0
  %1224 = vmatpush2.msra.mxu0 0.0
  %1225 = vmatprep.mubr.f32.mxu0 0.0
  %1226 = vmatmul.mubr.f32.gmra.mxu0 %v1156
  %v1227 = vpop.f32.mrf.mxu0
  %v1228 = vadd.f32 0.0, %v1227
  %v1229 = vpop.f32.mrf.mxu0
  %1230 = vdwg.mxu0
  %v1231 = vadd.f32 %v947, %v1228
  %s1232 = scalar_lea.vmem %s3, 32
  %v1233 = vld [vmem:[%s1232] sm:$0xff]
  %s1234 = scalar_lea.vmem %s2, 2048
  %v1235 = vld [vmem:[%s1234] sm:$0xff]
  %v1236 = vld [vmem:[%s1234 + $0x8] sm:$0xff]
  %v1237 = vld [vmem:[%s1234 + $0x10] sm:$0xff]
  %v1238 = vld [vmem:[%s1234 + $0x18] sm:$0xff]
  %v1239 = vld [vmem:[%s1234 + $0x20] sm:$0xff]
  %v1240 = vld [vmem:[%s1234 + $0x28] sm:$0xff]
  %v1241 = vld [vmem:[%s1234 + $0x30] sm:$0xff]
  %v1242 = vld [vmem:[%s1234 + $0x38] sm:$0xff]
  %v1243 = vld [vmem:[%s1234 + $0x40] sm:$0xff]
  %v1244 = vld [vmem:[%s1234 + $0x48] sm:$0xff]
  %v1245 = vld [vmem:[%s1234 + $0x50] sm:$0xff]
  %v1246 = vld [vmem:[%s1234 + $0x58] sm:$0xff]
  %v1247 = vld [vmem:[%s1234 + $0x60] sm:$0xff]
  %v1248 = vld [vmem:[%s1234 + $0x68] sm:$0xff]
  %v1249 = vld [vmem:[%s1234 + $0x70] sm:$0xff]
  %v1250 = vld [vmem:[%s1234 + $0x78] sm:$0xff]
  %v1251 = vld [vmem:[%s1234 + $0x80] sm:$0xff]
  %v1252 = vld [vmem:[%s1234 + $0x88] sm:$0xff]
  %v1253 = vld [vmem:[%s1234 + $0x90] sm:$0xff]
  %v1254 = vld [vmem:[%s1234 + $0x98] sm:$0xff]
  %v1255 = vld [vmem:[%s1234 + $0xa0] sm:$0xff]
  %v1256 = vld [vmem:[%s1234 + $0xa8] sm:$0xff]
  %v1257 = vld [vmem:[%s1234 + $0xb0] sm:$0xff]
  %v1258 = vld [vmem:[%s1234 + $0xb8] sm:$0xff]
  %v1259 = vld [vmem:[%s1234 + $0xc0] sm:$0xff]
  %v1260 = vld [vmem:[%s1234 + $0xc8] sm:$0xff]
  %v1261 = vld [vmem:[%s1234 + $0xd0] sm:$0xff]
  %v1262 = vld [vmem:[%s1234 + $0xd8] sm:$0xff]
  %v1263 = vld [vmem:[%s1234 + $0xe0] sm:$0xff]
  %v1264 = vld [vmem:[%s1234 + $0xe8] sm:$0xff]
  %v1265 = vld [vmem:[%s1234 + $0xf0] sm:$0xff]
  %v1266 = vld [vmem:[%s1234 + $0xf8] sm:$0xff]
  %v1267 = vld [vmem:[%s1234 + $0x100] sm:$0xff]
  %v1268 = vld [vmem:[%s1234 + $0x108] sm:$0xff]
  %v1269 = vld [vmem:[%s1234 + $0x110] sm:$0xff]
  %v1270 = vld [vmem:[%s1234 + $0x118] sm:$0xff]
  %v1271 = vld [vmem:[%s1234 + $0x120] sm:$0xff]
  %v1272 = vld [vmem:[%s1234 + $0x128] sm:$0xff]
  %v1273 = vld [vmem:[%s1234 + $0x130] sm:$0xff]
  %v1274 = vld [vmem:[%s1234 + $0x138] sm:$0xff]
  %v1275 = vld [vmem:[%s1234 + $0x140] sm:$0xff]
  %v1276 = vld [vmem:[%s1234 + $0x148] sm:$0xff]
  %v1277 = vld [vmem:[%s1234 + $0x150] sm:$0xff]
  %v1278 = vld [vmem:[%s1234 + $0x158] sm:$0xff]
  %v1279 = vld [vmem:[%s1234 + $0x160] sm:$0xff]
  %v1280 = vld [vmem:[%s1234 + $0x168] sm:$0xff]
  %v1281 = vld [vmem:[%s1234 + $0x170] sm:$0xff]
  %v1282 = vld [vmem:[%s1234 + $0x178] sm:$0xff]
  %v1283 = vld [vmem:[%s1234 + $0x180] sm:$0xff]
  %v1284 = vld [vmem:[%s1234 + $0x188] sm:$0xff]
  %v1285 = vld [vmem:[%s1234 + $0x190] sm:$0xff]
  %v1286 = vld [vmem:[%s1234 + $0x198] sm:$0xff]
  %v1287 = vld [vmem:[%s1234 + $0x1a0] sm:$0xff]
  %v1288 = vld [vmem:[%s1234 + $0x1a8] sm:$0xff]
  %v1289 = vld [vmem:[%s1234 + $0x1b0] sm:$0xff]
  %v1290 = vld [vmem:[%s1234 + $0x1b8] sm:$0xff]
  %v1291 = vld [vmem:[%s1234 + $0x1c0] sm:$0xff]
  %v1292 = vld [vmem:[%s1234 + $0x1c8] sm:$0xff]
  %v1293 = vld [vmem:[%s1234 + $0x1d0] sm:$0xff]
  %v1294 = vld [vmem:[%s1234 + $0x1d8] sm:$0xff]
  %v1295 = vld [vmem:[%s1234 + $0x1e0] sm:$0xff]
  %v1296 = vld [vmem:[%s1234 + $0x1e8] sm:$0xff]
  %v1297 = vld [vmem:[%s1234 + $0x1f0] sm:$0xff]
  %v1298 = vld [vmem:[%s1234 + $0x1f8] sm:$0xff]
  %1299 = vmatprep.subr.mxu0 0.0
  %1300 = vmatpush1.msra.mxu0 %v1250
  %1301 = vmatprep.subr.mxu0 0.0
  %1302 = vmatpush1.msra.mxu0 %v1249
  %1303 = vmatprep.subr.mxu0 0.0
  %1304 = vmatpush1.msra.mxu0 %v1248
  %1305 = vmatprep.subr.mxu0 0.0
  %1306 = vmatpush1.msra.mxu0 %v1247
  %1307 = vmatprep.subr.mxu0 0.0
  %1308 = vmatpush1.msra.mxu0 %v1246
  %1309 = vmatprep.subr.mxu0 0.0
  %1310 = vmatpush1.msra.mxu0 %v1245
  %1311 = vmatprep.subr.mxu0 0.0
  %1312 = vmatpush1.msra.mxu0 %v1244
  %1313 = vmatprep.subr.mxu0 0.0
  %1314 = vmatpush1.msra.mxu0 %v1243
  %1315 = vmatprep.subr.mxu0 0.0
  %1316 = vmatpush1.msra.mxu0 %v1242
  %1317 = vmatprep.subr.mxu0 0.0
  %1318 = vmatpush1.msra.mxu0 %v1241
  %1319 = vmatprep.subr.mxu0 0.0
  %1320 = vmatpush1.msra.mxu0 %v1240
  %1321 = vmatprep.subr.mxu0 0.0
  %1322 = vmatpush1.msra.mxu0 %v1239
  %1323 = vmatprep.subr.mxu0 0.0
  %1324 = vmatpush1.msra.mxu0 %v1238
  %1325 = vmatprep.subr.mxu0 0.0
  %1326 = vmatpush1.msra.mxu0 %v1237
  %1327 = vmatprep.subr.mxu0 0.0
  %1328 = vmatpush1.msra.mxu0 %v1236
  %1329 = vmatprep.subr.mxu0 0.0
  %1330 = vmatpush1.msra.mxu0 %v1235
  %1331 = vmatprep.subr.mxu0 0.0
  %1332 = vmatpush2.msra.mxu0 %v1266
  %1333 = vmatprep.subr.mxu0 0.0
  %1334 = vmatpush2.msra.mxu0 %v1265
  %1335 = vmatprep.subr.mxu0 0.0
  %1336 = vmatpush2.msra.mxu0 %v1264
  %1337 = vmatprep.subr.mxu0 0.0
  %1338 = vmatpush2.msra.mxu0 %v1263
  %1339 = vmatprep.subr.mxu0 0.0
  %1340 = vmatpush2.msra.mxu0 %v1262
  %1341 = vmatprep.subr.mxu0 0.0
  %1342 = vmatpush2.msra.mxu0 %v1261
  %1343 = vmatprep.subr.mxu0 0.0
  %1344 = vmatpush2.msra.mxu0 %v1260
  %1345 = vmatprep.subr.mxu0 0.0
  %1346 = vmatpush2.msra.mxu0 %v1259
  %1347 = vmatprep.subr.mxu0 0.0
  %1348 = vmatpush2.msra.mxu0 %v1258
  %1349 = vmatprep.subr.mxu0 0.0
  %1350 = vmatpush2.msra.mxu0 %v1257
  %1351 = vmatprep.subr.mxu0 0.0
  %1352 = vmatpush2.msra.mxu0 %v1256
  %1353 = vmatprep.subr.mxu0 0.0
  %1354 = vmatpush2.msra.mxu0 %v1255
  %1355 = vmatprep.subr.mxu0 0.0
  %1356 = vmatpush2.msra.mxu0 %v1254
  %1357 = vmatprep.subr.mxu0 0.0
  %1358 = vmatpush2.msra.mxu0 %v1253
  %1359 = vmatprep.subr.mxu0 0.0
  %1360 = vmatpush2.msra.mxu0 %v1252
  %1361 = vmatprep.subr.mxu0 0.0
  %1362 = vmatpush2.msra.mxu0 %v1251
  %1363 = vmatprep.mubr.f32.mxu0 %v152
  %1364 = vmatmul.mubr.f32.gmra.mxu0 %v82
  %v1365 = vpop.f32.mrf.mxu0
  %v1366 = vadd.f32 0.0, %v1365
  %v1367 = vpop.f32.mrf.mxu0
  %1368 = vdwg.mxu0
  %1369 = vmatprep.subr.mxu0 0.0
  %1370 = vmatpush1.msra.mxu0 %v1282
  %1371 = vmatprep.subr.mxu0 0.0
  %1372 = vmatpush1.msra.mxu0 %v1281
  %1373 = vmatprep.subr.mxu0 0.0
  %1374 = vmatpush1.msra.mxu0 %v1280
  %1375 = vmatprep.subr.mxu0 0.0
  %1376 = vmatpush1.msra.mxu0 %v1279
  %1377 = vmatprep.subr.mxu0 0.0
  %1378 = vmatpush1.msra.mxu0 %v1278
  %1379 = vmatprep.subr.mxu0 0.0
  %1380 = vmatpush1.msra.mxu0 %v1277
  %1381 = vmatprep.subr.mxu0 0.0
  %1382 = vmatpush1.msra.mxu0 %v1276
  %1383 = vmatprep.subr.mxu0 0.0
  %1384 = vmatpush1.msra.mxu0 %v1275
  %1385 = vmatprep.subr.mxu0 0.0
  %1386 = vmatpush1.msra.mxu0 %v1274
  %1387 = vmatprep.subr.mxu0 0.0
  %1388 = vmatpush1.msra.mxu0 %v1273
  %1389 = vmatprep.subr.mxu0 0.0
  %1390 = vmatpush1.msra.mxu0 %v1272
  %1391 = vmatprep.subr.mxu0 0.0
  %1392 = vmatpush1.msra.mxu0 %v1271
  %1393 = vmatprep.subr.mxu0 0.0
  %1394 = vmatpush1.msra.mxu0 %v1270
  %1395 = vmatprep.subr.mxu0 0.0
  %1396 = vmatpush1.msra.mxu0 %v1269
  %1397 = vmatprep.subr.mxu0 0.0
  %1398 = vmatpush1.msra.mxu0 %v1268
  %1399 = vmatprep.subr.mxu0 0.0
  %1400 = vmatpush1.msra.mxu0 %v1267
  %1401 = vmatprep.subr.mxu0 0.0
  %1402 = vmatpush2.msra.mxu0 %v1298
  %1403 = vmatprep.subr.mxu0 0.0
  %1404 = vmatpush2.msra.mxu0 %v1297
  %1405 = vmatprep.subr.mxu0 0.0
  %1406 = vmatpush2.msra.mxu0 %v1296
  %1407 = vmatprep.subr.mxu0 0.0
  %1408 = vmatpush2.msra.mxu0 %v1295
  %1409 = vmatprep.subr.mxu0 0.0
  %1410 = vmatpush2.msra.mxu0 %v1294
  %1411 = vmatprep.subr.mxu0 0.0
  %1412 = vmatpush2.msra.mxu0 %v1293
  %1413 = vmatprep.subr.mxu0 0.0
  %1414 = vmatpush2.msra.mxu0 %v1292
  %1415 = vmatprep.subr.mxu0 0.0
  %1416 = vmatpush2.msra.mxu0 %v1291
  %1417 = vmatprep.subr.mxu0 0.0
  %1418 = vmatpush2.msra.mxu0 %v1290
  %1419 = vmatprep.subr.mxu0 0.0
  %1420 = vmatpush2.msra.mxu0 %v1289
  %1421 = vmatprep.subr.mxu0 0.0
  %1422 = vmatpush2.msra.mxu0 %v1288
  %1423 = vmatprep.subr.mxu0 0.0
  %1424 = vmatpush2.msra.mxu0 %v1287
  %1425 = vmatprep.subr.mxu0 0.0
  %1426 = vmatpush2.msra.mxu0 %v1286
  %1427 = vmatprep.subr.mxu0 0.0
  %1428 = vmatpush2.msra.mxu0 %v1285
  %1429 = vmatprep.subr.mxu0 0.0
  %1430 = vmatpush2.msra.mxu0 %v1284
  %1431 = vmatprep.subr.mxu0 0.0
  %1432 = vmatpush2.msra.mxu0 %v1283
  %1433 = vmatprep.mubr.f32.mxu0 %v153
  %1434 = vmatmul.mubr.f32.gmra.mxu0 %v83
  %v1435 = vpop.f32.mrf.mxu0
  %v1436 = vadd.f32 %v1366, %v1435
  %v1437 = vpop.f32.mrf.mxu0
  %1438 = vdwg.mxu0
  %v1440 = vsel %vm296, %v1233, 0
  %v1443 = vsel %vm300, %v1436, 0
  %1445 = vmatprep.subr.mxu0 0.0
  %1446 = vmatpush1.msra.mxu0 0.0
  %1447 = vmatprep.subr.mxu0 0.0
  %1448 = vmatpush1.msra.mxu0 0.0
  %1449 = vmatprep.subr.mxu0 0.0
  %1450 = vmatpush1.msra.mxu0 0.0
  %1451 = vmatprep.subr.mxu0 0.0
  %1452 = vmatpush1.msra.mxu0 0.0
  %1453 = vmatprep.subr.mxu0 0.0
  %1454 = vmatpush1.msra.mxu0 0.0
  %1455 = vmatprep.subr.mxu0 0.0
  %1456 = vmatpush1.msra.mxu0 0.0
  %1457 = vmatprep.subr.mxu0 0.0
  %1458 = vmatpush1.msra.mxu0 0.0
  %1459 = vmatprep.subr.mxu0 0.0
  %1460 = vmatpush1.msra.mxu0 0.0
  %1461 = vmatprep.subr.mxu0 0.0
  %1462 = vmatpush1.msra.mxu0 0.0
  %1463 = vmatprep.subr.mxu0 0.0
  %1464 = vmatpush1.msra.mxu0 0.0
  %1465 = vmatprep.subr.mxu0 0.0
  %1466 = vmatpush1.msra.mxu0 0.0
  %1467 = vmatprep.subr.mxu0 0.0
  %1468 = vmatpush1.msra.mxu0 0.0
  %1469 = vmatprep.subr.mxu0 0.0
  %1470 = vmatpush1.msra.mxu0 0.0
  %1471 = vmatprep.subr.mxu0 0.0
  %1472 = vmatpush1.msra.mxu0 0.0
  %1473 = vmatprep.subr.mxu0 0.0
  %1474 = vmatpush1.msra.mxu0 0.0
  %1475 = vmatprep.subr.mxu0 0.0
  %1476 = vmatpush1.msra.mxu0 %v1443
  %1477 = vmatprep.subr.mxu0 0.0
  %1478 = vmatpush2.msra.mxu0 0.0
  %1479 = vmatprep.subr.mxu0 0.0
  %1480 = vmatpush2.msra.mxu0 0.0
  %1481 = vmatprep.subr.mxu0 0.0
  %1482 = vmatpush2.msra.mxu0 0.0
  %1483 = vmatprep.subr.mxu0 0.0
  %1484 = vmatpush2.msra.mxu0 0.0
  %1485 = vmatprep.subr.mxu0 0.0
  %1486 = vmatpush2.msra.mxu0 0.0
  %1487 = vmatprep.subr.mxu0 0.0
  %1488 = vmatpush2.msra.mxu0 0.0
  %1489 = vmatprep.subr.mxu0 0.0
  %1490 = vmatpush2.msra.mxu0 0.0
  %1491 = vmatprep.subr.mxu0 0.0
  %1492 = vmatpush2.msra.mxu0 0.0
  %1493 = vmatprep.subr.mxu0 0.0
  %1494 = vmatpush2.msra.mxu0 0.0
  %1495 = vmatprep.subr.mxu0 0.0
  %1496 = vmatpush2.msra.mxu0 0.0
  %1497 = vmatprep.subr.mxu0 0.0
  %1498 = vmatpush2.msra.mxu0 0.0
  %1499 = vmatprep.subr.mxu0 0.0
  %1500 = vmatpush2.msra.mxu0 0.0
  %1501 = vmatprep.subr.mxu0 0.0
  %1502 = vmatpush2.msra.mxu0 0.0
  %1503 = vmatprep.subr.mxu0 0.0
  %1504 = vmatpush2.msra.mxu0 0.0
  %1505 = vmatprep.subr.mxu0 0.0
  %1506 = vmatpush2.msra.mxu0 0.0
  %1507 = vmatprep.subr.mxu0 0.0
  %1508 = vmatpush2.msra.mxu0 0.0
  %1509 = vmatprep.mubr.f32.mxu0 0.0
  %1510 = vmatmul.mubr.f32.gmra.mxu0 %v1440
  %v1511 = vpop.f32.mrf.mxu0
  %v1512 = vadd.f32 0.0, %v1511
  %v1513 = vpop.f32.mrf.mxu0
  %1514 = vdwg.mxu0
  %v1515 = vadd.f32 %v1231, %v1512
  %s1516 = scalar_lea.vmem %s3, 40
  %v1517 = vld [vmem:[%s1516] sm:$0xff]
  %s1518 = scalar_lea.vmem %s2, 2560
  %v1519 = vld [vmem:[%s1518] sm:$0xff]
  %v1520 = vld [vmem:[%s1518 + $0x8] sm:$0xff]
  %v1521 = vld [vmem:[%s1518 + $0x10] sm:$0xff]
  %v1522 = vld [vmem:[%s1518 + $0x18] sm:$0xff]
  %v1523 = vld [vmem:[%s1518 + $0x20] sm:$0xff]
  %v1524 = vld [vmem:[%s1518 + $0x28] sm:$0xff]
  %v1525 = vld [vmem:[%s1518 + $0x30] sm:$0xff]
  %v1526 = vld [vmem:[%s1518 + $0x38] sm:$0xff]
  %v1527 = vld [vmem:[%s1518 + $0x40] sm:$0xff]
  %v1528 = vld [vmem:[%s1518 + $0x48] sm:$0xff]
  %v1529 = vld [vmem:[%s1518 + $0x50] sm:$0xff]
  %v1530 = vld [vmem:[%s1518 + $0x58] sm:$0xff]
  %v1531 = vld [vmem:[%s1518 + $0x60] sm:$0xff]
  %v1532 = vld [vmem:[%s1518 + $0x68] sm:$0xff]
  %v1533 = vld [vmem:[%s1518 + $0x70] sm:$0xff]
  %v1534 = vld [vmem:[%s1518 + $0x78] sm:$0xff]
  %v1535 = vld [vmem:[%s1518 + $0x80] sm:$0xff]
  %v1536 = vld [vmem:[%s1518 + $0x88] sm:$0xff]
  %v1537 = vld [vmem:[%s1518 + $0x90] sm:$0xff]
  %v1538 = vld [vmem:[%s1518 + $0x98] sm:$0xff]
  %v1539 = vld [vmem:[%s1518 + $0xa0] sm:$0xff]
  %v1540 = vld [vmem:[%s1518 + $0xa8] sm:$0xff]
  %v1541 = vld [vmem:[%s1518 + $0xb0] sm:$0xff]
  %v1542 = vld [vmem:[%s1518 + $0xb8] sm:$0xff]
  %v1543 = vld [vmem:[%s1518 + $0xc0] sm:$0xff]
  %v1544 = vld [vmem:[%s1518 + $0xc8] sm:$0xff]
  %v1545 = vld [vmem:[%s1518 + $0xd0] sm:$0xff]
  %v1546 = vld [vmem:[%s1518 + $0xd8] sm:$0xff]
  %v1547 = vld [vmem:[%s1518 + $0xe0] sm:$0xff]
  %v1548 = vld [vmem:[%s1518 + $0xe8] sm:$0xff]
  %v1549 = vld [vmem:[%s1518 + $0xf0] sm:$0xff]
  %v1550 = vld [vmem:[%s1518 + $0xf8] sm:$0xff]
  %v1551 = vld [vmem:[%s1518 + $0x100] sm:$0xff]
  %v1552 = vld [vmem:[%s1518 + $0x108] sm:$0xff]
  %v1553 = vld [vmem:[%s1518 + $0x110] sm:$0xff]
  %v1554 = vld [vmem:[%s1518 + $0x118] sm:$0xff]
  %v1555 = vld [vmem:[%s1518 + $0x120] sm:$0xff]
  %v1556 = vld [vmem:[%s1518 + $0x128] sm:$0xff]
  %v1557 = vld [vmem:[%s1518 + $0x130] sm:$0xff]
  %v1558 = vld [vmem:[%s1518 + $0x138] sm:$0xff]
  %v1559 = vld [vmem:[%s1518 + $0x140] sm:$0xff]
  %v1560 = vld [vmem:[%s1518 + $0x148] sm:$0xff]
  %v1561 = vld [vmem:[%s1518 + $0x150] sm:$0xff]
  %v1562 = vld [vmem:[%s1518 + $0x158] sm:$0xff]
  %v1563 = vld [vmem:[%s1518 + $0x160] sm:$0xff]
  %v1564 = vld [vmem:[%s1518 + $0x168] sm:$0xff]
  %v1565 = vld [vmem:[%s1518 + $0x170] sm:$0xff]
  %v1566 = vld [vmem:[%s1518 + $0x178] sm:$0xff]
  %v1567 = vld [vmem:[%s1518 + $0x180] sm:$0xff]
  %v1568 = vld [vmem:[%s1518 + $0x188] sm:$0xff]
  %v1569 = vld [vmem:[%s1518 + $0x190] sm:$0xff]
  %v1570 = vld [vmem:[%s1518 + $0x198] sm:$0xff]
  %v1571 = vld [vmem:[%s1518 + $0x1a0] sm:$0xff]
  %v1572 = vld [vmem:[%s1518 + $0x1a8] sm:$0xff]
  %v1573 = vld [vmem:[%s1518 + $0x1b0] sm:$0xff]
  %v1574 = vld [vmem:[%s1518 + $0x1b8] sm:$0xff]
  %v1575 = vld [vmem:[%s1518 + $0x1c0] sm:$0xff]
  %v1576 = vld [vmem:[%s1518 + $0x1c8] sm:$0xff]
  %v1577 = vld [vmem:[%s1518 + $0x1d0] sm:$0xff]
  %v1578 = vld [vmem:[%s1518 + $0x1d8] sm:$0xff]
  %v1579 = vld [vmem:[%s1518 + $0x1e0] sm:$0xff]
  %v1580 = vld [vmem:[%s1518 + $0x1e8] sm:$0xff]
  %v1581 = vld [vmem:[%s1518 + $0x1f0] sm:$0xff]
  %v1582 = vld [vmem:[%s1518 + $0x1f8] sm:$0xff]
  %1583 = vmatprep.subr.mxu0 0.0
  %1584 = vmatpush1.msra.mxu0 %v1534
  %1585 = vmatprep.subr.mxu0 0.0
  %1586 = vmatpush1.msra.mxu0 %v1533
  %1587 = vmatprep.subr.mxu0 0.0
  %1588 = vmatpush1.msra.mxu0 %v1532
  %1589 = vmatprep.subr.mxu0 0.0
  %1590 = vmatpush1.msra.mxu0 %v1531
  %1591 = vmatprep.subr.mxu0 0.0
  %1592 = vmatpush1.msra.mxu0 %v1530
  %1593 = vmatprep.subr.mxu0 0.0
  %1594 = vmatpush1.msra.mxu0 %v1529
  %1595 = vmatprep.subr.mxu0 0.0
  %1596 = vmatpush1.msra.mxu0 %v1528
  %1597 = vmatprep.subr.mxu0 0.0
  %1598 = vmatpush1.msra.mxu0 %v1527
  %1599 = vmatprep.subr.mxu0 0.0
  %1600 = vmatpush1.msra.mxu0 %v1526
  %1601 = vmatprep.subr.mxu0 0.0
  %1602 = vmatpush1.msra.mxu0 %v1525
  %1603 = vmatprep.subr.mxu0 0.0
  %1604 = vmatpush1.msra.mxu0 %v1524
  %1605 = vmatprep.subr.mxu0 0.0
  %1606 = vmatpush1.msra.mxu0 %v1523
  %1607 = vmatprep.subr.mxu0 0.0
  %1608 = vmatpush1.msra.mxu0 %v1522
  %1609 = vmatprep.subr.mxu0 0.0
  %1610 = vmatpush1.msra.mxu0 %v1521
  %1611 = vmatprep.subr.mxu0 0.0
  %1612 = vmatpush1.msra.mxu0 %v1520
  %1613 = vmatprep.subr.mxu0 0.0
  %1614 = vmatpush1.msra.mxu0 %v1519
  %1615 = vmatprep.subr.mxu0 0.0
  %1616 = vmatpush2.msra.mxu0 %v1550
  %1617 = vmatprep.subr.mxu0 0.0
  %1618 = vmatpush2.msra.mxu0 %v1549
  %1619 = vmatprep.subr.mxu0 0.0
  %1620 = vmatpush2.msra.mxu0 %v1548
  %1621 = vmatprep.subr.mxu0 0.0
  %1622 = vmatpush2.msra.mxu0 %v1547
  %1623 = vmatprep.subr.mxu0 0.0
  %1624 = vmatpush2.msra.mxu0 %v1546
  %1625 = vmatprep.subr.mxu0 0.0
  %1626 = vmatpush2.msra.mxu0 %v1545
  %1627 = vmatprep.subr.mxu0 0.0
  %1628 = vmatpush2.msra.mxu0 %v1544
  %1629 = vmatprep.subr.mxu0 0.0
  %1630 = vmatpush2.msra.mxu0 %v1543
  %1631 = vmatprep.subr.mxu0 0.0
  %1632 = vmatpush2.msra.mxu0 %v1542
  %1633 = vmatprep.subr.mxu0 0.0
  %1634 = vmatpush2.msra.mxu0 %v1541
  %1635 = vmatprep.subr.mxu0 0.0
  %1636 = vmatpush2.msra.mxu0 %v1540
  %1637 = vmatprep.subr.mxu0 0.0
  %1638 = vmatpush2.msra.mxu0 %v1539
  %1639 = vmatprep.subr.mxu0 0.0
  %1640 = vmatpush2.msra.mxu0 %v1538
  %1641 = vmatprep.subr.mxu0 0.0
  %1642 = vmatpush2.msra.mxu0 %v1537
  %1643 = vmatprep.subr.mxu0 0.0
  %1644 = vmatpush2.msra.mxu0 %v1536
  %1645 = vmatprep.subr.mxu0 0.0
  %1646 = vmatpush2.msra.mxu0 %v1535
  %1647 = vmatprep.mubr.f32.mxu0 %v152
  %1648 = vmatmul.mubr.f32.gmra.mxu0 %v82
  %v1649 = vpop.f32.mrf.mxu0
  %v1650 = vadd.f32 0.0, %v1649
  %v1651 = vpop.f32.mrf.mxu0
  %1652 = vdwg.mxu0
  %1653 = vmatprep.subr.mxu0 0.0
  %1654 = vmatpush1.msra.mxu0 %v1566
  %1655 = vmatprep.subr.mxu0 0.0
  %1656 = vmatpush1.msra.mxu0 %v1565
  %1657 = vmatprep.subr.mxu0 0.0
  %1658 = vmatpush1.msra.mxu0 %v1564
  %1659 = vmatprep.subr.mxu0 0.0
  %1660 = vmatpush1.msra.mxu0 %v1563
  %1661 = vmatprep.subr.mxu0 0.0
  %1662 = vmatpush1.msra.mxu0 %v1562
  %1663 = vmatprep.subr.mxu0 0.0
  %1664 = vmatpush1.msra.mxu0 %v1561
  %1665 = vmatprep.subr.mxu0 0.0
  %1666 = vmatpush1.msra.mxu0 %v1560
  %1667 = vmatprep.subr.mxu0 0.0
  %1668 = vmatpush1.msra.mxu0 %v1559
  %1669 = vmatprep.subr.mxu0 0.0
  %1670 = vmatpush1.msra.mxu0 %v1558
  %1671 = vmatprep.subr.mxu0 0.0
  %1672 = vmatpush1.msra.mxu0 %v1557
  %1673 = vmatprep.subr.mxu0 0.0
  %1674 = vmatpush1.msra.mxu0 %v1556
  %1675 = vmatprep.subr.mxu0 0.0
  %1676 = vmatpush1.msra.mxu0 %v1555
  %1677 = vmatprep.subr.mxu0 0.0
  %1678 = vmatpush1.msra.mxu0 %v1554
  %1679 = vmatprep.subr.mxu0 0.0
  %1680 = vmatpush1.msra.mxu0 %v1553
  %1681 = vmatprep.subr.mxu0 0.0
  %1682 = vmatpush1.msra.mxu0 %v1552
  %1683 = vmatprep.subr.mxu0 0.0
  %1684 = vmatpush1.msra.mxu0 %v1551
  %1685 = vmatprep.subr.mxu0 0.0
  %1686 = vmatpush2.msra.mxu0 %v1582
  %1687 = vmatprep.subr.mxu0 0.0
  %1688 = vmatpush2.msra.mxu0 %v1581
  %1689 = vmatprep.subr.mxu0 0.0
  %1690 = vmatpush2.msra.mxu0 %v1580
  %1691 = vmatprep.subr.mxu0 0.0
  %1692 = vmatpush2.msra.mxu0 %v1579
  %1693 = vmatprep.subr.mxu0 0.0
  %1694 = vmatpush2.msra.mxu0 %v1578
  %1695 = vmatprep.subr.mxu0 0.0
  %1696 = vmatpush2.msra.mxu0 %v1577
  %1697 = vmatprep.subr.mxu0 0.0
  %1698 = vmatpush2.msra.mxu0 %v1576
  %1699 = vmatprep.subr.mxu0 0.0
  %1700 = vmatpush2.msra.mxu0 %v1575
  %1701 = vmatprep.subr.mxu0 0.0
  %1702 = vmatpush2.msra.mxu0 %v1574
  %1703 = vmatprep.subr.mxu0 0.0
  %1704 = vmatpush2.msra.mxu0 %v1573
  %1705 = vmatprep.subr.mxu0 0.0
  %1706 = vmatpush2.msra.mxu0 %v1572
  %1707 = vmatprep.subr.mxu0 0.0
  %1708 = vmatpush2.msra.mxu0 %v1571
  %1709 = vmatprep.subr.mxu0 0.0
  %1710 = vmatpush2.msra.mxu0 %v1570
  %1711 = vmatprep.subr.mxu0 0.0
  %1712 = vmatpush2.msra.mxu0 %v1569
  %1713 = vmatprep.subr.mxu0 0.0
  %1714 = vmatpush2.msra.mxu0 %v1568
  %1715 = vmatprep.subr.mxu0 0.0
  %1716 = vmatpush2.msra.mxu0 %v1567
  %1717 = vmatprep.mubr.f32.mxu0 %v153
  %1718 = vmatmul.mubr.f32.gmra.mxu0 %v83
  %v1719 = vpop.f32.mrf.mxu0
  %v1720 = vadd.f32 %v1650, %v1719
  %v1721 = vpop.f32.mrf.mxu0
  %1722 = vdwg.mxu0
  %v1724 = vsel %vm296, %v1517, 0
  %v1727 = vsel %vm300, %v1720, 0
  %1729 = vmatprep.subr.mxu0 0.0
  %1730 = vmatpush1.msra.mxu0 0.0
  %1731 = vmatprep.subr.mxu0 0.0
  %1732 = vmatpush1.msra.mxu0 0.0
  %1733 = vmatprep.subr.mxu0 0.0
  %1734 = vmatpush1.msra.mxu0 0.0
  %1735 = vmatprep.subr.mxu0 0.0
  %1736 = vmatpush1.msra.mxu0 0.0
  %1737 = vmatprep.subr.mxu0 0.0
  %1738 = vmatpush1.msra.mxu0 0.0
  %1739 = vmatprep.subr.mxu0 0.0
  %1740 = vmatpush1.msra.mxu0 0.0
  %1741 = vmatprep.subr.mxu0 0.0
  %1742 = vmatpush1.msra.mxu0 0.0
  %1743 = vmatprep.subr.mxu0 0.0
  %1744 = vmatpush1.msra.mxu0 0.0
  %1745 = vmatprep.subr.mxu0 0.0
  %1746 = vmatpush1.msra.mxu0 0.0
  %1747 = vmatprep.subr.mxu0 0.0
  %1748 = vmatpush1.msra.mxu0 0.0
  %1749 = vmatprep.subr.mxu0 0.0
  %1750 = vmatpush1.msra.mxu0 0.0
  %1751 = vmatprep.subr.mxu0 0.0
  %1752 = vmatpush1.msra.mxu0 0.0
  %1753 = vmatprep.subr.mxu0 0.0
  %1754 = vmatpush1.msra.mxu0 0.0
  %1755 = vmatprep.subr.mxu0 0.0
  %1756 = vmatpush1.msra.mxu0 0.0
  %1757 = vmatprep.subr.mxu0 0.0
  %1758 = vmatpush1.msra.mxu0 0.0
  %1759 = vmatprep.subr.mxu0 0.0
  %1760 = vmatpush1.msra.mxu0 %v1727
  %1761 = vmatprep.subr.mxu0 0.0
  %1762 = vmatpush2.msra.mxu0 0.0
  %1763 = vmatprep.subr.mxu0 0.0
  %1764 = vmatpush2.msra.mxu0 0.0
  %1765 = vmatprep.subr.mxu0 0.0
  %1766 = vmatpush2.msra.mxu0 0.0
  %1767 = vmatprep.subr.mxu0 0.0
  %1768 = vmatpush2.msra.mxu0 0.0
  %1769 = vmatprep.subr.mxu0 0.0
  %1770 = vmatpush2.msra.mxu0 0.0
  %1771 = vmatprep.subr.mxu0 0.0
  %1772 = vmatpush2.msra.mxu0 0.0
  %1773 = vmatprep.subr.mxu0 0.0
  %1774 = vmatpush2.msra.mxu0 0.0
  %1775 = vmatprep.subr.mxu0 0.0
  %1776 = vmatpush2.msra.mxu0 0.0
  %1777 = vmatprep.subr.mxu0 0.0
  %1778 = vmatpush2.msra.mxu0 0.0
  %1779 = vmatprep.subr.mxu0 0.0
  %1780 = vmatpush2.msra.mxu0 0.0
  %1781 = vmatprep.subr.mxu0 0.0
  %1782 = vmatpush2.msra.mxu0 0.0
  %1783 = vmatprep.subr.mxu0 0.0
  %1784 = vmatpush2.msra.mxu0 0.0
  %1785 = vmatprep.subr.mxu0 0.0
  %1786 = vmatpush2.msra.mxu0 0.0
  %1787 = vmatprep.subr.mxu0 0.0
  %1788 = vmatpush2.msra.mxu0 0.0
  %1789 = vmatprep.subr.mxu0 0.0
  %1790 = vmatpush2.msra.mxu0 0.0
  %1791 = vmatprep.subr.mxu0 0.0
  %1792 = vmatpush2.msra.mxu0 0.0
  %1793 = vmatprep.mubr.f32.mxu0 0.0
  %1794 = vmatmul.mubr.f32.gmra.mxu0 %v1724
  %v1795 = vpop.f32.mrf.mxu0
  %v1796 = vadd.f32 0.0, %v1795
  %v1797 = vpop.f32.mrf.mxu0
  %1798 = vdwg.mxu0
  %v1799 = vadd.f32 %v1515, %v1796
  %s1800 = scalar_lea.vmem %s3, 48
  %v1801 = vld [vmem:[%s1800] sm:$0xff]
  %s1802 = scalar_lea.vmem %s2, 3072
  %v1803 = vld [vmem:[%s1802] sm:$0xff]
  %v1804 = vld [vmem:[%s1802 + $0x8] sm:$0xff]
  %v1805 = vld [vmem:[%s1802 + $0x10] sm:$0xff]
  %v1806 = vld [vmem:[%s1802 + $0x18] sm:$0xff]
  %v1807 = vld [vmem:[%s1802 + $0x20] sm:$0xff]
  %v1808 = vld [vmem:[%s1802 + $0x28] sm:$0xff]
  %v1809 = vld [vmem:[%s1802 + $0x30] sm:$0xff]
  %v1810 = vld [vmem:[%s1802 + $0x38] sm:$0xff]
  %v1811 = vld [vmem:[%s1802 + $0x40] sm:$0xff]
  %v1812 = vld [vmem:[%s1802 + $0x48] sm:$0xff]
  %v1813 = vld [vmem:[%s1802 + $0x50] sm:$0xff]
  %v1814 = vld [vmem:[%s1802 + $0x58] sm:$0xff]
  %v1815 = vld [vmem:[%s1802 + $0x60] sm:$0xff]
  %v1816 = vld [vmem:[%s1802 + $0x68] sm:$0xff]
  %v1817 = vld [vmem:[%s1802 + $0x70] sm:$0xff]
  %v1818 = vld [vmem:[%s1802 + $0x78] sm:$0xff]
  %v1819 = vld [vmem:[%s1802 + $0x80] sm:$0xff]
  %v1820 = vld [vmem:[%s1802 + $0x88] sm:$0xff]
  %v1821 = vld [vmem:[%s1802 + $0x90] sm:$0xff]
  %v1822 = vld [vmem:[%s1802 + $0x98] sm:$0xff]
  %v1823 = vld [vmem:[%s1802 + $0xa0] sm:$0xff]
  %v1824 = vld [vmem:[%s1802 + $0xa8] sm:$0xff]
  %v1825 = vld [vmem:[%s1802 + $0xb0] sm:$0xff]
  %v1826 = vld [vmem:[%s1802 + $0xb8] sm:$0xff]
  %v1827 = vld [vmem:[%s1802 + $0xc0] sm:$0xff]
  %v1828 = vld [vmem:[%s1802 + $0xc8] sm:$0xff]
  %v1829 = vld [vmem:[%s1802 + $0xd0] sm:$0xff]
  %v1830 = vld [vmem:[%s1802 + $0xd8] sm:$0xff]
  %v1831 = vld [vmem:[%s1802 + $0xe0] sm:$0xff]
  %v1832 = vld [vmem:[%s1802 + $0xe8] sm:$0xff]
  %v1833 = vld [vmem:[%s1802 + $0xf0] sm:$0xff]
  %v1834 = vld [vmem:[%s1802 + $0xf8] sm:$0xff]
  %v1835 = vld [vmem:[%s1802 + $0x100] sm:$0xff]
  %v1836 = vld [vmem:[%s1802 + $0x108] sm:$0xff]
  %v1837 = vld [vmem:[%s1802 + $0x110] sm:$0xff]
  %v1838 = vld [vmem:[%s1802 + $0x118] sm:$0xff]
  %v1839 = vld [vmem:[%s1802 + $0x120] sm:$0xff]
  %v1840 = vld [vmem:[%s1802 + $0x128] sm:$0xff]
  %v1841 = vld [vmem:[%s1802 + $0x130] sm:$0xff]
  %v1842 = vld [vmem:[%s1802 + $0x138] sm:$0xff]
  %v1843 = vld [vmem:[%s1802 + $0x140] sm:$0xff]
  %v1844 = vld [vmem:[%s1802 + $0x148] sm:$0xff]
  %v1845 = vld [vmem:[%s1802 + $0x150] sm:$0xff]
  %v1846 = vld [vmem:[%s1802 + $0x158] sm:$0xff]
  %v1847 = vld [vmem:[%s1802 + $0x160] sm:$0xff]
  %v1848 = vld [vmem:[%s1802 + $0x168] sm:$0xff]
  %v1849 = vld [vmem:[%s1802 + $0x170] sm:$0xff]
  %v1850 = vld [vmem:[%s1802 + $0x178] sm:$0xff]
  %v1851 = vld [vmem:[%s1802 + $0x180] sm:$0xff]
  %v1852 = vld [vmem:[%s1802 + $0x188] sm:$0xff]
  %v1853 = vld [vmem:[%s1802 + $0x190] sm:$0xff]
  %v1854 = vld [vmem:[%s1802 + $0x198] sm:$0xff]
  %v1855 = vld [vmem:[%s1802 + $0x1a0] sm:$0xff]
  %v1856 = vld [vmem:[%s1802 + $0x1a8] sm:$0xff]
  %v1857 = vld [vmem:[%s1802 + $0x1b0] sm:$0xff]
  %v1858 = vld [vmem:[%s1802 + $0x1b8] sm:$0xff]
  %v1859 = vld [vmem:[%s1802 + $0x1c0] sm:$0xff]
  %v1860 = vld [vmem:[%s1802 + $0x1c8] sm:$0xff]
  %v1861 = vld [vmem:[%s1802 + $0x1d0] sm:$0xff]
  %v1862 = vld [vmem:[%s1802 + $0x1d8] sm:$0xff]
  %v1863 = vld [vmem:[%s1802 + $0x1e0] sm:$0xff]
  %v1864 = vld [vmem:[%s1802 + $0x1e8] sm:$0xff]
  %v1865 = vld [vmem:[%s1802 + $0x1f0] sm:$0xff]
  %v1866 = vld [vmem:[%s1802 + $0x1f8] sm:$0xff]
  %1867 = vmatprep.subr.mxu0 0.0
  %1868 = vmatpush1.msra.mxu0 %v1818
  %1869 = vmatprep.subr.mxu0 0.0
  %1870 = vmatpush1.msra.mxu0 %v1817
  %1871 = vmatprep.subr.mxu0 0.0
  %1872 = vmatpush1.msra.mxu0 %v1816
  %1873 = vmatprep.subr.mxu0 0.0
  %1874 = vmatpush1.msra.mxu0 %v1815
  %1875 = vmatprep.subr.mxu0 0.0
  %1876 = vmatpush1.msra.mxu0 %v1814
  %1877 = vmatprep.subr.mxu0 0.0
  %1878 = vmatpush1.msra.mxu0 %v1813
  %1879 = vmatprep.subr.mxu0 0.0
  %1880 = vmatpush1.msra.mxu0 %v1812
  %1881 = vmatprep.subr.mxu0 0.0
  %1882 = vmatpush1.msra.mxu0 %v1811
  %1883 = vmatprep.subr.mxu0 0.0
  %1884 = vmatpush1.msra.mxu0 %v1810
  %1885 = vmatprep.subr.mxu0 0.0
  %1886 = vmatpush1.msra.mxu0 %v1809
  %1887 = vmatprep.subr.mxu0 0.0
  %1888 = vmatpush1.msra.mxu0 %v1808
  %1889 = vmatprep.subr.mxu0 0.0
  %1890 = vmatpush1.msra.mxu0 %v1807
  %1891 = vmatprep.subr.mxu0 0.0
  %1892 = vmatpush1.msra.mxu0 %v1806
  %1893 = vmatprep.subr.mxu0 0.0
  %1894 = vmatpush1.msra.mxu0 %v1805
  %1895 = vmatprep.subr.mxu0 0.0
  %1896 = vmatpush1.msra.mxu0 %v1804
  %1897 = vmatprep.subr.mxu0 0.0
  %1898 = vmatpush1.msra.mxu0 %v1803
  %1899 = vmatprep.subr.mxu0 0.0
  %1900 = vmatpush2.msra.mxu0 %v1834
  %1901 = vmatprep.subr.mxu0 0.0
  %1902 = vmatpush2.msra.mxu0 %v1833
  %1903 = vmatprep.subr.mxu0 0.0
  %1904 = vmatpush2.msra.mxu0 %v1832
  %1905 = vmatprep.subr.mxu0 0.0
  %1906 = vmatpush2.msra.mxu0 %v1831
  %1907 = vmatprep.subr.mxu0 0.0
  %1908 = vmatpush2.msra.mxu0 %v1830
  %1909 = vmatprep.subr.mxu0 0.0
  %1910 = vmatpush2.msra.mxu0 %v1829
  %1911 = vmatprep.subr.mxu0 0.0
  %1912 = vmatpush2.msra.mxu0 %v1828
  %1913 = vmatprep.subr.mxu0 0.0
  %1914 = vmatpush2.msra.mxu0 %v1827
  %1915 = vmatprep.subr.mxu0 0.0
  %1916 = vmatpush2.msra.mxu0 %v1826
  %1917 = vmatprep.subr.mxu0 0.0
  %1918 = vmatpush2.msra.mxu0 %v1825
  %1919 = vmatprep.subr.mxu0 0.0
  %1920 = vmatpush2.msra.mxu0 %v1824
  %1921 = vmatprep.subr.mxu0 0.0
  %1922 = vmatpush2.msra.mxu0 %v1823
  %1923 = vmatprep.subr.mxu0 0.0
  %1924 = vmatpush2.msra.mxu0 %v1822
  %1925 = vmatprep.subr.mxu0 0.0
  %1926 = vmatpush2.msra.mxu0 %v1821
  %1927 = vmatprep.subr.mxu0 0.0
  %1928 = vmatpush2.msra.mxu0 %v1820
  %1929 = vmatprep.subr.mxu0 0.0
  %1930 = vmatpush2.msra.mxu0 %v1819
  %1931 = vmatprep.mubr.f32.mxu0 %v152
  %1932 = vmatmul.mubr.f32.gmra.mxu0 %v82
  %v1933 = vpop.f32.mrf.mxu0
  %v1934 = vadd.f32 0.0, %v1933
  %v1935 = vpop.f32.mrf.mxu0
  %1936 = vdwg.mxu0
  %1937 = vmatprep.subr.mxu0 0.0
  %1938 = vmatpush1.msra.mxu0 %v1850
  %1939 = vmatprep.subr.mxu0 0.0
  %1940 = vmatpush1.msra.mxu0 %v1849
  %1941 = vmatprep.subr.mxu0 0.0
  %1942 = vmatpush1.msra.mxu0 %v1848
  %1943 = vmatprep.subr.mxu0 0.0
  %1944 = vmatpush1.msra.mxu0 %v1847
  %1945 = vmatprep.subr.mxu0 0.0
  %1946 = vmatpush1.msra.mxu0 %v1846
  %1947 = vmatprep.subr.mxu0 0.0
  %1948 = vmatpush1.msra.mxu0 %v1845
  %1949 = vmatprep.subr.mxu0 0.0
  %1950 = vmatpush1.msra.mxu0 %v1844
  %1951 = vmatprep.subr.mxu0 0.0
  %1952 = vmatpush1.msra.mxu0 %v1843
  %1953 = vmatprep.subr.mxu0 0.0
  %1954 = vmatpush1.msra.mxu0 %v1842
  %1955 = vmatprep.subr.mxu0 0.0
  %1956 = vmatpush1.msra.mxu0 %v1841
  %1957 = vmatprep.subr.mxu0 0.0
  %1958 = vmatpush1.msra.mxu0 %v1840
  %1959 = vmatprep.subr.mxu0 0.0
  %1960 = vmatpush1.msra.mxu0 %v1839
  %1961 = vmatprep.subr.mxu0 0.0
  %1962 = vmatpush1.msra.mxu0 %v1838
  %1963 = vmatprep.subr.mxu0 0.0
  %1964 = vmatpush1.msra.mxu0 %v1837
  %1965 = vmatprep.subr.mxu0 0.0
  %1966 = vmatpush1.msra.mxu0 %v1836
  %1967 = vmatprep.subr.mxu0 0.0
  %1968 = vmatpush1.msra.mxu0 %v1835
  %1969 = vmatprep.subr.mxu0 0.0
  %1970 = vmatpush2.msra.mxu0 %v1866
  %1971 = vmatprep.subr.mxu0 0.0
  %1972 = vmatpush2.msra.mxu0 %v1865
  %1973 = vmatprep.subr.mxu0 0.0
  %1974 = vmatpush2.msra.mxu0 %v1864
  %1975 = vmatprep.subr.mxu0 0.0
  %1976 = vmatpush2.msra.mxu0 %v1863
  %1977 = vmatprep.subr.mxu0 0.0
  %1978 = vmatpush2.msra.mxu0 %v1862
  %1979 = vmatprep.subr.mxu0 0.0
  %1980 = vmatpush2.msra.mxu0 %v1861
  %1981 = vmatprep.subr.mxu0 0.0
  %1982 = vmatpush2.msra.mxu0 %v1860
  %1983 = vmatprep.subr.mxu0 0.0
  %1984 = vmatpush2.msra.mxu0 %v1859
  %1985 = vmatprep.subr.mxu0 0.0
  %1986 = vmatpush2.msra.mxu0 %v1858
  %1987 = vmatprep.subr.mxu0 0.0
  %1988 = vmatpush2.msra.mxu0 %v1857
  %1989 = vmatprep.subr.mxu0 0.0
  %1990 = vmatpush2.msra.mxu0 %v1856
  %1991 = vmatprep.subr.mxu0 0.0
  %1992 = vmatpush2.msra.mxu0 %v1855
  %1993 = vmatprep.subr.mxu0 0.0
  %1994 = vmatpush2.msra.mxu0 %v1854
  %1995 = vmatprep.subr.mxu0 0.0
  %1996 = vmatpush2.msra.mxu0 %v1853
  %1997 = vmatprep.subr.mxu0 0.0
  %1998 = vmatpush2.msra.mxu0 %v1852
  %1999 = vmatprep.subr.mxu0 0.0
  %2000 = vmatpush2.msra.mxu0 %v1851
  %2001 = vmatprep.mubr.f32.mxu0 %v153
  %2002 = vmatmul.mubr.f32.gmra.mxu0 %v83
  %v2003 = vpop.f32.mrf.mxu0
  %v2004 = vadd.f32 %v1934, %v2003
  %v2005 = vpop.f32.mrf.mxu0
  %2006 = vdwg.mxu0
  %v2008 = vsel %vm296, %v1801, 0
  %v2011 = vsel %vm300, %v2004, 0
  %2013 = vmatprep.subr.mxu0 0.0
  %2014 = vmatpush1.msra.mxu0 0.0
  %2015 = vmatprep.subr.mxu0 0.0
  %2016 = vmatpush1.msra.mxu0 0.0
  %2017 = vmatprep.subr.mxu0 0.0
  %2018 = vmatpush1.msra.mxu0 0.0
  %2019 = vmatprep.subr.mxu0 0.0
  %2020 = vmatpush1.msra.mxu0 0.0
  %2021 = vmatprep.subr.mxu0 0.0
  %2022 = vmatpush1.msra.mxu0 0.0
  %2023 = vmatprep.subr.mxu0 0.0
  %2024 = vmatpush1.msra.mxu0 0.0
  %2025 = vmatprep.subr.mxu0 0.0
  %2026 = vmatpush1.msra.mxu0 0.0
  %2027 = vmatprep.subr.mxu0 0.0
  %2028 = vmatpush1.msra.mxu0 0.0
  %2029 = vmatprep.subr.mxu0 0.0
  %2030 = vmatpush1.msra.mxu0 0.0
  %2031 = vmatprep.subr.mxu0 0.0
  %2032 = vmatpush1.msra.mxu0 0.0
  %2033 = vmatprep.subr.mxu0 0.0
  %2034 = vmatpush1.msra.mxu0 0.0
  %2035 = vmatprep.subr.mxu0 0.0
  %2036 = vmatpush1.msra.mxu0 0.0
  %2037 = vmatprep.subr.mxu0 0.0
  %2038 = vmatpush1.msra.mxu0 0.0
  %2039 = vmatprep.subr.mxu0 0.0
  %2040 = vmatpush1.msra.mxu0 0.0
  %2041 = vmatprep.subr.mxu0 0.0
  %2042 = vmatpush1.msra.mxu0 0.0
  %2043 = vmatprep.subr.mxu0 0.0
  %2044 = vmatpush1.msra.mxu0 %v2011
  %2045 = vmatprep.subr.mxu0 0.0
  %2046 = vmatpush2.msra.mxu0 0.0
  %2047 = vmatprep.subr.mxu0 0.0
  %2048 = vmatpush2.msra.mxu0 0.0
  %2049 = vmatprep.subr.mxu0 0.0
  %2050 = vmatpush2.msra.mxu0 0.0
  %2051 = vmatprep.subr.mxu0 0.0
  %2052 = vmatpush2.msra.mxu0 0.0
  %2053 = vmatprep.subr.mxu0 0.0
  %2054 = vmatpush2.msra.mxu0 0.0
  %2055 = vmatprep.subr.mxu0 0.0
  %2056 = vmatpush2.msra.mxu0 0.0
  %2057 = vmatprep.subr.mxu0 0.0
  %2058 = vmatpush2.msra.mxu0 0.0
  %2059 = vmatprep.subr.mxu0 0.0
  %2060 = vmatpush2.msra.mxu0 0.0
  %2061 = vmatprep.subr.mxu0 0.0
  %2062 = vmatpush2.msra.mxu0 0.0
  %2063 = vmatprep.subr.mxu0 0.0
  %2064 = vmatpush2.msra.mxu0 0.0
  %2065 = vmatprep.subr.mxu0 0.0
  %2066 = vmatpush2.msra.mxu0 0.0
  %2067 = vmatprep.subr.mxu0 0.0
  %2068 = vmatpush2.msra.mxu0 0.0
  %2069 = vmatprep.subr.mxu0 0.0
  %2070 = vmatpush2.msra.mxu0 0.0
  %2071 = vmatprep.subr.mxu0 0.0
  %2072 = vmatpush2.msra.mxu0 0.0
  %2073 = vmatprep.subr.mxu0 0.0
  %2074 = vmatpush2.msra.mxu0 0.0
  %2075 = vmatprep.subr.mxu0 0.0
  %2076 = vmatpush2.msra.mxu0 0.0
  %2077 = vmatprep.mubr.f32.mxu0 0.0
  %2078 = vmatmul.mubr.f32.gmra.mxu0 %v2008
  %v2079 = vpop.f32.mrf.mxu0
  %v2080 = vadd.f32 0.0, %v2079
  %v2081 = vpop.f32.mrf.mxu0
  %2082 = vdwg.mxu0
  %v2083 = vadd.f32 %v1799, %v2080
  %s2084 = scalar_lea.vmem %s3, 56
  %v2085 = vld [vmem:[%s2084] sm:$0xff]
  %s2086 = scalar_lea.vmem %s2, 3584
  %v2087 = vld [vmem:[%s2086] sm:$0xff]
  %v2088 = vld [vmem:[%s2086 + $0x8] sm:$0xff]
  %v2089 = vld [vmem:[%s2086 + $0x10] sm:$0xff]
  %v2090 = vld [vmem:[%s2086 + $0x18] sm:$0xff]
  %v2091 = vld [vmem:[%s2086 + $0x20] sm:$0xff]
  %v2092 = vld [vmem:[%s2086 + $0x28] sm:$0xff]
  %v2093 = vld [vmem:[%s2086 + $0x30] sm:$0xff]
  %v2094 = vld [vmem:[%s2086 + $0x38] sm:$0xff]
  %v2095 = vld [vmem:[%s2086 + $0x40] sm:$0xff]
  %v2096 = vld [vmem:[%s2086 + $0x48] sm:$0xff]
  %v2097 = vld [vmem:[%s2086 + $0x50] sm:$0xff]
  %v2098 = vld [vmem:[%s2086 + $0x58] sm:$0xff]
  %v2099 = vld [vmem:[%s2086 + $0x60] sm:$0xff]
  %v2100 = vld [vmem:[%s2086 + $0x68] sm:$0xff]
  %v2101 = vld [vmem:[%s2086 + $0x70] sm:$0xff]
  %v2102 = vld [vmem:[%s2086 + $0x78] sm:$0xff]
  %v2103 = vld [vmem:[%s2086 + $0x80] sm:$0xff]
  %v2104 = vld [vmem:[%s2086 + $0x88] sm:$0xff]
  %v2105 = vld [vmem:[%s2086 + $0x90] sm:$0xff]
  %v2106 = vld [vmem:[%s2086 + $0x98] sm:$0xff]
  %v2107 = vld [vmem:[%s2086 + $0xa0] sm:$0xff]
  %v2108 = vld [vmem:[%s2086 + $0xa8] sm:$0xff]
  %v2109 = vld [vmem:[%s2086 + $0xb0] sm:$0xff]
  %v2110 = vld [vmem:[%s2086 + $0xb8] sm:$0xff]
  %v2111 = vld [vmem:[%s2086 + $0xc0] sm:$0xff]
  %v2112 = vld [vmem:[%s2086 + $0xc8] sm:$0xff]
  %v2113 = vld [vmem:[%s2086 + $0xd0] sm:$0xff]
  %v2114 = vld [vmem:[%s2086 + $0xd8] sm:$0xff]
  %v2115 = vld [vmem:[%s2086 + $0xe0] sm:$0xff]
  %v2116 = vld [vmem:[%s2086 + $0xe8] sm:$0xff]
  %v2117 = vld [vmem:[%s2086 + $0xf0] sm:$0xff]
  %v2118 = vld [vmem:[%s2086 + $0xf8] sm:$0xff]
  %v2119 = vld [vmem:[%s2086 + $0x100] sm:$0xff]
  %v2120 = vld [vmem:[%s2086 + $0x108] sm:$0xff]
  %v2121 = vld [vmem:[%s2086 + $0x110] sm:$0xff]
  %v2122 = vld [vmem:[%s2086 + $0x118] sm:$0xff]
  %v2123 = vld [vmem:[%s2086 + $0x120] sm:$0xff]
  %v2124 = vld [vmem:[%s2086 + $0x128] sm:$0xff]
  %v2125 = vld [vmem:[%s2086 + $0x130] sm:$0xff]
  %v2126 = vld [vmem:[%s2086 + $0x138] sm:$0xff]
  %v2127 = vld [vmem:[%s2086 + $0x140] sm:$0xff]
  %v2128 = vld [vmem:[%s2086 + $0x148] sm:$0xff]
  %v2129 = vld [vmem:[%s2086 + $0x150] sm:$0xff]
  %v2130 = vld [vmem:[%s2086 + $0x158] sm:$0xff]
  %v2131 = vld [vmem:[%s2086 + $0x160] sm:$0xff]
  %v2132 = vld [vmem:[%s2086 + $0x168] sm:$0xff]
  %v2133 = vld [vmem:[%s2086 + $0x170] sm:$0xff]
  %v2134 = vld [vmem:[%s2086 + $0x178] sm:$0xff]
  %v2135 = vld [vmem:[%s2086 + $0x180] sm:$0xff]
  %v2136 = vld [vmem:[%s2086 + $0x188] sm:$0xff]
  %v2137 = vld [vmem:[%s2086 + $0x190] sm:$0xff]
  %v2138 = vld [vmem:[%s2086 + $0x198] sm:$0xff]
  %v2139 = vld [vmem:[%s2086 + $0x1a0] sm:$0xff]
  %v2140 = vld [vmem:[%s2086 + $0x1a8] sm:$0xff]
  %v2141 = vld [vmem:[%s2086 + $0x1b0] sm:$0xff]
  %v2142 = vld [vmem:[%s2086 + $0x1b8] sm:$0xff]
  %v2143 = vld [vmem:[%s2086 + $0x1c0] sm:$0xff]
  %v2144 = vld [vmem:[%s2086 + $0x1c8] sm:$0xff]
  %v2145 = vld [vmem:[%s2086 + $0x1d0] sm:$0xff]
  %v2146 = vld [vmem:[%s2086 + $0x1d8] sm:$0xff]
  %v2147 = vld [vmem:[%s2086 + $0x1e0] sm:$0xff]
  %v2148 = vld [vmem:[%s2086 + $0x1e8] sm:$0xff]
  %v2149 = vld [vmem:[%s2086 + $0x1f0] sm:$0xff]
  %v2150 = vld [vmem:[%s2086 + $0x1f8] sm:$0xff]
  %2151 = vmatprep.subr.mxu0 0.0
  %2152 = vmatpush1.msra.mxu0 %v2102
  %2153 = vmatprep.subr.mxu0 0.0
  %2154 = vmatpush1.msra.mxu0 %v2101
  %2155 = vmatprep.subr.mxu0 0.0
  %2156 = vmatpush1.msra.mxu0 %v2100
  %2157 = vmatprep.subr.mxu0 0.0
  %2158 = vmatpush1.msra.mxu0 %v2099
  %2159 = vmatprep.subr.mxu0 0.0
  %2160 = vmatpush1.msra.mxu0 %v2098
  %2161 = vmatprep.subr.mxu0 0.0
  %2162 = vmatpush1.msra.mxu0 %v2097
  %2163 = vmatprep.subr.mxu0 0.0
  %2164 = vmatpush1.msra.mxu0 %v2096
  %2165 = vmatprep.subr.mxu0 0.0
  %2166 = vmatpush1.msra.mxu0 %v2095
  %2167 = vmatprep.subr.mxu0 0.0
  %2168 = vmatpush1.msra.mxu0 %v2094
  %2169 = vmatprep.subr.mxu0 0.0
  %2170 = vmatpush1.msra.mxu0 %v2093
  %2171 = vmatprep.subr.mxu0 0.0
  %2172 = vmatpush1.msra.mxu0 %v2092
  %2173 = vmatprep.subr.mxu0 0.0
  %2174 = vmatpush1.msra.mxu0 %v2091
  %2175 = vmatprep.subr.mxu0 0.0
  %2176 = vmatpush1.msra.mxu0 %v2090
  %2177 = vmatprep.subr.mxu0 0.0
  %2178 = vmatpush1.msra.mxu0 %v2089
  %2179 = vmatprep.subr.mxu0 0.0
  %2180 = vmatpush1.msra.mxu0 %v2088
  %2181 = vmatprep.subr.mxu0 0.0
  %2182 = vmatpush1.msra.mxu0 %v2087
  %2183 = vmatprep.subr.mxu0 0.0
  %2184 = vmatpush2.msra.mxu0 %v2118
  %2185 = vmatprep.subr.mxu0 0.0
  %2186 = vmatpush2.msra.mxu0 %v2117
  %2187 = vmatprep.subr.mxu0 0.0
  %2188 = vmatpush2.msra.mxu0 %v2116
  %2189 = vmatprep.subr.mxu0 0.0
  %2190 = vmatpush2.msra.mxu0 %v2115
  %2191 = vmatprep.subr.mxu0 0.0
  %2192 = vmatpush2.msra.mxu0 %v2114
  %2193 = vmatprep.subr.mxu0 0.0
  %2194 = vmatpush2.msra.mxu0 %v2113
  %2195 = vmatprep.subr.mxu0 0.0
  %2196 = vmatpush2.msra.mxu0 %v2112
  %2197 = vmatprep.subr.mxu0 0.0
  %2198 = vmatpush2.msra.mxu0 %v2111
  %2199 = vmatprep.subr.mxu0 0.0
  %2200 = vmatpush2.msra.mxu0 %v2110
  %2201 = vmatprep.subr.mxu0 0.0
  %2202 = vmatpush2.msra.mxu0 %v2109
  %2203 = vmatprep.subr.mxu0 0.0
  %2204 = vmatpush2.msra.mxu0 %v2108
  %2205 = vmatprep.subr.mxu0 0.0
  %2206 = vmatpush2.msra.mxu0 %v2107
  %2207 = vmatprep.subr.mxu0 0.0
  %2208 = vmatpush2.msra.mxu0 %v2106
  %2209 = vmatprep.subr.mxu0 0.0
  %2210 = vmatpush2.msra.mxu0 %v2105
  %2211 = vmatprep.subr.mxu0 0.0
  %2212 = vmatpush2.msra.mxu0 %v2104
  %2213 = vmatprep.subr.mxu0 0.0
  %2214 = vmatpush2.msra.mxu0 %v2103
  %2215 = vmatprep.mubr.f32.mxu0 %v152
  %2216 = vmatmul.mubr.f32.gmra.mxu0 %v82
  %v2217 = vpop.f32.mrf.mxu0
  %v2218 = vadd.f32 0.0, %v2217
  %v2219 = vpop.f32.mrf.mxu0
  %2220 = vdwg.mxu0
  %2221 = vmatprep.subr.mxu0 0.0
  %2222 = vmatpush1.msra.mxu0 %v2134
  %2223 = vmatprep.subr.mxu0 0.0
  %2224 = vmatpush1.msra.mxu0 %v2133
  %2225 = vmatprep.subr.mxu0 0.0
  %2226 = vmatpush1.msra.mxu0 %v2132
  %2227 = vmatprep.subr.mxu0 0.0
  %2228 = vmatpush1.msra.mxu0 %v2131
  %2229 = vmatprep.subr.mxu0 0.0
  %2230 = vmatpush1.msra.mxu0 %v2130
  %2231 = vmatprep.subr.mxu0 0.0
  %2232 = vmatpush1.msra.mxu0 %v2129
  %2233 = vmatprep.subr.mxu0 0.0
  %2234 = vmatpush1.msra.mxu0 %v2128
  %2235 = vmatprep.subr.mxu0 0.0
  %2236 = vmatpush1.msra.mxu0 %v2127
  %2237 = vmatprep.subr.mxu0 0.0
  %2238 = vmatpush1.msra.mxu0 %v2126
  %2239 = vmatprep.subr.mxu0 0.0
  %2240 = vmatpush1.msra.mxu0 %v2125
  %2241 = vmatprep.subr.mxu0 0.0
  %2242 = vmatpush1.msra.mxu0 %v2124
  %2243 = vmatprep.subr.mxu0 0.0
  %2244 = vmatpush1.msra.mxu0 %v2123
  %2245 = vmatprep.subr.mxu0 0.0
  %2246 = vmatpush1.msra.mxu0 %v2122
  %2247 = vmatprep.subr.mxu0 0.0
  %2248 = vmatpush1.msra.mxu0 %v2121
  %2249 = vmatprep.subr.mxu0 0.0
  %2250 = vmatpush1.msra.mxu0 %v2120
  %2251 = vmatprep.subr.mxu0 0.0
  %2252 = vmatpush1.msra.mxu0 %v2119
  %2253 = vmatprep.subr.mxu0 0.0
  %2254 = vmatpush2.msra.mxu0 %v2150
  %2255 = vmatprep.subr.mxu0 0.0
  %2256 = vmatpush2.msra.mxu0 %v2149
  %2257 = vmatprep.subr.mxu0 0.0
  %2258 = vmatpush2.msra.mxu0 %v2148
  %2259 = vmatprep.subr.mxu0 0.0
  %2260 = vmatpush2.msra.mxu0 %v2147
  %2261 = vmatprep.subr.mxu0 0.0
  %2262 = vmatpush2.msra.mxu0 %v2146
  %2263 = vmatprep.subr.mxu0 0.0
  %2264 = vmatpush2.msra.mxu0 %v2145
  %2265 = vmatprep.subr.mxu0 0.0
  %2266 = vmatpush2.msra.mxu0 %v2144
  %2267 = vmatprep.subr.mxu0 0.0
  %2268 = vmatpush2.msra.mxu0 %v2143
  %2269 = vmatprep.subr.mxu0 0.0
  %2270 = vmatpush2.msra.mxu0 %v2142
  %2271 = vmatprep.subr.mxu0 0.0
  %2272 = vmatpush2.msra.mxu0 %v2141
  %2273 = vmatprep.subr.mxu0 0.0
  %2274 = vmatpush2.msra.mxu0 %v2140
  %2275 = vmatprep.subr.mxu0 0.0
  %2276 = vmatpush2.msra.mxu0 %v2139
  %2277 = vmatprep.subr.mxu0 0.0
  %2278 = vmatpush2.msra.mxu0 %v2138
  %2279 = vmatprep.subr.mxu0 0.0
  %2280 = vmatpush2.msra.mxu0 %v2137
  %2281 = vmatprep.subr.mxu0 0.0
  %2282 = vmatpush2.msra.mxu0 %v2136
  %2283 = vmatprep.subr.mxu0 0.0
  %2284 = vmatpush2.msra.mxu0 %v2135
  %2285 = vmatprep.mubr.f32.mxu0 %v153
  %2286 = vmatmul.mubr.f32.gmra.mxu0 %v83
  %v2287 = vpop.f32.mrf.mxu0
  %v2288 = vadd.f32 %v2218, %v2287
  %v2289 = vpop.f32.mrf.mxu0
  %2290 = vdwg.mxu0
  %v2292 = vsel %vm296, %v2085, 0
  %v2295 = vsel %vm300, %v2288, 0
  %2297 = vmatprep.subr.mxu0 0.0
  %2298 = vmatpush1.msra.mxu0 0.0
  %2299 = vmatprep.subr.mxu0 0.0
  %2300 = vmatpush1.msra.mxu0 0.0
  %2301 = vmatprep.subr.mxu0 0.0
  %2302 = vmatpush1.msra.mxu0 0.0
  %2303 = vmatprep.subr.mxu0 0.0
  %2304 = vmatpush1.msra.mxu0 0.0
  %2305 = vmatprep.subr.mxu0 0.0
  %2306 = vmatpush1.msra.mxu0 0.0
  %2307 = vmatprep.subr.mxu0 0.0
  %2308 = vmatpush1.msra.mxu0 0.0
  %2309 = vmatprep.subr.mxu0 0.0
  %2310 = vmatpush1.msra.mxu0 0.0
  %2311 = vmatprep.subr.mxu0 0.0
  %2312 = vmatpush1.msra.mxu0 0.0
  %2313 = vmatprep.subr.mxu0 0.0
  %2314 = vmatpush1.msra.mxu0 0.0
  %2315 = vmatprep.subr.mxu0 0.0
  %2316 = vmatpush1.msra.mxu0 0.0
  %2317 = vmatprep.subr.mxu0 0.0
  %2318 = vmatpush1.msra.mxu0 0.0
  %2319 = vmatprep.subr.mxu0 0.0
  %2320 = vmatpush1.msra.mxu0 0.0
  %2321 = vmatprep.subr.mxu0 0.0
  %2322 = vmatpush1.msra.mxu0 0.0
  %2323 = vmatprep.subr.mxu0 0.0
  %2324 = vmatpush1.msra.mxu0 0.0
  %2325 = vmatprep.subr.mxu0 0.0
  %2326 = vmatpush1.msra.mxu0 0.0
  %2327 = vmatprep.subr.mxu0 0.0
  %2328 = vmatpush1.msra.mxu0 %v2295
  %2329 = vmatprep.subr.mxu0 0.0
  %2330 = vmatpush2.msra.mxu0 0.0
  %2331 = vmatprep.subr.mxu0 0.0
  %2332 = vmatpush2.msra.mxu0 0.0
  %2333 = vmatprep.subr.mxu0 0.0
  %2334 = vmatpush2.msra.mxu0 0.0
  %2335 = vmatprep.subr.mxu0 0.0
  %2336 = vmatpush2.msra.mxu0 0.0
  %2337 = vmatprep.subr.mxu0 0.0
  %2338 = vmatpush2.msra.mxu0 0.0
  %2339 = vmatprep.subr.mxu0 0.0
  %2340 = vmatpush2.msra.mxu0 0.0
  %2341 = vmatprep.subr.mxu0 0.0
  %2342 = vmatpush2.msra.mxu0 0.0
  %2343 = vmatprep.subr.mxu0 0.0
  %2344 = vmatpush2.msra.mxu0 0.0
  %2345 = vmatprep.subr.mxu0 0.0
  %2346 = vmatpush2.msra.mxu0 0.0
  %2347 = vmatprep.subr.mxu0 0.0
  %2348 = vmatpush2.msra.mxu0 0.0
  %2349 = vmatprep.subr.mxu0 0.0
  %2350 = vmatpush2.msra.mxu0 0.0
  %2351 = vmatprep.subr.mxu0 0.0
  %2352 = vmatpush2.msra.mxu0 0.0
  %2353 = vmatprep.subr.mxu0 0.0
  %2354 = vmatpush2.msra.mxu0 0.0
  %2355 = vmatprep.subr.mxu0 0.0
  %2356 = vmatpush2.msra.mxu0 0.0
  %2357 = vmatprep.subr.mxu0 0.0
  %2358 = vmatpush2.msra.mxu0 0.0
  %2359 = vmatprep.subr.mxu0 0.0
  %2360 = vmatpush2.msra.mxu0 0.0
  %2361 = vmatprep.mubr.f32.mxu0 0.0
  %2362 = vmatmul.mubr.f32.gmra.mxu0 %v2292
  %v2363 = vpop.f32.mrf.mxu0
  %v2364 = vadd.f32 0.0, %v2363
  %v2365 = vpop.f32.mrf.mxu0
  %2366 = vdwg.mxu0
  %v2367 = vadd.f32 %v2083, %v2364
  %s2368 = scalar_lea.vmem %s3, 64
  %v2369 = vld [vmem:[%s2368] sm:$0xff]
  %s2370 = scalar_lea.vmem %s2, 4096
  %v2371 = vld [vmem:[%s2370] sm:$0xff]
  %v2372 = vld [vmem:[%s2370 + $0x8] sm:$0xff]
  %v2373 = vld [vmem:[%s2370 + $0x10] sm:$0xff]
  %v2374 = vld [vmem:[%s2370 + $0x18] sm:$0xff]
  %v2375 = vld [vmem:[%s2370 + $0x20] sm:$0xff]
  %v2376 = vld [vmem:[%s2370 + $0x28] sm:$0xff]
  %v2377 = vld [vmem:[%s2370 + $0x30] sm:$0xff]
  %v2378 = vld [vmem:[%s2370 + $0x38] sm:$0xff]
  %v2379 = vld [vmem:[%s2370 + $0x40] sm:$0xff]
  %v2380 = vld [vmem:[%s2370 + $0x48] sm:$0xff]
  %v2381 = vld [vmem:[%s2370 + $0x50] sm:$0xff]
  %v2382 = vld [vmem:[%s2370 + $0x58] sm:$0xff]
  %v2383 = vld [vmem:[%s2370 + $0x60] sm:$0xff]
  %v2384 = vld [vmem:[%s2370 + $0x68] sm:$0xff]
  %v2385 = vld [vmem:[%s2370 + $0x70] sm:$0xff]
  %v2386 = vld [vmem:[%s2370 + $0x78] sm:$0xff]
  %v2387 = vld [vmem:[%s2370 + $0x80] sm:$0xff]
  %v2388 = vld [vmem:[%s2370 + $0x88] sm:$0xff]
  %v2389 = vld [vmem:[%s2370 + $0x90] sm:$0xff]
  %v2390 = vld [vmem:[%s2370 + $0x98] sm:$0xff]
  %v2391 = vld [vmem:[%s2370 + $0xa0] sm:$0xff]
  %v2392 = vld [vmem:[%s2370 + $0xa8] sm:$0xff]
  %v2393 = vld [vmem:[%s2370 + $0xb0] sm:$0xff]
  %v2394 = vld [vmem:[%s2370 + $0xb8] sm:$0xff]
  %v2395 = vld [vmem:[%s2370 + $0xc0] sm:$0xff]
  %v2396 = vld [vmem:[%s2370 + $0xc8] sm:$0xff]
  %v2397 = vld [vmem:[%s2370 + $0xd0] sm:$0xff]
  %v2398 = vld [vmem:[%s2370 + $0xd8] sm:$0xff]
  %v2399 = vld [vmem:[%s2370 + $0xe0] sm:$0xff]
  %v2400 = vld [vmem:[%s2370 + $0xe8] sm:$0xff]
  %v2401 = vld [vmem:[%s2370 + $0xf0] sm:$0xff]
  %v2402 = vld [vmem:[%s2370 + $0xf8] sm:$0xff]
  %v2403 = vld [vmem:[%s2370 + $0x100] sm:$0xff]
  %v2404 = vld [vmem:[%s2370 + $0x108] sm:$0xff]
  %v2405 = vld [vmem:[%s2370 + $0x110] sm:$0xff]
  %v2406 = vld [vmem:[%s2370 + $0x118] sm:$0xff]
  %v2407 = vld [vmem:[%s2370 + $0x120] sm:$0xff]
  %v2408 = vld [vmem:[%s2370 + $0x128] sm:$0xff]
  %v2409 = vld [vmem:[%s2370 + $0x130] sm:$0xff]
  %v2410 = vld [vmem:[%s2370 + $0x138] sm:$0xff]
  %v2411 = vld [vmem:[%s2370 + $0x140] sm:$0xff]
  %v2412 = vld [vmem:[%s2370 + $0x148] sm:$0xff]
  %v2413 = vld [vmem:[%s2370 + $0x150] sm:$0xff]
  %v2414 = vld [vmem:[%s2370 + $0x158] sm:$0xff]
  %v2415 = vld [vmem:[%s2370 + $0x160] sm:$0xff]
  %v2416 = vld [vmem:[%s2370 + $0x168] sm:$0xff]
  %v2417 = vld [vmem:[%s2370 + $0x170] sm:$0xff]
  %v2418 = vld [vmem:[%s2370 + $0x178] sm:$0xff]
  %v2419 = vld [vmem:[%s2370 + $0x180] sm:$0xff]
  %v2420 = vld [vmem:[%s2370 + $0x188] sm:$0xff]
  %v2421 = vld [vmem:[%s2370 + $0x190] sm:$0xff]
  %v2422 = vld [vmem:[%s2370 + $0x198] sm:$0xff]
  %v2423 = vld [vmem:[%s2370 + $0x1a0] sm:$0xff]
  %v2424 = vld [vmem:[%s2370 + $0x1a8] sm:$0xff]
  %v2425 = vld [vmem:[%s2370 + $0x1b0] sm:$0xff]
  %v2426 = vld [vmem:[%s2370 + $0x1b8] sm:$0xff]
  %v2427 = vld [vmem:[%s2370 + $0x1c0] sm:$0xff]
  %v2428 = vld [vmem:[%s2370 + $0x1c8] sm:$0xff]
  %v2429 = vld [vmem:[%s2370 + $0x1d0] sm:$0xff]
  %v2430 = vld [vmem:[%s2370 + $0x1d8] sm:$0xff]
  %v2431 = vld [vmem:[%s2370 + $0x1e0] sm:$0xff]
  %v2432 = vld [vmem:[%s2370 + $0x1e8] sm:$0xff]
  %v2433 = vld [vmem:[%s2370 + $0x1f0] sm:$0xff]
  %v2434 = vld [vmem:[%s2370 + $0x1f8] sm:$0xff]
  %2435 = vmatprep.subr.mxu0 0.0
  %2436 = vmatpush1.msra.mxu0 %v2386
  %2437 = vmatprep.subr.mxu0 0.0
  %2438 = vmatpush1.msra.mxu0 %v2385
  %2439 = vmatprep.subr.mxu0 0.0
  %2440 = vmatpush1.msra.mxu0 %v2384
  %2441 = vmatprep.subr.mxu0 0.0
  %2442 = vmatpush1.msra.mxu0 %v2383
  %2443 = vmatprep.subr.mxu0 0.0
  %2444 = vmatpush1.msra.mxu0 %v2382
  %2445 = vmatprep.subr.mxu0 0.0
  %2446 = vmatpush1.msra.mxu0 %v2381
  %2447 = vmatprep.subr.mxu0 0.0
  %2448 = vmatpush1.msra.mxu0 %v2380
  %2449 = vmatprep.subr.mxu0 0.0
  %2450 = vmatpush1.msra.mxu0 %v2379
  %2451 = vmatprep.subr.mxu0 0.0
  %2452 = vmatpush1.msra.mxu0 %v2378
  %2453 = vmatprep.subr.mxu0 0.0
  %2454 = vmatpush1.msra.mxu0 %v2377
  %2455 = vmatprep.subr.mxu0 0.0
  %2456 = vmatpush1.msra.mxu0 %v2376
  %2457 = vmatprep.subr.mxu0 0.0
  %2458 = vmatpush1.msra.mxu0 %v2375
  %2459 = vmatprep.subr.mxu0 0.0
  %2460 = vmatpush1.msra.mxu0 %v2374
  %2461 = vmatprep.subr.mxu0 0.0
  %2462 = vmatpush1.msra.mxu0 %v2373
  %2463 = vmatprep.subr.mxu0 0.0
  %2464 = vmatpush1.msra.mxu0 %v2372
  %2465 = vmatprep.subr.mxu0 0.0
  %2466 = vmatpush1.msra.mxu0 %v2371
  %2467 = vmatprep.subr.mxu0 0.0
  %2468 = vmatpush2.msra.mxu0 %v2402
  %2469 = vmatprep.subr.mxu0 0.0
  %2470 = vmatpush2.msra.mxu0 %v2401
  %2471 = vmatprep.subr.mxu0 0.0
  %2472 = vmatpush2.msra.mxu0 %v2400
  %2473 = vmatprep.subr.mxu0 0.0
  %2474 = vmatpush2.msra.mxu0 %v2399
  %2475 = vmatprep.subr.mxu0 0.0
  %2476 = vmatpush2.msra.mxu0 %v2398
  %2477 = vmatprep.subr.mxu0 0.0
  %2478 = vmatpush2.msra.mxu0 %v2397
  %2479 = vmatprep.subr.mxu0 0.0
  %2480 = vmatpush2.msra.mxu0 %v2396
  %2481 = vmatprep.subr.mxu0 0.0
  %2482 = vmatpush2.msra.mxu0 %v2395
  %2483 = vmatprep.subr.mxu0 0.0
  %2484 = vmatpush2.msra.mxu0 %v2394
  %2485 = vmatprep.subr.mxu0 0.0
  %2486 = vmatpush2.msra.mxu0 %v2393
  %2487 = vmatprep.subr.mxu0 0.0
  %2488 = vmatpush2.msra.mxu0 %v2392
  %2489 = vmatprep.subr.mxu0 0.0
  %2490 = vmatpush2.msra.mxu0 %v2391
  %2491 = vmatprep.subr.mxu0 0.0
  %2492 = vmatpush2.msra.mxu0 %v2390
  %2493 = vmatprep.subr.mxu0 0.0
  %2494 = vmatpush2.msra.mxu0 %v2389
  %2495 = vmatprep.subr.mxu0 0.0
  %2496 = vmatpush2.msra.mxu0 %v2388
  %2497 = vmatprep.subr.mxu0 0.0
  %2498 = vmatpush2.msra.mxu0 %v2387
  %2499 = vmatprep.mubr.f32.mxu0 %v152
  %2500 = vmatmul.mubr.f32.gmra.mxu0 %v82
  %v2501 = vpop.f32.mrf.mxu0
  %v2502 = vadd.f32 0.0, %v2501
  %v2503 = vpop.f32.mrf.mxu0
  %2504 = vdwg.mxu0
  %2505 = vmatprep.subr.mxu0 0.0
  %2506 = vmatpush1.msra.mxu0 %v2418
  %2507 = vmatprep.subr.mxu0 0.0
  %2508 = vmatpush1.msra.mxu0 %v2417
  %2509 = vmatprep.subr.mxu0 0.0
  %2510 = vmatpush1.msra.mxu0 %v2416
  %2511 = vmatprep.subr.mxu0 0.0
  %2512 = vmatpush1.msra.mxu0 %v2415
  %2513 = vmatprep.subr.mxu0 0.0
  %2514 = vmatpush1.msra.mxu0 %v2414
  %2515 = vmatprep.subr.mxu0 0.0
  %2516 = vmatpush1.msra.mxu0 %v2413
  %2517 = vmatprep.subr.mxu0 0.0
  %2518 = vmatpush1.msra.mxu0 %v2412
  %2519 = vmatprep.subr.mxu0 0.0
  %2520 = vmatpush1.msra.mxu0 %v2411
  %2521 = vmatprep.subr.mxu0 0.0
  %2522 = vmatpush1.msra.mxu0 %v2410
  %2523 = vmatprep.subr.mxu0 0.0
  %2524 = vmatpush1.msra.mxu0 %v2409
  %2525 = vmatprep.subr.mxu0 0.0
  %2526 = vmatpush1.msra.mxu0 %v2408
  %2527 = vmatprep.subr.mxu0 0.0
  %2528 = vmatpush1.msra.mxu0 %v2407
  %2529 = vmatprep.subr.mxu0 0.0
  %2530 = vmatpush1.msra.mxu0 %v2406
  %2531 = vmatprep.subr.mxu0 0.0
  %2532 = vmatpush1.msra.mxu0 %v2405
  %2533 = vmatprep.subr.mxu0 0.0
  %2534 = vmatpush1.msra.mxu0 %v2404
  %2535 = vmatprep.subr.mxu0 0.0
  %2536 = vmatpush1.msra.mxu0 %v2403
  %2537 = vmatprep.subr.mxu0 0.0
  %2538 = vmatpush2.msra.mxu0 %v2434
  %2539 = vmatprep.subr.mxu0 0.0
  %2540 = vmatpush2.msra.mxu0 %v2433
  %2541 = vmatprep.subr.mxu0 0.0
  %2542 = vmatpush2.msra.mxu0 %v2432
  %2543 = vmatprep.subr.mxu0 0.0
  %2544 = vmatpush2.msra.mxu0 %v2431
  %2545 = vmatprep.subr.mxu0 0.0
  %2546 = vmatpush2.msra.mxu0 %v2430
  %2547 = vmatprep.subr.mxu0 0.0
  %2548 = vmatpush2.msra.mxu0 %v2429
  %2549 = vmatprep.subr.mxu0 0.0
  %2550 = vmatpush2.msra.mxu0 %v2428
  %2551 = vmatprep.subr.mxu0 0.0
  %2552 = vmatpush2.msra.mxu0 %v2427
  %2553 = vmatprep.subr.mxu0 0.0
  %2554 = vmatpush2.msra.mxu0 %v2426
  %2555 = vmatprep.subr.mxu0 0.0
  %2556 = vmatpush2.msra.mxu0 %v2425
  %2557 = vmatprep.subr.mxu0 0.0
  %2558 = vmatpush2.msra.mxu0 %v2424
  %2559 = vmatprep.subr.mxu0 0.0
  %2560 = vmatpush2.msra.mxu0 %v2423
  %2561 = vmatprep.subr.mxu0 0.0
  %2562 = vmatpush2.msra.mxu0 %v2422
  %2563 = vmatprep.subr.mxu0 0.0
  %2564 = vmatpush2.msra.mxu0 %v2421
  %2565 = vmatprep.subr.mxu0 0.0
  %2566 = vmatpush2.msra.mxu0 %v2420
  %2567 = vmatprep.subr.mxu0 0.0
  %2568 = vmatpush2.msra.mxu0 %v2419
  %2569 = vmatprep.mubr.f32.mxu0 %v153
  %2570 = vmatmul.mubr.f32.gmra.mxu0 %v83
  %v2571 = vpop.f32.mrf.mxu0
  %v2572 = vadd.f32 %v2502, %v2571
  %v2573 = vpop.f32.mrf.mxu0
  %2574 = vdwg.mxu0
  %v2576 = vsel %vm296, %v2369, 0
  %v2579 = vsel %vm300, %v2572, 0
  %2581 = vmatprep.subr.mxu0 0.0
  %2582 = vmatpush1.msra.mxu0 0.0
  %2583 = vmatprep.subr.mxu0 0.0
  %2584 = vmatpush1.msra.mxu0 0.0
  %2585 = vmatprep.subr.mxu0 0.0
  %2586 = vmatpush1.msra.mxu0 0.0
  %2587 = vmatprep.subr.mxu0 0.0
  %2588 = vmatpush1.msra.mxu0 0.0
  %2589 = vmatprep.subr.mxu0 0.0
  %2590 = vmatpush1.msra.mxu0 0.0
  %2591 = vmatprep.subr.mxu0 0.0
  %2592 = vmatpush1.msra.mxu0 0.0
  %2593 = vmatprep.subr.mxu0 0.0
  %2594 = vmatpush1.msra.mxu0 0.0
  %2595 = vmatprep.subr.mxu0 0.0
  %2596 = vmatpush1.msra.mxu0 0.0
  %2597 = vmatprep.subr.mxu0 0.0
  %2598 = vmatpush1.msra.mxu0 0.0
  %2599 = vmatprep.subr.mxu0 0.0
  %2600 = vmatpush1.msra.mxu0 0.0
  %2601 = vmatprep.subr.mxu0 0.0
  %2602 = vmatpush1.msra.mxu0 0.0
  %2603 = vmatprep.subr.mxu0 0.0
  %2604 = vmatpush1.msra.mxu0 0.0
  %2605 = vmatprep.subr.mxu0 0.0
  %2606 = vmatpush1.msra.mxu0 0.0
  %2607 = vmatprep.subr.mxu0 0.0
  %2608 = vmatpush1.msra.mxu0 0.0
  %2609 = vmatprep.subr.mxu0 0.0
  %2610 = vmatpush1.msra.mxu0 0.0
  %2611 = vmatprep.subr.mxu0 0.0
  %2612 = vmatpush1.msra.mxu0 %v2579
  %2613 = vmatprep.subr.mxu0 0.0
  %2614 = vmatpush2.msra.mxu0 0.0
  %2615 = vmatprep.subr.mxu0 0.0
  %2616 = vmatpush2.msra.mxu0 0.0
  %2617 = vmatprep.subr.mxu0 0.0
  %2618 = vmatpush2.msra.mxu0 0.0
  %2619 = vmatprep.subr.mxu0 0.0
  %2620 = vmatpush2.msra.mxu0 0.0
  %2621 = vmatprep.subr.mxu0 0.0
  %2622 = vmatpush2.msra.mxu0 0.0
  %2623 = vmatprep.subr.mxu0 0.0
  %2624 = vmatpush2.msra.mxu0 0.0
  %2625 = vmatprep.subr.mxu0 0.0
  %2626 = vmatpush2.msra.mxu0 0.0
  %2627 = vmatprep.subr.mxu0 0.0
  %2628 = vmatpush2.msra.mxu0 0.0
  %2629 = vmatprep.subr.mxu0 0.0
  %2630 = vmatpush2.msra.mxu0 0.0
  %2631 = vmatprep.subr.mxu0 0.0
  %2632 = vmatpush2.msra.mxu0 0.0
  %2633 = vmatprep.subr.mxu0 0.0
  %2634 = vmatpush2.msra.mxu0 0.0
  %2635 = vmatprep.subr.mxu0 0.0
  %2636 = vmatpush2.msra.mxu0 0.0
  %2637 = vmatprep.subr.mxu0 0.0
  %2638 = vmatpush2.msra.mxu0 0.0
  %2639 = vmatprep.subr.mxu0 0.0
  %2640 = vmatpush2.msra.mxu0 0.0
  %2641 = vmatprep.subr.mxu0 0.0
  %2642 = vmatpush2.msra.mxu0 0.0
  %2643 = vmatprep.subr.mxu0 0.0
  %2644 = vmatpush2.msra.mxu0 0.0
  %2645 = vmatprep.mubr.f32.mxu0 0.0
  %2646 = vmatmul.mubr.f32.gmra.mxu0 %v2576
  %v2647 = vpop.f32.mrf.mxu0
  %v2648 = vadd.f32 0.0, %v2647
  %v2649 = vpop.f32.mrf.mxu0
  %2650 = vdwg.mxu0
  %v2651 = vadd.f32 %v2367, %v2648
  %v2652 = vmul.f32 %v2651, 0.5
  %v2653 = vmul.f32 %v2651, 0.70710677
  %vm2654 = vcmp.ge.f32.partialorder %v2653, 0.0
  %v2655 = vsub.f32 0.0, %v2653
  %v2656 = vsel %vm2654, %v2653, %v2655
  %v2657 = vmul.f32 %v2656, 0.3275911
  %v2658 = vadd.f32 %v2657, 1.0
  %v2659 = vrcp.pop %v2658
  %v2660 = vmul.f32 1.0, %v2659
  %v2661 = vmul.f32 %v2660, 1.0614054
  %v2662 = vadd.f32 %v2661, -1.4531521
  %v2663 = vmul.f32 %v2662, %v2660
  %v2664 = vadd.f32 %v2663, 1.4214138
  %v2665 = vmul.f32 %v2664, %v2660
  %v2666 = vadd.f32 %v2665, -0.28449672
  %v2667 = vmul.f32 %v2666, %v2660
  %v2668 = vadd.f32 %v2667, 0.2548296
  %v2669 = vmul.f32 %v2668, %v2660
  %v2670 = vsub.f32 0.0, %v2656
  %v2671 = vmul.f32 %v2670, %v2656
  %v2672 = vmul.f32 %v2671, 1.442695
  %v2673 = vpow.pop %v2672
  %v2674 = vmul.f32 %v2669, %v2673
  %v2675 = vsub.f32 1.0, %v2674
  %v2676 = vsub.f32 0.0, %v2675
  %v2677 = vsel %vm2654, %v2675, %v2676
  %v2678 = vadd.f32 %v2677, 1.0
  %v2679 = vmul.f32 %v2652, %v2678
  %v2680 = vld [vmem:[%s5] sm:$0xff]
  %v2681 = vld [vmem:[%s5 + $0x8] sm:$0xff]
  %v2682 = vld [vmem:[%s5 + $0x10] sm:$0xff]
  %v2683 = vld [vmem:[%s5 + $0x18] sm:$0xff]
  %v2684 = vld [vmem:[%s5 + $0x20] sm:$0xff]
  %v2685 = vld [vmem:[%s5 + $0x28] sm:$0xff]
  %v2686 = vld [vmem:[%s5 + $0x30] sm:$0xff]
  %v2687 = vld [vmem:[%s5 + $0x38] sm:$0xff]
  %v2688 = vld [vmem:[%s5 + $0x40] sm:$0xff]
  %v2689 = vld [vmem:[%s5 + $0x48] sm:$0xff]
  %v2690 = vld [vmem:[%s5 + $0x50] sm:$0xff]
  %v2691 = vld [vmem:[%s5 + $0x58] sm:$0xff]
  %v2692 = vld [vmem:[%s5 + $0x60] sm:$0x3]
  %vm2693 = vcmask 801792
  %v2695 = vsel %vm2693, %v2679, 0
  %vm2697 = vcmask 1041408
  %v2699 = vsel %vm2697, %v2692, 0
  %2701 = vmatprep.subr.mxu0 0.0
  %2702 = vmatpush1.msra.mxu0 0.0
  %2703 = vmatprep.subr.mxu0 0.0
  %2704 = vmatpush1.msra.mxu0 0.0
  %2705 = vmatprep.subr.mxu0 0.0
  %2706 = vmatpush1.msra.mxu0 0.0
  %2707 = vmatprep.subr.mxu0 0.0
  %2708 = vmatpush1.msra.mxu0 %v2699
  %2709 = vmatprep.subr.mxu0 0.0
  %2710 = vmatpush1.msra.mxu0 %v2691
  %2711 = vmatprep.subr.mxu0 0.0
  %2712 = vmatpush1.msra.mxu0 %v2690
  %2713 = vmatprep.subr.mxu0 0.0
  %2714 = vmatpush1.msra.mxu0 %v2689
  %2715 = vmatprep.subr.mxu0 0.0
  %2716 = vmatpush1.msra.mxu0 %v2688
  %2717 = vmatprep.subr.mxu0 0.0
  %2718 = vmatpush1.msra.mxu0 %v2687
  %2719 = vmatprep.subr.mxu0 0.0
  %2720 = vmatpush1.msra.mxu0 %v2686
  %2721 = vmatprep.subr.mxu0 0.0
  %2722 = vmatpush1.msra.mxu0 %v2685
  %2723 = vmatprep.subr.mxu0 0.0
  %2724 = vmatpush1.msra.mxu0 %v2684
  %2725 = vmatprep.subr.mxu0 0.0
  %2726 = vmatpush1.msra.mxu0 %v2683
  %2727 = vmatprep.subr.mxu0 0.0
  %2728 = vmatpush1.msra.mxu0 %v2682
  %2729 = vmatprep.subr.mxu0 0.0
  %2730 = vmatpush1.msra.mxu0 %v2681
  %2731 = vmatprep.subr.mxu0 0.0
  %2732 = vmatpush1.msra.mxu0 %v2680
  %2733 = vmatprep.subr.mxu0 0.0
  %2734 = vmatpush2.msra.mxu0 0.0
  %2735 = vmatprep.subr.mxu0 0.0
  %2736 = vmatpush2.msra.mxu0 0.0
  %2737 = vmatprep.subr.mxu0 0.0
  %2738 = vmatpush2.msra.mxu0 0.0
  %2739 = vmatprep.subr.mxu0 0.0
  %2740 = vmatpush2.msra.mxu0 0.0
  %2741 = vmatprep.subr.mxu0 0.0
  %2742 = vmatpush2.msra.mxu0 0.0
  %2743 = vmatprep.subr.mxu0 0.0
  %2744 = vmatpush2.msra.mxu0 0.0
  %2745 = vmatprep.subr.mxu0 0.0
  %2746 = vmatpush2.msra.mxu0 0.0
  %2747 = vmatprep.subr.mxu0 0.0
  %2748 = vmatpush2.msra.mxu0 0.0
  %2749 = vmatprep.subr.mxu0 0.0
  %2750 = vmatpush2.msra.mxu0 0.0
  %2751 = vmatprep.subr.mxu0 0.0
  %2752 = vmatpush2.msra.mxu0 0.0
  %2753 = vmatprep.subr.mxu0 0.0
  %2754 = vmatpush2.msra.mxu0 0.0
  %2755 = vmatprep.subr.mxu0 0.0
  %2756 = vmatpush2.msra.mxu0 0.0
  %2757 = vmatprep.subr.mxu0 0.0
  %2758 = vmatpush2.msra.mxu0 0.0
  %2759 = vmatprep.subr.mxu0 0.0
  %2760 = vmatpush2.msra.mxu0 0.0
  %2761 = vmatprep.subr.mxu0 0.0
  %2762 = vmatpush2.msra.mxu0 0.0
  %2763 = vmatprep.subr.mxu0 0.0
  %2764 = vmatpush2.msra.mxu0 0.0
  %2765 = vmatprep.mubr.f32.mxu0 0.0
  %2766 = vmatmul.mubr.f32.gmra.mxu0 %v2695
  %v2767 = vpop.f32.mrf.mxu0
  %v2768 = vadd.f32 0.0, %v2767
  %v2769 = vpop.f32.mrf.mxu0
  %2770 = vdwg.mxu0
  %s2771 = scalar_lea.vmem %s5, 104
  %v2772 = vld [vmem:[%s2771] sm:$0xff]
  %v2773 = vld [vmem:[%s2771 + $0x8] sm:$0xff]
  %v2774 = vld [vmem:[%s2771 + $0x10] sm:$0xff]
  %v2775 = vld [vmem:[%s2771 + $0x18] sm:$0xff]
  %v2776 = vld [vmem:[%s2771 + $0x20] sm:$0xff]
  %v2777 = vld [vmem:[%s2771 + $0x28] sm:$0xff]
  %v2778 = vld [vmem:[%s2771 + $0x30] sm:$0xff]
  %v2779 = vld [vmem:[%s2771 + $0x38] sm:$0xff]
  %v2780 = vld [vmem:[%s2771 + $0x40] sm:$0xff]
  %v2781 = vld [vmem:[%s2771 + $0x48] sm:$0xff]
  %v2782 = vld [vmem:[%s2771 + $0x50] sm:$0xff]
  %v2783 = vld [vmem:[%s2771 + $0x58] sm:$0xff]
  %v2784 = vld [vmem:[%s2771 + $0x60] sm:$0x3]
  %v2786 = vsel %vm2697, %v2784, 0
  %2788 = vmatprep.subr.mxu0 0.0
  %2789 = vmatpush1.msra.mxu0 0.0
  %2790 = vmatprep.subr.mxu0 0.0
  %2791 = vmatpush1.msra.mxu0 0.0
  %2792 = vmatprep.subr.mxu0 0.0
  %2793 = vmatpush1.msra.mxu0 0.0
  %2794 = vmatprep.subr.mxu0 0.0
  %2795 = vmatpush1.msra.mxu0 %v2786
  %2796 = vmatprep.subr.mxu0 0.0
  %2797 = vmatpush1.msra.mxu0 %v2783
  %2798 = vmatprep.subr.mxu0 0.0
  %2799 = vmatpush1.msra.mxu0 %v2782
  %2800 = vmatprep.subr.mxu0 0.0
  %2801 = vmatpush1.msra.mxu0 %v2781
  %2802 = vmatprep.subr.mxu0 0.0
  %2803 = vmatpush1.msra.mxu0 %v2780
  %2804 = vmatprep.subr.mxu0 0.0
  %2805 = vmatpush1.msra.mxu0 %v2779
  %2806 = vmatprep.subr.mxu0 0.0
  %2807 = vmatpush1.msra.mxu0 %v2778
  %2808 = vmatprep.subr.mxu0 0.0
  %2809 = vmatpush1.msra.mxu0 %v2777
  %2810 = vmatprep.subr.mxu0 0.0
  %2811 = vmatpush1.msra.mxu0 %v2776
  %2812 = vmatprep.subr.mxu0 0.0
  %2813 = vmatpush1.msra.mxu0 %v2775
  %2814 = vmatprep.subr.mxu0 0.0
  %2815 = vmatpush1.msra.mxu0 %v2774
  %2816 = vmatprep.subr.mxu0 0.0
  %2817 = vmatpush1.msra.mxu0 %v2773
  %2818 = vmatprep.subr.mxu0 0.0
  %2819 = vmatpush1.msra.mxu0 %v2772
  %2820 = vmatprep.subr.mxu0 0.0
  %2821 = vmatpush2.msra.mxu0 0.0
  %2822 = vmatprep.subr.mxu0 0.0
  %2823 = vmatpush2.msra.mxu0 0.0
  %2824 = vmatprep.subr.mxu0 0.0
  %2825 = vmatpush2.msra.mxu0 0.0
  %2826 = vmatprep.subr.mxu0 0.0
  %2827 = vmatpush2.msra.mxu0 0.0
  %2828 = vmatprep.subr.mxu0 0.0
  %2829 = vmatpush2.msra.mxu0 0.0
  %2830 = vmatprep.subr.mxu0 0.0
  %2831 = vmatpush2.msra.mxu0 0.0
  %2832 = vmatprep.subr.mxu0 0.0
  %2833 = vmatpush2.msra.mxu0 0.0
  %2834 = vmatprep.subr.mxu0 0.0
  %2835 = vmatpush2.msra.mxu0 0.0
  %2836 = vmatprep.subr.mxu0 0.0
  %2837 = vmatpush2.msra.mxu0 0.0
  %2838 = vmatprep.subr.mxu0 0.0
  %2839 = vmatpush2.msra.mxu0 0.0
  %2840 = vmatprep.subr.mxu0 0.0
  %2841 = vmatpush2.msra.mxu0 0.0
  %2842 = vmatprep.subr.mxu0 0.0
  %2843 = vmatpush2.msra.mxu0 0.0
  %2844 = vmatprep.subr.mxu0 0.0
  %2845 = vmatpush2.msra.mxu0 0.0
  %2846 = vmatprep.subr.mxu0 0.0
  %2847 = vmatpush2.msra.mxu0 0.0
  %2848 = vmatprep.subr.mxu0 0.0
  %2849 = vmatpush2.msra.mxu0 0.0
  %2850 = vmatprep.subr.mxu0 0.0
  %2851 = vmatpush2.msra.mxu0 0.0
  %2852 = vmatprep.mubr.f32.mxu0 0.0
  %2853 = vmatmul.mubr.f32.gmra.mxu0 %v2695
  %v2854 = vpop.f32.mrf.mxu0
  %v2855 = vadd.f32 0.0, %v2854
  %v2856 = vpop.f32.mrf.mxu0
  %2857 = vdwg.mxu0
  %s2858 = scalar_lea.vmem %s5, 208
  %v2859 = vld [vmem:[%s2858] sm:$0xff]
  %v2860 = vld [vmem:[%s2858 + $0x8] sm:$0xff]
  %v2861 = vld [vmem:[%s2858 + $0x10] sm:$0xff]
  %v2862 = vld [vmem:[%s2858 + $0x18] sm:$0xff]
  %v2863 = vld [vmem:[%s2858 + $0x20] sm:$0xff]
  %v2864 = vld [vmem:[%s2858 + $0x28] sm:$0xff]
  %v2865 = vld [vmem:[%s2858 + $0x30] sm:$0xff]
  %v2866 = vld [vmem:[%s2858 + $0x38] sm:$0xff]
  %v2867 = vld [vmem:[%s2858 + $0x40] sm:$0xff]
  %v2868 = vld [vmem:[%s2858 + $0x48] sm:$0xff]
  %v2869 = vld [vmem:[%s2858 + $0x50] sm:$0xff]
  %v2870 = vld [vmem:[%s2858 + $0x58] sm:$0xff]
  %v2871 = vld [vmem:[%s2858 + $0x60] sm:$0x3]
  %v2873 = vsel %vm2697, %v2871, 0
  %2875 = vmatprep.subr.mxu0 0.0
  %2876 = vmatpush1.msra.mxu0 0.0
  %2877 = vmatprep.subr.mxu0 0.0
  %2878 = vmatpush1.msra.mxu0 0.0
  %2879 = vmatprep.subr.mxu0 0.0
  %2880 = vmatpush1.msra.mxu0 0.0
  %2881 = vmatprep.subr.mxu0 0.0
  %2882 = vmatpush1.msra.mxu0 %v2873
  %2883 = vmatprep.subr.mxu0 0.0
  %2884 = vmatpush1.msra.mxu0 %v2870
  %2885 = vmatprep.subr.mxu0 0.0
  %2886 = vmatpush1.msra.mxu0 %v2869
  %2887 = vmatprep.subr.mxu0 0.0
  %2888 = vmatpush1.msra.mxu0 %v2868
  %2889 = vmatprep.subr.mxu0 0.0
  %2890 = vmatpush1.msra.mxu0 %v2867
  %2891 = vmatprep.subr.mxu0 0.0
  %2892 = vmatpush1.msra.mxu0 %v2866
  %2893 = vmatprep.subr.mxu0 0.0
  %2894 = vmatpush1.msra.mxu0 %v2865
  %2895 = vmatprep.subr.mxu0 0.0
  %2896 = vmatpush1.msra.mxu0 %v2864
  %2897 = vmatprep.subr.mxu0 0.0
  %2898 = vmatpush1.msra.mxu0 %v2863
  %2899 = vmatprep.subr.mxu0 0.0
  %2900 = vmatpush1.msra.mxu0 %v2862
  %2901 = vmatprep.subr.mxu0 0.0
  %2902 = vmatpush1.msra.mxu0 %v2861
  %2903 = vmatprep.subr.mxu0 0.0
  %2904 = vmatpush1.msra.mxu0 %v2860
  %2905 = vmatprep.subr.mxu0 0.0
  %2906 = vmatpush1.msra.mxu0 %v2859
  %2907 = vmatprep.subr.mxu0 0.0
  %2908 = vmatpush2.msra.mxu0 0.0
  %2909 = vmatprep.subr.mxu0 0.0
  %2910 = vmatpush2.msra.mxu0 0.0
  %2911 = vmatprep.subr.mxu0 0.0
  %2912 = vmatpush2.msra.mxu0 0.0
  %2913 = vmatprep.subr.mxu0 0.0
  %2914 = vmatpush2.msra.mxu0 0.0
  %2915 = vmatprep.subr.mxu0 0.0
  %2916 = vmatpush2.msra.mxu0 0.0
  %2917 = vmatprep.subr.mxu0 0.0
  %2918 = vmatpush2.msra.mxu0 0.0
  %2919 = vmatprep.subr.mxu0 0.0
  %2920 = vmatpush2.msra.mxu0 0.0
  %2921 = vmatprep.subr.mxu0 0.0
  %2922 = vmatpush2.msra.mxu0 0.0
  %2923 = vmatprep.subr.mxu0 0.0
  %2924 = vmatpush2.msra.mxu0 0.0
  %2925 = vmatprep.subr.mxu0 0.0
  %2926 = vmatpush2.msra.mxu0 0.0
  %2927 = vmatprep.subr.mxu0 0.0
  %2928 = vmatpush2.msra.mxu0 0.0
  %2929 = vmatprep.subr.mxu0 0.0
  %2930 = vmatpush2.msra.mxu0 0.0
  %2931 = vmatprep.subr.mxu0 0.0
  %2932 = vmatpush2.msra.mxu0 0.0
  %2933 = vmatprep.subr.mxu0 0.0
  %2934 = vmatpush2.msra.mxu0 0.0
  %2935 = vmatprep.subr.mxu0 0.0
  %2936 = vmatpush2.msra.mxu0 0.0
  %2937 = vmatprep.subr.mxu0 0.0
  %2938 = vmatpush2.msra.mxu0 0.0
  %2939 = vmatprep.mubr.f32.mxu0 0.0
  %2940 = vmatmul.mubr.f32.gmra.mxu0 %v2695
  %v2941 = vpop.f32.mrf.mxu0
  %v2942 = vadd.f32 0.0, %v2941
  %v2943 = vpop.f32.mrf.mxu0
  %2944 = vdwg.mxu0
  %s2945 = scalar_lea.vmem %s5, 312
  %v2946 = vld [vmem:[%s2945] sm:$0xff]
  %v2947 = vld [vmem:[%s2945 + $0x8] sm:$0xff]
  %v2948 = vld [vmem:[%s2945 + $0x10] sm:$0xff]
  %v2949 = vld [vmem:[%s2945 + $0x18] sm:$0xff]
  %v2950 = vld [vmem:[%s2945 + $0x20] sm:$0xff]
  %v2951 = vld [vmem:[%s2945 + $0x28] sm:$0xff]
  %v2952 = vld [vmem:[%s2945 + $0x30] sm:$0xff]
  %v2953 = vld [vmem:[%s2945 + $0x38] sm:$0xff]
  %v2954 = vld [vmem:[%s2945 + $0x40] sm:$0xff]
  %v2955 = vld [vmem:[%s2945 + $0x48] sm:$0xff]
  %v2956 = vld [vmem:[%s2945 + $0x50] sm:$0xff]
  %v2957 = vld [vmem:[%s2945 + $0x58] sm:$0xff]
  %v2958 = vld [vmem:[%s2945 + $0x60] sm:$0x3]
  %v2960 = vsel %vm2697, %v2958, 0
  %2962 = vmatprep.subr.mxu0 0.0
  %2963 = vmatpush1.msra.mxu0 0.0
  %2964 = vmatprep.subr.mxu0 0.0
  %2965 = vmatpush1.msra.mxu0 0.0
  %2966 = vmatprep.subr.mxu0 0.0
  %2967 = vmatpush1.msra.mxu0 0.0
  %2968 = vmatprep.subr.mxu0 0.0
  %2969 = vmatpush1.msra.mxu0 %v2960
  %2970 = vmatprep.subr.mxu0 0.0
  %2971 = vmatpush1.msra.mxu0 %v2957
  %2972 = vmatprep.subr.mxu0 0.0
  %2973 = vmatpush1.msra.mxu0 %v2956
  %2974 = vmatprep.subr.mxu0 0.0
  %2975 = vmatpush1.msra.mxu0 %v2955
  %2976 = vmatprep.subr.mxu0 0.0
  %2977 = vmatpush1.msra.mxu0 %v2954
  %2978 = vmatprep.subr.mxu0 0.0
  %2979 = vmatpush1.msra.mxu0 %v2953
  %2980 = vmatprep.subr.mxu0 0.0
  %2981 = vmatpush1.msra.mxu0 %v2952
  %2982 = vmatprep.subr.mxu0 0.0
  %2983 = vmatpush1.msra.mxu0 %v2951
  %2984 = vmatprep.subr.mxu0 0.0
  %2985 = vmatpush1.msra.mxu0 %v2950
  %2986 = vmatprep.subr.mxu0 0.0
  %2987 = vmatpush1.msra.mxu0 %v2949
  %2988 = vmatprep.subr.mxu0 0.0
  %2989 = vmatpush1.msra.mxu0 %v2948
  %2990 = vmatprep.subr.mxu0 0.0
  %2991 = vmatpush1.msra.mxu0 %v2947
  %2992 = vmatprep.subr.mxu0 0.0
  %2993 = vmatpush1.msra.mxu0 %v2946
  %2994 = vmatprep.subr.mxu0 0.0
  %2995 = vmatpush2.msra.mxu0 0.0
  %2996 = vmatprep.subr.mxu0 0.0
  %2997 = vmatpush2.msra.mxu0 0.0
  %2998 = vmatprep.subr.mxu0 0.0
  %2999 = vmatpush2.msra.mxu0 0.0
  %3000 = vmatprep.subr.mxu0 0.0
  %3001 = vmatpush2.msra.mxu0 0.0
  %3002 = vmatprep.subr.mxu0 0.0
  %3003 = vmatpush2.msra.mxu0 0.0
  %3004 = vmatprep.subr.mxu0 0.0
  %3005 = vmatpush2.msra.mxu0 0.0
  %3006 = vmatprep.subr.mxu0 0.0
  %3007 = vmatpush2.msra.mxu0 0.0
  %3008 = vmatprep.subr.mxu0 0.0
  %3009 = vmatpush2.msra.mxu0 0.0
  %3010 = vmatprep.subr.mxu0 0.0
  %3011 = vmatpush2.msra.mxu0 0.0
  %3012 = vmatprep.subr.mxu0 0.0
  %3013 = vmatpush2.msra.mxu0 0.0
  %3014 = vmatprep.subr.mxu0 0.0
  %3015 = vmatpush2.msra.mxu0 0.0
  %3016 = vmatprep.subr.mxu0 0.0
  %3017 = vmatpush2.msra.mxu0 0.0
  %3018 = vmatprep.subr.mxu0 0.0
  %3019 = vmatpush2.msra.mxu0 0.0
  %3020 = vmatprep.subr.mxu0 0.0
  %3021 = vmatpush2.msra.mxu0 0.0
  %3022 = vmatprep.subr.mxu0 0.0
  %3023 = vmatpush2.msra.mxu0 0.0
  %3024 = vmatprep.subr.mxu0 0.0
  %3025 = vmatpush2.msra.mxu0 0.0
  %3026 = vmatprep.mubr.f32.mxu0 0.0
  %3027 = vmatmul.mubr.f32.gmra.mxu0 %v2695
  %v3028 = vpop.f32.mrf.mxu0
  %v3029 = vadd.f32 0.0, %v3028
  %v3030 = vpop.f32.mrf.mxu0
  %3031 = vdwg.mxu0
  %s3032 = scalar_lea.vmem %s5, 416
  %v3033 = vld [vmem:[%s3032] sm:$0xff]
  %v3034 = vld [vmem:[%s3032 + $0x8] sm:$0xff]
  %v3035 = vld [vmem:[%s3032 + $0x10] sm:$0xff]
  %v3036 = vld [vmem:[%s3032 + $0x18] sm:$0xff]
  %v3037 = vld [vmem:[%s3032 + $0x20] sm:$0xff]
  %v3038 = vld [vmem:[%s3032 + $0x28] sm:$0xff]
  %v3039 = vld [vmem:[%s3032 + $0x30] sm:$0xff]
  %v3040 = vld [vmem:[%s3032 + $0x38] sm:$0xff]
  %v3041 = vld [vmem:[%s3032 + $0x40] sm:$0xff]
  %v3042 = vld [vmem:[%s3032 + $0x48] sm:$0xff]
  %v3043 = vld [vmem:[%s3032 + $0x50] sm:$0xff]
  %v3044 = vld [vmem:[%s3032 + $0x58] sm:$0xff]
  %v3045 = vld [vmem:[%s3032 + $0x60] sm:$0x3]
  %v3047 = vsel %vm2697, %v3045, 0
  %3049 = vmatprep.subr.mxu0 0.0
  %3050 = vmatpush1.msra.mxu0 0.0
  %3051 = vmatprep.subr.mxu0 0.0
  %3052 = vmatpush1.msra.mxu0 0.0
  %3053 = vmatprep.subr.mxu0 0.0
  %3054 = vmatpush1.msra.mxu0 0.0
  %3055 = vmatprep.subr.mxu0 0.0
  %3056 = vmatpush1.msra.mxu0 %v3047
  %3057 = vmatprep.subr.mxu0 0.0
  %3058 = vmatpush1.msra.mxu0 %v3044
  %3059 = vmatprep.subr.mxu0 0.0
  %3060 = vmatpush1.msra.mxu0 %v3043
  %3061 = vmatprep.subr.mxu0 0.0
  %3062 = vmatpush1.msra.mxu0 %v3042
  %3063 = vmatprep.subr.mxu0 0.0
  %3064 = vmatpush1.msra.mxu0 %v3041
  %3065 = vmatprep.subr.mxu0 0.0
  %3066 = vmatpush1.msra.mxu0 %v3040
  %3067 = vmatprep.subr.mxu0 0.0
  %3068 = vmatpush1.msra.mxu0 %v3039
  %3069 = vmatprep.subr.mxu0 0.0
  %3070 = vmatpush1.msra.mxu0 %v3038
  %3071 = vmatprep.subr.mxu0 0.0
  %3072 = vmatpush1.msra.mxu0 %v3037
  %3073 = vmatprep.subr.mxu0 0.0
  %3074 = vmatpush1.msra.mxu0 %v3036
  %3075 = vmatprep.subr.mxu0 0.0
  %3076 = vmatpush1.msra.mxu0 %v3035
  %3077 = vmatprep.subr.mxu0 0.0
  %3078 = vmatpush1.msra.mxu0 %v3034
  %3079 = vmatprep.subr.mxu0 0.0
  %3080 = vmatpush1.msra.mxu0 %v3033
  %3081 = vmatprep.subr.mxu0 0.0
  %3082 = vmatpush2.msra.mxu0 0.0
  %3083 = vmatprep.subr.mxu0 0.0
  %3084 = vmatpush2.msra.mxu0 0.0
  %3085 = vmatprep.subr.mxu0 0.0
  %3086 = vmatpush2.msra.mxu0 0.0
  %3087 = vmatprep.subr.mxu0 0.0
  %3088 = vmatpush2.msra.mxu0 0.0
  %3089 = vmatprep.subr.mxu0 0.0
  %3090 = vmatpush2.msra.mxu0 0.0
  %3091 = vmatprep.subr.mxu0 0.0
  %3092 = vmatpush2.msra.mxu0 0.0
  %3093 = vmatprep.subr.mxu0 0.0
  %3094 = vmatpush2.msra.mxu0 0.0
  %3095 = vmatprep.subr.mxu0 0.0
  %3096 = vmatpush2.msra.mxu0 0.0
  %3097 = vmatprep.subr.mxu0 0.0
  %3098 = vmatpush2.msra.mxu0 0.0
  %3099 = vmatprep.subr.mxu0 0.0
  %3100 = vmatpush2.msra.mxu0 0.0
  %3101 = vmatprep.subr.mxu0 0.0
  %3102 = vmatpush2.msra.mxu0 0.0
  %3103 = vmatprep.subr.mxu0 0.0
  %3104 = vmatpush2.msra.mxu0 0.0
  %3105 = vmatprep.subr.mxu0 0.0
  %3106 = vmatpush2.msra.mxu0 0.0
  %3107 = vmatprep.subr.mxu0 0.0
  %3108 = vmatpush2.msra.mxu0 0.0
  %3109 = vmatprep.subr.mxu0 0.0
  %3110 = vmatpush2.msra.mxu0 0.0
  %3111 = vmatprep.subr.mxu0 0.0
  %3112 = vmatpush2.msra.mxu0 0.0
  %3113 = vmatprep.mubr.f32.mxu0 0.0
  %3114 = vmatmul.mubr.f32.gmra.mxu0 %v2695
  %v3115 = vpop.f32.mrf.mxu0
  %v3116 = vadd.f32 0.0, %v3115
  %v3117 = vpop.f32.mrf.mxu0
  %3118 = vdwg.mxu0
  %s3119 = scalar_lea.vmem %s5, 520
  %v3120 = vld [vmem:[%s3119] sm:$0xff]
  %v3121 = vld [vmem:[%s3119 + $0x8] sm:$0xff]
  %v3122 = vld [vmem:[%s3119 + $0x10] sm:$0xff]
  %v3123 = vld [vmem:[%s3119 + $0x18] sm:$0xff]
  %v3124 = vld [vmem:[%s3119 + $0x20] sm:$0xff]
  %v3125 = vld [vmem:[%s3119 + $0x28] sm:$0xff]
  %v3126 = vld [vmem:[%s3119 + $0x30] sm:$0xff]
  %v3127 = vld [vmem:[%s3119 + $0x38] sm:$0xff]
  %v3128 = vld [vmem:[%s3119 + $0x40] sm:$0xff]
  %v3129 = vld [vmem:[%s3119 + $0x48] sm:$0xff]
  %v3130 = vld [vmem:[%s3119 + $0x50] sm:$0xff]
  %v3131 = vld [vmem:[%s3119 + $0x58] sm:$0xff]
  %v3132 = vld [vmem:[%s3119 + $0x60] sm:$0x3]
  %v3134 = vsel %vm2697, %v3132, 0
  %3136 = vmatprep.subr.mxu0 0.0
  %3137 = vmatpush1.msra.mxu0 0.0
  %3138 = vmatprep.subr.mxu0 0.0
  %3139 = vmatpush1.msra.mxu0 0.0
  %3140 = vmatprep.subr.mxu0 0.0
  %3141 = vmatpush1.msra.mxu0 0.0
  %3142 = vmatprep.subr.mxu0 0.0
  %3143 = vmatpush1.msra.mxu0 %v3134
  %3144 = vmatprep.subr.mxu0 0.0
  %3145 = vmatpush1.msra.mxu0 %v3131
  %3146 = vmatprep.subr.mxu0 0.0
  %3147 = vmatpush1.msra.mxu0 %v3130
  %3148 = vmatprep.subr.mxu0 0.0
  %3149 = vmatpush1.msra.mxu0 %v3129
  %3150 = vmatprep.subr.mxu0 0.0
  %3151 = vmatpush1.msra.mxu0 %v3128
  %3152 = vmatprep.subr.mxu0 0.0
  %3153 = vmatpush1.msra.mxu0 %v3127
  %3154 = vmatprep.subr.mxu0 0.0
  %3155 = vmatpush1.msra.mxu0 %v3126
  %3156 = vmatprep.subr.mxu0 0.0
  %3157 = vmatpush1.msra.mxu0 %v3125
  %3158 = vmatprep.subr.mxu0 0.0
  %3159 = vmatpush1.msra.mxu0 %v3124
  %3160 = vmatprep.subr.mxu0 0.0
  %3161 = vmatpush1.msra.mxu0 %v3123
  %3162 = vmatprep.subr.mxu0 0.0
  %3163 = vmatpush1.msra.mxu0 %v3122
  %3164 = vmatprep.subr.mxu0 0.0
  %3165 = vmatpush1.msra.mxu0 %v3121
  %3166 = vmatprep.subr.mxu0 0.0
  %3167 = vmatpush1.msra.mxu0 %v3120
  %3168 = vmatprep.subr.mxu0 0.0
  %3169 = vmatpush2.msra.mxu0 0.0
  %3170 = vmatprep.subr.mxu0 0.0
  %3171 = vmatpush2.msra.mxu0 0.0
  %3172 = vmatprep.subr.mxu0 0.0
  %3173 = vmatpush2.msra.mxu0 0.0
  %3174 = vmatprep.subr.mxu0 0.0
  %3175 = vmatpush2.msra.mxu0 0.0
  %3176 = vmatprep.subr.mxu0 0.0
  %3177 = vmatpush2.msra.mxu0 0.0
  %3178 = vmatprep.subr.mxu0 0.0
  %3179 = vmatpush2.msra.mxu0 0.0
  %3180 = vmatprep.subr.mxu0 0.0
  %3181 = vmatpush2.msra.mxu0 0.0
  %3182 = vmatprep.subr.mxu0 0.0
  %3183 = vmatpush2.msra.mxu0 0.0
  %3184 = vmatprep.subr.mxu0 0.0
  %3185 = vmatpush2.msra.mxu0 0.0
  %3186 = vmatprep.subr.mxu0 0.0
  %3187 = vmatpush2.msra.mxu0 0.0
  %3188 = vmatprep.subr.mxu0 0.0
  %3189 = vmatpush2.msra.mxu0 0.0
  %3190 = vmatprep.subr.mxu0 0.0
  %3191 = vmatpush2.msra.mxu0 0.0
  %3192 = vmatprep.subr.mxu0 0.0
  %3193 = vmatpush2.msra.mxu0 0.0
  %3194 = vmatprep.subr.mxu0 0.0
  %3195 = vmatpush2.msra.mxu0 0.0
  %3196 = vmatprep.subr.mxu0 0.0
  %3197 = vmatpush2.msra.mxu0 0.0
  %3198 = vmatprep.subr.mxu0 0.0
  %3199 = vmatpush2.msra.mxu0 0.0
  %3200 = vmatprep.mubr.f32.mxu0 0.0
  %3201 = vmatmul.mubr.f32.gmra.mxu0 %v2695
  %v3202 = vpop.f32.mrf.mxu0
  %v3203 = vadd.f32 0.0, %v3202
  %v3204 = vpop.f32.mrf.mxu0
  %3205 = vdwg.mxu0
  %s3206 = scalar_lea.vmem %s5, 624
  %v3207 = vld [vmem:[%s3206] sm:$0xff]
  %v3208 = vld [vmem:[%s3206 + $0x8] sm:$0xff]
  %v3209 = vld [vmem:[%s3206 + $0x10] sm:$0xff]
  %v3210 = vld [vmem:[%s3206 + $0x18] sm:$0xff]
  %v3211 = vld [vmem:[%s3206 + $0x20] sm:$0xff]
  %v3212 = vld [vmem:[%s3206 + $0x28] sm:$0xff]
  %v3213 = vld [vmem:[%s3206 + $0x30] sm:$0xff]
  %v3214 = vld [vmem:[%s3206 + $0x38] sm:$0xff]
  %v3215 = vld [vmem:[%s3206 + $0x40] sm:$0xff]
  %v3216 = vld [vmem:[%s3206 + $0x48] sm:$0xff]
  %v3217 = vld [vmem:[%s3206 + $0x50] sm:$0xff]
  %v3218 = vld [vmem:[%s3206 + $0x58] sm:$0xff]
  %v3219 = vld [vmem:[%s3206 + $0x60] sm:$0x3]
  %v3221 = vsel %vm2697, %v3219, 0
  %3223 = vmatprep.subr.mxu0 0.0
  %3224 = vmatpush1.msra.mxu0 0.0
  %3225 = vmatprep.subr.mxu0 0.0
  %3226 = vmatpush1.msra.mxu0 0.0
  %3227 = vmatprep.subr.mxu0 0.0
  %3228 = vmatpush1.msra.mxu0 0.0
  %3229 = vmatprep.subr.mxu0 0.0
  %3230 = vmatpush1.msra.mxu0 %v3221
  %3231 = vmatprep.subr.mxu0 0.0
  %3232 = vmatpush1.msra.mxu0 %v3218
  %3233 = vmatprep.subr.mxu0 0.0
  %3234 = vmatpush1.msra.mxu0 %v3217
  %3235 = vmatprep.subr.mxu0 0.0
  %3236 = vmatpush1.msra.mxu0 %v3216
  %3237 = vmatprep.subr.mxu0 0.0
  %3238 = vmatpush1.msra.mxu0 %v3215
  %3239 = vmatprep.subr.mxu0 0.0
  %3240 = vmatpush1.msra.mxu0 %v3214
  %3241 = vmatprep.subr.mxu0 0.0
  %3242 = vmatpush1.msra.mxu0 %v3213
  %3243 = vmatprep.subr.mxu0 0.0
  %3244 = vmatpush1.msra.mxu0 %v3212
  %3245 = vmatprep.subr.mxu0 0.0
  %3246 = vmatpush1.msra.mxu0 %v3211
  %3247 = vmatprep.subr.mxu0 0.0
  %3248 = vmatpush1.msra.mxu0 %v3210
  %3249 = vmatprep.subr.mxu0 0.0
  %3250 = vmatpush1.msra.mxu0 %v3209
  %3251 = vmatprep.subr.mxu0 0.0
  %3252 = vmatpush1.msra.mxu0 %v3208
  %3253 = vmatprep.subr.mxu0 0.0
  %3254 = vmatpush1.msra.mxu0 %v3207
  %3255 = vmatprep.subr.mxu0 0.0
  %3256 = vmatpush2.msra.mxu0 0.0
  %3257 = vmatprep.subr.mxu0 0.0
  %3258 = vmatpush2.msra.mxu0 0.0
  %3259 = vmatprep.subr.mxu0 0.0
  %3260 = vmatpush2.msra.mxu0 0.0
  %3261 = vmatprep.subr.mxu0 0.0
  %3262 = vmatpush2.msra.mxu0 0.0
  %3263 = vmatprep.subr.mxu0 0.0
  %3264 = vmatpush2.msra.mxu0 0.0
  %3265 = vmatprep.subr.mxu0 0.0
  %3266 = vmatpush2.msra.mxu0 0.0
  %3267 = vmatprep.subr.mxu0 0.0
  %3268 = vmatpush2.msra.mxu0 0.0
  %3269 = vmatprep.subr.mxu0 0.0
  %3270 = vmatpush2.msra.mxu0 0.0
  %3271 = vmatprep.subr.mxu0 0.0
  %3272 = vmatpush2.msra.mxu0 0.0
  %3273 = vmatprep.subr.mxu0 0.0
  %3274 = vmatpush2.msra.mxu0 0.0
  %3275 = vmatprep.subr.mxu0 0.0
  %3276 = vmatpush2.msra.mxu0 0.0
  %3277 = vmatprep.subr.mxu0 0.0
  %3278 = vmatpush2.msra.mxu0 0.0
  %3279 = vmatprep.subr.mxu0 0.0
  %3280 = vmatpush2.msra.mxu0 0.0
  %3281 = vmatprep.subr.mxu0 0.0
  %3282 = vmatpush2.msra.mxu0 0.0
  %3283 = vmatprep.subr.mxu0 0.0
  %3284 = vmatpush2.msra.mxu0 0.0
  %3285 = vmatprep.subr.mxu0 0.0
  %3286 = vmatpush2.msra.mxu0 0.0
  %3287 = vmatprep.mubr.f32.mxu0 0.0
  %3288 = vmatmul.mubr.f32.gmra.mxu0 %v2695
  %v3289 = vpop.f32.mrf.mxu0
  %v3290 = vadd.f32 0.0, %v3289
  %v3291 = vpop.f32.mrf.mxu0
  %3292 = vdwg.mxu0
  %s3293 = scalar_lea.vmem %s5, 728
  %v3294 = vld [vmem:[%s3293] sm:$0xff]
  %v3295 = vld [vmem:[%s3293 + $0x8] sm:$0xff]
  %v3296 = vld [vmem:[%s3293 + $0x10] sm:$0xff]
  %v3297 = vld [vmem:[%s3293 + $0x18] sm:$0xff]
  %v3298 = vld [vmem:[%s3293 + $0x20] sm:$0xff]
  %v3299 = vld [vmem:[%s3293 + $0x28] sm:$0xff]
  %v3300 = vld [vmem:[%s3293 + $0x30] sm:$0xff]
  %v3301 = vld [vmem:[%s3293 + $0x38] sm:$0xff]
  %v3302 = vld [vmem:[%s3293 + $0x40] sm:$0xff]
  %v3303 = vld [vmem:[%s3293 + $0x48] sm:$0xff]
  %v3304 = vld [vmem:[%s3293 + $0x50] sm:$0xff]
  %v3305 = vld [vmem:[%s3293 + $0x58] sm:$0xff]
  %v3306 = vld [vmem:[%s3293 + $0x60] sm:$0x3]
  %v3308 = vsel %vm2697, %v3306, 0
  %3310 = vmatprep.subr.mxu0 0.0
  %3311 = vmatpush1.msra.mxu0 0.0
  %3312 = vmatprep.subr.mxu0 0.0
  %3313 = vmatpush1.msra.mxu0 0.0
  %3314 = vmatprep.subr.mxu0 0.0
  %3315 = vmatpush1.msra.mxu0 0.0
  %3316 = vmatprep.subr.mxu0 0.0
  %3317 = vmatpush1.msra.mxu0 %v3308
  %3318 = vmatprep.subr.mxu0 0.0
  %3319 = vmatpush1.msra.mxu0 %v3305
  %3320 = vmatprep.subr.mxu0 0.0
  %3321 = vmatpush1.msra.mxu0 %v3304
  %3322 = vmatprep.subr.mxu0 0.0
  %3323 = vmatpush1.msra.mxu0 %v3303
  %3324 = vmatprep.subr.mxu0 0.0
  %3325 = vmatpush1.msra.mxu0 %v3302
  %3326 = vmatprep.subr.mxu0 0.0
  %3327 = vmatpush1.msra.mxu0 %v3301
  %3328 = vmatprep.subr.mxu0 0.0
  %3329 = vmatpush1.msra.mxu0 %v3300
  %3330 = vmatprep.subr.mxu0 0.0
  %3331 = vmatpush1.msra.mxu0 %v3299
  %3332 = vmatprep.subr.mxu0 0.0
  %3333 = vmatpush1.msra.mxu0 %v3298
  %3334 = vmatprep.subr.mxu0 0.0
  %3335 = vmatpush1.msra.mxu0 %v3297
  %3336 = vmatprep.subr.mxu0 0.0
  %3337 = vmatpush1.msra.mxu0 %v3296
  %3338 = vmatprep.subr.mxu0 0.0
  %3339 = vmatpush1.msra.mxu0 %v3295
  %3340 = vmatprep.subr.mxu0 0.0
  %3341 = vmatpush1.msra.mxu0 %v3294
  %3342 = vmatprep.subr.mxu0 0.0
  %3343 = vmatpush2.msra.mxu0 0.0
  %3344 = vmatprep.subr.mxu0 0.0
  %3345 = vmatpush2.msra.mxu0 0.0
  %3346 = vmatprep.subr.mxu0 0.0
  %3347 = vmatpush2.msra.mxu0 0.0
  %3348 = vmatprep.subr.mxu0 0.0
  %3349 = vmatpush2.msra.mxu0 0.0
  %3350 = vmatprep.subr.mxu0 0.0
  %3351 = vmatpush2.msra.mxu0 0.0
  %3352 = vmatprep.subr.mxu0 0.0
  %3353 = vmatpush2.msra.mxu0 0.0
  %3354 = vmatprep.subr.mxu0 0.0
  %3355 = vmatpush2.msra.mxu0 0.0
  %3356 = vmatprep.subr.mxu0 0.0
  %3357 = vmatpush2.msra.mxu0 0.0
  %3358 = vmatprep.subr.mxu0 0.0
  %3359 = vmatpush2.msra.mxu0 0.0
  %3360 = vmatprep.subr.mxu0 0.0
  %3361 = vmatpush2.msra.mxu0 0.0
  %3362 = vmatprep.subr.mxu0 0.0
  %3363 = vmatpush2.msra.mxu0 0.0
  %3364 = vmatprep.subr.mxu0 0.0
  %3365 = vmatpush2.msra.mxu0 0.0
  %3366 = vmatprep.subr.mxu0 0.0
  %3367 = vmatpush2.msra.mxu0 0.0
  %3368 = vmatprep.subr.mxu0 0.0
  %3369 = vmatpush2.msra.mxu0 0.0
  %3370 = vmatprep.subr.mxu0 0.0
  %3371 = vmatpush2.msra.mxu0 0.0
  %3372 = vmatprep.subr.mxu0 0.0
  %3373 = vmatpush2.msra.mxu0 0.0
  %3374 = vmatprep.mubr.f32.mxu0 0.0
  %3375 = vmatmul.mubr.f32.gmra.mxu0 %v2695
  %v3376 = vpop.f32.mrf.mxu0
  %v3377 = vadd.f32 0.0, %v3376
  %v3378 = vpop.f32.mrf.mxu0
  %3379 = vdwg.mxu0
  %s3380 = scalar_lea.vmem %s5, 832
  %v3381 = vld [vmem:[%s3380] sm:$0xff]
  %v3382 = vld [vmem:[%s3380 + $0x8] sm:$0xff]
  %v3383 = vld [vmem:[%s3380 + $0x10] sm:$0xff]
  %v3384 = vld [vmem:[%s3380 + $0x18] sm:$0xff]
  %v3385 = vld [vmem:[%s3380 + $0x20] sm:$0xff]
  %v3386 = vld [vmem:[%s3380 + $0x28] sm:$0xff]
  %v3387 = vld [vmem:[%s3380 + $0x30] sm:$0xff]
  %v3388 = vld [vmem:[%s3380 + $0x38] sm:$0xff]
  %v3389 = vld [vmem:[%s3380 + $0x40] sm:$0xff]
  %v3390 = vld [vmem:[%s3380 + $0x48] sm:$0xff]
  %v3391 = vld [vmem:[%s3380 + $0x50] sm:$0xff]
  %v3392 = vld [vmem:[%s3380 + $0x58] sm:$0xff]
  %v3393 = vld [vmem:[%s3380 + $0x60] sm:$0x3]
  %v3395 = vsel %vm2697, %v3393, 0
  %3397 = vmatprep.subr.mxu0 0.0
  %3398 = vmatpush1.msra.mxu0 0.0
  %3399 = vmatprep.subr.mxu0 0.0
  %3400 = vmatpush1.msra.mxu0 0.0
  %3401 = vmatprep.subr.mxu0 0.0
  %3402 = vmatpush1.msra.mxu0 0.0
  %3403 = vmatprep.subr.mxu0 0.0
  %3404 = vmatpush1.msra.mxu0 %v3395
  %3405 = vmatprep.subr.mxu0 0.0
  %3406 = vmatpush1.msra.mxu0 %v3392
  %3407 = vmatprep.subr.mxu0 0.0
  %3408 = vmatpush1.msra.mxu0 %v3391
  %3409 = vmatprep.subr.mxu0 0.0
  %3410 = vmatpush1.msra.mxu0 %v3390
  %3411 = vmatprep.subr.mxu0 0.0
  %3412 = vmatpush1.msra.mxu0 %v3389
  %3413 = vmatprep.subr.mxu0 0.0
  %3414 = vmatpush1.msra.mxu0 %v3388
  %3415 = vmatprep.subr.mxu0 0.0
  %3416 = vmatpush1.msra.mxu0 %v3387
  %3417 = vmatprep.subr.mxu0 0.0
  %3418 = vmatpush1.msra.mxu0 %v3386
  %3419 = vmatprep.subr.mxu0 0.0
  %3420 = vmatpush1.msra.mxu0 %v3385
  %3421 = vmatprep.subr.mxu0 0.0
  %3422 = vmatpush1.msra.mxu0 %v3384
  %3423 = vmatprep.subr.mxu0 0.0
  %3424 = vmatpush1.msra.mxu0 %v3383
  %3425 = vmatprep.subr.mxu0 0.0
  %3426 = vmatpush1.msra.mxu0 %v3382
  %3427 = vmatprep.subr.mxu0 0.0
  %3428 = vmatpush1.msra.mxu0 %v3381
  %3429 = vmatprep.subr.mxu0 0.0
  %3430 = vmatpush2.msra.mxu0 0.0
  %3431 = vmatprep.subr.mxu0 0.0
  %3432 = vmatpush2.msra.mxu0 0.0
  %3433 = vmatprep.subr.mxu0 0.0
  %3434 = vmatpush2.msra.mxu0 0.0
  %3435 = vmatprep.subr.mxu0 0.0
  %3436 = vmatpush2.msra.mxu0 0.0
  %3437 = vmatprep.subr.mxu0 0.0
  %3438 = vmatpush2.msra.mxu0 0.0
  %3439 = vmatprep.subr.mxu0 0.0
  %3440 = vmatpush2.msra.mxu0 0.0
  %3441 = vmatprep.subr.mxu0 0.0
  %3442 = vmatpush2.msra.mxu0 0.0
  %3443 = vmatprep.subr.mxu0 0.0
  %3444 = vmatpush2.msra.mxu0 0.0
  %3445 = vmatprep.subr.mxu0 0.0
  %3446 = vmatpush2.msra.mxu0 0.0
  %3447 = vmatprep.subr.mxu0 0.0
  %3448 = vmatpush2.msra.mxu0 0.0
  %3449 = vmatprep.subr.mxu0 0.0
  %3450 = vmatpush2.msra.mxu0 0.0
  %3451 = vmatprep.subr.mxu0 0.0
  %3452 = vmatpush2.msra.mxu0 0.0
  %3453 = vmatprep.subr.mxu0 0.0
  %3454 = vmatpush2.msra.mxu0 0.0
  %3455 = vmatprep.subr.mxu0 0.0
  %3456 = vmatpush2.msra.mxu0 0.0
  %3457 = vmatprep.subr.mxu0 0.0
  %3458 = vmatpush2.msra.mxu0 0.0
  %3459 = vmatprep.subr.mxu0 0.0
  %3460 = vmatpush2.msra.mxu0 0.0
  %3461 = vmatprep.mubr.f32.mxu0 0.0
  %3462 = vmatmul.mubr.f32.gmra.mxu0 %v2695
  %v3463 = vpop.f32.mrf.mxu0
  %v3464 = vadd.f32 0.0, %v3463
  %v3465 = vpop.f32.mrf.mxu0
  %3466 = vdwg.mxu0
  %v3467 = vld [vmem:[%s6] sm:$0xff]
  %v3468 = vld [vmem:[%s7] sm:$0xff]
  %3470 = vset.pattern.permute.xlu0 0
  %3471 = vperm.xlu0 %3470, %v3468
  %v3472 = vpop.permute.xlu0 %3471
  %vm3474 = vcmask 588800
  %v3476 = vsel %vm3474, %v3467, 0
  %3478 = vmatprep.subr.mxu0 0.0
  %3479 = vmatpush1.msra.mxu0 0.0
  %3480 = vmatprep.subr.mxu0 0.0
  %3481 = vmatpush1.msra.mxu0 0.0
  %3482 = vmatprep.subr.mxu0 0.0
  %3483 = vmatpush1.msra.mxu0 0.0
  %3484 = vmatprep.subr.mxu0 0.0
  %3485 = vmatpush1.msra.mxu0 0.0
  %3486 = vmatprep.subr.mxu0 0.0
  %3487 = vmatpush1.msra.mxu0 0.0
  %3488 = vmatprep.subr.mxu0 0.0
  %3489 = vmatpush1.msra.mxu0 0.0
  %3490 = vmatprep.subr.mxu0 0.0
  %3491 = vmatpush1.msra.mxu0 0.0
  %3492 = vmatprep.subr.mxu0 0.0
  %3493 = vmatpush1.msra.mxu0 %v3464
  %3494 = vmatprep.subr.mxu0 0.0
  %3495 = vmatpush1.msra.mxu0 %v3377
  %3496 = vmatprep.subr.mxu0 0.0
  %3497 = vmatpush1.msra.mxu0 %v3290
  %3498 = vmatprep.subr.mxu0 0.0
  %3499 = vmatpush1.msra.mxu0 %v3203
  %3500 = vmatprep.subr.mxu0 0.0
  %3501 = vmatpush1.msra.mxu0 %v3116
  %3502 = vmatprep.subr.mxu0 0.0
  %3503 = vmatpush1.msra.mxu0 %v3029
  %3504 = vmatprep.subr.mxu0 0.0
  %3505 = vmatpush1.msra.mxu0 %v2942
  %3506 = vmatprep.subr.mxu0 0.0
  %3507 = vmatpush1.msra.mxu0 %v2855
  %3508 = vmatprep.subr.mxu0 0.0
  %3509 = vmatpush1.msra.mxu0 %v2768
  %3510 = vmatprep.subr.mxu0 0.0
  %3511 = vmatpush2.msra.mxu0 0.0
  %3512 = vmatprep.subr.mxu0 0.0
  %3513 = vmatpush2.msra.mxu0 0.0
  %3514 = vmatprep.subr.mxu0 0.0
  %3515 = vmatpush2.msra.mxu0 0.0
  %3516 = vmatprep.subr.mxu0 0.0
  %3517 = vmatpush2.msra.mxu0 0.0
  %3518 = vmatprep.subr.mxu0 0.0
  %3519 = vmatpush2.msra.mxu0 0.0
  %3520 = vmatprep.subr.mxu0 0.0
  %3521 = vmatpush2.msra.mxu0 0.0
  %3522 = vmatprep.subr.mxu0 0.0
  %3523 = vmatpush2.msra.mxu0 0.0
  %3524 = vmatprep.subr.mxu0 0.0
  %3525 = vmatpush2.msra.mxu0 0.0
  %3526 = vmatprep.subr.mxu0 0.0
  %3527 = vmatpush2.msra.mxu0 0.0
  %3528 = vmatprep.subr.mxu0 0.0
  %3529 = vmatpush2.msra.mxu0 0.0
  %3530 = vmatprep.subr.mxu0 0.0
  %3531 = vmatpush2.msra.mxu0 0.0
  %3532 = vmatprep.subr.mxu0 0.0
  %3533 = vmatpush2.msra.mxu0 0.0
  %3534 = vmatprep.subr.mxu0 0.0
  %3535 = vmatpush2.msra.mxu0 0.0
  %3536 = vmatprep.subr.mxu0 0.0
  %3537 = vmatpush2.msra.mxu0 0.0
  %3538 = vmatprep.subr.mxu0 0.0
  %3539 = vmatpush2.msra.mxu0 0.0
  %3540 = vmatprep.subr.mxu0 0.0
  %3541 = vmatpush2.msra.mxu0 0.0
  %3542 = vmatprep.mubr.f32.mxu0 0.0
  %3543 = vmatmul.mubr.f32.gmra.mxu0 %v3476
  %v3544 = vpop.f32.mrf.mxu0
  %v3545 = vadd.f32 %v3472, %v3544
  %v3546 = vpop.f32.mrf.mxu0
  %3547 = vdwg.mxu0
  %v3548 = vmul.f32 %v3545, 0.5
  %v3549 = vmul.f32 %v3545, 0.70710677
  %vm3550 = vcmp.ge.f32.partialorder %v3549, 0.0
  %v3551 = vsub.f32 0.0, %v3549
  %v3552 = vsel %vm3550, %v3549, %v3551
  %v3553 = vmul.f32 %v3552, 0.3275911
  %v3554 = vadd.f32 %v3553, 1.0
  %v3555 = vrcp.pop %v3554
  %v3556 = vmul.f32 1.0, %v3555
  %v3557 = vmul.f32 %v3556, 1.0614054
  %v3558 = vadd.f32 %v3557, -1.4531521
  %v3559 = vmul.f32 %v3558, %v3556
  %v3560 = vadd.f32 %v3559, 1.4214138
  %v3561 = vmul.f32 %v3560, %v3556
  %v3562 = vadd.f32 %v3561, -0.28449672
  %v3563 = vmul.f32 %v3562, %v3556
  %v3564 = vadd.f32 %v3563, 0.2548296
  %v3565 = vmul.f32 %v3564, %v3556
  %v3566 = vsub.f32 0.0, %v3552
  %v3567 = vmul.f32 %v3566, %v3552
  %v3568 = vmul.f32 %v3567, 1.442695
  %v3569 = vpow.pop %v3568
  %v3570 = vmul.f32 %v3565, %v3569
  %v3571 = vsub.f32 1.0, %v3570
  %v3572 = vsub.f32 0.0, %v3571
  %v3573 = vsel %vm3550, %v3571, %v3572
  %v3574 = vadd.f32 %v3573, 1.0
  %v3575 = vmul.f32 %v3548, %v3574
  %v3576 = vld [vmem:[%s8] sm:$0xff]
  %v3577 = vld [vmem:[%s8 + $0x8] sm:$0xff]
  %v3578 = vld [vmem:[%s8 + $0x10] sm:$0xff]
  %v3579 = vld [vmem:[%s8 + $0x18] sm:$0xff]
  %v3580 = vld [vmem:[%s8 + $0x20] sm:$0xff]
  %v3581 = vld [vmem:[%s8 + $0x28] sm:$0xff]
  %v3582 = vld [vmem:[%s8 + $0x30] sm:$0x3]
  %vm3583 = vcmask 408576
  %v3585 = vsel %vm3583, %v3575, 0
  %v3588 = vsel %vm2697, %v3582, 0
  %3590 = vmatprep.subr.mxu0 0.0
  %3591 = vmatpush1.msra.mxu0 0.0
  %3592 = vmatprep.subr.mxu0 0.0
  %3593 = vmatpush1.msra.mxu0 0.0
  %3594 = vmatprep.subr.mxu0 0.0
  %3595 = vmatpush1.msra.mxu0 0.0
  %3596 = vmatprep.subr.mxu0 0.0
  %3597 = vmatpush1.msra.mxu0 0.0
  %3598 = vmatprep.subr.mxu0 0.0
  %3599 = vmatpush1.msra.mxu0 0.0
  %3600 = vmatprep.subr.mxu0 0.0
  %3601 = vmatpush1.msra.mxu0 0.0
  %3602 = vmatprep.subr.mxu0 0.0
  %3603 = vmatpush1.msra.mxu0 0.0
  %3604 = vmatprep.subr.mxu0 0.0
  %3605 = vmatpush1.msra.mxu0 0.0
  %3606 = vmatprep.subr.mxu0 0.0
  %3607 = vmatpush1.msra.mxu0 0.0
  %3608 = vmatprep.subr.mxu0 0.0
  %3609 = vmatpush1.msra.mxu0 %v3588
  %3610 = vmatprep.subr.mxu0 0.0
  %3611 = vmatpush1.msra.mxu0 %v3581
  %3612 = vmatprep.subr.mxu0 0.0
  %3613 = vmatpush1.msra.mxu0 %v3580
  %3614 = vmatprep.subr.mxu0 0.0
  %3615 = vmatpush1.msra.mxu0 %v3579
  %3616 = vmatprep.subr.mxu0 0.0
  %3617 = vmatpush1.msra.mxu0 %v3578
  %3618 = vmatprep.subr.mxu0 0.0
  %3619 = vmatpush1.msra.mxu0 %v3577
  %3620 = vmatprep.subr.mxu0 0.0
  %3621 = vmatpush1.msra.mxu0 %v3576
  %3622 = vmatprep.subr.mxu0 0.0
  %3623 = vmatpush2.msra.mxu0 0.0
  %3624 = vmatprep.subr.mxu0 0.0
  %3625 = vmatpush2.msra.mxu0 0.0
  %3626 = vmatprep.subr.mxu0 0.0
  %3627 = vmatpush2.msra.mxu0 0.0
  %3628 = vmatprep.subr.mxu0 0.0
  %3629 = vmatpush2.msra.mxu0 0.0
  %3630 = vmatprep.subr.mxu0 0.0
  %3631 = vmatpush2.msra.mxu0 0.0
  %3632 = vmatprep.subr.mxu0 0.0
  %3633 = vmatpush2.msra.mxu0 0.0
  %3634 = vmatprep.subr.mxu0 0.0
  %3635 = vmatpush2.msra.mxu0 0.0
  %3636 = vmatprep.subr.mxu0 0.0
  %3637 = vmatpush2.msra.mxu0 0.0
  %3638 = vmatprep.subr.mxu0 0.0
  %3639 = vmatpush2.msra.mxu0 0.0
  %3640 = vmatprep.subr.mxu0 0.0
  %3641 = vmatpush2.msra.mxu0 0.0
  %3642 = vmatprep.subr.mxu0 0.0
  %3643 = vmatpush2.msra.mxu0 0.0
  %3644 = vmatprep.subr.mxu0 0.0
  %3645 = vmatpush2.msra.mxu0 0.0
  %3646 = vmatprep.subr.mxu0 0.0
  %3647 = vmatpush2.msra.mxu0 0.0
  %3648 = vmatprep.subr.mxu0 0.0
  %3649 = vmatpush2.msra.mxu0 0.0
  %3650 = vmatprep.subr.mxu0 0.0
  %3651 = vmatpush2.msra.mxu0 0.0
  %3652 = vmatprep.subr.mxu0 0.0
  %3653 = vmatpush2.msra.mxu0 0.0
  %3654 = vmatprep.mubr.f32.mxu0 0.0
  %3655 = vmatmul.mubr.f32.gmra.mxu0 %v3585
  %v3656 = vpop.f32.mrf.mxu0
  %v3657 = vadd.f32 0.0, %v3656
  %v3658 = vpop.f32.mrf.mxu0
  %3659 = vdwg.mxu0
  %s3660 = scalar_lea.vmem %s8, 56
  %v3661 = vld [vmem:[%s3660] sm:$0xff]
  %v3662 = vld [vmem:[%s3660 + $0x8] sm:$0xff]
  %v3663 = vld [vmem:[%s3660 + $0x10] sm:$0xff]
  %v3664 = vld [vmem:[%s3660 + $0x18] sm:$0xff]
  %v3665 = vld [vmem:[%s3660 + $0x20] sm:$0xff]
  %v3666 = vld [vmem:[%s3660 + $0x28] sm:$0xff]
  %v3667 = vld [vmem:[%s3660 + $0x30] sm:$0x3]
  %v3669 = vsel %vm2697, %v3667, 0
  %3671 = vmatprep.subr.mxu0 0.0
  %3672 = vmatpush1.msra.mxu0 0.0
  %3673 = vmatprep.subr.mxu0 0.0
  %3674 = vmatpush1.msra.mxu0 0.0
  %3675 = vmatprep.subr.mxu0 0.0
  %3676 = vmatpush1.msra.mxu0 0.0
  %3677 = vmatprep.subr.mxu0 0.0
  %3678 = vmatpush1.msra.mxu0 0.0
  %3679 = vmatprep.subr.mxu0 0.0
  %3680 = vmatpush1.msra.mxu0 0.0
  %3681 = vmatprep.subr.mxu0 0.0
  %3682 = vmatpush1.msra.mxu0 0.0
  %3683 = vmatprep.subr.mxu0 0.0
  %3684 = vmatpush1.msra.mxu0 0.0
  %3685 = vmatprep.subr.mxu0 0.0
  %3686 = vmatpush1.msra.mxu0 0.0
  %3687 = vmatprep.subr.mxu0 0.0
  %3688 = vmatpush1.msra.mxu0 0.0
  %3689 = vmatprep.subr.mxu0 0.0
  %3690 = vmatpush1.msra.mxu0 %v3669
  %3691 = vmatprep.subr.mxu0 0.0
  %3692 = vmatpush1.msra.mxu0 %v3666
  %3693 = vmatprep.subr.mxu0 0.0
  %3694 = vmatpush1.msra.mxu0 %v3665
  %3695 = vmatprep.subr.mxu0 0.0
  %3696 = vmatpush1.msra.mxu0 %v3664
  %3697 = vmatprep.subr.mxu0 0.0
  %3698 = vmatpush1.msra.mxu0 %v3663
  %3699 = vmatprep.subr.mxu0 0.0
  %3700 = vmatpush1.msra.mxu0 %v3662
  %3701 = vmatprep.subr.mxu0 0.0
  %3702 = vmatpush1.msra.mxu0 %v3661
  %3703 = vmatprep.subr.mxu0 0.0
  %3704 = vmatpush2.msra.mxu0 0.0
  %3705 = vmatprep.subr.mxu0 0.0
  %3706 = vmatpush2.msra.mxu0 0.0
  %3707 = vmatprep.subr.mxu0 0.0
  %3708 = vmatpush2.msra.mxu0 0.0
  %3709 = vmatprep.subr.mxu0 0.0
  %3710 = vmatpush2.msra.mxu0 0.0
  %3711 = vmatprep.subr.mxu0 0.0
  %3712 = vmatpush2.msra.mxu0 0.0
  %3713 = vmatprep.subr.mxu0 0.0
  %3714 = vmatpush2.msra.mxu0 0.0
  %3715 = vmatprep.subr.mxu0 0.0
  %3716 = vmatpush2.msra.mxu0 0.0
  %3717 = vmatprep.subr.mxu0 0.0
  %3718 = vmatpush2.msra.mxu0 0.0
  %3719 = vmatprep.subr.mxu0 0.0
  %3720 = vmatpush2.msra.mxu0 0.0
  %3721 = vmatprep.subr.mxu0 0.0
  %3722 = vmatpush2.msra.mxu0 0.0
  %3723 = vmatprep.subr.mxu0 0.0
  %3724 = vmatpush2.msra.mxu0 0.0
  %3725 = vmatprep.subr.mxu0 0.0
  %3726 = vmatpush2.msra.mxu0 0.0
  %3727 = vmatprep.subr.mxu0 0.0
  %3728 = vmatpush2.msra.mxu0 0.0
  %3729 = vmatprep.subr.mxu0 0.0
  %3730 = vmatpush2.msra.mxu0 0.0
  %3731 = vmatprep.subr.mxu0 0.0
  %3732 = vmatpush2.msra.mxu0 0.0
  %3733 = vmatprep.subr.mxu0 0.0
  %3734 = vmatpush2.msra.mxu0 0.0
  %3735 = vmatprep.mubr.f32.mxu0 0.0
  %3736 = vmatmul.mubr.f32.gmra.mxu0 %v3585
  %v3737 = vpop.f32.mrf.mxu0
  %v3738 = vadd.f32 0.0, %v3737
  %v3739 = vpop.f32.mrf.mxu0
  %3740 = vdwg.mxu0
  %s3741 = scalar_lea.vmem %s8, 112
  %v3742 = vld [vmem:[%s3741] sm:$0xff]
  %v3743 = vld [vmem:[%s3741 + $0x8] sm:$0xff]
  %v3744 = vld [vmem:[%s3741 + $0x10] sm:$0xff]
  %v3745 = vld [vmem:[%s3741 + $0x18] sm:$0xff]
  %v3746 = vld [vmem:[%s3741 + $0x20] sm:$0xff]
  %v3747 = vld [vmem:[%s3741 + $0x28] sm:$0xff]
  %v3748 = vld [vmem:[%s3741 + $0x30] sm:$0x3]
  %v3750 = vsel %vm2697, %v3748, 0
  %3752 = vmatprep.subr.mxu0 0.0
  %3753 = vmatpush1.msra.mxu0 0.0
  %3754 = vmatprep.subr.mxu0 0.0
  %3755 = vmatpush1.msra.mxu0 0.0
  %3756 = vmatprep.subr.mxu0 0.0
  %3757 = vmatpush1.msra.mxu0 0.0
  %3758 = vmatprep.subr.mxu0 0.0
  %3759 = vmatpush1.msra.mxu0 0.0
  %3760 = vmatprep.subr.mxu0 0.0
  %3761 = vmatpush1.msra.mxu0 0.0
  %3762 = vmatprep.subr.mxu0 0.0
  %3763 = vmatpush1.msra.mxu0 0.0
  %3764 = vmatprep.subr.mxu0 0.0
  %3765 = vmatpush1.msra.mxu0 0.0
  %3766 = vmatprep.subr.mxu0 0.0
  %3767 = vmatpush1.msra.mxu0 0.0
  %3768 = vmatprep.subr.mxu0 0.0
  %3769 = vmatpush1.msra.mxu0 0.0
  %3770 = vmatprep.subr.mxu0 0.0
  %3771 = vmatpush1.msra.mxu0 %v3750
  %3772 = vmatprep.subr.mxu0 0.0
  %3773 = vmatpush1.msra.mxu0 %v3747
  %3774 = vmatprep.subr.mxu0 0.0
  %3775 = vmatpush1.msra.mxu0 %v3746
  %3776 = vmatprep.subr.mxu0 0.0
  %3777 = vmatpush1.msra.mxu0 %v3745
  %3778 = vmatprep.subr.mxu0 0.0
  %3779 = vmatpush1.msra.mxu0 %v3744
  %3780 = vmatprep.subr.mxu0 0.0
  %3781 = vmatpush1.msra.mxu0 %v3743
  %3782 = vmatprep.subr.mxu0 0.0
  %3783 = vmatpush1.msra.mxu0 %v3742
  %3784 = vmatprep.subr.mxu0 0.0
  %3785 = vmatpush2.msra.mxu0 0.0
  %3786 = vmatprep.subr.mxu0 0.0
  %3787 = vmatpush2.msra.mxu0 0.0
  %3788 = vmatprep.subr.mxu0 0.0
  %3789 = vmatpush2.msra.mxu0 0.0
  %3790 = vmatprep.subr.mxu0 0.0
  %3791 = vmatpush2.msra.mxu0 0.0
  %3792 = vmatprep.subr.mxu0 0.0
  %3793 = vmatpush2.msra.mxu0 0.0
  %3794 = vmatprep.subr.mxu0 0.0
  %3795 = vmatpush2.msra.mxu0 0.0
  %3796 = vmatprep.subr.mxu0 0.0
  %3797 = vmatpush2.msra.mxu0 0.0
  %3798 = vmatprep.subr.mxu0 0.0
  %3799 = vmatpush2.msra.mxu0 0.0
  %3800 = vmatprep.subr.mxu0 0.0
  %3801 = vmatpush2.msra.mxu0 0.0
  %3802 = vmatprep.subr.mxu0 0.0
  %3803 = vmatpush2.msra.mxu0 0.0
  %3804 = vmatprep.subr.mxu0 0.0
  %3805 = vmatpush2.msra.mxu0 0.0
  %3806 = vmatprep.subr.mxu0 0.0
  %3807 = vmatpush2.msra.mxu0 0.0
  %3808 = vmatprep.subr.mxu0 0.0
  %3809 = vmatpush2.msra.mxu0 0.0
  %3810 = vmatprep.subr.mxu0 0.0
  %3811 = vmatpush2.msra.mxu0 0.0
  %3812 = vmatprep.subr.mxu0 0.0
  %3813 = vmatpush2.msra.mxu0 0.0
  %3814 = vmatprep.subr.mxu0 0.0
  %3815 = vmatpush2.msra.mxu0 0.0
  %3816 = vmatprep.mubr.f32.mxu0 0.0
  %3817 = vmatmul.mubr.f32.gmra.mxu0 %v3585
  %v3818 = vpop.f32.mrf.mxu0
  %v3819 = vadd.f32 0.0, %v3818
  %v3820 = vpop.f32.mrf.mxu0
  %3821 = vdwg.mxu0
  %s3822 = scalar_lea.vmem %s8, 168
  %v3823 = vld [vmem:[%s3822] sm:$0xff]
  %v3824 = vld [vmem:[%s3822 + $0x8] sm:$0xff]
  %v3825 = vld [vmem:[%s3822 + $0x10] sm:$0xff]
  %v3826 = vld [vmem:[%s3822 + $0x18] sm:$0xff]
  %v3827 = vld [vmem:[%s3822 + $0x20] sm:$0xff]
  %v3828 = vld [vmem:[%s3822 + $0x28] sm:$0xff]
  %v3829 = vld [vmem:[%s3822 + $0x30] sm:$0x3]
  %v3831 = vsel %vm2697, %v3829, 0
  %3833 = vmatprep.subr.mxu0 0.0
  %3834 = vmatpush1.msra.mxu0 0.0
  %3835 = vmatprep.subr.mxu0 0.0
  %3836 = vmatpush1.msra.mxu0 0.0
  %3837 = vmatprep.subr.mxu0 0.0
  %3838 = vmatpush1.msra.mxu0 0.0
  %3839 = vmatprep.subr.mxu0 0.0
  %3840 = vmatpush1.msra.mxu0 0.0
  %3841 = vmatprep.subr.mxu0 0.0
  %3842 = vmatpush1.msra.mxu0 0.0
  %3843 = vmatprep.subr.mxu0 0.0
  %3844 = vmatpush1.msra.mxu0 0.0
  %3845 = vmatprep.subr.mxu0 0.0
  %3846 = vmatpush1.msra.mxu0 0.0
  %3847 = vmatprep.subr.mxu0 0.0
  %3848 = vmatpush1.msra.mxu0 0.0
  %3849 = vmatprep.subr.mxu0 0.0
  %3850 = vmatpush1.msra.mxu0 0.0
  %3851 = vmatprep.subr.mxu0 0.0
  %3852 = vmatpush1.msra.mxu0 %v3831
  %3853 = vmatprep.subr.mxu0 0.0
  %3854 = vmatpush1.msra.mxu0 %v3828
  %3855 = vmatprep.subr.mxu0 0.0
  %3856 = vmatpush1.msra.mxu0 %v3827
  %3857 = vmatprep.subr.mxu0 0.0
  %3858 = vmatpush1.msra.mxu0 %v3826
  %3859 = vmatprep.subr.mxu0 0.0
  %3860 = vmatpush1.msra.mxu0 %v3825
  %3861 = vmatprep.subr.mxu0 0.0
  %3862 = vmatpush1.msra.mxu0 %v3824
  %3863 = vmatprep.subr.mxu0 0.0
  %3864 = vmatpush1.msra.mxu0 %v3823
  %3865 = vmatprep.subr.mxu0 0.0
  %3866 = vmatpush2.msra.mxu0 0.0
  %3867 = vmatprep.subr.mxu0 0.0
  %3868 = vmatpush2.msra.mxu0 0.0
  %3869 = vmatprep.subr.mxu0 0.0
  %3870 = vmatpush2.msra.mxu0 0.0
  %3871 = vmatprep.subr.mxu0 0.0
  %3872 = vmatpush2.msra.mxu0 0.0
  %3873 = vmatprep.subr.mxu0 0.0
  %3874 = vmatpush2.msra.mxu0 0.0
  %3875 = vmatprep.subr.mxu0 0.0
  %3876 = vmatpush2.msra.mxu0 0.0
  %3877 = vmatprep.subr.mxu0 0.0
  %3878 = vmatpush2.msra.mxu0 0.0
  %3879 = vmatprep.subr.mxu0 0.0
  %3880 = vmatpush2.msra.mxu0 0.0
  %3881 = vmatprep.subr.mxu0 0.0
  %3882 = vmatpush2.msra.mxu0 0.0
  %3883 = vmatprep.subr.mxu0 0.0
  %3884 = vmatpush2.msra.mxu0 0.0
  %3885 = vmatprep.subr.mxu0 0.0
  %3886 = vmatpush2.msra.mxu0 0.0
  %3887 = vmatprep.subr.mxu0 0.0
  %3888 = vmatpush2.msra.mxu0 0.0
  %3889 = vmatprep.subr.mxu0 0.0
  %3890 = vmatpush2.msra.mxu0 0.0
  %3891 = vmatprep.subr.mxu0 0.0
  %3892 = vmatpush2.msra.mxu0 0.0
  %3893 = vmatprep.subr.mxu0 0.0
  %3894 = vmatpush2.msra.mxu0 0.0
  %3895 = vmatprep.subr.mxu0 0.0
  %3896 = vmatpush2.msra.mxu0 0.0
  %3897 = vmatprep.mubr.f32.mxu0 0.0
  %3898 = vmatmul.mubr.f32.gmra.mxu0 %v3585
  %v3899 = vpop.f32.mrf.mxu0
  %v3900 = vadd.f32 0.0, %v3899
  %v3901 = vpop.f32.mrf.mxu0
  %3902 = vdwg.mxu0
  %s3903 = scalar_lea.vmem %s8, 224
  %v3904 = vld [vmem:[%s3903] sm:$0xff]
  %v3905 = vld [vmem:[%s3903 + $0x8] sm:$0xff]
  %v3906 = vld [vmem:[%s3903 + $0x10] sm:$0xff]
  %v3907 = vld [vmem:[%s3903 + $0x18] sm:$0xff]
  %v3908 = vld [vmem:[%s3903 + $0x20] sm:$0xff]
  %v3909 = vld [vmem:[%s3903 + $0x28] sm:$0xff]
  %v3910 = vld [vmem:[%s3903 + $0x30] sm:$0x3]
  %v3912 = vsel %vm2697, %v3910, 0
  %3914 = vmatprep.subr.mxu0 0.0
  %3915 = vmatpush1.msra.mxu0 0.0
  %3916 = vmatprep.subr.mxu0 0.0
  %3917 = vmatpush1.msra.mxu0 0.0
  %3918 = vmatprep.subr.mxu0 0.0
  %3919 = vmatpush1.msra.mxu0 0.0
  %3920 = vmatprep.subr.mxu0 0.0
  %3921 = vmatpush1.msra.mxu0 0.0
  %3922 = vmatprep.subr.mxu0 0.0
  %3923 = vmatpush1.msra.mxu0 0.0
  %3924 = vmatprep.subr.mxu0 0.0
  %3925 = vmatpush1.msra.mxu0 0.0
  %3926 = vmatprep.subr.mxu0 0.0
  %3927 = vmatpush1.msra.mxu0 0.0
  %3928 = vmatprep.subr.mxu0 0.0
  %3929 = vmatpush1.msra.mxu0 0.0
  %3930 = vmatprep.subr.mxu0 0.0
  %3931 = vmatpush1.msra.mxu0 0.0
  %3932 = vmatprep.subr.mxu0 0.0
  %3933 = vmatpush1.msra.mxu0 %v3912
  %3934 = vmatprep.subr.mxu0 0.0
  %3935 = vmatpush1.msra.mxu0 %v3909
  %3936 = vmatprep.subr.mxu0 0.0
  %3937 = vmatpush1.msra.mxu0 %v3908
  %3938 = vmatprep.subr.mxu0 0.0
  %3939 = vmatpush1.msra.mxu0 %v3907
  %3940 = vmatprep.subr.mxu0 0.0
  %3941 = vmatpush1.msra.mxu0 %v3906
  %3942 = vmatprep.subr.mxu0 0.0
  %3943 = vmatpush1.msra.mxu0 %v3905
  %3944 = vmatprep.subr.mxu0 0.0
  %3945 = vmatpush1.msra.mxu0 %v3904
  %3946 = vmatprep.subr.mxu0 0.0
  %3947 = vmatpush2.msra.mxu0 0.0
  %3948 = vmatprep.subr.mxu0 0.0
  %3949 = vmatpush2.msra.mxu0 0.0
  %3950 = vmatprep.subr.mxu0 0.0
  %3951 = vmatpush2.msra.mxu0 0.0
  %3952 = vmatprep.subr.mxu0 0.0
  %3953 = vmatpush2.msra.mxu0 0.0
  %3954 = vmatprep.subr.mxu0 0.0
  %3955 = vmatpush2.msra.mxu0 0.0
  %3956 = vmatprep.subr.mxu0 0.0
  %3957 = vmatpush2.msra.mxu0 0.0
  %3958 = vmatprep.subr.mxu0 0.0
  %3959 = vmatpush2.msra.mxu0 0.0
  %3960 = vmatprep.subr.mxu0 0.0
  %3961 = vmatpush2.msra.mxu0 0.0
  %3962 = vmatprep.subr.mxu0 0.0
  %3963 = vmatpush2.msra.mxu0 0.0
  %3964 = vmatprep.subr.mxu0 0.0
  %3965 = vmatpush2.msra.mxu0 0.0
  %3966 = vmatprep.subr.mxu0 0.0
  %3967 = vmatpush2.msra.mxu0 0.0
  %3968 = vmatprep.subr.mxu0 0.0
  %3969 = vmatpush2.msra.mxu0 0.0
  %3970 = vmatprep.subr.mxu0 0.0
  %3971 = vmatpush2.msra.mxu0 0.0
  %3972 = vmatprep.subr.mxu0 0.0
  %3973 = vmatpush2.msra.mxu0 0.0
  %3974 = vmatprep.subr.mxu0 0.0
  %3975 = vmatpush2.msra.mxu0 0.0
  %3976 = vmatprep.subr.mxu0 0.0
  %3977 = vmatpush2.msra.mxu0 0.0
  %3978 = vmatprep.mubr.f32.mxu0 0.0
  %3979 = vmatmul.mubr.f32.gmra.mxu0 %v3585
  %v3980 = vpop.f32.mrf.mxu0
  %v3981 = vadd.f32 0.0, %v3980
  %v3982 = vpop.f32.mrf.mxu0
  %3983 = vdwg.mxu0
  %s3984 = scalar_lea.vmem %s8, 280
  %v3985 = vld [vmem:[%s3984] sm:$0xff]
  %v3986 = vld [vmem:[%s3984 + $0x8] sm:$0xff]
  %v3987 = vld [vmem:[%s3984 + $0x10] sm:$0xff]
  %v3988 = vld [vmem:[%s3984 + $0x18] sm:$0xff]
  %v3989 = vld [vmem:[%s3984 + $0x20] sm:$0xff]
  %v3990 = vld [vmem:[%s3984 + $0x28] sm:$0xff]
  %v3991 = vld [vmem:[%s3984 + $0x30] sm:$0x3]
  %v3993 = vsel %vm2697, %v3991, 0
  %3995 = vmatprep.subr.mxu0 0.0
  %3996 = vmatpush1.msra.mxu0 0.0
  %3997 = vmatprep.subr.mxu0 0.0
  %3998 = vmatpush1.msra.mxu0 0.0
  %3999 = vmatprep.subr.mxu0 0.0
  %4000 = vmatpush1.msra.mxu0 0.0
  %4001 = vmatprep.subr.mxu0 0.0
  %4002 = vmatpush1.msra.mxu0 0.0
  %4003 = vmatprep.subr.mxu0 0.0
  %4004 = vmatpush1.msra.mxu0 0.0
  %4005 = vmatprep.subr.mxu0 0.0
  %4006 = vmatpush1.msra.mxu0 0.0
  %4007 = vmatprep.subr.mxu0 0.0
  %4008 = vmatpush1.msra.mxu0 0.0
  %4009 = vmatprep.subr.mxu0 0.0
  %4010 = vmatpush1.msra.mxu0 0.0
  %4011 = vmatprep.subr.mxu0 0.0
  %4012 = vmatpush1.msra.mxu0 0.0
  %4013 = vmatprep.subr.mxu0 0.0
  %4014 = vmatpush1.msra.mxu0 %v3993
  %4015 = vmatprep.subr.mxu0 0.0
  %4016 = vmatpush1.msra.mxu0 %v3990
  %4017 = vmatprep.subr.mxu0 0.0
  %4018 = vmatpush1.msra.mxu0 %v3989
  %4019 = vmatprep.subr.mxu0 0.0
  %4020 = vmatpush1.msra.mxu0 %v3988
  %4021 = vmatprep.subr.mxu0 0.0
  %4022 = vmatpush1.msra.mxu0 %v3987
  %4023 = vmatprep.subr.mxu0 0.0
  %4024 = vmatpush1.msra.mxu0 %v3986
  %4025 = vmatprep.subr.mxu0 0.0
  %4026 = vmatpush1.msra.mxu0 %v3985
  %4027 = vmatprep.subr.mxu0 0.0
  %4028 = vmatpush2.msra.mxu0 0.0
  %4029 = vmatprep.subr.mxu0 0.0
  %4030 = vmatpush2.msra.mxu0 0.0
  %4031 = vmatprep.subr.mxu0 0.0
  %4032 = vmatpush2.msra.mxu0 0.0
  %4033 = vmatprep.subr.mxu0 0.0
  %4034 = vmatpush2.msra.mxu0 0.0
  %4035 = vmatprep.subr.mxu0 0.0
  %4036 = vmatpush2.msra.mxu0 0.0
  %4037 = vmatprep.subr.mxu0 0.0
  %4038 = vmatpush2.msra.mxu0 0.0
  %4039 = vmatprep.subr.mxu0 0.0
  %4040 = vmatpush2.msra.mxu0 0.0
  %4041 = vmatprep.subr.mxu0 0.0
  %4042 = vmatpush2.msra.mxu0 0.0
  %4043 = vmatprep.subr.mxu0 0.0
  %4044 = vmatpush2.msra.mxu0 0.0
  %4045 = vmatprep.subr.mxu0 0.0
  %4046 = vmatpush2.msra.mxu0 0.0
  %4047 = vmatprep.subr.mxu0 0.0
  %4048 = vmatpush2.msra.mxu0 0.0
  %4049 = vmatprep.subr.mxu0 0.0
  %4050 = vmatpush2.msra.mxu0 0.0
  %4051 = vmatprep.subr.mxu0 0.0
  %4052 = vmatpush2.msra.mxu0 0.0
  %4053 = vmatprep.subr.mxu0 0.0
  %4054 = vmatpush2.msra.mxu0 0.0
  %4055 = vmatprep.subr.mxu0 0.0
  %4056 = vmatpush2.msra.mxu0 0.0
  %4057 = vmatprep.subr.mxu0 0.0
  %4058 = vmatpush2.msra.mxu0 0.0
  %4059 = vmatprep.mubr.f32.mxu0 0.0
  %4060 = vmatmul.mubr.f32.gmra.mxu0 %v3585
  %v4061 = vpop.f32.mrf.mxu0
  %v4062 = vadd.f32 0.0, %v4061
  %v4063 = vpop.f32.mrf.mxu0
  %4064 = vdwg.mxu0
  %s4065 = scalar_lea.vmem %s8, 336
  %v4066 = vld [vmem:[%s4065] sm:$0xff]
  %v4067 = vld [vmem:[%s4065 + $0x8] sm:$0xff]
  %v4068 = vld [vmem:[%s4065 + $0x10] sm:$0xff]
  %v4069 = vld [vmem:[%s4065 + $0x18] sm:$0xff]
  %v4070 = vld [vmem:[%s4065 + $0x20] sm:$0xff]
  %v4071 = vld [vmem:[%s4065 + $0x28] sm:$0xff]
  %v4072 = vld [vmem:[%s4065 + $0x30] sm:$0x3]
  %v4074 = vsel %vm2697, %v4072, 0
  %4076 = vmatprep.subr.mxu0 0.0
  %4077 = vmatpush1.msra.mxu0 0.0
  %4078 = vmatprep.subr.mxu0 0.0
  %4079 = vmatpush1.msra.mxu0 0.0
  %4080 = vmatprep.subr.mxu0 0.0
  %4081 = vmatpush1.msra.mxu0 0.0
  %4082 = vmatprep.subr.mxu0 0.0
  %4083 = vmatpush1.msra.mxu0 0.0
  %4084 = vmatprep.subr.mxu0 0.0
  %4085 = vmatpush1.msra.mxu0 0.0
  %4086 = vmatprep.subr.mxu0 0.0
  %4087 = vmatpush1.msra.mxu0 0.0
  %4088 = vmatprep.subr.mxu0 0.0
  %4089 = vmatpush1.msra.mxu0 0.0
  %4090 = vmatprep.subr.mxu0 0.0
  %4091 = vmatpush1.msra.mxu0 0.0
  %4092 = vmatprep.subr.mxu0 0.0
  %4093 = vmatpush1.msra.mxu0 0.0
  %4094 = vmatprep.subr.mxu0 0.0
  %4095 = vmatpush1.msra.mxu0 %v4074
  %4096 = vmatprep.subr.mxu0 0.0
  %4097 = vmatpush1.msra.mxu0 %v4071
  %4098 = vmatprep.subr.mxu0 0.0
  %4099 = vmatpush1.msra.mxu0 %v4070
  %4100 = vmatprep.subr.mxu0 0.0
  %4101 = vmatpush1.msra.mxu0 %v4069
  %4102 = vmatprep.subr.mxu0 0.0
  %4103 = vmatpush1.msra.mxu0 %v4068
  %4104 = vmatprep.subr.mxu0 0.0
  %4105 = vmatpush1.msra.mxu0 %v4067
  %4106 = vmatprep.subr.mxu0 0.0
  %4107 = vmatpush1.msra.mxu0 %v4066
  %4108 = vmatprep.subr.mxu0 0.0
  %4109 = vmatpush2.msra.mxu0 0.0
  %4110 = vmatprep.subr.mxu0 0.0
  %4111 = vmatpush2.msra.mxu0 0.0
  %4112 = vmatprep.subr.mxu0 0.0
  %4113 = vmatpush2.msra.mxu0 0.0
  %4114 = vmatprep.subr.mxu0 0.0
  %4115 = vmatpush2.msra.mxu0 0.0
  %4116 = vmatprep.subr.mxu0 0.0
  %4117 = vmatpush2.msra.mxu0 0.0
  %4118 = vmatprep.subr.mxu0 0.0
  %4119 = vmatpush2.msra.mxu0 0.0
  %4120 = vmatprep.subr.mxu0 0.0
  %4121 = vmatpush2.msra.mxu0 0.0
  %4122 = vmatprep.subr.mxu0 0.0
  %4123 = vmatpush2.msra.mxu0 0.0
  %4124 = vmatprep.subr.mxu0 0.0
  %4125 = vmatpush2.msra.mxu0 0.0
  %4126 = vmatprep.subr.mxu0 0.0
  %4127 = vmatpush2.msra.mxu0 0.0
  %4128 = vmatprep.subr.mxu0 0.0
  %4129 = vmatpush2.msra.mxu0 0.0
  %4130 = vmatprep.subr.mxu0 0.0
  %4131 = vmatpush2.msra.mxu0 0.0
  %4132 = vmatprep.subr.mxu0 0.0
  %4133 = vmatpush2.msra.mxu0 0.0
  %4134 = vmatprep.subr.mxu0 0.0
  %4135 = vmatpush2.msra.mxu0 0.0
  %4136 = vmatprep.subr.mxu0 0.0
  %4137 = vmatpush2.msra.mxu0 0.0
  %4138 = vmatprep.subr.mxu0 0.0
  %4139 = vmatpush2.msra.mxu0 0.0
  %4140 = vmatprep.mubr.f32.mxu0 0.0
  %4141 = vmatmul.mubr.f32.gmra.mxu0 %v3585
  %v4142 = vpop.f32.mrf.mxu0
  %v4143 = vadd.f32 0.0, %v4142
  %v4144 = vpop.f32.mrf.mxu0
  %4145 = vdwg.mxu0
  %s4146 = scalar_lea.vmem %s8, 392
  %v4147 = vld [vmem:[%s4146] sm:$0xff]
  %v4148 = vld [vmem:[%s4146 + $0x8] sm:$0xff]
  %v4149 = vld [vmem:[%s4146 + $0x10] sm:$0xff]
  %v4150 = vld [vmem:[%s4146 + $0x18] sm:$0xff]
  %v4151 = vld [vmem:[%s4146 + $0x20] sm:$0xff]
  %v4152 = vld [vmem:[%s4146 + $0x28] sm:$0xff]
  %v4153 = vld [vmem:[%s4146 + $0x30] sm:$0x3]
  %v4155 = vsel %vm2697, %v4153, 0
  %4157 = vmatprep.subr.mxu0 0.0
  %4158 = vmatpush1.msra.mxu0 0.0
  %4159 = vmatprep.subr.mxu0 0.0
  %4160 = vmatpush1.msra.mxu0 0.0
  %4161 = vmatprep.subr.mxu0 0.0
  %4162 = vmatpush1.msra.mxu0 0.0
  %4163 = vmatprep.subr.mxu0 0.0
  %4164 = vmatpush1.msra.mxu0 0.0
  %4165 = vmatprep.subr.mxu0 0.0
  %4166 = vmatpush1.msra.mxu0 0.0
  %4167 = vmatprep.subr.mxu0 0.0
  %4168 = vmatpush1.msra.mxu0 0.0
  %4169 = vmatprep.subr.mxu0 0.0
  %4170 = vmatpush1.msra.mxu0 0.0
  %4171 = vmatprep.subr.mxu0 0.0
  %4172 = vmatpush1.msra.mxu0 0.0
  %4173 = vmatprep.subr.mxu0 0.0
  %4174 = vmatpush1.msra.mxu0 0.0
  %4175 = vmatprep.subr.mxu0 0.0
  %4176 = vmatpush1.msra.mxu0 %v4155
  %4177 = vmatprep.subr.mxu0 0.0
  %4178 = vmatpush1.msra.mxu0 %v4152
  %4179 = vmatprep.subr.mxu0 0.0
  %4180 = vmatpush1.msra.mxu0 %v4151
  %4181 = vmatprep.subr.mxu0 0.0
  %4182 = vmatpush1.msra.mxu0 %v4150
  %4183 = vmatprep.subr.mxu0 0.0
  %4184 = vmatpush1.msra.mxu0 %v4149
  %4185 = vmatprep.subr.mxu0 0.0
  %4186 = vmatpush1.msra.mxu0 %v4148
  %4187 = vmatprep.subr.mxu0 0.0
  %4188 = vmatpush1.msra.mxu0 %v4147
  %4189 = vmatprep.subr.mxu0 0.0
  %4190 = vmatpush2.msra.mxu0 0.0
  %4191 = vmatprep.subr.mxu0 0.0
  %4192 = vmatpush2.msra.mxu0 0.0
  %4193 = vmatprep.subr.mxu0 0.0
  %4194 = vmatpush2.msra.mxu0 0.0
  %4195 = vmatprep.subr.mxu0 0.0
  %4196 = vmatpush2.msra.mxu0 0.0
  %4197 = vmatprep.subr.mxu0 0.0
  %4198 = vmatpush2.msra.mxu0 0.0
  %4199 = vmatprep.subr.mxu0 0.0
  %4200 = vmatpush2.msra.mxu0 0.0
  %4201 = vmatprep.subr.mxu0 0.0
  %4202 = vmatpush2.msra.mxu0 0.0
  %4203 = vmatprep.subr.mxu0 0.0
  %4204 = vmatpush2.msra.mxu0 0.0
  %4205 = vmatprep.subr.mxu0 0.0
  %4206 = vmatpush2.msra.mxu0 0.0
  %4207 = vmatprep.subr.mxu0 0.0
  %4208 = vmatpush2.msra.mxu0 0.0
  %4209 = vmatprep.subr.mxu0 0.0
  %4210 = vmatpush2.msra.mxu0 0.0
  %4211 = vmatprep.subr.mxu0 0.0
  %4212 = vmatpush2.msra.mxu0 0.0
  %4213 = vmatprep.subr.mxu0 0.0
  %4214 = vmatpush2.msra.mxu0 0.0
  %4215 = vmatprep.subr.mxu0 0.0
  %4216 = vmatpush2.msra.mxu0 0.0
  %4217 = vmatprep.subr.mxu0 0.0
  %4218 = vmatpush2.msra.mxu0 0.0
  %4219 = vmatprep.subr.mxu0 0.0
  %4220 = vmatpush2.msra.mxu0 0.0
  %4221 = vmatprep.mubr.f32.mxu0 0.0
  %4222 = vmatmul.mubr.f32.gmra.mxu0 %v3585
  %v4223 = vpop.f32.mrf.mxu0
  %v4224 = vadd.f32 0.0, %v4223
  %v4225 = vpop.f32.mrf.mxu0
  %4226 = vdwg.mxu0
  %s4227 = scalar_lea.vmem %s8, 448
  %v4228 = vld [vmem:[%s4227] sm:$0xff]
  %v4229 = vld [vmem:[%s4227 + $0x8] sm:$0xff]
  %v4230 = vld [vmem:[%s4227 + $0x10] sm:$0xff]
  %v4231 = vld [vmem:[%s4227 + $0x18] sm:$0xff]
  %v4232 = vld [vmem:[%s4227 + $0x20] sm:$0xff]
  %v4233 = vld [vmem:[%s4227 + $0x28] sm:$0xff]
  %v4234 = vld [vmem:[%s4227 + $0x30] sm:$0x3]
  %v4236 = vsel %vm2697, %v4234, 0
  %4238 = vmatprep.subr.mxu0 0.0
  %4239 = vmatpush1.msra.mxu0 0.0
  %4240 = vmatprep.subr.mxu0 0.0
  %4241 = vmatpush1.msra.mxu0 0.0
  %4242 = vmatprep.subr.mxu0 0.0
  %4243 = vmatpush1.msra.mxu0 0.0
  %4244 = vmatprep.subr.mxu0 0.0
  %4245 = vmatpush1.msra.mxu0 0.0
  %4246 = vmatprep.subr.mxu0 0.0
  %4247 = vmatpush1.msra.mxu0 0.0
  %4248 = vmatprep.subr.mxu0 0.0
  %4249 = vmatpush1.msra.mxu0 0.0
  %4250 = vmatprep.subr.mxu0 0.0
  %4251 = vmatpush1.msra.mxu0 0.0
  %4252 = vmatprep.subr.mxu0 0.0
  %4253 = vmatpush1.msra.mxu0 0.0
  %4254 = vmatprep.subr.mxu0 0.0
  %4255 = vmatpush1.msra.mxu0 0.0
  %4256 = vmatprep.subr.mxu0 0.0
  %4257 = vmatpush1.msra.mxu0 %v4236
  %4258 = vmatprep.subr.mxu0 0.0
  %4259 = vmatpush1.msra.mxu0 %v4233
  %4260 = vmatprep.subr.mxu0 0.0
  %4261 = vmatpush1.msra.mxu0 %v4232
  %4262 = vmatprep.subr.mxu0 0.0
  %4263 = vmatpush1.msra.mxu0 %v4231
  %4264 = vmatprep.subr.mxu0 0.0
  %4265 = vmatpush1.msra.mxu0 %v4230
  %4266 = vmatprep.subr.mxu0 0.0
  %4267 = vmatpush1.msra.mxu0 %v4229
  %4268 = vmatprep.subr.mxu0 0.0
  %4269 = vmatpush1.msra.mxu0 %v4228
  %4270 = vmatprep.subr.mxu0 0.0
  %4271 = vmatpush2.msra.mxu0 0.0
  %4272 = vmatprep.subr.mxu0 0.0
  %4273 = vmatpush2.msra.mxu0 0.0
  %4274 = vmatprep.subr.mxu0 0.0
  %4275 = vmatpush2.msra.mxu0 0.0
  %4276 = vmatprep.subr.mxu0 0.0
  %4277 = vmatpush2.msra.mxu0 0.0
  %4278 = vmatprep.subr.mxu0 0.0
  %4279 = vmatpush2.msra.mxu0 0.0
  %4280 = vmatprep.subr.mxu0 0.0
  %4281 = vmatpush2.msra.mxu0 0.0
  %4282 = vmatprep.subr.mxu0 0.0
  %4283 = vmatpush2.msra.mxu0 0.0
  %4284 = vmatprep.subr.mxu0 0.0
  %4285 = vmatpush2.msra.mxu0 0.0
  %4286 = vmatprep.subr.mxu0 0.0
  %4287 = vmatpush2.msra.mxu0 0.0
  %4288 = vmatprep.subr.mxu0 0.0
  %4289 = vmatpush2.msra.mxu0 0.0
  %4290 = vmatprep.subr.mxu0 0.0
  %4291 = vmatpush2.msra.mxu0 0.0
  %4292 = vmatprep.subr.mxu0 0.0
  %4293 = vmatpush2.msra.mxu0 0.0
  %4294 = vmatprep.subr.mxu0 0.0
  %4295 = vmatpush2.msra.mxu0 0.0
  %4296 = vmatprep.subr.mxu0 0.0
  %4297 = vmatpush2.msra.mxu0 0.0
  %4298 = vmatprep.subr.mxu0 0.0
  %4299 = vmatpush2.msra.mxu0 0.0
  %4300 = vmatprep.subr.mxu0 0.0
  %4301 = vmatpush2.msra.mxu0 0.0
  %4302 = vmatprep.mubr.f32.mxu0 0.0
  %4303 = vmatmul.mubr.f32.gmra.mxu0 %v3585
  %v4304 = vpop.f32.mrf.mxu0
  %v4305 = vadd.f32 0.0, %v4304
  %v4306 = vpop.f32.mrf.mxu0
  %4307 = vdwg.mxu0
  %v4308 = vld [vmem:[%s9] sm:$0xff]
  %v4309 = vld [vmem:[%s10] sm:$0xff]
  %4311 = vset.pattern.permute.xlu0 0
  %4312 = vperm.xlu0 %4311, %v4309
  %v4313 = vpop.permute.xlu0 %4312
  %v4316 = vsel %vm3474, %v4308, 0
  %4318 = vmatprep.subr.mxu0 0.0
  %4319 = vmatpush1.msra.mxu0 0.0
  %4320 = vmatprep.subr.mxu0 0.0
  %4321 = vmatpush1.msra.mxu0 0.0
  %4322 = vmatprep.subr.mxu0 0.0
  %4323 = vmatpush1.msra.mxu0 0.0
  %4324 = vmatprep.subr.mxu0 0.0
  %4325 = vmatpush1.msra.mxu0 0.0
  %4326 = vmatprep.subr.mxu0 0.0
  %4327 = vmatpush1.msra.mxu0 0.0
  %4328 = vmatprep.subr.mxu0 0.0
  %4329 = vmatpush1.msra.mxu0 0.0
  %4330 = vmatprep.subr.mxu0 0.0
  %4331 = vmatpush1.msra.mxu0 0.0
  %4332 = vmatprep.subr.mxu0 0.0
  %4333 = vmatpush1.msra.mxu0 %v4305
  %4334 = vmatprep.subr.mxu0 0.0
  %4335 = vmatpush1.msra.mxu0 %v4224
  %4336 = vmatprep.subr.mxu0 0.0
  %4337 = vmatpush1.msra.mxu0 %v4143
  %4338 = vmatprep.subr.mxu0 0.0
  %4339 = vmatpush1.msra.mxu0 %v4062
  %4340 = vmatprep.subr.mxu0 0.0
  %4341 = vmatpush1.msra.mxu0 %v3981
  %4342 = vmatprep.subr.mxu0 0.0
  %4343 = vmatpush1.msra.mxu0 %v3900
  %4344 = vmatprep.subr.mxu0 0.0
  %4345 = vmatpush1.msra.mxu0 %v3819
  %4346 = vmatprep.subr.mxu0 0.0
  %4347 = vmatpush1.msra.mxu0 %v3738
  %4348 = vmatprep.subr.mxu0 0.0
  %4349 = vmatpush1.msra.mxu0 %v3657
  %4350 = vmatprep.subr.mxu0 0.0
  %4351 = vmatpush2.msra.mxu0 0.0
  %4352 = vmatprep.subr.mxu0 0.0
  %4353 = vmatpush2.msra.mxu0 0.0
  %4354 = vmatprep.subr.mxu0 0.0
  %4355 = vmatpush2.msra.mxu0 0.0
  %4356 = vmatprep.subr.mxu0 0.0
  %4357 = vmatpush2.msra.mxu0 0.0
  %4358 = vmatprep.subr.mxu0 0.0
  %4359 = vmatpush2.msra.mxu0 0.0
  %4360 = vmatprep.subr.mxu0 0.0
  %4361 = vmatpush2.msra.mxu0 0.0
  %4362 = vmatprep.subr.mxu0 0.0
  %4363 = vmatpush2.msra.mxu0 0.0
  %4364 = vmatprep.subr.mxu0 0.0
  %4365 = vmatpush2.msra.mxu0 0.0
  %4366 = vmatprep.subr.mxu0 0.0
  %4367 = vmatpush2.msra.mxu0 0.0
  %4368 = vmatprep.subr.mxu0 0.0
  %4369 = vmatpush2.msra.mxu0 0.0
  %4370 = vmatprep.subr.mxu0 0.0
  %4371 = vmatpush2.msra.mxu0 0.0
  %4372 = vmatprep.subr.mxu0 0.0
  %4373 = vmatpush2.msra.mxu0 0.0
  %4374 = vmatprep.subr.mxu0 0.0
  %4375 = vmatpush2.msra.mxu0 0.0
  %4376 = vmatprep.subr.mxu0 0.0
  %4377 = vmatpush2.msra.mxu0 0.0
  %4378 = vmatprep.subr.mxu0 0.0
  %4379 = vmatpush2.msra.mxu0 0.0
  %4380 = vmatprep.subr.mxu0 0.0
  %4381 = vmatpush2.msra.mxu0 0.0
  %4382 = vmatprep.mubr.f32.mxu0 0.0
  %4383 = vmatmul.mubr.f32.gmra.mxu0 %v4316
  %v4384 = vpop.f32.mrf.mxu0
  %v4385 = vadd.f32 %v4313, %v4384
  %v4386 = vpop.f32.mrf.mxu0
  %4387 = vdwg.mxu0
  %v4388 = vmul.f32 %v4385, 0.5
  %v4389 = vmul.f32 %v4385, 0.70710677
  %vm4390 = vcmp.ge.f32.partialorder %v4389, 0.0
  %v4391 = vsub.f32 0.0, %v4389
  %v4392 = vsel %vm4390, %v4389, %v4391
  %v4393 = vmul.f32 %v4392, 0.3275911
  %v4394 = vadd.f32 %v4393, 1.0
  %v4395 = vrcp.pop %v4394
  %v4396 = vmul.f32 1.0, %v4395
  %v4397 = vmul.f32 %v4396, 1.0614054
  %v4398 = vadd.f32 %v4397, -1.4531521
  %v4399 = vmul.f32 %v4398, %v4396
  %v4400 = vadd.f32 %v4399, 1.4214138
  %v4401 = vmul.f32 %v4400, %v4396
  %v4402 = vadd.f32 %v4401, -0.28449672
  %v4403 = vmul.f32 %v4402, %v4396
  %v4404 = vadd.f32 %v4403, 0.2548296
  %v4405 = vmul.f32 %v4404, %v4396
  %v4406 = vsub.f32 0.0, %v4392
  %v4407 = vmul.f32 %v4406, %v4392
  %v4408 = vmul.f32 %v4407, 1.442695
  %v4409 = vpow.pop %v4408
  %v4410 = vmul.f32 %v4405, %v4409
  %v4411 = vsub.f32 1.0, %v4410
  %v4412 = vsub.f32 0.0, %v4411
  %v4413 = vsel %vm4390, %v4411, %v4412
  %v4414 = vadd.f32 %v4413, 1.0
  %v4415 = vmul.f32 %v4388, %v4414
  %v4416 = vld [vmem:[%s11] sm:$0xff]
  %v4417 = vld [vmem:[%s11 + $0x8] sm:$0xff]
  %v4418 = vld [vmem:[%s11 + $0x10] sm:$0x3]
  %vm4419 = vcmask 146432
  %v4421 = vsel %vm4419, %v4415, 0
  %v4424 = vsel %vm2697, %v4418, 0
  %4426 = vmatprep.subr.mxu0 0.0
  %4427 = vmatpush1.msra.mxu0 0.0
  %4428 = vmatprep.subr.mxu0 0.0
  %4429 = vmatpush1.msra.mxu0 0.0
  %4430 = vmatprep.subr.mxu0 0.0
  %4431 = vmatpush1.msra.mxu0 0.0
  %4432 = vmatprep.subr.mxu0 0.0
  %4433 = vmatpush1.msra.mxu0 0.0
  %4434 = vmatprep.subr.mxu0 0.0
  %4435 = vmatpush1.msra.mxu0 0.0
  %4436 = vmatprep.subr.mxu0 0.0
  %4437 = vmatpush1.msra.mxu0 0.0
  %4438 = vmatprep.subr.mxu0 0.0
  %4439 = vmatpush1.msra.mxu0 0.0
  %4440 = vmatprep.subr.mxu0 0.0
  %4441 = vmatpush1.msra.mxu0 0.0
  %4442 = vmatprep.subr.mxu0 0.0
  %4443 = vmatpush1.msra.mxu0 0.0
  %4444 = vmatprep.subr.mxu0 0.0
  %4445 = vmatpush1.msra.mxu0 0.0
  %4446 = vmatprep.subr.mxu0 0.0
  %4447 = vmatpush1.msra.mxu0 0.0
  %4448 = vmatprep.subr.mxu0 0.0
  %4449 = vmatpush1.msra.mxu0 0.0
  %4450 = vmatprep.subr.mxu0 0.0
  %4451 = vmatpush1.msra.mxu0 0.0
  %4452 = vmatprep.subr.mxu0 0.0
  %4453 = vmatpush1.msra.mxu0 %v4424
  %4454 = vmatprep.subr.mxu0 0.0
  %4455 = vmatpush1.msra.mxu0 %v4417
  %4456 = vmatprep.subr.mxu0 0.0
  %4457 = vmatpush1.msra.mxu0 %v4416
  %4458 = vmatprep.subr.mxu0 0.0
  %4459 = vmatpush2.msra.mxu0 0.0
  %4460 = vmatprep.subr.mxu0 0.0
  %4461 = vmatpush2.msra.mxu0 0.0
  %4462 = vmatprep.subr.mxu0 0.0
  %4463 = vmatpush2.msra.mxu0 0.0
  %4464 = vmatprep.subr.mxu0 0.0
  %4465 = vmatpush2.msra.mxu0 0.0
  %4466 = vmatprep.subr.mxu0 0.0
  %4467 = vmatpush2.msra.mxu0 0.0
  %4468 = vmatprep.subr.mxu0 0.0
  %4469 = vmatpush2.msra.mxu0 0.0
  %4470 = vmatprep.subr.mxu0 0.0
  %4471 = vmatpush2.msra.mxu0 0.0
  %4472 = vmatprep.subr.mxu0 0.0
  %4473 = vmatpush2.msra.mxu0 0.0
  %4474 = vmatprep.subr.mxu0 0.0
  %4475 = vmatpush2.msra.mxu0 0.0
  %4476 = vmatprep.subr.mxu0 0.0
  %4477 = vmatpush2.msra.mxu0 0.0
  %4478 = vmatprep.subr.mxu0 0.0
  %4479 = vmatpush2.msra.mxu0 0.0
  %4480 = vmatprep.subr.mxu0 0.0
  %4481 = vmatpush2.msra.mxu0 0.0
  %4482 = vmatprep.subr.mxu0 0.0
  %4483 = vmatpush2.msra.mxu0 0.0
  %4484 = vmatprep.subr.mxu0 0.0
  %4485 = vmatpush2.msra.mxu0 0.0
  %4486 = vmatprep.subr.mxu0 0.0
  %4487 = vmatpush2.msra.mxu0 0.0
  %4488 = vmatprep.subr.mxu0 0.0
  %4489 = vmatpush2.msra.mxu0 0.0
  %4490 = vmatprep.mubr.f32.mxu0 0.0
  %4491 = vmatmul.mubr.f32.gmra.mxu0 %v4421
  %v4492 = vpop.f32.mrf.mxu0
  %v4493 = vadd.f32 0.0, %v4492
  %v4494 = vpop.f32.mrf.mxu0
  %4495 = vdwg.mxu0
  %s4496 = scalar_lea.vmem %s11, 24
  %v4497 = vld [vmem:[%s4496] sm:$0xff]
  %v4498 = vld [vmem:[%s4496 + $0x8] sm:$0xff]
  %v4499 = vld [vmem:[%s4496 + $0x10] sm:$0x3]
  %v4501 = vsel %vm2697, %v4499, 0
  %4503 = vmatprep.subr.mxu0 0.0
  %4504 = vmatpush1.msra.mxu0 0.0
  %4505 = vmatprep.subr.mxu0 0.0
  %4506 = vmatpush1.msra.mxu0 0.0
  %4507 = vmatprep.subr.mxu0 0.0
  %4508 = vmatpush1.msra.mxu0 0.0
  %4509 = vmatprep.subr.mxu0 0.0
  %4510 = vmatpush1.msra.mxu0 0.0
  %4511 = vmatprep.subr.mxu0 0.0
  %4512 = vmatpush1.msra.mxu0 0.0
  %4513 = vmatprep.subr.mxu0 0.0
  %4514 = vmatpush1.msra.mxu0 0.0
  %4515 = vmatprep.subr.mxu0 0.0
  %4516 = vmatpush1.msra.mxu0 0.0
  %4517 = vmatprep.subr.mxu0 0.0
  %4518 = vmatpush1.msra.mxu0 0.0
  %4519 = vmatprep.subr.mxu0 0.0
  %4520 = vmatpush1.msra.mxu0 0.0
  %4521 = vmatprep.subr.mxu0 0.0
  %4522 = vmatpush1.msra.mxu0 0.0
  %4523 = vmatprep.subr.mxu0 0.0
  %4524 = vmatpush1.msra.mxu0 0.0
  %4525 = vmatprep.subr.mxu0 0.0
  %4526 = vmatpush1.msra.mxu0 0.0
  %4527 = vmatprep.subr.mxu0 0.0
  %4528 = vmatpush1.msra.mxu0 0.0
  %4529 = vmatprep.subr.mxu0 0.0
  %4530 = vmatpush1.msra.mxu0 %v4501
  %4531 = vmatprep.subr.mxu0 0.0
  %4532 = vmatpush1.msra.mxu0 %v4498
  %4533 = vmatprep.subr.mxu0 0.0
  %4534 = vmatpush1.msra.mxu0 %v4497
  %4535 = vmatprep.subr.mxu0 0.0
  %4536 = vmatpush2.msra.mxu0 0.0
  %4537 = vmatprep.subr.mxu0 0.0
  %4538 = vmatpush2.msra.mxu0 0.0
  %4539 = vmatprep.subr.mxu0 0.0
  %4540 = vmatpush2.msra.mxu0 0.0
  %4541 = vmatprep.subr.mxu0 0.0
  %4542 = vmatpush2.msra.mxu0 0.0
  %4543 = vmatprep.subr.mxu0 0.0
  %4544 = vmatpush2.msra.mxu0 0.0
  %4545 = vmatprep.subr.mxu0 0.0
  %4546 = vmatpush2.msra.mxu0 0.0
  %4547 = vmatprep.subr.mxu0 0.0
  %4548 = vmatpush2.msra.mxu0 0.0
  %4549 = vmatprep.subr.mxu0 0.0
  %4550 = vmatpush2.msra.mxu0 0.0
  %4551 = vmatprep.subr.mxu0 0.0
  %4552 = vmatpush2.msra.mxu0 0.0
  %4553 = vmatprep.subr.mxu0 0.0
  %4554 = vmatpush2.msra.mxu0 0.0
  %4555 = vmatprep.subr.mxu0 0.0
  %4556 = vmatpush2.msra.mxu0 0.0
  %4557 = vmatprep.subr.mxu0 0.0
  %4558 = vmatpush2.msra.mxu0 0.0
  %4559 = vmatprep.subr.mxu0 0.0
  %4560 = vmatpush2.msra.mxu0 0.0
  %4561 = vmatprep.subr.mxu0 0.0
  %4562 = vmatpush2.msra.mxu0 0.0
  %4563 = vmatprep.subr.mxu0 0.0
  %4564 = vmatpush2.msra.mxu0 0.0
  %4565 = vmatprep.subr.mxu0 0.0
  %4566 = vmatpush2.msra.mxu0 0.0
  %4567 = vmatprep.mubr.f32.mxu0 0.0
  %4568 = vmatmul.mubr.f32.gmra.mxu0 %v4421
  %v4569 = vpop.f32.mrf.mxu0
  %v4570 = vadd.f32 0.0, %v4569
  %v4571 = vpop.f32.mrf.mxu0
  %4572 = vdwg.mxu0
  %s4573 = scalar_lea.vmem %s11, 48
  %v4574 = vld [vmem:[%s4573] sm:$0xff]
  %v4575 = vld [vmem:[%s4573 + $0x8] sm:$0xff]
  %v4576 = vld [vmem:[%s4573 + $0x10] sm:$0x3]
  %v4578 = vsel %vm2697, %v4576, 0
  %4580 = vmatprep.subr.mxu0 0.0
  %4581 = vmatpush1.msra.mxu0 0.0
  %4582 = vmatprep.subr.mxu0 0.0
  %4583 = vmatpush1.msra.mxu0 0.0
  %4584 = vmatprep.subr.mxu0 0.0
  %4585 = vmatpush1.msra.mxu0 0.0
  %4586 = vmatprep.subr.mxu0 0.0
  %4587 = vmatpush1.msra.mxu0 0.0
  %4588 = vmatprep.subr.mxu0 0.0
  %4589 = vmatpush1.msra.mxu0 0.0
  %4590 = vmatprep.subr.mxu0 0.0
  %4591 = vmatpush1.msra.mxu0 0.0
  %4592 = vmatprep.subr.mxu0 0.0
  %4593 = vmatpush1.msra.mxu0 0.0
  %4594 = vmatprep.subr.mxu0 0.0
  %4595 = vmatpush1.msra.mxu0 0.0
  %4596 = vmatprep.subr.mxu0 0.0
  %4597 = vmatpush1.msra.mxu0 0.0
  %4598 = vmatprep.subr.mxu0 0.0
  %4599 = vmatpush1.msra.mxu0 0.0
  %4600 = vmatprep.subr.mxu0 0.0
  %4601 = vmatpush1.msra.mxu0 0.0
  %4602 = vmatprep.subr.mxu0 0.0
  %4603 = vmatpush1.msra.mxu0 0.0
  %4604 = vmatprep.subr.mxu0 0.0
  %4605 = vmatpush1.msra.mxu0 0.0
  %4606 = vmatprep.subr.mxu0 0.0
  %4607 = vmatpush1.msra.mxu0 %v4578
  %4608 = vmatprep.subr.mxu0 0.0
  %4609 = vmatpush1.msra.mxu0 %v4575
  %4610 = vmatprep.subr.mxu0 0.0
  %4611 = vmatpush1.msra.mxu0 %v4574
  %4612 = vmatprep.subr.mxu0 0.0
  %4613 = vmatpush2.msra.mxu0 0.0
  %4614 = vmatprep.subr.mxu0 0.0
  %4615 = vmatpush2.msra.mxu0 0.0
  %4616 = vmatprep.subr.mxu0 0.0
  %4617 = vmatpush2.msra.mxu0 0.0
  %4618 = vmatprep.subr.mxu0 0.0
  %4619 = vmatpush2.msra.mxu0 0.0
  %4620 = vmatprep.subr.mxu0 0.0
  %4621 = vmatpush2.msra.mxu0 0.0
  %4622 = vmatprep.subr.mxu0 0.0
  %4623 = vmatpush2.msra.mxu0 0.0
  %4624 = vmatprep.subr.mxu0 0.0
  %4625 = vmatpush2.msra.mxu0 0.0
  %4626 = vmatprep.subr.mxu0 0.0
  %4627 = vmatpush2.msra.mxu0 0.0
  %4628 = vmatprep.subr.mxu0 0.0
  %4629 = vmatpush2.msra.mxu0 0.0
  %4630 = vmatprep.subr.mxu0 0.0
  %4631 = vmatpush2.msra.mxu0 0.0
  %4632 = vmatprep.subr.mxu0 0.0
  %4633 = vmatpush2.msra.mxu0 0.0
  %4634 = vmatprep.subr.mxu0 0.0
  %4635 = vmatpush2.msra.mxu0 0.0
  %4636 = vmatprep.subr.mxu0 0.0
  %4637 = vmatpush2.msra.mxu0 0.0
  %4638 = vmatprep.subr.mxu0 0.0
  %4639 = vmatpush2.msra.mxu0 0.0
  %4640 = vmatprep.subr.mxu0 0.0
  %4641 = vmatpush2.msra.mxu0 0.0
  %4642 = vmatprep.subr.mxu0 0.0
  %4643 = vmatpush2.msra.mxu0 0.0
  %4644 = vmatprep.mubr.f32.mxu0 0.0
  %4645 = vmatmul.mubr.f32.gmra.mxu0 %v4421
  %v4646 = vpop.f32.mrf.mxu0
  %v4647 = vadd.f32 0.0, %v4646
  %v4648 = vpop.f32.mrf.mxu0
  %4649 = vdwg.mxu0
  %s4650 = scalar_lea.vmem %s11, 72
  %v4651 = vld [vmem:[%s4650] sm:$0xff]
  %v4652 = vld [vmem:[%s4650 + $0x8] sm:$0xff]
  %v4653 = vld [vmem:[%s4650 + $0x10] sm:$0x3]
  %v4655 = vsel %vm2697, %v4653, 0
  %4657 = vmatprep.subr.mxu0 0.0
  %4658 = vmatpush1.msra.mxu0 0.0
  %4659 = vmatprep.subr.mxu0 0.0
  %4660 = vmatpush1.msra.mxu0 0.0
  %4661 = vmatprep.subr.mxu0 0.0
  %4662 = vmatpush1.msra.mxu0 0.0
  %4663 = vmatprep.subr.mxu0 0.0
  %4664 = vmatpush1.msra.mxu0 0.0
  %4665 = vmatprep.subr.mxu0 0.0
  %4666 = vmatpush1.msra.mxu0 0.0
  %4667 = vmatprep.subr.mxu0 0.0
  %4668 = vmatpush1.msra.mxu0 0.0
  %4669 = vmatprep.subr.mxu0 0.0
  %4670 = vmatpush1.msra.mxu0 0.0
  %4671 = vmatprep.subr.mxu0 0.0
  %4672 = vmatpush1.msra.mxu0 0.0
  %4673 = vmatprep.subr.mxu0 0.0
  %4674 = vmatpush1.msra.mxu0 0.0
  %4675 = vmatprep.subr.mxu0 0.0
  %4676 = vmatpush1.msra.mxu0 0.0
  %4677 = vmatprep.subr.mxu0 0.0
  %4678 = vmatpush1.msra.mxu0 0.0
  %4679 = vmatprep.subr.mxu0 0.0
  %4680 = vmatpush1.msra.mxu0 0.0
  %4681 = vmatprep.subr.mxu0 0.0
  %4682 = vmatpush1.msra.mxu0 0.0
  %4683 = vmatprep.subr.mxu0 0.0
  %4684 = vmatpush1.msra.mxu0 %v4655
  %4685 = vmatprep.subr.mxu0 0.0
  %4686 = vmatpush1.msra.mxu0 %v4652
  %4687 = vmatprep.subr.mxu0 0.0
  %4688 = vmatpush1.msra.mxu0 %v4651
  %4689 = vmatprep.subr.mxu0 0.0
  %4690 = vmatpush2.msra.mxu0 0.0
  %4691 = vmatprep.subr.mxu0 0.0
  %4692 = vmatpush2.msra.mxu0 0.0
  %4693 = vmatprep.subr.mxu0 0.0
  %4694 = vmatpush2.msra.mxu0 0.0
  %4695 = vmatprep.subr.mxu0 0.0
  %4696 = vmatpush2.msra.mxu0 0.0
  %4697 = vmatprep.subr.mxu0 0.0
  %4698 = vmatpush2.msra.mxu0 0.0
  %4699 = vmatprep.subr.mxu0 0.0
  %4700 = vmatpush2.msra.mxu0 0.0
  %4701 = vmatprep.subr.mxu0 0.0
  %4702 = vmatpush2.msra.mxu0 0.0
  %4703 = vmatprep.subr.mxu0 0.0
  %4704 = vmatpush2.msra.mxu0 0.0
  %4705 = vmatprep.subr.mxu0 0.0
  %4706 = vmatpush2.msra.mxu0 0.0
  %4707 = vmatprep.subr.mxu0 0.0
  %4708 = vmatpush2.msra.mxu0 0.0
  %4709 = vmatprep.subr.mxu0 0.0
  %4710 = vmatpush2.msra.mxu0 0.0
  %4711 = vmatprep.subr.mxu0 0.0
  %4712 = vmatpush2.msra.mxu0 0.0
  %4713 = vmatprep.subr.mxu0 0.0
  %4714 = vmatpush2.msra.mxu0 0.0
  %4715 = vmatprep.subr.mxu0 0.0
  %4716 = vmatpush2.msra.mxu0 0.0
  %4717 = vmatprep.subr.mxu0 0.0
  %4718 = vmatpush2.msra.mxu0 0.0
  %4719 = vmatprep.subr.mxu0 0.0
  %4720 = vmatpush2.msra.mxu0 0.0
  %4721 = vmatprep.mubr.f32.mxu0 0.0
  %4722 = vmatmul.mubr.f32.gmra.mxu0 %v4421
  %v4723 = vpop.f32.mrf.mxu0
  %v4724 = vadd.f32 0.0, %v4723
  %v4725 = vpop.f32.mrf.mxu0
  %4726 = vdwg.mxu0
  %s4727 = scalar_lea.vmem %s11, 96
  %v4728 = vld [vmem:[%s4727] sm:$0xff]
  %v4729 = vld [vmem:[%s4727 + $0x8] sm:$0xff]
  %v4730 = vld [vmem:[%s4727 + $0x10] sm:$0x3]
  %v4732 = vsel %vm2697, %v4730, 0
  %4734 = vmatprep.subr.mxu0 0.0
  %4735 = vmatpush1.msra.mxu0 0.0
  %4736 = vmatprep.subr.mxu0 0.0
  %4737 = vmatpush1.msra.mxu0 0.0
  %4738 = vmatprep.subr.mxu0 0.0
  %4739 = vmatpush1.msra.mxu0 0.0
  %4740 = vmatprep.subr.mxu0 0.0
  %4741 = vmatpush1.msra.mxu0 0.0
  %4742 = vmatprep.subr.mxu0 0.0
  %4743 = vmatpush1.msra.mxu0 0.0
  %4744 = vmatprep.subr.mxu0 0.0
  %4745 = vmatpush1.msra.mxu0 0.0
  %4746 = vmatprep.subr.mxu0 0.0
  %4747 = vmatpush1.msra.mxu0 0.0
  %4748 = vmatprep.subr.mxu0 0.0
  %4749 = vmatpush1.msra.mxu0 0.0
  %4750 = vmatprep.subr.mxu0 0.0
  %4751 = vmatpush1.msra.mxu0 0.0
  %4752 = vmatprep.subr.mxu0 0.0
  %4753 = vmatpush1.msra.mxu0 0.0
  %4754 = vmatprep.subr.mxu0 0.0
  %4755 = vmatpush1.msra.mxu0 0.0
  %4756 = vmatprep.subr.mxu0 0.0
  %4757 = vmatpush1.msra.mxu0 0.0
  %4758 = vmatprep.subr.mxu0 0.0
  %4759 = vmatpush1.msra.mxu0 0.0
  %4760 = vmatprep.subr.mxu0 0.0
  %4761 = vmatpush1.msra.mxu0 %v4732
  %4762 = vmatprep.subr.mxu0 0.0
  %4763 = vmatpush1.msra.mxu0 %v4729
  %4764 = vmatprep.subr.mxu0 0.0
  %4765 = vmatpush1.msra.mxu0 %v4728
  %4766 = vmatprep.subr.mxu0 0.0
  %4767 = vmatpush2.msra.mxu0 0.0
  %4768 = vmatprep.subr.mxu0 0.0
  %4769 = vmatpush2.msra.mxu0 0.0
  %4770 = vmatprep.subr.mxu0 0.0
  %4771 = vmatpush2.msra.mxu0 0.0
  %4772 = vmatprep.subr.mxu0 0.0
  %4773 = vmatpush2.msra.mxu0 0.0
  %4774 = vmatprep.subr.mxu0 0.0
  %4775 = vmatpush2.msra.mxu0 0.0
  %4776 = vmatprep.subr.mxu0 0.0
  %4777 = vmatpush2.msra.mxu0 0.0
  %4778 = vmatprep.subr.mxu0 0.0
  %4779 = vmatpush2.msra.mxu0 0.0
  %4780 = vmatprep.subr.mxu0 0.0
  %4781 = vmatpush2.msra.mxu0 0.0
  %4782 = vmatprep.subr.mxu0 0.0
  %4783 = vmatpush2.msra.mxu0 0.0
  %4784 = vmatprep.subr.mxu0 0.0
  %4785 = vmatpush2.msra.mxu0 0.0
  %4786 = vmatprep.subr.mxu0 0.0
  %4787 = vmatpush2.msra.mxu0 0.0
  %4788 = vmatprep.subr.mxu0 0.0
  %4789 = vmatpush2.msra.mxu0 0.0
  %4790 = vmatprep.subr.mxu0 0.0
  %4791 = vmatpush2.msra.mxu0 0.0
  %4792 = vmatprep.subr.mxu0 0.0
  %4793 = vmatpush2.msra.mxu0 0.0
  %4794 = vmatprep.subr.mxu0 0.0
  %4795 = vmatpush2.msra.mxu0 0.0
  %4796 = vmatprep.subr.mxu0 0.0
  %4797 = vmatpush2.msra.mxu0 0.0
  %4798 = vmatprep.mubr.f32.mxu0 0.0
  %4799 = vmatmul.mubr.f32.gmra.mxu0 %v4421
  %v4800 = vpop.f32.mrf.mxu0
  %v4801 = vadd.f32 0.0, %v4800
  %v4802 = vpop.f32.mrf.mxu0
  %4803 = vdwg.mxu0
  %s4804 = scalar_lea.vmem %s11, 120
  %v4805 = vld [vmem:[%s4804] sm:$0xff]
  %v4806 = vld [vmem:[%s4804 + $0x8] sm:$0xff]
  %v4807 = vld [vmem:[%s4804 + $0x10] sm:$0x3]
  %v4809 = vsel %vm2697, %v4807, 0
  %4811 = vmatprep.subr.mxu0 0.0
  %4812 = vmatpush1.msra.mxu0 0.0
  %4813 = vmatprep.subr.mxu0 0.0
  %4814 = vmatpush1.msra.mxu0 0.0
  %4815 = vmatprep.subr.mxu0 0.0
  %4816 = vmatpush1.msra.mxu0 0.0
  %4817 = vmatprep.subr.mxu0 0.0
  %4818 = vmatpush1.msra.mxu0 0.0
  %4819 = vmatprep.subr.mxu0 0.0
  %4820 = vmatpush1.msra.mxu0 0.0
  %4821 = vmatprep.subr.mxu0 0.0
  %4822 = vmatpush1.msra.mxu0 0.0
  %4823 = vmatprep.subr.mxu0 0.0
  %4824 = vmatpush1.msra.mxu0 0.0
  %4825 = vmatprep.subr.mxu0 0.0
  %4826 = vmatpush1.msra.mxu0 0.0
  %4827 = vmatprep.subr.mxu0 0.0
  %4828 = vmatpush1.msra.mxu0 0.0
  %4829 = vmatprep.subr.mxu0 0.0
  %4830 = vmatpush1.msra.mxu0 0.0
  %4831 = vmatprep.subr.mxu0 0.0
  %4832 = vmatpush1.msra.mxu0 0.0
  %4833 = vmatprep.subr.mxu0 0.0
  %4834 = vmatpush1.msra.mxu0 0.0
  %4835 = vmatprep.subr.mxu0 0.0
  %4836 = vmatpush1.msra.mxu0 0.0
  %4837 = vmatprep.subr.mxu0 0.0
  %4838 = vmatpush1.msra.mxu0 %v4809
  %4839 = vmatprep.subr.mxu0 0.0
  %4840 = vmatpush1.msra.mxu0 %v4806
  %4841 = vmatprep.subr.mxu0 0.0
  %4842 = vmatpush1.msra.mxu0 %v4805
  %4843 = vmatprep.subr.mxu0 0.0
  %4844 = vmatpush2.msra.mxu0 0.0
  %4845 = vmatprep.subr.mxu0 0.0
  %4846 = vmatpush2.msra.mxu0 0.0
  %4847 = vmatprep.subr.mxu0 0.0
  %4848 = vmatpush2.msra.mxu0 0.0
  %4849 = vmatprep.subr.mxu0 0.0
  %4850 = vmatpush2.msra.mxu0 0.0
  %4851 = vmatprep.subr.mxu0 0.0
  %4852 = vmatpush2.msra.mxu0 0.0
  %4853 = vmatprep.subr.mxu0 0.0
  %4854 = vmatpush2.msra.mxu0 0.0
  %4855 = vmatprep.subr.mxu0 0.0
  %4856 = vmatpush2.msra.mxu0 0.0
  %4857 = vmatprep.subr.mxu0 0.0
  %4858 = vmatpush2.msra.mxu0 0.0
  %4859 = vmatprep.subr.mxu0 0.0
  %4860 = vmatpush2.msra.mxu0 0.0
  %4861 = vmatprep.subr.mxu0 0.0
  %4862 = vmatpush2.msra.mxu0 0.0
  %4863 = vmatprep.subr.mxu0 0.0
  %4864 = vmatpush2.msra.mxu0 0.0
  %4865 = vmatprep.subr.mxu0 0.0
  %4866 = vmatpush2.msra.mxu0 0.0
  %4867 = vmatprep.subr.mxu0 0.0
  %4868 = vmatpush2.msra.mxu0 0.0
  %4869 = vmatprep.subr.mxu0 0.0
  %4870 = vmatpush2.msra.mxu0 0.0
  %4871 = vmatprep.subr.mxu0 0.0
  %4872 = vmatpush2.msra.mxu0 0.0
  %4873 = vmatprep.subr.mxu0 0.0
  %4874 = vmatpush2.msra.mxu0 0.0
  %4875 = vmatprep.mubr.f32.mxu0 0.0
  %4876 = vmatmul.mubr.f32.gmra.mxu0 %v4421
  %v4877 = vpop.f32.mrf.mxu0
  %v4878 = vadd.f32 0.0, %v4877
  %v4879 = vpop.f32.mrf.mxu0
  %4880 = vdwg.mxu0
  %s4881 = scalar_lea.vmem %s11, 144
  %v4882 = vld [vmem:[%s4881] sm:$0xff]
  %v4883 = vld [vmem:[%s4881 + $0x8] sm:$0xff]
  %v4884 = vld [vmem:[%s4881 + $0x10] sm:$0x3]
  %v4886 = vsel %vm2697, %v4884, 0
  %4888 = vmatprep.subr.mxu0 0.0
  %4889 = vmatpush1.msra.mxu0 0.0
  %4890 = vmatprep.subr.mxu0 0.0
  %4891 = vmatpush1.msra.mxu0 0.0
  %4892 = vmatprep.subr.mxu0 0.0
  %4893 = vmatpush1.msra.mxu0 0.0
  %4894 = vmatprep.subr.mxu0 0.0
  %4895 = vmatpush1.msra.mxu0 0.0
  %4896 = vmatprep.subr.mxu0 0.0
  %4897 = vmatpush1.msra.mxu0 0.0
  %4898 = vmatprep.subr.mxu0 0.0
  %4899 = vmatpush1.msra.mxu0 0.0
  %4900 = vmatprep.subr.mxu0 0.0
  %4901 = vmatpush1.msra.mxu0 0.0
  %4902 = vmatprep.subr.mxu0 0.0
  %4903 = vmatpush1.msra.mxu0 0.0
  %4904 = vmatprep.subr.mxu0 0.0
  %4905 = vmatpush1.msra.mxu0 0.0
  %4906 = vmatprep.subr.mxu0 0.0
  %4907 = vmatpush1.msra.mxu0 0.0
  %4908 = vmatprep.subr.mxu0 0.0
  %4909 = vmatpush1.msra.mxu0 0.0
  %4910 = vmatprep.subr.mxu0 0.0
  %4911 = vmatpush1.msra.mxu0 0.0
  %4912 = vmatprep.subr.mxu0 0.0
  %4913 = vmatpush1.msra.mxu0 0.0
  %4914 = vmatprep.subr.mxu0 0.0
  %4915 = vmatpush1.msra.mxu0 %v4886
  %4916 = vmatprep.subr.mxu0 0.0
  %4917 = vmatpush1.msra.mxu0 %v4883
  %4918 = vmatprep.subr.mxu0 0.0
  %4919 = vmatpush1.msra.mxu0 %v4882
  %4920 = vmatprep.subr.mxu0 0.0
  %4921 = vmatpush2.msra.mxu0 0.0
  %4922 = vmatprep.subr.mxu0 0.0
  %4923 = vmatpush2.msra.mxu0 0.0
  %4924 = vmatprep.subr.mxu0 0.0
  %4925 = vmatpush2.msra.mxu0 0.0
  %4926 = vmatprep.subr.mxu0 0.0
  %4927 = vmatpush2.msra.mxu0 0.0
  %4928 = vmatprep.subr.mxu0 0.0
  %4929 = vmatpush2.msra.mxu0 0.0
  %4930 = vmatprep.subr.mxu0 0.0
  %4931 = vmatpush2.msra.mxu0 0.0
  %4932 = vmatprep.subr.mxu0 0.0
  %4933 = vmatpush2.msra.mxu0 0.0
  %4934 = vmatprep.subr.mxu0 0.0
  %4935 = vmatpush2.msra.mxu0 0.0
  %4936 = vmatprep.subr.mxu0 0.0
  %4937 = vmatpush2.msra.mxu0 0.0
  %4938 = vmatprep.subr.mxu0 0.0
  %4939 = vmatpush2.msra.mxu0 0.0
  %4940 = vmatprep.subr.mxu0 0.0
  %4941 = vmatpush2.msra.mxu0 0.0
  %4942 = vmatprep.subr.mxu0 0.0
  %4943 = vmatpush2.msra.mxu0 0.0
  %4944 = vmatprep.subr.mxu0 0.0
  %4945 = vmatpush2.msra.mxu0 0.0
  %4946 = vmatprep.subr.mxu0 0.0
  %4947 = vmatpush2.msra.mxu0 0.0
  %4948 = vmatprep.subr.mxu0 0.0
  %4949 = vmatpush2.msra.mxu0 0.0
  %4950 = vmatprep.subr.mxu0 0.0
  %4951 = vmatpush2.msra.mxu0 0.0
  %4952 = vmatprep.mubr.f32.mxu0 0.0
  %4953 = vmatmul.mubr.f32.gmra.mxu0 %v4421
  %v4954 = vpop.f32.mrf.mxu0
  %v4955 = vadd.f32 0.0, %v4954
  %v4956 = vpop.f32.mrf.mxu0
  %4957 = vdwg.mxu0
  %s4958 = scalar_lea.vmem %s11, 168
  %v4959 = vld [vmem:[%s4958] sm:$0xff]
  %v4960 = vld [vmem:[%s4958 + $0x8] sm:$0xff]
  %v4961 = vld [vmem:[%s4958 + $0x10] sm:$0x3]
  %v4963 = vsel %vm2697, %v4961, 0
  %4965 = vmatprep.subr.mxu0 0.0
  %4966 = vmatpush1.msra.mxu0 0.0
  %4967 = vmatprep.subr.mxu0 0.0
  %4968 = vmatpush1.msra.mxu0 0.0
  %4969 = vmatprep.subr.mxu0 0.0
  %4970 = vmatpush1.msra.mxu0 0.0
  %4971 = vmatprep.subr.mxu0 0.0
  %4972 = vmatpush1.msra.mxu0 0.0
  %4973 = vmatprep.subr.mxu0 0.0
  %4974 = vmatpush1.msra.mxu0 0.0
  %4975 = vmatprep.subr.mxu0 0.0
  %4976 = vmatpush1.msra.mxu0 0.0
  %4977 = vmatprep.subr.mxu0 0.0
  %4978 = vmatpush1.msra.mxu0 0.0
  %4979 = vmatprep.subr.mxu0 0.0
  %4980 = vmatpush1.msra.mxu0 0.0
  %4981 = vmatprep.subr.mxu0 0.0
  %4982 = vmatpush1.msra.mxu0 0.0
  %4983 = vmatprep.subr.mxu0 0.0
  %4984 = vmatpush1.msra.mxu0 0.0
  %4985 = vmatprep.subr.mxu0 0.0
  %4986 = vmatpush1.msra.mxu0 0.0
  %4987 = vmatprep.subr.mxu0 0.0
  %4988 = vmatpush1.msra.mxu0 0.0
  %4989 = vmatprep.subr.mxu0 0.0
  %4990 = vmatpush1.msra.mxu0 0.0
  %4991 = vmatprep.subr.mxu0 0.0
  %4992 = vmatpush1.msra.mxu0 %v4963
  %4993 = vmatprep.subr.mxu0 0.0
  %4994 = vmatpush1.msra.mxu0 %v4960
  %4995 = vmatprep.subr.mxu0 0.0
  %4996 = vmatpush1.msra.mxu0 %v4959
  %4997 = vmatprep.subr.mxu0 0.0
  %4998 = vmatpush2.msra.mxu0 0.0
  %4999 = vmatprep.subr.mxu0 0.0
  %5000 = vmatpush2.msra.mxu0 0.0
  %5001 = vmatprep.subr.mxu0 0.0
  %5002 = vmatpush2.msra.mxu0 0.0
  %5003 = vmatprep.subr.mxu0 0.0
  %5004 = vmatpush2.msra.mxu0 0.0
  %5005 = vmatprep.subr.mxu0 0.0
  %5006 = vmatpush2.msra.mxu0 0.0
  %5007 = vmatprep.subr.mxu0 0.0
  %5008 = vmatpush2.msra.mxu0 0.0
  %5009 = vmatprep.subr.mxu0 0.0
  %5010 = vmatpush2.msra.mxu0 0.0
  %5011 = vmatprep.subr.mxu0 0.0
  %5012 = vmatpush2.msra.mxu0 0.0
  %5013 = vmatprep.subr.mxu0 0.0
  %5014 = vmatpush2.msra.mxu0 0.0
  %5015 = vmatprep.subr.mxu0 0.0
  %5016 = vmatpush2.msra.mxu0 0.0
  %5017 = vmatprep.subr.mxu0 0.0
  %5018 = vmatpush2.msra.mxu0 0.0
  %5019 = vmatprep.subr.mxu0 0.0
  %5020 = vmatpush2.msra.mxu0 0.0
  %5021 = vmatprep.subr.mxu0 0.0
  %5022 = vmatpush2.msra.mxu0 0.0
  %5023 = vmatprep.subr.mxu0 0.0
  %5024 = vmatpush2.msra.mxu0 0.0
  %5025 = vmatprep.subr.mxu0 0.0
  %5026 = vmatpush2.msra.mxu0 0.0
  %5027 = vmatprep.subr.mxu0 0.0
  %5028 = vmatpush2.msra.mxu0 0.0
  %5029 = vmatprep.mubr.f32.mxu0 0.0
  %5030 = vmatmul.mubr.f32.gmra.mxu0 %v4421
  %v5031 = vpop.f32.mrf.mxu0
  %v5032 = vadd.f32 0.0, %v5031
  %v5033 = vpop.f32.mrf.mxu0
  %5034 = vdwg.mxu0
  %s5035 = scalar_lea.vmem %s11, 192
  %v5036 = vld [vmem:[%s5035] sm:$0xff]
  %v5037 = vld [vmem:[%s5035 + $0x8] sm:$0xff]
  %v5038 = vld [vmem:[%s5035 + $0x10] sm:$0x3]
  %v5040 = vsel %vm2697, %v5038, 0
  %5042 = vmatprep.subr.mxu0 0.0
  %5043 = vmatpush1.msra.mxu0 0.0
  %5044 = vmatprep.subr.mxu0 0.0
  %5045 = vmatpush1.msra.mxu0 0.0
  %5046 = vmatprep.subr.mxu0 0.0
  %5047 = vmatpush1.msra.mxu0 0.0
  %5048 = vmatprep.subr.mxu0 0.0
  %5049 = vmatpush1.msra.mxu0 0.0
  %5050 = vmatprep.subr.mxu0 0.0
  %5051 = vmatpush1.msra.mxu0 0.0
  %5052 = vmatprep.subr.mxu0 0.0
  %5053 = vmatpush1.msra.mxu0 0.0
  %5054 = vmatprep.subr.mxu0 0.0
  %5055 = vmatpush1.msra.mxu0 0.0
  %5056 = vmatprep.subr.mxu0 0.0
  %5057 = vmatpush1.msra.mxu0 0.0
  %5058 = vmatprep.subr.mxu0 0.0
  %5059 = vmatpush1.msra.mxu0 0.0
  %5060 = vmatprep.subr.mxu0 0.0
  %5061 = vmatpush1.msra.mxu0 0.0
  %5062 = vmatprep.subr.mxu0 0.0
  %5063 = vmatpush1.msra.mxu0 0.0
  %5064 = vmatprep.subr.mxu0 0.0
  %5065 = vmatpush1.msra.mxu0 0.0
  %5066 = vmatprep.subr.mxu0 0.0
  %5067 = vmatpush1.msra.mxu0 0.0
  %5068 = vmatprep.subr.mxu0 0.0
  %5069 = vmatpush1.msra.mxu0 %v5040
  %5070 = vmatprep.subr.mxu0 0.0
  %5071 = vmatpush1.msra.mxu0 %v5037
  %5072 = vmatprep.subr.mxu0 0.0
  %5073 = vmatpush1.msra.mxu0 %v5036
  %5074 = vmatprep.subr.mxu0 0.0
  %5075 = vmatpush2.msra.mxu0 0.0
  %5076 = vmatprep.subr.mxu0 0.0
  %5077 = vmatpush2.msra.mxu0 0.0
  %5078 = vmatprep.subr.mxu0 0.0
  %5079 = vmatpush2.msra.mxu0 0.0
  %5080 = vmatprep.subr.mxu0 0.0
  %5081 = vmatpush2.msra.mxu0 0.0
  %5082 = vmatprep.subr.mxu0 0.0
  %5083 = vmatpush2.msra.mxu0 0.0
  %5084 = vmatprep.subr.mxu0 0.0
  %5085 = vmatpush2.msra.mxu0 0.0
  %5086 = vmatprep.subr.mxu0 0.0
  %5087 = vmatpush2.msra.mxu0 0.0
  %5088 = vmatprep.subr.mxu0 0.0
  %5089 = vmatpush2.msra.mxu0 0.0
  %5090 = vmatprep.subr.mxu0 0.0
  %5091 = vmatpush2.msra.mxu0 0.0
  %5092 = vmatprep.subr.mxu0 0.0
  %5093 = vmatpush2.msra.mxu0 0.0
  %5094 = vmatprep.subr.mxu0 0.0
  %5095 = vmatpush2.msra.mxu0 0.0
  %5096 = vmatprep.subr.mxu0 0.0
  %5097 = vmatpush2.msra.mxu0 0.0
  %5098 = vmatprep.subr.mxu0 0.0
  %5099 = vmatpush2.msra.mxu0 0.0
  %5100 = vmatprep.subr.mxu0 0.0
  %5101 = vmatpush2.msra.mxu0 0.0
  %5102 = vmatprep.subr.mxu0 0.0
  %5103 = vmatpush2.msra.mxu0 0.0
  %5104 = vmatprep.subr.mxu0 0.0
  %5105 = vmatpush2.msra.mxu0 0.0
  %5106 = vmatprep.mubr.f32.mxu0 0.0
  %5107 = vmatmul.mubr.f32.gmra.mxu0 %v4421
  %v5108 = vpop.f32.mrf.mxu0
  %v5109 = vadd.f32 0.0, %v5108
  %v5110 = vpop.f32.mrf.mxu0
  %5111 = vdwg.mxu0
  %v5112 = vld [vmem:[%s12] sm:$0xff]
  %v5113 = vld [vmem:[%s12 + $0x8] sm:$0xff]
  %v5114 = vld [vmem:[%s13] sm:$0xff]
  %v5115 = vld [vmem:[%s13 + $0x8] sm:$0xff]
  %5117 = vset.pattern.permute.xlu0 0
  %5118 = vperm.xlu0 %5117, %v5114
  %v5119 = vpop.permute.xlu0 %5118
  %5122 = vset.pattern.permute.xlu0 0
  %5123 = vperm.xlu0 %5122, %v5115
  %v5124 = vpop.permute.xlu0 %5123
  %v5127 = vsel %vm3474, %v5112, 0
  %v5130 = vsel %vm3474, %v5113, 0
  %5132 = vmatprep.subr.mxu0 0.0
  %5133 = vmatpush1.msra.mxu0 0.0
  %5134 = vmatprep.subr.mxu0 0.0
  %5135 = vmatpush1.msra.mxu0 0.0
  %5136 = vmatprep.subr.mxu0 0.0
  %5137 = vmatpush1.msra.mxu0 0.0
  %5138 = vmatprep.subr.mxu0 0.0
  %5139 = vmatpush1.msra.mxu0 0.0
  %5140 = vmatprep.subr.mxu0 0.0
  %5141 = vmatpush1.msra.mxu0 0.0
  %5142 = vmatprep.subr.mxu0 0.0
  %5143 = vmatpush1.msra.mxu0 0.0
  %5144 = vmatprep.subr.mxu0 0.0
  %5145 = vmatpush1.msra.mxu0 0.0
  %5146 = vmatprep.subr.mxu0 0.0
  %5147 = vmatpush1.msra.mxu0 %v5109
  %5148 = vmatprep.subr.mxu0 0.0
  %5149 = vmatpush1.msra.mxu0 %v5032
  %5150 = vmatprep.subr.mxu0 0.0
  %5151 = vmatpush1.msra.mxu0 %v4955
  %5152 = vmatprep.subr.mxu0 0.0
  %5153 = vmatpush1.msra.mxu0 %v4878
  %5154 = vmatprep.subr.mxu0 0.0
  %5155 = vmatpush1.msra.mxu0 %v4801
  %5156 = vmatprep.subr.mxu0 0.0
  %5157 = vmatpush1.msra.mxu0 %v4724
  %5158 = vmatprep.subr.mxu0 0.0
  %5159 = vmatpush1.msra.mxu0 %v4647
  %5160 = vmatprep.subr.mxu0 0.0
  %5161 = vmatpush1.msra.mxu0 %v4570
  %5162 = vmatprep.subr.mxu0 0.0
  %5163 = vmatpush1.msra.mxu0 %v4493
  %5164 = vmatprep.subr.mxu0 0.0
  %5165 = vmatpush2.msra.mxu0 0.0
  %5166 = vmatprep.subr.mxu0 0.0
  %5167 = vmatpush2.msra.mxu0 0.0
  %5168 = vmatprep.subr.mxu0 0.0
  %5169 = vmatpush2.msra.mxu0 0.0
  %5170 = vmatprep.subr.mxu0 0.0
  %5171 = vmatpush2.msra.mxu0 0.0
  %5172 = vmatprep.subr.mxu0 0.0
  %5173 = vmatpush2.msra.mxu0 0.0
  %5174 = vmatprep.subr.mxu0 0.0
  %5175 = vmatpush2.msra.mxu0 0.0
  %5176 = vmatprep.subr.mxu0 0.0
  %5177 = vmatpush2.msra.mxu0 0.0
  %5178 = vmatprep.subr.mxu0 0.0
  %5179 = vmatpush2.msra.mxu0 0.0
  %5180 = vmatprep.subr.mxu0 0.0
  %5181 = vmatpush2.msra.mxu0 0.0
  %5182 = vmatprep.subr.mxu0 0.0
  %5183 = vmatpush2.msra.mxu0 0.0
  %5184 = vmatprep.subr.mxu0 0.0
  %5185 = vmatpush2.msra.mxu0 0.0
  %5186 = vmatprep.subr.mxu0 0.0
  %5187 = vmatpush2.msra.mxu0 0.0
  %5188 = vmatprep.subr.mxu0 0.0
  %5189 = vmatpush2.msra.mxu0 0.0
  %5190 = vmatprep.subr.mxu0 0.0
  %5191 = vmatpush2.msra.mxu0 0.0
  %5192 = vmatprep.subr.mxu0 0.0
  %5193 = vmatpush2.msra.mxu0 0.0
  %5194 = vmatprep.subr.mxu0 0.0
  %5195 = vmatpush2.msra.mxu0 0.0
  %5196 = vmatprep.mubr.f32.mxu0 0.0
  %5197 = vmatmul.mubr.f32.gmra.mxu0 %v5127
  %v5198 = vpop.f32.mrf.mxu0
  %v5199 = vadd.f32 %v5119, %v5198
  %v5200 = vpop.f32.mrf.mxu0
  %5201 = vmatprep.mubr.f32.mxu0 0.0
  %5202 = vmatmul.mubr.f32.gmra.mxu0 %v5130
  %v5203 = vpop.f32.mrf.mxu0
  %v5204 = vadd.f32 %v5124, %v5203
  %v5205 = vpop.f32.mrf.mxu0
  %5206 = vdwg.mxu0
  %vm5207 = vcmask 15360
  %v5208 = vsel %vm5207, %v5199, 0.0
  %v5209 = vsel %vm5207, %v5204, 0.0
  %v5210 = vadd.f32 %v5208, %v5209
  %v5211 = vrot.slane %v5210, 4
  %v5212 = vadd.f32 %v5210, %v5211
  %v5213 = vrot.slane %v5212, 2
  %v5214 = vadd.f32 %v5212, %v5213
  %v5215 = vrot.slane %v5214, 1
  %v5216 = vadd.f32 %v5214, %v5215
  %v5217 = vrcp.pop 16.0
  %v5218 = vmul.f32 %v5216, %v5217
  %v5219 = vsub.f32 %v5199, %v5218
  %v5220 = vsub.f32 %v5204, %v5218
  %v5221 = vmul.f32 %v5219, %v5219
  %v5222 = vmul.f32 %v5220, %v5220
  %v5223 = vsel %vm5207, %v5221, 0.0
  %v5224 = vsel %vm5207, %v5222, 0.0
  %v5225 = vadd.f32 %v5223, %v5224
  %v5226 = vrot.slane %v5225, 4
  %v5227 = vadd.f32 %v5225, %v5226
  %v5228 = vrot.slane %v5227, 2
  %v5229 = vadd.f32 %v5227, %v5228
  %v5230 = vrot.slane %v5229, 1
  %v5231 = vadd.f32 %v5229, %v5230
  %v5232 = vmul.f32 %v5231, %v5217
  %v5233 = vadd.f32 %v5232, 1e-05
  %v5234 = vrsqrt.pop %v5233
  %v5235 = vmul.f32 %v5219, %v5234
  %v5236 = vmul.f32 %v5220, %v5234
  %v5237 = vmul.f32 %v5235, 0.5
  %v5238 = vmul.f32 %v5236, 0.5
  %v5239 = vmul.f32 %v5235, 0.70710677
  %v5240 = vmul.f32 %v5236, 0.70710677
  %vm5241 = vcmp.ge.f32.partialorder %v5239, 0.0
  %vm5242 = vcmp.ge.f32.partialorder %v5240, 0.0
  %v5243 = vsub.f32 0.0, %v5239
  %v5244 = vsub.f32 0.0, %v5240
  %v5245 = vsel %vm5241, %v5239, %v5243
  %v5246 = vsel %vm5242, %v5240, %v5244
  %v5247 = vmul.f32 %v5245, 0.3275911
  %v5248 = vmul.f32 %v5246, 0.3275911
  %v5249 = vadd.f32 %v5247, 1.0
  %v5250 = vadd.f32 %v5248, 1.0
  %v5251 = vrcp.pop %v5249
  %v5252 = vmul.f32 1.0, %v5251
  %v5253 = vrcp.pop %v5250
  %v5254 = vmul.f32 1.0, %v5253
  %v5255 = vmul.f32 %v5252, 1.0614054
  %v5256 = vmul.f32 %v5254, 1.0614054
  %v5257 = vadd.f32 %v5255, -1.4531521
  %v5258 = vadd.f32 %v5256, -1.4531521
  %v5259 = vmul.f32 %v5257, %v5252
  %v5260 = vmul.f32 %v5258, %v5254
  %v5261 = vadd.f32 %v5259, 1.4214138
  %v5262 = vadd.f32 %v5260, 1.4214138
  %v5263 = vmul.f32 %v5261, %v5252
  %v5264 = vmul.f32 %v5262, %v5254
  %v5265 = vadd.f32 %v5263, -0.28449672
  %v5266 = vadd.f32 %v5264, -0.28449672
  %v5267 = vmul.f32 %v5265, %v5252
  %v5268 = vmul.f32 %v5266, %v5254
  %v5269 = vadd.f32 %v5267, 0.2548296
  %v5270 = vadd.f32 %v5268, 0.2548296
  %v5271 = vmul.f32 %v5269, %v5252
  %v5272 = vmul.f32 %v5270, %v5254
  %v5273 = vsub.f32 0.0, %v5245
  %v5274 = vsub.f32 0.0, %v5246
  %v5275 = vmul.f32 %v5273, %v5245
  %v5276 = vmul.f32 %v5274, %v5246
  %v5277 = vmul.f32 %v5275, 1.442695
  %v5278 = vpow.pop %v5277
  %v5279 = vmul.f32 %v5276, 1.442695
  %v5280 = vpow.pop %v5279
  %v5281 = vmul.f32 %v5271, %v5278
  %v5282 = vmul.f32 %v5272, %v5280
  %v5283 = vsub.f32 1.0, %v5281
  %v5284 = vsub.f32 1.0, %v5282
  %v5285 = vsub.f32 0.0, %v5283
  %v5286 = vsub.f32 0.0, %v5284
  %v5287 = vsel %vm5241, %v5283, %v5285
  %v5288 = vsel %vm5242, %v5284, %v5286
  %v5289 = vadd.f32 %v5287, 1.0
  %v5290 = vadd.f32 %v5288, 1.0
  %v5291 = vmul.f32 %v5237, %v5289
  %v5292 = vmul.f32 %v5238, %v5290
  %5293 = vst.msk [vmem:[%s26] sm:$0xff] %vm5207, %v5291
  %5294 = vst.msk [vmem:[%s26 + $0x8] sm:$0xff] %vm5207, %v5292
  %v5295 = vld [vmem:[%s14] sm:$0xff]
  %v5296 = vld [vmem:[%s14 + $0x8] sm:$0xff]
  %v5297 = vld [vmem:[%s15] sm:$0xff]
  %v5298 = vld [vmem:[%s15 + $0x8] sm:$0xff]
  %v5299 = vld [vmem:[%s1] sm:$0xf]
  %v5301 = vsel %vm296, %v5297, 0
  %v5304 = vsel %vm296, %v5298, 0
  %v5307 = vsel %vm300, %v5299, 0
  %5309 = vmatprep.subr.mxu0 0.0
  %5310 = vmatpush1.msra.mxu0 0.0
  %5311 = vmatprep.subr.mxu0 0.0
  %5312 = vmatpush1.msra.mxu0 0.0
  %5313 = vmatprep.subr.mxu0 0.0
  %5314 = vmatpush1.msra.mxu0 0.0
  %5315 = vmatprep.subr.mxu0 0.0
  %5316 = vmatpush1.msra.mxu0 0.0
  %5317 = vmatprep.subr.mxu0 0.0
  %5318 = vmatpush1.msra.mxu0 0.0
  %5319 = vmatprep.subr.mxu0 0.0
  %5320 = vmatpush1.msra.mxu0 0.0
  %5321 = vmatprep.subr.mxu0 0.0
  %5322 = vmatpush1.msra.mxu0 0.0
  %5323 = vmatprep.subr.mxu0 0.0
  %5324 = vmatpush1.msra.mxu0 0.0
  %5325 = vmatprep.subr.mxu0 0.0
  %5326 = vmatpush1.msra.mxu0 0.0
  %5327 = vmatprep.subr.mxu0 0.0
  %5328 = vmatpush1.msra.mxu0 0.0
  %5329 = vmatprep.subr.mxu0 0.0
  %5330 = vmatpush1.msra.mxu0 0.0
  %5331 = vmatprep.subr.mxu0 0.0
  %5332 = vmatpush1.msra.mxu0 0.0
  %5333 = vmatprep.subr.mxu0 0.0
  %5334 = vmatpush1.msra.mxu0 0.0
  %5335 = vmatprep.subr.mxu0 0.0
  %5336 = vmatpush1.msra.mxu0 0.0
  %5337 = vmatprep.subr.mxu0 0.0
  %5338 = vmatpush1.msra.mxu0 0.0
  %5339 = vmatprep.subr.mxu0 0.0
  %5340 = vmatpush1.msra.mxu0 %v5307
  %5341 = vmatprep.subr.mxu0 0.0
  %5342 = vmatpush2.msra.mxu0 0.0
  %5343 = vmatprep.subr.mxu0 0.0
  %5344 = vmatpush2.msra.mxu0 0.0
  %5345 = vmatprep.subr.mxu0 0.0
  %5346 = vmatpush2.msra.mxu0 0.0
  %5347 = vmatprep.subr.mxu0 0.0
  %5348 = vmatpush2.msra.mxu0 0.0
  %5349 = vmatprep.subr.mxu0 0.0
  %5350 = vmatpush2.msra.mxu0 0.0
  %5351 = vmatprep.subr.mxu0 0.0
  %5352 = vmatpush2.msra.mxu0 0.0
  %5353 = vmatprep.subr.mxu0 0.0
  %5354 = vmatpush2.msra.mxu0 0.0
  %5355 = vmatprep.subr.mxu0 0.0
  %5356 = vmatpush2.msra.mxu0 0.0
  %5357 = vmatprep.subr.mxu0 0.0
  %5358 = vmatpush2.msra.mxu0 0.0
  %5359 = vmatprep.subr.mxu0 0.0
  %5360 = vmatpush2.msra.mxu0 0.0
  %5361 = vmatprep.subr.mxu0 0.0
  %5362 = vmatpush2.msra.mxu0 0.0
  %5363 = vmatprep.subr.mxu0 0.0
  %5364 = vmatpush2.msra.mxu0 0.0
  %5365 = vmatprep.subr.mxu0 0.0
  %5366 = vmatpush2.msra.mxu0 0.0
  %5367 = vmatprep.subr.mxu0 0.0
  %5368 = vmatpush2.msra.mxu0 0.0
  %5369 = vmatprep.subr.mxu0 0.0
  %5370 = vmatpush2.msra.mxu0 0.0
  %5371 = vmatprep.subr.mxu0 0.0
  %5372 = vmatpush2.msra.mxu0 0.0
  %5373 = vmatprep.mubr.f32.mxu0 0.0
  %5374 = vmatmul.mubr.f32.gmra.mxu0 %v5301
  %v5375 = vpop.f32.mrf.mxu0
  %v5376 = vadd.f32 0.0, %v5375
  %v5377 = vpop.f32.mrf.mxu0
  %5378 = vmatprep.mubr.f32.mxu0 0.0
  %5379 = vmatmul.mubr.f32.gmra.mxu0 %v5304
  %v5380 = vpop.f32.mrf.mxu0
  %v5381 = vadd.f32 0.0, %v5380
  %v5382 = vpop.f32.mrf.mxu0
  %5383 = vdwg.mxu0
  %vm5384 = vcmask 130048
  %v5386 = vsel %vm5384, %v5295, 0
  %v5389 = vsel %vm5384, %v5296, 0
  %5391 = vmatprep.subr.mxu0 0.0
  %5392 = vmatpush1.msra.mxu0 0.0
  %5393 = vmatprep.subr.mxu0 0.0
  %5394 = vmatpush1.msra.mxu0 0.0
  %5395 = vmatprep.subr.mxu0 0.0
  %5396 = vmatpush1.msra.mxu0 0.0
  %5397 = vmatprep.subr.mxu0 0.0
  %5398 = vmatpush1.msra.mxu0 0.0
  %5399 = vmatprep.subr.mxu0 0.0
  %5400 = vmatpush1.msra.mxu0 0.0
  %5401 = vmatprep.subr.mxu0 0.0
  %5402 = vmatpush1.msra.mxu0 0.0
  %5403 = vmatprep.subr.mxu0 0.0
  %5404 = vmatpush1.msra.mxu0 0.0
  %5405 = vmatprep.subr.mxu0 0.0
  %5406 = vmatpush1.msra.mxu0 0.0
  %5407 = vmatprep.subr.mxu0 0.0
  %5408 = vmatpush1.msra.mxu0 0.0
  %5409 = vmatprep.subr.mxu0 0.0
  %5410 = vmatpush1.msra.mxu0 0.0
  %5411 = vmatprep.subr.mxu0 0.0
  %5412 = vmatpush1.msra.mxu0 0.0
  %5413 = vmatprep.subr.mxu0 0.0
  %5414 = vmatpush1.msra.mxu0 0.0
  %5415 = vmatprep.subr.mxu0 0.0
  %5416 = vmatpush1.msra.mxu0 0.0
  %5417 = vmatprep.subr.mxu0 0.0
  %5418 = vmatpush1.msra.mxu0 0.0
  %5419 = vmatprep.subr.mxu0 0.0
  %5420 = vmatpush1.msra.mxu0 %v5292
  %5421 = vmatprep.subr.mxu0 0.0
  %5422 = vmatpush1.msra.mxu0 %v5291
  %5423 = vmatprep.subr.mxu0 0.0
  %5424 = vmatpush2.msra.mxu0 0.0
  %5425 = vmatprep.subr.mxu0 0.0
  %5426 = vmatpush2.msra.mxu0 0.0
  %5427 = vmatprep.subr.mxu0 0.0
  %5428 = vmatpush2.msra.mxu0 0.0
  %5429 = vmatprep.subr.mxu0 0.0
  %5430 = vmatpush2.msra.mxu0 0.0
  %5431 = vmatprep.subr.mxu0 0.0
  %5432 = vmatpush2.msra.mxu0 0.0
  %5433 = vmatprep.subr.mxu0 0.0
  %5434 = vmatpush2.msra.mxu0 0.0
  %5435 = vmatprep.subr.mxu0 0.0
  %5436 = vmatpush2.msra.mxu0 0.0
  %5437 = vmatprep.subr.mxu0 0.0
  %5438 = vmatpush2.msra.mxu0 0.0
  %5439 = vmatprep.subr.mxu0 0.0
  %5440 = vmatpush2.msra.mxu0 0.0
  %5441 = vmatprep.subr.mxu0 0.0
  %5442 = vmatpush2.msra.mxu0 0.0
  %5443 = vmatprep.subr.mxu0 0.0
  %5444 = vmatpush2.msra.mxu0 0.0
  %5445 = vmatprep.subr.mxu0 0.0
  %5446 = vmatpush2.msra.mxu0 0.0
  %5447 = vmatprep.subr.mxu0 0.0
  %5448 = vmatpush2.msra.mxu0 0.0
  %5449 = vmatprep.subr.mxu0 0.0
  %5450 = vmatpush2.msra.mxu0 0.0
  %5451 = vmatprep.subr.mxu0 0.0
  %5452 = vmatpush2.msra.mxu0 0.0
  %5453 = vmatprep.subr.mxu0 0.0
  %5454 = vmatpush2.msra.mxu0 0.0
  %5455 = vmatprep.mubr.f32.mxu0 0.0
  %5456 = vmatmul.mubr.f32.gmra.mxu0 %v5386
  %v5457 = vpop.f32.mrf.mxu0
  %v5458 = vadd.f32 %v5376, %v5457
  %v5459 = vpop.f32.mrf.mxu0
  %5460 = vmatprep.mubr.f32.mxu0 0.0
  %5461 = vmatmul.mubr.f32.gmra.mxu0 %v5389
  %v5462 = vpop.f32.mrf.mxu0
  %v5463 = vadd.f32 %v5381, %v5462
  %v5464 = vpop.f32.mrf.mxu0
  %5465 = vdwg.mxu0
  %v5466 = vld [vmem:[%s16] sm:$0xff]
  %v5467 = vld [vmem:[%s16 + $0x8] sm:$0xff]
  %5469 = vset.pattern.permute.xlu0 0
  %5470 = vperm.xlu0 %5469, %v5466
  %v5471 = vpop.permute.xlu0 %5470
  %5474 = vset.pattern.permute.xlu0 0
  %5475 = vperm.xlu0 %5474, %v5467
  %v5476 = vpop.permute.xlu0 %5475
  %v5478 = vadd.f32 %v5458, %v5471
  %v5479 = vadd.f32 %v5463, %v5476
  %v5480 = vld [vmem:[%s17] sm:$0x3]
  %v5482 = vsel %vm5207, %v5478, 0
  %v5485 = vsel %vm5207, %v5479, 0
  %v5488 = vsel %vm2697, %v5480, 0
  %5490 = vmatprep.subr.mxu0 0.0
  %5491 = vmatpush1.msra.mxu0 0.0
  %5492 = vmatprep.subr.mxu0 0.0
  %5493 = vmatpush1.msra.mxu0 0.0
  %5494 = vmatprep.subr.mxu0 0.0
  %5495 = vmatpush1.msra.mxu0 0.0
  %5496 = vmatprep.subr.mxu0 0.0
  %5497 = vmatpush1.msra.mxu0 0.0
  %5498 = vmatprep.subr.mxu0 0.0
  %5499 = vmatpush1.msra.mxu0 0.0
  %5500 = vmatprep.subr.mxu0 0.0
  %5501 = vmatpush1.msra.mxu0 0.0
  %5502 = vmatprep.subr.mxu0 0.0
  %5503 = vmatpush1.msra.mxu0 0.0
  %5504 = vmatprep.subr.mxu0 0.0
  %5505 = vmatpush1.msra.mxu0 0.0
  %5506 = vmatprep.subr.mxu0 0.0
  %5507 = vmatpush1.msra.mxu0 0.0
  %5508 = vmatprep.subr.mxu0 0.0
  %5509 = vmatpush1.msra.mxu0 0.0
  %5510 = vmatprep.subr.mxu0 0.0
  %5511 = vmatpush1.msra.mxu0 0.0
  %5512 = vmatprep.subr.mxu0 0.0
  %5513 = vmatpush1.msra.mxu0 0.0
  %5514 = vmatprep.subr.mxu0 0.0
  %5515 = vmatpush1.msra.mxu0 0.0
  %5516 = vmatprep.subr.mxu0 0.0
  %5517 = vmatpush1.msra.mxu0 0.0
  %5518 = vmatprep.subr.mxu0 0.0
  %5519 = vmatpush1.msra.mxu0 0.0
  %5520 = vmatprep.subr.mxu0 0.0
  %5521 = vmatpush1.msra.mxu0 %v5488
  %5522 = vmatprep.subr.mxu0 0.0
  %5523 = vmatpush2.msra.mxu0 0.0
  %5524 = vmatprep.subr.mxu0 0.0
  %5525 = vmatpush2.msra.mxu0 0.0
  %5526 = vmatprep.subr.mxu0 0.0
  %5527 = vmatpush2.msra.mxu0 0.0
  %5528 = vmatprep.subr.mxu0 0.0
  %5529 = vmatpush2.msra.mxu0 0.0
  %5530 = vmatprep.subr.mxu0 0.0
  %5531 = vmatpush2.msra.mxu0 0.0
  %5532 = vmatprep.subr.mxu0 0.0
  %5533 = vmatpush2.msra.mxu0 0.0
  %5534 = vmatprep.subr.mxu0 0.0
  %5535 = vmatpush2.msra.mxu0 0.0
  %5536 = vmatprep.subr.mxu0 0.0
  %5537 = vmatpush2.msra.mxu0 0.0
  %5538 = vmatprep.subr.mxu0 0.0
  %5539 = vmatpush2.msra.mxu0 0.0
  %5540 = vmatprep.subr.mxu0 0.0
  %5541 = vmatpush2.msra.mxu0 0.0
  %5542 = vmatprep.subr.mxu0 0.0
  %5543 = vmatpush2.msra.mxu0 0.0
  %5544 = vmatprep.subr.mxu0 0.0
  %5545 = vmatpush2.msra.mxu0 0.0
  %5546 = vmatprep.subr.mxu0 0.0
  %5547 = vmatpush2.msra.mxu0 0.0
  %5548 = vmatprep.subr.mxu0 0.0
  %5549 = vmatpush2.msra.mxu0 0.0
  %5550 = vmatprep.subr.mxu0 0.0
  %5551 = vmatpush2.msra.mxu0 0.0
  %5552 = vmatprep.subr.mxu0 0.0
  %5553 = vmatpush2.msra.mxu0 0.0
  %5554 = vmatprep.mubr.f32.mxu0 0.0
  %5555 = vmatmul.mubr.f32.gmra.mxu0 %v5482
  %v5556 = vpop.f32.mrf.mxu0
  %v5557 = vadd.f32 0.0, %v5556
  %v5558 = vpop.f32.mrf.mxu0
  %5559 = vmatprep.mubr.f32.mxu0 0.0
  %5560 = vmatmul.mubr.f32.gmra.mxu0 %v5485
  %v5561 = vpop.f32.mrf.mxu0
  %v5562 = vadd.f32 0.0, %v5561
  %v5563 = vpop.f32.mrf.mxu0
  %5564 = vdwg.mxu0
  %s5565 = scalar_lea.vmem %s17, 2
  %v5566 = vld [vmem:[%s5565] sm:$0x3]
  %v5568 = vsel %vm2697, %v5566, 0
  %5570 = vmatprep.subr.mxu0 0.0
  %5571 = vmatpush1.msra.mxu0 0.0
  %5572 = vmatprep.subr.mxu0 0.0
  %5573 = vmatpush1.msra.mxu0 0.0
  %5574 = vmatprep.subr.mxu0 0.0
  %5575 = vmatpush1.msra.mxu0 0.0
  %5576 = vmatprep.subr.mxu0 0.0
  %5577 = vmatpush1.msra.mxu0 0.0
  %5578 = vmatprep.subr.mxu0 0.0
  %5579 = vmatpush1.msra.mxu0 0.0
  %5580 = vmatprep.subr.mxu0 0.0
  %5581 = vmatpush1.msra.mxu0 0.0
  %5582 = vmatprep.subr.mxu0 0.0
  %5583 = vmatpush1.msra.mxu0 0.0
  %5584 = vmatprep.subr.mxu0 0.0
  %5585 = vmatpush1.msra.mxu0 0.0
  %5586 = vmatprep.subr.mxu0 0.0
  %5587 = vmatpush1.msra.mxu0 0.0
  %5588 = vmatprep.subr.mxu0 0.0
  %5589 = vmatpush1.msra.mxu0 0.0
  %5590 = vmatprep.subr.mxu0 0.0
  %5591 = vmatpush1.msra.mxu0 0.0
  %5592 = vmatprep.subr.mxu0 0.0
  %5593 = vmatpush1.msra.mxu0 0.0
  %5594 = vmatprep.subr.mxu0 0.0
  %5595 = vmatpush1.msra.mxu0 0.0
  %5596 = vmatprep.subr.mxu0 0.0
  %5597 = vmatpush1.msra.mxu0 0.0
  %5598 = vmatprep.subr.mxu0 0.0
  %5599 = vmatpush1.msra.mxu0 0.0
  %5600 = vmatprep.subr.mxu0 0.0
  %5601 = vmatpush1.msra.mxu0 %v5568
  %5602 = vmatprep.subr.mxu0 0.0
  %5603 = vmatpush2.msra.mxu0 0.0
  %5604 = vmatprep.subr.mxu0 0.0
  %5605 = vmatpush2.msra.mxu0 0.0
  %5606 = vmatprep.subr.mxu0 0.0
  %5607 = vmatpush2.msra.mxu0 0.0
  %5608 = vmatprep.subr.mxu0 0.0
  %5609 = vmatpush2.msra.mxu0 0.0
  %5610 = vmatprep.subr.mxu0 0.0
  %5611 = vmatpush2.msra.mxu0 0.0
  %5612 = vmatprep.subr.mxu0 0.0
  %5613 = vmatpush2.msra.mxu0 0.0
  %5614 = vmatprep.subr.mxu0 0.0
  %5615 = vmatpush2.msra.mxu0 0.0
  %5616 = vmatprep.subr.mxu0 0.0
  %5617 = vmatpush2.msra.mxu0 0.0
  %5618 = vmatprep.subr.mxu0 0.0
  %5619 = vmatpush2.msra.mxu0 0.0
  %5620 = vmatprep.subr.mxu0 0.0
  %5621 = vmatpush2.msra.mxu0 0.0
  %5622 = vmatprep.subr.mxu0 0.0
  %5623 = vmatpush2.msra.mxu0 0.0
  %5624 = vmatprep.subr.mxu0 0.0
  %5625 = vmatpush2.msra.mxu0 0.0
  %5626 = vmatprep.subr.mxu0 0.0
  %5627 = vmatpush2.msra.mxu0 0.0
  %5628 = vmatprep.subr.mxu0 0.0
  %5629 = vmatpush2.msra.mxu0 0.0
  %5630 = vmatprep.subr.mxu0 0.0
  %5631 = vmatpush2.msra.mxu0 0.0
  %5632 = vmatprep.subr.mxu0 0.0
  %5633 = vmatpush2.msra.mxu0 0.0
  %5634 = vmatprep.mubr.f32.mxu0 0.0
  %5635 = vmatmul.mubr.f32.gmra.mxu0 %v5482
  %v5636 = vpop.f32.mrf.mxu0
  %v5637 = vadd.f32 0.0, %v5636
  %v5638 = vpop.f32.mrf.mxu0
  %5639 = vmatprep.mubr.f32.mxu0 0.0
  %5640 = vmatmul.mubr.f32.gmra.mxu0 %v5485
  %v5641 = vpop.f32.mrf.mxu0
  %v5642 = vadd.f32 0.0, %v5641
  %v5643 = vpop.f32.mrf.mxu0
  %5644 = vdwg.mxu0
  %s5645 = scalar_lea.vmem %s17, 4
  %v5646 = vld [vmem:[%s5645] sm:$0x3]
  %v5648 = vsel %vm2697, %v5646, 0
  %5650 = vmatprep.subr.mxu0 0.0
  %5651 = vmatpush1.msra.mxu0 0.0
  %5652 = vmatprep.subr.mxu0 0.0
  %5653 = vmatpush1.msra.mxu0 0.0
  %5654 = vmatprep.subr.mxu0 0.0
  %5655 = vmatpush1.msra.mxu0 0.0
  %5656 = vmatprep.subr.mxu0 0.0
  %5657 = vmatpush1.msra.mxu0 0.0
  %5658 = vmatprep.subr.mxu0 0.0
  %5659 = vmatpush1.msra.mxu0 0.0
  %5660 = vmatprep.subr.mxu0 0.0
  %5661 = vmatpush1.msra.mxu0 0.0
  %5662 = vmatprep.subr.mxu0 0.0
  %5663 = vmatpush1.msra.mxu0 0.0
  %5664 = vmatprep.subr.mxu0 0.0
  %5665 = vmatpush1.msra.mxu0 0.0
  %5666 = vmatprep.subr.mxu0 0.0
  %5667 = vmatpush1.msra.mxu0 0.0
  %5668 = vmatprep.subr.mxu0 0.0
  %5669 = vmatpush1.msra.mxu0 0.0
  %5670 = vmatprep.subr.mxu0 0.0
  %5671 = vmatpush1.msra.mxu0 0.0
  %5672 = vmatprep.subr.mxu0 0.0
  %5673 = vmatpush1.msra.mxu0 0.0
  %5674 = vmatprep.subr.mxu0 0.0
  %5675 = vmatpush1.msra.mxu0 0.0
  %5676 = vmatprep.subr.mxu0 0.0
  %5677 = vmatpush1.msra.mxu0 0.0
  %5678 = vmatprep.subr.mxu0 0.0
  %5679 = vmatpush1.msra.mxu0 0.0
  %5680 = vmatprep.subr.mxu0 0.0
  %5681 = vmatpush1.msra.mxu0 %v5648
  %5682 = vmatprep.subr.mxu0 0.0
  %5683 = vmatpush2.msra.mxu0 0.0
  %5684 = vmatprep.subr.mxu0 0.0
  %5685 = vmatpush2.msra.mxu0 0.0
  %5686 = vmatprep.subr.mxu0 0.0
  %5687 = vmatpush2.msra.mxu0 0.0
  %5688 = vmatprep.subr.mxu0 0.0
  %5689 = vmatpush2.msra.mxu0 0.0
  %5690 = vmatprep.subr.mxu0 0.0
  %5691 = vmatpush2.msra.mxu0 0.0
  %5692 = vmatprep.subr.mxu0 0.0
  %5693 = vmatpush2.msra.mxu0 0.0
  %5694 = vmatprep.subr.mxu0 0.0
  %5695 = vmatpush2.msra.mxu0 0.0
  %5696 = vmatprep.subr.mxu0 0.0
  %5697 = vmatpush2.msra.mxu0 0.0
  %5698 = vmatprep.subr.mxu0 0.0
  %5699 = vmatpush2.msra.mxu0 0.0
  %5700 = vmatprep.subr.mxu0 0.0
  %5701 = vmatpush2.msra.mxu0 0.0
  %5702 = vmatprep.subr.mxu0 0.0
  %5703 = vmatpush2.msra.mxu0 0.0
  %5704 = vmatprep.subr.mxu0 0.0
  %5705 = vmatpush2.msra.mxu0 0.0
  %5706 = vmatprep.subr.mxu0 0.0
  %5707 = vmatpush2.msra.mxu0 0.0
  %5708 = vmatprep.subr.mxu0 0.0
  %5709 = vmatpush2.msra.mxu0 0.0
  %5710 = vmatprep.subr.mxu0 0.0
  %5711 = vmatpush2.msra.mxu0 0.0
  %5712 = vmatprep.subr.mxu0 0.0
  %5713 = vmatpush2.msra.mxu0 0.0
  %5714 = vmatprep.mubr.f32.mxu0 0.0
  %5715 = vmatmul.mubr.f32.gmra.mxu0 %v5482
  %v5716 = vpop.f32.mrf.mxu0
  %v5717 = vadd.f32 0.0, %v5716
  %v5718 = vpop.f32.mrf.mxu0
  %5719 = vmatprep.mubr.f32.mxu0 0.0
  %5720 = vmatmul.mubr.f32.gmra.mxu0 %v5485
  %v5721 = vpop.f32.mrf.mxu0
  %v5722 = vadd.f32 0.0, %v5721
  %v5723 = vpop.f32.mrf.mxu0
  %5724 = vdwg.mxu0
  %s5725 = scalar_lea.vmem %s17, 6
  %v5726 = vld [vmem:[%s5725] sm:$0x3]
  %v5728 = vsel %vm2697, %v5726, 0
  %5730 = vmatprep.subr.mxu0 0.0
  %5731 = vmatpush1.msra.mxu0 0.0
  %5732 = vmatprep.subr.mxu0 0.0
  %5733 = vmatpush1.msra.mxu0 0.0
  %5734 = vmatprep.subr.mxu0 0.0
  %5735 = vmatpush1.msra.mxu0 0.0
  %5736 = vmatprep.subr.mxu0 0.0
  %5737 = vmatpush1.msra.mxu0 0.0
  %5738 = vmatprep.subr.mxu0 0.0
  %5739 = vmatpush1.msra.mxu0 0.0
  %5740 = vmatprep.subr.mxu0 0.0
  %5741 = vmatpush1.msra.mxu0 0.0
  %5742 = vmatprep.subr.mxu0 0.0
  %5743 = vmatpush1.msra.mxu0 0.0
  %5744 = vmatprep.subr.mxu0 0.0
  %5745 = vmatpush1.msra.mxu0 0.0
  %5746 = vmatprep.subr.mxu0 0.0
  %5747 = vmatpush1.msra.mxu0 0.0
  %5748 = vmatprep.subr.mxu0 0.0
  %5749 = vmatpush1.msra.mxu0 0.0
  %5750 = vmatprep.subr.mxu0 0.0
  %5751 = vmatpush1.msra.mxu0 0.0
  %5752 = vmatprep.subr.mxu0 0.0
  %5753 = vmatpush1.msra.mxu0 0.0
  %5754 = vmatprep.subr.mxu0 0.0
  %5755 = vmatpush1.msra.mxu0 0.0
  %5756 = vmatprep.subr.mxu0 0.0
  %5757 = vmatpush1.msra.mxu0 0.0
  %5758 = vmatprep.subr.mxu0 0.0
  %5759 = vmatpush1.msra.mxu0 0.0
  %5760 = vmatprep.subr.mxu0 0.0
  %5761 = vmatpush1.msra.mxu0 %v5728
  %5762 = vmatprep.subr.mxu0 0.0
  %5763 = vmatpush2.msra.mxu0 0.0
  %5764 = vmatprep.subr.mxu0 0.0
  %5765 = vmatpush2.msra.mxu0 0.0
  %5766 = vmatprep.subr.mxu0 0.0
  %5767 = vmatpush2.msra.mxu0 0.0
  %5768 = vmatprep.subr.mxu0 0.0
  %5769 = vmatpush2.msra.mxu0 0.0
  %5770 = vmatprep.subr.mxu0 0.0
  %5771 = vmatpush2.msra.mxu0 0.0
  %5772 = vmatprep.subr.mxu0 0.0
  %5773 = vmatpush2.msra.mxu0 0.0
  %5774 = vmatprep.subr.mxu0 0.0
  %5775 = vmatpush2.msra.mxu0 0.0
  %5776 = vmatprep.subr.mxu0 0.0
  %5777 = vmatpush2.msra.mxu0 0.0
  %5778 = vmatprep.subr.mxu0 0.0
  %5779 = vmatpush2.msra.mxu0 0.0
  %5780 = vmatprep.subr.mxu0 0.0
  %5781 = vmatpush2.msra.mxu0 0.0
  %5782 = vmatprep.subr.mxu0 0.0
  %5783 = vmatpush2.msra.mxu0 0.0
  %5784 = vmatprep.subr.mxu0 0.0
  %5785 = vmatpush2.msra.mxu0 0.0
  %5786 = vmatprep.subr.mxu0 0.0
  %5787 = vmatpush2.msra.mxu0 0.0
  %5788 = vmatprep.subr.mxu0 0.0
  %5789 = vmatpush2.msra.mxu0 0.0
  %5790 = vmatprep.subr.mxu0 0.0
  %5791 = vmatpush2.msra.mxu0 0.0
  %5792 = vmatprep.subr.mxu0 0.0
  %5793 = vmatpush2.msra.mxu0 0.0
  %5794 = vmatprep.mubr.f32.mxu0 0.0
  %5795 = vmatmul.mubr.f32.gmra.mxu0 %v5482
  %v5796 = vpop.f32.mrf.mxu0
  %v5797 = vadd.f32 0.0, %v5796
  %v5798 = vpop.f32.mrf.mxu0
  %5799 = vmatprep.mubr.f32.mxu0 0.0
  %5800 = vmatmul.mubr.f32.gmra.mxu0 %v5485
  %v5801 = vpop.f32.mrf.mxu0
  %v5802 = vadd.f32 0.0, %v5801
  %v5803 = vpop.f32.mrf.mxu0
  %5804 = vdwg.mxu0
  %s5805 = scalar_lea.vmem %s17, 8
  %v5806 = vld [vmem:[%s5805] sm:$0x3]
  %v5808 = vsel %vm2697, %v5806, 0
  %5810 = vmatprep.subr.mxu0 0.0
  %5811 = vmatpush1.msra.mxu0 0.0
  %5812 = vmatprep.subr.mxu0 0.0
  %5813 = vmatpush1.msra.mxu0 0.0
  %5814 = vmatprep.subr.mxu0 0.0
  %5815 = vmatpush1.msra.mxu0 0.0
  %5816 = vmatprep.subr.mxu0 0.0
  %5817 = vmatpush1.msra.mxu0 0.0
  %5818 = vmatprep.subr.mxu0 0.0
  %5819 = vmatpush1.msra.mxu0 0.0
  %5820 = vmatprep.subr.mxu0 0.0
  %5821 = vmatpush1.msra.mxu0 0.0
  %5822 = vmatprep.subr.mxu0 0.0
  %5823 = vmatpush1.msra.mxu0 0.0
  %5824 = vmatprep.subr.mxu0 0.0
  %5825 = vmatpush1.msra.mxu0 0.0
  %5826 = vmatprep.subr.mxu0 0.0
  %5827 = vmatpush1.msra.mxu0 0.0
  %5828 = vmatprep.subr.mxu0 0.0
  %5829 = vmatpush1.msra.mxu0 0.0
  %5830 = vmatprep.subr.mxu0 0.0
  %5831 = vmatpush1.msra.mxu0 0.0
  %5832 = vmatprep.subr.mxu0 0.0
  %5833 = vmatpush1.msra.mxu0 0.0
  %5834 = vmatprep.subr.mxu0 0.0
  %5835 = vmatpush1.msra.mxu0 0.0
  %5836 = vmatprep.subr.mxu0 0.0
  %5837 = vmatpush1.msra.mxu0 0.0
  %5838 = vmatprep.subr.mxu0 0.0
  %5839 = vmatpush1.msra.mxu0 0.0
  %5840 = vmatprep.subr.mxu0 0.0
  %5841 = vmatpush1.msra.mxu0 %v5808
  %5842 = vmatprep.subr.mxu0 0.0
  %5843 = vmatpush2.msra.mxu0 0.0
  %5844 = vmatprep.subr.mxu0 0.0
  %5845 = vmatpush2.msra.mxu0 0.0
  %5846 = vmatprep.subr.mxu0 0.0
  %5847 = vmatpush2.msra.mxu0 0.0
  %5848 = vmatprep.subr.mxu0 0.0
  %5849 = vmatpush2.msra.mxu0 0.0
  %5850 = vmatprep.subr.mxu0 0.0
  %5851 = vmatpush2.msra.mxu0 0.0
  %5852 = vmatprep.subr.mxu0 0.0
  %5853 = vmatpush2.msra.mxu0 0.0
  %5854 = vmatprep.subr.mxu0 0.0
  %5855 = vmatpush2.msra.mxu0 0.0
  %5856 = vmatprep.subr.mxu0 0.0
  %5857 = vmatpush2.msra.mxu0 0.0
  %5858 = vmatprep.subr.mxu0 0.0
  %5859 = vmatpush2.msra.mxu0 0.0
  %5860 = vmatprep.subr.mxu0 0.0
  %5861 = vmatpush2.msra.mxu0 0.0
  %5862 = vmatprep.subr.mxu0 0.0
  %5863 = vmatpush2.msra.mxu0 0.0
  %5864 = vmatprep.subr.mxu0 0.0
  %5865 = vmatpush2.msra.mxu0 0.0
  %5866 = vmatprep.subr.mxu0 0.0
  %5867 = vmatpush2.msra.mxu0 0.0
  %5868 = vmatprep.subr.mxu0 0.0
  %5869 = vmatpush2.msra.mxu0 0.0
  %5870 = vmatprep.subr.mxu0 0.0
  %5871 = vmatpush2.msra.mxu0 0.0
  %5872 = vmatprep.subr.mxu0 0.0
  %5873 = vmatpush2.msra.mxu0 0.0
  %5874 = vmatprep.mubr.f32.mxu0 0.0
  %5875 = vmatmul.mubr.f32.gmra.mxu0 %v5482
  %v5876 = vpop.f32.mrf.mxu0
  %v5877 = vadd.f32 0.0, %v5876
  %v5878 = vpop.f32.mrf.mxu0
  %5879 = vmatprep.mubr.f32.mxu0 0.0
  %5880 = vmatmul.mubr.f32.gmra.mxu0 %v5485
  %v5881 = vpop.f32.mrf.mxu0
  %v5882 = vadd.f32 0.0, %v5881
  %v5883 = vpop.f32.mrf.mxu0
  %5884 = vdwg.mxu0
  %s5885 = scalar_lea.vmem %s17, 10
  %v5886 = vld [vmem:[%s5885] sm:$0x3]
  %v5888 = vsel %vm2697, %v5886, 0
  %5890 = vmatprep.subr.mxu0 0.0
  %5891 = vmatpush1.msra.mxu0 0.0
  %5892 = vmatprep.subr.mxu0 0.0
  %5893 = vmatpush1.msra.mxu0 0.0
  %5894 = vmatprep.subr.mxu0 0.0
  %5895 = vmatpush1.msra.mxu0 0.0
  %5896 = vmatprep.subr.mxu0 0.0
  %5897 = vmatpush1.msra.mxu0 0.0
  %5898 = vmatprep.subr.mxu0 0.0
  %5899 = vmatpush1.msra.mxu0 0.0
  %5900 = vmatprep.subr.mxu0 0.0
  %5901 = vmatpush1.msra.mxu0 0.0
  %5902 = vmatprep.subr.mxu0 0.0
  %5903 = vmatpush1.msra.mxu0 0.0
  %5904 = vmatprep.subr.mxu0 0.0
  %5905 = vmatpush1.msra.mxu0 0.0
  %5906 = vmatprep.subr.mxu0 0.0
  %5907 = vmatpush1.msra.mxu0 0.0
  %5908 = vmatprep.subr.mxu0 0.0
  %5909 = vmatpush1.msra.mxu0 0.0
  %5910 = vmatprep.subr.mxu0 0.0
  %5911 = vmatpush1.msra.mxu0 0.0
  %5912 = vmatprep.subr.mxu0 0.0
  %5913 = vmatpush1.msra.mxu0 0.0
  %5914 = vmatprep.subr.mxu0 0.0
  %5915 = vmatpush1.msra.mxu0 0.0
  %5916 = vmatprep.subr.mxu0 0.0
  %5917 = vmatpush1.msra.mxu0 0.0
  %5918 = vmatprep.subr.mxu0 0.0
  %5919 = vmatpush1.msra.mxu0 0.0
  %5920 = vmatprep.subr.mxu0 0.0
  %5921 = vmatpush1.msra.mxu0 %v5888
  %5922 = vmatprep.subr.mxu0 0.0
  %5923 = vmatpush2.msra.mxu0 0.0
  %5924 = vmatprep.subr.mxu0 0.0
  %5925 = vmatpush2.msra.mxu0 0.0
  %5926 = vmatprep.subr.mxu0 0.0
  %5927 = vmatpush2.msra.mxu0 0.0
  %5928 = vmatprep.subr.mxu0 0.0
  %5929 = vmatpush2.msra.mxu0 0.0
  %5930 = vmatprep.subr.mxu0 0.0
  %5931 = vmatpush2.msra.mxu0 0.0
  %5932 = vmatprep.subr.mxu0 0.0
  %5933 = vmatpush2.msra.mxu0 0.0
  %5934 = vmatprep.subr.mxu0 0.0
  %5935 = vmatpush2.msra.mxu0 0.0
  %5936 = vmatprep.subr.mxu0 0.0
  %5937 = vmatpush2.msra.mxu0 0.0
  %5938 = vmatprep.subr.mxu0 0.0
  %5939 = vmatpush2.msra.mxu0 0.0
  %5940 = vmatprep.subr.mxu0 0.0
  %5941 = vmatpush2.msra.mxu0 0.0
  %5942 = vmatprep.subr.mxu0 0.0
  %5943 = vmatpush2.msra.mxu0 0.0
  %5944 = vmatprep.subr.mxu0 0.0
  %5945 = vmatpush2.msra.mxu0 0.0
  %5946 = vmatprep.subr.mxu0 0.0
  %5947 = vmatpush2.msra.mxu0 0.0
  %5948 = vmatprep.subr.mxu0 0.0
  %5949 = vmatpush2.msra.mxu0 0.0
  %5950 = vmatprep.subr.mxu0 0.0
  %5951 = vmatpush2.msra.mxu0 0.0
  %5952 = vmatprep.subr.mxu0 0.0
  %5953 = vmatpush2.msra.mxu0 0.0
  %5954 = vmatprep.mubr.f32.mxu0 0.0
  %5955 = vmatmul.mubr.f32.gmra.mxu0 %v5482
  %v5956 = vpop.f32.mrf.mxu0
  %v5957 = vadd.f32 0.0, %v5956
  %v5958 = vpop.f32.mrf.mxu0
  %5959 = vmatprep.mubr.f32.mxu0 0.0
  %5960 = vmatmul.mubr.f32.gmra.mxu0 %v5485
  %v5961 = vpop.f32.mrf.mxu0
  %v5962 = vadd.f32 0.0, %v5961
  %v5963 = vpop.f32.mrf.mxu0
  %5964 = vdwg.mxu0
  %s5965 = scalar_lea.vmem %s17, 12
  %v5966 = vld [vmem:[%s5965] sm:$0x3]
  %v5968 = vsel %vm2697, %v5966, 0
  %5970 = vmatprep.subr.mxu0 0.0
  %5971 = vmatpush1.msra.mxu0 0.0
  %5972 = vmatprep.subr.mxu0 0.0
  %5973 = vmatpush1.msra.mxu0 0.0
  %5974 = vmatprep.subr.mxu0 0.0
  %5975 = vmatpush1.msra.mxu0 0.0
  %5976 = vmatprep.subr.mxu0 0.0
  %5977 = vmatpush1.msra.mxu0 0.0
  %5978 = vmatprep.subr.mxu0 0.0
  %5979 = vmatpush1.msra.mxu0 0.0
  %5980 = vmatprep.subr.mxu0 0.0
  %5981 = vmatpush1.msra.mxu0 0.0
  %5982 = vmatprep.subr.mxu0 0.0
  %5983 = vmatpush1.msra.mxu0 0.0
  %5984 = vmatprep.subr.mxu0 0.0
  %5985 = vmatpush1.msra.mxu0 0.0
  %5986 = vmatprep.subr.mxu0 0.0
  %5987 = vmatpush1.msra.mxu0 0.0
  %5988 = vmatprep.subr.mxu0 0.0
  %5989 = vmatpush1.msra.mxu0 0.0
  %5990 = vmatprep.subr.mxu0 0.0
  %5991 = vmatpush1.msra.mxu0 0.0
  %5992 = vmatprep.subr.mxu0 0.0
  %5993 = vmatpush1.msra.mxu0 0.0
  %5994 = vmatprep.subr.mxu0 0.0
  %5995 = vmatpush1.msra.mxu0 0.0
  %5996 = vmatprep.subr.mxu0 0.0
  %5997 = vmatpush1.msra.mxu0 0.0
  %5998 = vmatprep.subr.mxu0 0.0
  %5999 = vmatpush1.msra.mxu0 0.0
  %6000 = vmatprep.subr.mxu0 0.0
  %6001 = vmatpush1.msra.mxu0 %v5968
  %6002 = vmatprep.subr.mxu0 0.0
  %6003 = vmatpush2.msra.mxu0 0.0
  %6004 = vmatprep.subr.mxu0 0.0
  %6005 = vmatpush2.msra.mxu0 0.0
  %6006 = vmatprep.subr.mxu0 0.0
  %6007 = vmatpush2.msra.mxu0 0.0
  %6008 = vmatprep.subr.mxu0 0.0
  %6009 = vmatpush2.msra.mxu0 0.0
  %6010 = vmatprep.subr.mxu0 0.0
  %6011 = vmatpush2.msra.mxu0 0.0
  %6012 = vmatprep.subr.mxu0 0.0
  %6013 = vmatpush2.msra.mxu0 0.0
  %6014 = vmatprep.subr.mxu0 0.0
  %6015 = vmatpush2.msra.mxu0 0.0
  %6016 = vmatprep.subr.mxu0 0.0
  %6017 = vmatpush2.msra.mxu0 0.0
  %6018 = vmatprep.subr.mxu0 0.0
  %6019 = vmatpush2.msra.mxu0 0.0
  %6020 = vmatprep.subr.mxu0 0.0
  %6021 = vmatpush2.msra.mxu0 0.0
  %6022 = vmatprep.subr.mxu0 0.0
  %6023 = vmatpush2.msra.mxu0 0.0
  %6024 = vmatprep.subr.mxu0 0.0
  %6025 = vmatpush2.msra.mxu0 0.0
  %6026 = vmatprep.subr.mxu0 0.0
  %6027 = vmatpush2.msra.mxu0 0.0
  %6028 = vmatprep.subr.mxu0 0.0
  %6029 = vmatpush2.msra.mxu0 0.0
  %6030 = vmatprep.subr.mxu0 0.0
  %6031 = vmatpush2.msra.mxu0 0.0
  %6032 = vmatprep.subr.mxu0 0.0
  %6033 = vmatpush2.msra.mxu0 0.0
  %6034 = vmatprep.mubr.f32.mxu0 0.0
  %6035 = vmatmul.mubr.f32.gmra.mxu0 %v5482
  %v6036 = vpop.f32.mrf.mxu0
  %v6037 = vadd.f32 0.0, %v6036
  %v6038 = vpop.f32.mrf.mxu0
  %6039 = vmatprep.mubr.f32.mxu0 0.0
  %6040 = vmatmul.mubr.f32.gmra.mxu0 %v5485
  %v6041 = vpop.f32.mrf.mxu0
  %v6042 = vadd.f32 0.0, %v6041
  %v6043 = vpop.f32.mrf.mxu0
  %6044 = vdwg.mxu0
  %s6045 = scalar_lea.vmem %s17, 14
  %v6046 = vld [vmem:[%s6045] sm:$0x3]
  %v6048 = vsel %vm2697, %v6046, 0
  %6050 = vmatprep.subr.mxu0 0.0
  %6051 = vmatpush1.msra.mxu0 0.0
  %6052 = vmatprep.subr.mxu0 0.0
  %6053 = vmatpush1.msra.mxu0 0.0
  %6054 = vmatprep.subr.mxu0 0.0
  %6055 = vmatpush1.msra.mxu0 0.0
  %6056 = vmatprep.subr.mxu0 0.0
  %6057 = vmatpush1.msra.mxu0 0.0
  %6058 = vmatprep.subr.mxu0 0.0
  %6059 = vmatpush1.msra.mxu0 0.0
  %6060 = vmatprep.subr.mxu0 0.0
  %6061 = vmatpush1.msra.mxu0 0.0
  %6062 = vmatprep.subr.mxu0 0.0
  %6063 = vmatpush1.msra.mxu0 0.0
  %6064 = vmatprep.subr.mxu0 0.0
  %6065 = vmatpush1.msra.mxu0 0.0
  %6066 = vmatprep.subr.mxu0 0.0
  %6067 = vmatpush1.msra.mxu0 0.0
  %6068 = vmatprep.subr.mxu0 0.0
  %6069 = vmatpush1.msra.mxu0 0.0
  %6070 = vmatprep.subr.mxu0 0.0
  %6071 = vmatpush1.msra.mxu0 0.0
  %6072 = vmatprep.subr.mxu0 0.0
  %6073 = vmatpush1.msra.mxu0 0.0
  %6074 = vmatprep.subr.mxu0 0.0
  %6075 = vmatpush1.msra.mxu0 0.0
  %6076 = vmatprep.subr.mxu0 0.0
  %6077 = vmatpush1.msra.mxu0 0.0
  %6078 = vmatprep.subr.mxu0 0.0
  %6079 = vmatpush1.msra.mxu0 0.0
  %6080 = vmatprep.subr.mxu0 0.0
  %6081 = vmatpush1.msra.mxu0 %v6048
  %6082 = vmatprep.subr.mxu0 0.0
  %6083 = vmatpush2.msra.mxu0 0.0
  %6084 = vmatprep.subr.mxu0 0.0
  %6085 = vmatpush2.msra.mxu0 0.0
  %6086 = vmatprep.subr.mxu0 0.0
  %6087 = vmatpush2.msra.mxu0 0.0
  %6088 = vmatprep.subr.mxu0 0.0
  %6089 = vmatpush2.msra.mxu0 0.0
  %6090 = vmatprep.subr.mxu0 0.0
  %6091 = vmatpush2.msra.mxu0 0.0
  %6092 = vmatprep.subr.mxu0 0.0
  %6093 = vmatpush2.msra.mxu0 0.0
  %6094 = vmatprep.subr.mxu0 0.0
  %6095 = vmatpush2.msra.mxu0 0.0
  %6096 = vmatprep.subr.mxu0 0.0
  %6097 = vmatpush2.msra.mxu0 0.0
  %6098 = vmatprep.subr.mxu0 0.0
  %6099 = vmatpush2.msra.mxu0 0.0
  %6100 = vmatprep.subr.mxu0 0.0
  %6101 = vmatpush2.msra.mxu0 0.0
  %6102 = vmatprep.subr.mxu0 0.0
  %6103 = vmatpush2.msra.mxu0 0.0
  %6104 = vmatprep.subr.mxu0 0.0
  %6105 = vmatpush2.msra.mxu0 0.0
  %6106 = vmatprep.subr.mxu0 0.0
  %6107 = vmatpush2.msra.mxu0 0.0
  %6108 = vmatprep.subr.mxu0 0.0
  %6109 = vmatpush2.msra.mxu0 0.0
  %6110 = vmatprep.subr.mxu0 0.0
  %6111 = vmatpush2.msra.mxu0 0.0
  %6112 = vmatprep.subr.mxu0 0.0
  %6113 = vmatpush2.msra.mxu0 0.0
  %6114 = vmatprep.mubr.f32.mxu0 0.0
  %6115 = vmatmul.mubr.f32.gmra.mxu0 %v5482
  %v6116 = vpop.f32.mrf.mxu0
  %v6117 = vadd.f32 0.0, %v6116
  %v6118 = vpop.f32.mrf.mxu0
  %6119 = vmatprep.mubr.f32.mxu0 0.0
  %6120 = vmatmul.mubr.f32.gmra.mxu0 %v5485
  %v6121 = vpop.f32.mrf.mxu0
  %v6122 = vadd.f32 0.0, %v6121
  %v6123 = vpop.f32.mrf.mxu0
  %6124 = vdwg.mxu0
  %s6125 = scalar_lea.vmem %s17, 16
  %v6126 = vld [vmem:[%s6125] sm:$0x3]
  %v6128 = vsel %vm2697, %v6126, 0
  %6130 = vmatprep.subr.mxu0 0.0
  %6131 = vmatpush1.msra.mxu0 0.0
  %6132 = vmatprep.subr.mxu0 0.0
  %6133 = vmatpush1.msra.mxu0 0.0
  %6134 = vmatprep.subr.mxu0 0.0
  %6135 = vmatpush1.msra.mxu0 0.0
  %6136 = vmatprep.subr.mxu0 0.0
  %6137 = vmatpush1.msra.mxu0 0.0
  %6138 = vmatprep.subr.mxu0 0.0
  %6139 = vmatpush1.msra.mxu0 0.0
  %6140 = vmatprep.subr.mxu0 0.0
  %6141 = vmatpush1.msra.mxu0 0.0
  %6142 = vmatprep.subr.mxu0 0.0
  %6143 = vmatpush1.msra.mxu0 0.0
  %6144 = vmatprep.subr.mxu0 0.0
  %6145 = vmatpush1.msra.mxu0 0.0
  %6146 = vmatprep.subr.mxu0 0.0
  %6147 = vmatpush1.msra.mxu0 0.0
  %6148 = vmatprep.subr.mxu0 0.0
  %6149 = vmatpush1.msra.mxu0 0.0
  %6150 = vmatprep.subr.mxu0 0.0
  %6151 = vmatpush1.msra.mxu0 0.0
  %6152 = vmatprep.subr.mxu0 0.0
  %6153 = vmatpush1.msra.mxu0 0.0
  %6154 = vmatprep.subr.mxu0 0.0
  %6155 = vmatpush1.msra.mxu0 0.0
  %6156 = vmatprep.subr.mxu0 0.0
  %6157 = vmatpush1.msra.mxu0 0.0
  %6158 = vmatprep.subr.mxu0 0.0
  %6159 = vmatpush1.msra.mxu0 0.0
  %6160 = vmatprep.subr.mxu0 0.0
  %6161 = vmatpush1.msra.mxu0 %v6128
  %6162 = vmatprep.subr.mxu0 0.0
  %6163 = vmatpush2.msra.mxu0 0.0
  %6164 = vmatprep.subr.mxu0 0.0
  %6165 = vmatpush2.msra.mxu0 0.0
  %6166 = vmatprep.subr.mxu0 0.0
  %6167 = vmatpush2.msra.mxu0 0.0
  %6168 = vmatprep.subr.mxu0 0.0
  %6169 = vmatpush2.msra.mxu0 0.0
  %6170 = vmatprep.subr.mxu0 0.0
  %6171 = vmatpush2.msra.mxu0 0.0
  %6172 = vmatprep.subr.mxu0 0.0
  %6173 = vmatpush2.msra.mxu0 0.0
  %6174 = vmatprep.subr.mxu0 0.0
  %6175 = vmatpush2.msra.mxu0 0.0
  %6176 = vmatprep.subr.mxu0 0.0
  %6177 = vmatpush2.msra.mxu0 0.0
  %6178 = vmatprep.subr.mxu0 0.0
  %6179 = vmatpush2.msra.mxu0 0.0
  %6180 = vmatprep.subr.mxu0 0.0
  %6181 = vmatpush2.msra.mxu0 0.0
  %6182 = vmatprep.subr.mxu0 0.0
  %6183 = vmatpush2.msra.mxu0 0.0
  %6184 = vmatprep.subr.mxu0 0.0
  %6185 = vmatpush2.msra.mxu0 0.0
  %6186 = vmatprep.subr.mxu0 0.0
  %6187 = vmatpush2.msra.mxu0 0.0
  %6188 = vmatprep.subr.mxu0 0.0
  %6189 = vmatpush2.msra.mxu0 0.0
  %6190 = vmatprep.subr.mxu0 0.0
  %6191 = vmatpush2.msra.mxu0 0.0
  %6192 = vmatprep.subr.mxu0 0.0
  %6193 = vmatpush2.msra.mxu0 0.0
  %6194 = vmatprep.mubr.f32.mxu0 0.0
  %6195 = vmatmul.mubr.f32.gmra.mxu0 %v5482
  %v6196 = vpop.f32.mrf.mxu0
  %v6197 = vadd.f32 0.0, %v6196
  %v6198 = vpop.f32.mrf.mxu0
  %6199 = vmatprep.mubr.f32.mxu0 0.0
  %6200 = vmatmul.mubr.f32.gmra.mxu0 %v5485
  %v6201 = vpop.f32.mrf.mxu0
  %v6202 = vadd.f32 0.0, %v6201
  %v6203 = vpop.f32.mrf.mxu0
  %6204 = vdwg.mxu0
  %v6205 = vld [vmem:[%s18] sm:$0xff]
  %v6206 = vld [vmem:[%s18 + $0x8] sm:$0xff]
  %v6207 = vld [vmem:[%s19] sm:$0xff]
  %6209 = vset.pattern.permute.xlu0 0
  %6210 = vperm.xlu0 %6209, %v6207
  %v6211 = vpop.permute.xlu0 %6210
  %v6214 = vsel %vm5384, %v6206, 0
  %6216 = vmatprep.subr.mxu0 0.0
  %6217 = vmatpush1.msra.mxu0 %v6122
  %6218 = vmatprep.subr.mxu0 0.0
  %6219 = vmatpush1.msra.mxu0 %v6117
  %6220 = vmatprep.subr.mxu0 0.0
  %6221 = vmatpush1.msra.mxu0 %v6042
  %6222 = vmatprep.subr.mxu0 0.0
  %6223 = vmatpush1.msra.mxu0 %v6037
  %6224 = vmatprep.subr.mxu0 0.0
  %6225 = vmatpush1.msra.mxu0 %v5962
  %6226 = vmatprep.subr.mxu0 0.0
  %6227 = vmatpush1.msra.mxu0 %v5957
  %6228 = vmatprep.subr.mxu0 0.0
  %6229 = vmatpush1.msra.mxu0 %v5882
  %6230 = vmatprep.subr.mxu0 0.0
  %6231 = vmatpush1.msra.mxu0 %v5877
  %6232 = vmatprep.subr.mxu0 0.0
  %6233 = vmatpush1.msra.mxu0 %v5802
  %6234 = vmatprep.subr.mxu0 0.0
  %6235 = vmatpush1.msra.mxu0 %v5797
  %6236 = vmatprep.subr.mxu0 0.0
  %6237 = vmatpush1.msra.mxu0 %v5722
  %6238 = vmatprep.subr.mxu0 0.0
  %6239 = vmatpush1.msra.mxu0 %v5717
  %6240 = vmatprep.subr.mxu0 0.0
  %6241 = vmatpush1.msra.mxu0 %v5642
  %6242 = vmatprep.subr.mxu0 0.0
  %6243 = vmatpush1.msra.mxu0 %v5637
  %6244 = vmatprep.subr.mxu0 0.0
  %6245 = vmatpush1.msra.mxu0 %v5562
  %6246 = vmatprep.subr.mxu0 0.0
  %6247 = vmatpush1.msra.mxu0 %v5557
  %6248 = vmatprep.subr.mxu0 0.0
  %6249 = vmatpush2.msra.mxu0 0.0
  %6250 = vmatprep.subr.mxu0 0.0
  %6251 = vmatpush2.msra.mxu0 0.0
  %6252 = vmatprep.subr.mxu0 0.0
  %6253 = vmatpush2.msra.mxu0 0.0
  %6254 = vmatprep.subr.mxu0 0.0
  %6255 = vmatpush2.msra.mxu0 0.0
  %6256 = vmatprep.subr.mxu0 0.0
  %6257 = vmatpush2.msra.mxu0 0.0
  %6258 = vmatprep.subr.mxu0 0.0
  %6259 = vmatpush2.msra.mxu0 0.0
  %6260 = vmatprep.subr.mxu0 0.0
  %6261 = vmatpush2.msra.mxu0 0.0
  %6262 = vmatprep.subr.mxu0 0.0
  %6263 = vmatpush2.msra.mxu0 0.0
  %6264 = vmatprep.subr.mxu0 0.0
  %6265 = vmatpush2.msra.mxu0 0.0
  %6266 = vmatprep.subr.mxu0 0.0
  %6267 = vmatpush2.msra.mxu0 0.0
  %6268 = vmatprep.subr.mxu0 0.0
  %6269 = vmatpush2.msra.mxu0 0.0
  %6270 = vmatprep.subr.mxu0 0.0
  %6271 = vmatpush2.msra.mxu0 0.0
  %6272 = vmatprep.subr.mxu0 0.0
  %6273 = vmatpush2.msra.mxu0 0.0
  %6274 = vmatprep.subr.mxu0 0.0
  %6275 = vmatpush2.msra.mxu0 0.0
  %6276 = vmatprep.subr.mxu0 0.0
  %6277 = vmatpush2.msra.mxu0 %v6202
  %6278 = vmatprep.subr.mxu0 0.0
  %6279 = vmatpush2.msra.mxu0 %v6197
  %6280 = vmatprep.mubr.f32.mxu0 %v6214
  %6281 = vmatmul.mubr.f32.gmra.mxu0 %v6205
  %v6282 = vpop.f32.mrf.mxu0
  %v6283 = vadd.f32 %v6211, %v6282
  %v6284 = vpop.f32.mrf.mxu0
  %6285 = vdwg.mxu0
  %v6286 = vmul.f32 %v6283, 0.5
  %v6287 = vmul.f32 %v6283, 0.70710677
  %vm6288 = vcmp.ge.f32.partialorder %v6287, 0.0
  %v6289 = vsub.f32 0.0, %v6287
  %v6290 = vsel %vm6288, %v6287, %v6289
  %v6291 = vmul.f32 %v6290, 0.3275911
  %v6292 = vadd.f32 %v6291, 1.0
  %v6293 = vrcp.pop %v6292
  %v6294 = vmul.f32 1.0, %v6293
  %v6295 = vmul.f32 %v6294, 1.0614054
  %v6296 = vadd.f32 %v6295, -1.4531521
  %v6297 = vmul.f32 %v6296, %v6294
  %v6298 = vadd.f32 %v6297, 1.4214138
  %v6299 = vmul.f32 %v6298, %v6294
  %v6300 = vadd.f32 %v6299, -0.28449672
  %v6301 = vmul.f32 %v6300, %v6294
  %v6302 = vadd.f32 %v6301, 0.2548296
  %v6303 = vmul.f32 %v6302, %v6294
  %v6304 = vsub.f32 0.0, %v6290
  %v6305 = vmul.f32 %v6304, %v6290
  %v6306 = vmul.f32 %v6305, 1.442695
  %v6307 = vpow.pop %v6306
  %v6308 = vmul.f32 %v6303, %v6307
  %v6309 = vsub.f32 1.0, %v6308
  %v6310 = vsub.f32 0.0, %v6309
  %v6311 = vsel %vm6288, %v6309, %v6310
  %v6312 = vadd.f32 %v6311, 1.0
  %v6313 = vmul.f32 %v6286, %v6312
  %v6314 = vld [vmem:[%s20] sm:$0xff]
  %v6315 = vld [vmem:[%s20 + $0x8] sm:$0xff]
  %v6316 = vld [vmem:[%s20 + $0x10] sm:$0xff]
  %v6317 = vld [vmem:[%s20 + $0x18] sm:$0xff]
  %v6318 = vld [vmem:[%s20 + $0x20] sm:$0xff]
  %v6319 = vld [vmem:[%s20 + $0x28] sm:$0xff]
  %v6320 = vld [vmem:[%s20 + $0x30] sm:$0xff]
  %v6321 = vld [vmem:[%s20 + $0x38] sm:$0xff]
  %v6322 = vld [vmem:[%s20 + $0x40] sm:$0xff]
  %v6323 = vld [vmem:[%s20 + $0x48] sm:$0xff]
  %v6324 = vld [vmem:[%s20 + $0x50] sm:$0xff]
  %v6325 = vld [vmem:[%s20 + $0x58] sm:$0xff]
  %v6326 = vld [vmem:[%s20 + $0x60] sm:$0xff]
  %v6327 = vld [vmem:[%s20 + $0x68] sm:$0xff]
  %v6328 = vld [vmem:[%s20 + $0x70] sm:$0xff]
  %v6329 = vld [vmem:[%s20 + $0x78] sm:$0xff]
  %v6330 = vld [vmem:[%s20 + $0x80] sm:$0xff]
  %v6331 = vld [vmem:[%s20 + $0x88] sm:$0xff]
  %v6332 = vld [vmem:[%s20 + $0x90] sm:$0xff]
  %v6333 = vld [vmem:[%s20 + $0x98] sm:$0xff]
  %v6334 = vld [vmem:[%s20 + $0xa0] sm:$0xff]
  %v6335 = vld [vmem:[%s20 + $0xa8] sm:$0xff]
  %v6336 = vld [vmem:[%s20 + $0xb0] sm:$0xff]
  %v6337 = vld [vmem:[%s20 + $0xb8] sm:$0xff]
  %v6338 = vld [vmem:[%s20 + $0xc0] sm:$0xff]
  %v6339 = vld [vmem:[%s20 + $0xc8] sm:$0xff]
  %v6340 = vld [vmem:[%s20 + $0xd0] sm:$0xff]
  %v6342 = vsel %vm3474, %v6313, 0
  %6344 = vmatprep.subr.mxu0 0.0
  %6345 = vmatpush1.msra.mxu0 0.0
  %6346 = vmatprep.subr.mxu0 0.0
  %6347 = vmatpush1.msra.mxu0 0.0
  %6348 = vmatprep.subr.mxu0 0.0
  %6349 = vmatpush1.msra.mxu0 0.0
  %6350 = vmatprep.subr.mxu0 0.0
  %6351 = vmatpush1.msra.mxu0 0.0
  %6352 = vmatprep.subr.mxu0 0.0
  %6353 = vmatpush1.msra.mxu0 0.0
  %6354 = vmatprep.subr.mxu0 0.0
  %6355 = vmatpush1.msra.mxu0 0.0
  %6356 = vmatprep.subr.mxu0 0.0
  %6357 = vmatpush1.msra.mxu0 0.0
  %6358 = vmatprep.subr.mxu0 %v6339
  %6359 = vmatpush1.msra.mxu0 %v6338
  %6360 = vmatprep.subr.mxu0 %v6336
  %6361 = vmatpush1.msra.mxu0 %v6335
  %6362 = vmatprep.subr.mxu0 %v6333
  %6363 = vmatpush1.msra.mxu0 %v6332
  %6364 = vmatprep.subr.mxu0 %v6330
  %6365 = vmatpush1.msra.mxu0 %v6329
  %6366 = vmatprep.subr.mxu0 %v6327
  %6367 = vmatpush1.msra.mxu0 %v6326
  %6368 = vmatprep.subr.mxu0 %v6324
  %6369 = vmatpush1.msra.mxu0 %v6323
  %6370 = vmatprep.subr.mxu0 %v6321
  %6371 = vmatpush1.msra.mxu0 %v6320
  %6372 = vmatprep.subr.mxu0 %v6318
  %6373 = vmatpush1.msra.mxu0 %v6317
  %6374 = vmatprep.subr.mxu0 %v6315
  %6375 = vmatpush1.msra.mxu0 %v6314
  %6376 = vmatprep.subr.mxu0 0.0
  %6377 = vmatpush2.msra.mxu0 0.0
  %6378 = vmatprep.subr.mxu0 0.0
  %6379 = vmatpush2.msra.mxu0 0.0
  %6380 = vmatprep.subr.mxu0 0.0
  %6381 = vmatpush2.msra.mxu0 0.0
  %6382 = vmatprep.subr.mxu0 0.0
  %6383 = vmatpush2.msra.mxu0 0.0
  %6384 = vmatprep.subr.mxu0 0.0
  %6385 = vmatpush2.msra.mxu0 0.0
  %6386 = vmatprep.subr.mxu0 0.0
  %6387 = vmatpush2.msra.mxu0 0.0
  %6388 = vmatprep.subr.mxu0 0.0
  %6389 = vmatpush2.msra.mxu0 0.0
  %6390 = vmatprep.subr.mxu0 0.0
  %6391 = vmatpush2.msra.mxu0 0.0
  %6392 = vmatprep.subr.mxu0 0.0
  %6393 = vmatpush2.msra.mxu0 0.0
  %6394 = vmatprep.subr.mxu0 0.0
  %6395 = vmatpush2.msra.mxu0 0.0
  %6396 = vmatprep.subr.mxu0 0.0
  %6397 = vmatpush2.msra.mxu0 0.0
  %6398 = vmatprep.subr.mxu0 0.0
  %6399 = vmatpush2.msra.mxu0 0.0
  %6400 = vmatprep.subr.mxu0 0.0
  %6401 = vmatpush2.msra.mxu0 0.0
  %6402 = vmatprep.subr.mxu0 0.0
  %6403 = vmatpush2.msra.mxu0 0.0
  %6404 = vmatprep.subr.mxu0 0.0
  %6405 = vmatpush2.msra.mxu0 0.0
  %6406 = vmatprep.subr.mxu0 0.0
  %6407 = vmatpush2.msra.mxu0 0.0
  %6408 = vmatprep.mubr.f32.mxu0 0.0
  %6409 = vmatmul.mubr.f32.gmra.mxu0 %v6342
  %v6410 = vpop.f32.mrf.mxu0
  %v6411 = vadd.f32 0.0, %v6410
  %v6412 = vpop.f32.mrf.mxu0
  %v6413 = vadd.f32 0.0, %v6412
  %6414 = vdwg.mxu0
  %6415 = vmatprep.subr.mxu0 0.0
  %6416 = vmatpush1.msra.mxu0 0.0
  %6417 = vmatprep.subr.mxu0 0.0
  %6418 = vmatpush1.msra.mxu0 0.0
  %6419 = vmatprep.subr.mxu0 0.0
  %6420 = vmatpush1.msra.mxu0 0.0
  %6421 = vmatprep.subr.mxu0 0.0
  %6422 = vmatpush1.msra.mxu0 0.0
  %6423 = vmatprep.subr.mxu0 0.0
  %6424 = vmatpush1.msra.mxu0 0.0
  %6425 = vmatprep.subr.mxu0 0.0
  %6426 = vmatpush1.msra.mxu0 0.0
  %6427 = vmatprep.subr.mxu0 0.0
  %6428 = vmatpush1.msra.mxu0 0.0
  %6429 = vmatprep.subr.mxu0 0.0
  %6430 = vmatpush1.msra.mxu0 %v6340
  %6431 = vmatprep.subr.mxu0 0.0
  %6432 = vmatpush1.msra.mxu0 %v6337
  %6433 = vmatprep.subr.mxu0 0.0
  %6434 = vmatpush1.msra.mxu0 %v6334
  %6435 = vmatprep.subr.mxu0 0.0
  %6436 = vmatpush1.msra.mxu0 %v6331
  %6437 = vmatprep.subr.mxu0 0.0
  %6438 = vmatpush1.msra.mxu0 %v6328
  %6439 = vmatprep.subr.mxu0 0.0
  %6440 = vmatpush1.msra.mxu0 %v6325
  %6441 = vmatprep.subr.mxu0 0.0
  %6442 = vmatpush1.msra.mxu0 %v6322
  %6443 = vmatprep.subr.mxu0 0.0
  %6444 = vmatpush1.msra.mxu0 %v6319
  %6445 = vmatprep.subr.mxu0 0.0
  %6446 = vmatpush1.msra.mxu0 %v6316
  %6447 = vmatprep.subr.mxu0 0.0
  %6448 = vmatpush2.msra.mxu0 0.0
  %6449 = vmatprep.subr.mxu0 0.0
  %6450 = vmatpush2.msra.mxu0 0.0
  %6451 = vmatprep.subr.mxu0 0.0
  %6452 = vmatpush2.msra.mxu0 0.0
  %6453 = vmatprep.subr.mxu0 0.0
  %6454 = vmatpush2.msra.mxu0 0.0
  %6455 = vmatprep.subr.mxu0 0.0
  %6456 = vmatpush2.msra.mxu0 0.0
  %6457 = vmatprep.subr.mxu0 0.0
  %6458 = vmatpush2.msra.mxu0 0.0
  %6459 = vmatprep.subr.mxu0 0.0
  %6460 = vmatpush2.msra.mxu0 0.0
  %6461 = vmatprep.subr.mxu0 0.0
  %6462 = vmatpush2.msra.mxu0 0.0
  %6463 = vmatprep.subr.mxu0 0.0
  %6464 = vmatpush2.msra.mxu0 0.0
  %6465 = vmatprep.subr.mxu0 0.0
  %6466 = vmatpush2.msra.mxu0 0.0
  %6467 = vmatprep.subr.mxu0 0.0
  %6468 = vmatpush2.msra.mxu0 0.0
  %6469 = vmatprep.subr.mxu0 0.0
  %6470 = vmatpush2.msra.mxu0 0.0
  %6471 = vmatprep.subr.mxu0 0.0
  %6472 = vmatpush2.msra.mxu0 0.0
  %6473 = vmatprep.subr.mxu0 0.0
  %6474 = vmatpush2.msra.mxu0 0.0
  %6475 = vmatprep.subr.mxu0 0.0
  %6476 = vmatpush2.msra.mxu0 0.0
  %6477 = vmatprep.subr.mxu0 0.0
  %6478 = vmatpush2.msra.mxu0 0.0
  %6479 = vmatprep.mubr.f32.mxu0 0.0
  %6480 = vmatmul.mubr.f32.gmra.mxu0 %v6342
  %v6481 = vpop.f32.mrf.mxu0
  %v6482 = vadd.f32 0.0, %v6481
  %v6483 = vpop.f32.mrf.mxu0
  %6484 = vdwg.mxu0
  %s6485 = scalar_lea.vmem %s20, 216
  %v6486 = vld [vmem:[%s6485] sm:$0xff]
  %v6487 = vld [vmem:[%s6485 + $0x8] sm:$0xff]
  %v6488 = vld [vmem:[%s6485 + $0x10] sm:$0xff]
  %v6489 = vld [vmem:[%s6485 + $0x18] sm:$0xff]
  %v6490 = vld [vmem:[%s6485 + $0x20] sm:$0xff]
  %v6491 = vld [vmem:[%s6485 + $0x28] sm:$0xff]
  %v6492 = vld [vmem:[%s6485 + $0x30] sm:$0xff]
  %v6493 = vld [vmem:[%s6485 + $0x38] sm:$0xff]
  %v6494 = vld [vmem:[%s6485 + $0x40] sm:$0xff]
  %v6495 = vld [vmem:[%s6485 + $0x48] sm:$0xff]
  %v6496 = vld [vmem:[%s6485 + $0x50] sm:$0xff]
  %v6497 = vld [vmem:[%s6485 + $0x58] sm:$0xff]
  %v6498 = vld [vmem:[%s6485 + $0x60] sm:$0xff]
  %v6499 = vld [vmem:[%s6485 + $0x68] sm:$0xff]
  %v6500 = vld [vmem:[%s6485 + $0x70] sm:$0xff]
  %v6501 = vld [vmem:[%s6485 + $0x78] sm:$0xff]
  %v6502 = vld [vmem:[%s6485 + $0x80] sm:$0xff]
  %v6503 = vld [vmem:[%s6485 + $0x88] sm:$0xff]
  %v6504 = vld [vmem:[%s6485 + $0x90] sm:$0xff]
  %v6505 = vld [vmem:[%s6485 + $0x98] sm:$0xff]
  %v6506 = vld [vmem:[%s6485 + $0xa0] sm:$0xff]
  %v6507 = vld [vmem:[%s6485 + $0xa8] sm:$0xff]
  %v6508 = vld [vmem:[%s6485 + $0xb0] sm:$0xff]
  %v6509 = vld [vmem:[%s6485 + $0xb8] sm:$0xff]
  %v6510 = vld [vmem:[%s6485 + $0xc0] sm:$0xff]
  %v6511 = vld [vmem:[%s6485 + $0xc8] sm:$0xff]
  %v6512 = vld [vmem:[%s6485 + $0xd0] sm:$0xff]
  %6513 = vmatprep.subr.mxu0 0.0
  %6514 = vmatpush1.msra.mxu0 0.0
  %6515 = vmatprep.subr.mxu0 0.0
  %6516 = vmatpush1.msra.mxu0 0.0
  %6517 = vmatprep.subr.mxu0 0.0
  %6518 = vmatpush1.msra.mxu0 0.0
  %6519 = vmatprep.subr.mxu0 0.0
  %6520 = vmatpush1.msra.mxu0 0.0
  %6521 = vmatprep.subr.mxu0 0.0
  %6522 = vmatpush1.msra.mxu0 0.0
  %6523 = vmatprep.subr.mxu0 0.0
  %6524 = vmatpush1.msra.mxu0 0.0
  %6525 = vmatprep.subr.mxu0 0.0
  %6526 = vmatpush1.msra.mxu0 0.0
  %6527 = vmatprep.subr.mxu0 %v6511
  %6528 = vmatpush1.msra.mxu0 %v6510
  %6529 = vmatprep.subr.mxu0 %v6508
  %6530 = vmatpush1.msra.mxu0 %v6507
  %6531 = vmatprep.subr.mxu0 %v6505
  %6532 = vmatpush1.msra.mxu0 %v6504
  %6533 = vmatprep.subr.mxu0 %v6502
  %6534 = vmatpush1.msra.mxu0 %v6501
  %6535 = vmatprep.subr.mxu0 %v6499
  %6536 = vmatpush1.msra.mxu0 %v6498
  %6537 = vmatprep.subr.mxu0 %v6496
  %6538 = vmatpush1.msra.mxu0 %v6495
  %6539 = vmatprep.subr.mxu0 %v6493
  %6540 = vmatpush1.msra.mxu0 %v6492
  %6541 = vmatprep.subr.mxu0 %v6490
  %6542 = vmatpush1.msra.mxu0 %v6489
  %6543 = vmatprep.subr.mxu0 %v6487
  %6544 = vmatpush1.msra.mxu0 %v6486
  %6545 = vmatprep.subr.mxu0 0.0
  %6546 = vmatpush2.msra.mxu0 0.0
  %6547 = vmatprep.subr.mxu0 0.0
  %6548 = vmatpush2.msra.mxu0 0.0
  %6549 = vmatprep.subr.mxu0 0.0
  %6550 = vmatpush2.msra.mxu0 0.0
  %6551 = vmatprep.subr.mxu0 0.0
  %6552 = vmatpush2.msra.mxu0 0.0
  %6553 = vmatprep.subr.mxu0 0.0
  %6554 = vmatpush2.msra.mxu0 0.0
  %6555 = vmatprep.subr.mxu0 0.0
  %6556 = vmatpush2.msra.mxu0 0.0
  %6557 = vmatprep.subr.mxu0 0.0
  %6558 = vmatpush2.msra.mxu0 0.0
  %6559 = vmatprep.subr.mxu0 0.0
  %6560 = vmatpush2.msra.mxu0 0.0
  %6561 = vmatprep.subr.mxu0 0.0
  %6562 = vmatpush2.msra.mxu0 0.0
  %6563 = vmatprep.subr.mxu0 0.0
  %6564 = vmatpush2.msra.mxu0 0.0
  %6565 = vmatprep.subr.mxu0 0.0
  %6566 = vmatpush2.msra.mxu0 0.0
  %6567 = vmatprep.subr.mxu0 0.0
  %6568 = vmatpush2.msra.mxu0 0.0
  %6569 = vmatprep.subr.mxu0 0.0
  %6570 = vmatpush2.msra.mxu0 0.0
  %6571 = vmatprep.subr.mxu0 0.0
  %6572 = vmatpush2.msra.mxu0 0.0
  %6573 = vmatprep.subr.mxu0 0.0
  %6574 = vmatpush2.msra.mxu0 0.0
  %6575 = vmatprep.subr.mxu0 0.0
  %6576 = vmatpush2.msra.mxu0 0.0
  %6577 = vmatprep.mubr.f32.mxu0 0.0
  %6578 = vmatmul.mubr.f32.gmra.mxu0 %v6342
  %v6579 = vpop.f32.mrf.mxu0
  %v6580 = vadd.f32 0.0, %v6579
  %v6581 = vpop.f32.mrf.mxu0
  %v6582 = vadd.f32 0.0, %v6581
  %6583 = vdwg.mxu0
  %6584 = vmatprep.subr.mxu0 0.0
  %6585 = vmatpush1.msra.mxu0 0.0
  %6586 = vmatprep.subr.mxu0 0.0
  %6587 = vmatpush1.msra.mxu0 0.0
  %6588 = vmatprep.subr.mxu0 0.0
  %6589 = vmatpush1.msra.mxu0 0.0
  %6590 = vmatprep.subr.mxu0 0.0
  %6591 = vmatpush1.msra.mxu0 0.0
  %6592 = vmatprep.subr.mxu0 0.0
  %6593 = vmatpush1.msra.mxu0 0.0
  %6594 = vmatprep.subr.mxu0 0.0
  %6595 = vmatpush1.msra.mxu0 0.0
  %6596 = vmatprep.subr.mxu0 0.0
  %6597 = vmatpush1.msra.mxu0 0.0
  %6598 = vmatprep.subr.mxu0 0.0
  %6599 = vmatpush1.msra.mxu0 %v6512
  %6600 = vmatprep.subr.mxu0 0.0
  %6601 = vmatpush1.msra.mxu0 %v6509
  %6602 = vmatprep.subr.mxu0 0.0
  %6603 = vmatpush1.msra.mxu0 %v6506
  %6604 = vmatprep.subr.mxu0 0.0
  %6605 = vmatpush1.msra.mxu0 %v6503
  %6606 = vmatprep.subr.mxu0 0.0
  %6607 = vmatpush1.msra.mxu0 %v6500
  %6608 = vmatprep.subr.mxu0 0.0
  %6609 = vmatpush1.msra.mxu0 %v6497
  %6610 = vmatprep.subr.mxu0 0.0
  %6611 = vmatpush1.msra.mxu0 %v6494
  %6612 = vmatprep.subr.mxu0 0.0
  %6613 = vmatpush1.msra.mxu0 %v6491
  %6614 = vmatprep.subr.mxu0 0.0
  %6615 = vmatpush1.msra.mxu0 %v6488
  %6616 = vmatprep.subr.mxu0 0.0
  %6617 = vmatpush2.msra.mxu0 0.0
  %6618 = vmatprep.subr.mxu0 0.0
  %6619 = vmatpush2.msra.mxu0 0.0
  %6620 = vmatprep.subr.mxu0 0.0
  %6621 = vmatpush2.msra.mxu0 0.0
  %6622 = vmatprep.subr.mxu0 0.0
  %6623 = vmatpush2.msra.mxu0 0.0
  %6624 = vmatprep.subr.mxu0 0.0
  %6625 = vmatpush2.msra.mxu0 0.0
  %6626 = vmatprep.subr.mxu0 0.0
  %6627 = vmatpush2.msra.mxu0 0.0
  %6628 = vmatprep.subr.mxu0 0.0
  %6629 = vmatpush2.msra.mxu0 0.0
  %6630 = vmatprep.subr.mxu0 0.0
  %6631 = vmatpush2.msra.mxu0 0.0
  %6632 = vmatprep.subr.mxu0 0.0
  %6633 = vmatpush2.msra.mxu0 0.0
  %6634 = vmatprep.subr.mxu0 0.0
  %6635 = vmatpush2.msra.mxu0 0.0
  %6636 = vmatprep.subr.mxu0 0.0
  %6637 = vmatpush2.msra.mxu0 0.0
  %6638 = vmatprep.subr.mxu0 0.0
  %6639 = vmatpush2.msra.mxu0 0.0
  %6640 = vmatprep.subr.mxu0 0.0
  %6641 = vmatpush2.msra.mxu0 0.0
  %6642 = vmatprep.subr.mxu0 0.0
  %6643 = vmatpush2.msra.mxu0 0.0
  %6644 = vmatprep.subr.mxu0 0.0
  %6645 = vmatpush2.msra.mxu0 0.0
  %6646 = vmatprep.subr.mxu0 0.0
  %6647 = vmatpush2.msra.mxu0 0.0
  %6648 = vmatprep.mubr.f32.mxu0 0.0
  %6649 = vmatmul.mubr.f32.gmra.mxu0 %v6342
  %v6650 = vpop.f32.mrf.mxu0
  %v6651 = vadd.f32 0.0, %v6650
  %v6652 = vpop.f32.mrf.mxu0
  %6653 = vdwg.mxu0
  %s6654 = scalar_lea.vmem %s20, 432
  %v6655 = vld [vmem:[%s6654] sm:$0xff]
  %v6656 = vld [vmem:[%s6654 + $0x8] sm:$0xff]
  %v6657 = vld [vmem:[%s6654 + $0x10] sm:$0xff]
  %v6658 = vld [vmem:[%s6654 + $0x18] sm:$0xff]
  %v6659 = vld [vmem:[%s6654 + $0x20] sm:$0xff]
  %v6660 = vld [vmem:[%s6654 + $0x28] sm:$0xff]
  %v6661 = vld [vmem:[%s6654 + $0x30] sm:$0xff]
  %v6662 = vld [vmem:[%s6654 + $0x38] sm:$0xff]
  %v6663 = vld [vmem:[%s6654 + $0x40] sm:$0xff]
  %v6664 = vld [vmem:[%s6654 + $0x48] sm:$0xff]
  %v6665 = vld [vmem:[%s6654 + $0x50] sm:$0xff]
  %v6666 = vld [vmem:[%s6654 + $0x58] sm:$0xff]
  %v6667 = vld [vmem:[%s6654 + $0x60] sm:$0xff]
  %v6668 = vld [vmem:[%s6654 + $0x68] sm:$0xff]
  %v6669 = vld [vmem:[%s6654 + $0x70] sm:$0xff]
  %v6670 = vld [vmem:[%s6654 + $0x78] sm:$0xff]
  %v6671 = vld [vmem:[%s6654 + $0x80] sm:$0xff]
  %v6672 = vld [vmem:[%s6654 + $0x88] sm:$0xff]
  %v6673 = vld [vmem:[%s6654 + $0x90] sm:$0xff]
  %v6674 = vld [vmem:[%s6654 + $0x98] sm:$0xff]
  %v6675 = vld [vmem:[%s6654 + $0xa0] sm:$0xff]
  %v6676 = vld [vmem:[%s6654 + $0xa8] sm:$0xff]
  %v6677 = vld [vmem:[%s6654 + $0xb0] sm:$0xff]
  %v6678 = vld [vmem:[%s6654 + $0xb8] sm:$0xff]
  %v6679 = vld [vmem:[%s6654 + $0xc0] sm:$0xff]
  %v6680 = vld [vmem:[%s6654 + $0xc8] sm:$0xff]
  %v6681 = vld [vmem:[%s6654 + $0xd0] sm:$0xff]
  %6682 = vmatprep.subr.mxu0 0.0
  %6683 = vmatpush1.msra.mxu0 0.0
  %6684 = vmatprep.subr.mxu0 0.0
  %6685 = vmatpush1.msra.mxu0 0.0
  %6686 = vmatprep.subr.mxu0 0.0
  %6687 = vmatpush1.msra.mxu0 0.0
  %6688 = vmatprep.subr.mxu0 0.0
  %6689 = vmatpush1.msra.mxu0 0.0
  %6690 = vmatprep.subr.mxu0 0.0
  %6691 = vmatpush1.msra.mxu0 0.0
  %6692 = vmatprep.subr.mxu0 0.0
  %6693 = vmatpush1.msra.mxu0 0.0
  %6694 = vmatprep.subr.mxu0 0.0
  %6695 = vmatpush1.msra.mxu0 0.0
  %6696 = vmatprep.subr.mxu0 %v6680
  %6697 = vmatpush1.msra.mxu0 %v6679
  %6698 = vmatprep.subr.mxu0 %v6677
  %6699 = vmatpush1.msra.mxu0 %v6676
  %6700 = vmatprep.subr.mxu0 %v6674
  %6701 = vmatpush1.msra.mxu0 %v6673
  %6702 = vmatprep.subr.mxu0 %v6671
  %6703 = vmatpush1.msra.mxu0 %v6670
  %6704 = vmatprep.subr.mxu0 %v6668
  %6705 = vmatpush1.msra.mxu0 %v6667
  %6706 = vmatprep.subr.mxu0 %v6665
  %6707 = vmatpush1.msra.mxu0 %v6664
  %6708 = vmatprep.subr.mxu0 %v6662
  %6709 = vmatpush1.msra.mxu0 %v6661
  %6710 = vmatprep.subr.mxu0 %v6659
  %6711 = vmatpush1.msra.mxu0 %v6658
  %6712 = vmatprep.subr.mxu0 %v6656
  %6713 = vmatpush1.msra.mxu0 %v6655
  %6714 = vmatprep.subr.mxu0 0.0
  %6715 = vmatpush2.msra.mxu0 0.0
  %6716 = vmatprep.subr.mxu0 0.0
  %6717 = vmatpush2.msra.mxu0 0.0
  %6718 = vmatprep.subr.mxu0 0.0
  %6719 = vmatpush2.msra.mxu0 0.0
  %6720 = vmatprep.subr.mxu0 0.0
  %6721 = vmatpush2.msra.mxu0 0.0
  %6722 = vmatprep.subr.mxu0 0.0
  %6723 = vmatpush2.msra.mxu0 0.0
  %6724 = vmatprep.subr.mxu0 0.0
  %6725 = vmatpush2.msra.mxu0 0.0
  %6726 = vmatprep.subr.mxu0 0.0
  %6727 = vmatpush2.msra.mxu0 0.0
  %6728 = vmatprep.subr.mxu0 0.0
  %6729 = vmatpush2.msra.mxu0 0.0
  %6730 = vmatprep.subr.mxu0 0.0
  %6731 = vmatpush2.msra.mxu0 0.0
  %6732 = vmatprep.subr.mxu0 0.0
  %6733 = vmatpush2.msra.mxu0 0.0
  %6734 = vmatprep.subr.mxu0 0.0
  %6735 = vmatpush2.msra.mxu0 0.0
  %6736 = vmatprep.subr.mxu0 0.0
  %6737 = vmatpush2.msra.mxu0 0.0
  %6738 = vmatprep.subr.mxu0 0.0
  %6739 = vmatpush2.msra.mxu0 0.0
  %6740 = vmatprep.subr.mxu0 0.0
  %6741 = vmatpush2.msra.mxu0 0.0
  %6742 = vmatprep.subr.mxu0 0.0
  %6743 = vmatpush2.msra.mxu0 0.0
  %6744 = vmatprep.subr.mxu0 0.0
  %6745 = vmatpush2.msra.mxu0 0.0
  %6746 = vmatprep.mubr.f32.mxu0 0.0
  %6747 = vmatmul.mubr.f32.gmra.mxu0 %v6342
  %v6748 = vpop.f32.mrf.mxu0
  %v6749 = vadd.f32 0.0, %v6748
  %v6750 = vpop.f32.mrf.mxu0
  %v6751 = vadd.f32 0.0, %v6750
  %6752 = vdwg.mxu0
  %6753 = vmatprep.subr.mxu0 0.0
  %6754 = vmatpush1.msra.mxu0 0.0
  %6755 = vmatprep.subr.mxu0 0.0
  %6756 = vmatpush1.msra.mxu0 0.0
  %6757 = vmatprep.subr.mxu0 0.0
  %6758 = vmatpush1.msra.mxu0 0.0
  %6759 = vmatprep.subr.mxu0 0.0
  %6760 = vmatpush1.msra.mxu0 0.0
  %6761 = vmatprep.subr.mxu0 0.0
  %6762 = vmatpush1.msra.mxu0 0.0
  %6763 = vmatprep.subr.mxu0 0.0
  %6764 = vmatpush1.msra.mxu0 0.0
  %6765 = vmatprep.subr.mxu0 0.0
  %6766 = vmatpush1.msra.mxu0 0.0
  %6767 = vmatprep.subr.mxu0 0.0
  %6768 = vmatpush1.msra.mxu0 %v6681
  %6769 = vmatprep.subr.mxu0 0.0
  %6770 = vmatpush1.msra.mxu0 %v6678
  %6771 = vmatprep.subr.mxu0 0.0
  %6772 = vmatpush1.msra.mxu0 %v6675
  %6773 = vmatprep.subr.mxu0 0.0
  %6774 = vmatpush1.msra.mxu0 %v6672
  %6775 = vmatprep.subr.mxu0 0.0
  %6776 = vmatpush1.msra.mxu0 %v6669
  %6777 = vmatprep.subr.mxu0 0.0
  %6778 = vmatpush1.msra.mxu0 %v6666
  %6779 = vmatprep.subr.mxu0 0.0
  %6780 = vmatpush1.msra.mxu0 %v6663
  %6781 = vmatprep.subr.mxu0 0.0
  %6782 = vmatpush1.msra.mxu0 %v6660
  %6783 = vmatprep.subr.mxu0 0.0
  %6784 = vmatpush1.msra.mxu0 %v6657
  %6785 = vmatprep.subr.mxu0 0.0
  %6786 = vmatpush2.msra.mxu0 0.0
  %6787 = vmatprep.subr.mxu0 0.0
  %6788 = vmatpush2.msra.mxu0 0.0
  %6789 = vmatprep.subr.mxu0 0.0
  %6790 = vmatpush2.msra.mxu0 0.0
  %6791 = vmatprep.subr.mxu0 0.0
  %6792 = vmatpush2.msra.mxu0 0.0
  %6793 = vmatprep.subr.mxu0 0.0
  %6794 = vmatpush2.msra.mxu0 0.0
  %6795 = vmatprep.subr.mxu0 0.0
  %6796 = vmatpush2.msra.mxu0 0.0
  %6797 = vmatprep.subr.mxu0 0.0
  %6798 = vmatpush2.msra.mxu0 0.0
  %6799 = vmatprep.subr.mxu0 0.0
  %6800 = vmatpush2.msra.mxu0 0.0
  %6801 = vmatprep.subr.mxu0 0.0
  %6802 = vmatpush2.msra.mxu0 0.0
  %6803 = vmatprep.subr.mxu0 0.0
  %6804 = vmatpush2.msra.mxu0 0.0
  %6805 = vmatprep.subr.mxu0 0.0
  %6806 = vmatpush2.msra.mxu0 0.0
  %6807 = vmatprep.subr.mxu0 0.0
  %6808 = vmatpush2.msra.mxu0 0.0
  %6809 = vmatprep.subr.mxu0 0.0
  %6810 = vmatpush2.msra.mxu0 0.0
  %6811 = vmatprep.subr.mxu0 0.0
  %6812 = vmatpush2.msra.mxu0 0.0
  %6813 = vmatprep.subr.mxu0 0.0
  %6814 = vmatpush2.msra.mxu0 0.0
  %6815 = vmatprep.subr.mxu0 0.0
  %6816 = vmatpush2.msra.mxu0 0.0
  %6817 = vmatprep.mubr.f32.mxu0 0.0
  %6818 = vmatmul.mubr.f32.gmra.mxu0 %v6342
  %v6819 = vpop.f32.mrf.mxu0
  %v6820 = vadd.f32 0.0, %v6819
  %v6821 = vpop.f32.mrf.mxu0
  %6822 = vdwg.mxu0
  %s6823 = scalar_lea.vmem %s20, 648
  %v6824 = vld [vmem:[%s6823] sm:$0xff]
  %v6825 = vld [vmem:[%s6823 + $0x8] sm:$0xff]
  %v6826 = vld [vmem:[%s6823 + $0x10] sm:$0xff]
  %v6827 = vld [vmem:[%s6823 + $0x18] sm:$0xff]
  %v6828 = vld [vmem:[%s6823 + $0x20] sm:$0xff]
  %v6829 = vld [vmem:[%s6823 + $0x28] sm:$0xff]
  %v6830 = vld [vmem:[%s6823 + $0x30] sm:$0xff]
  %v6831 = vld [vmem:[%s6823 + $0x38] sm:$0xff]
  %v6832 = vld [vmem:[%s6823 + $0x40] sm:$0xff]
  %v6833 = vld [vmem:[%s6823 + $0x48] sm:$0xff]
  %v6834 = vld [vmem:[%s6823 + $0x50] sm:$0xff]
  %v6835 = vld [vmem:[%s6823 + $0x58] sm:$0xff]
  %v6836 = vld [vmem:[%s6823 + $0x60] sm:$0xff]
  %v6837 = vld [vmem:[%s6823 + $0x68] sm:$0xff]
  %v6838 = vld [vmem:[%s6823 + $0x70] sm:$0xff]
  %v6839 = vld [vmem:[%s6823 + $0x78] sm:$0xff]
  %v6840 = vld [vmem:[%s6823 + $0x80] sm:$0xff]
  %v6841 = vld [vmem:[%s6823 + $0x88] sm:$0xff]
  %v6842 = vld [vmem:[%s6823 + $0x90] sm:$0xff]
  %v6843 = vld [vmem:[%s6823 + $0x98] sm:$0xff]
  %v6844 = vld [vmem:[%s6823 + $0xa0] sm:$0xff]
  %v6845 = vld [vmem:[%s6823 + $0xa8] sm:$0xff]
  %v6846 = vld [vmem:[%s6823 + $0xb0] sm:$0xff]
  %v6847 = vld [vmem:[%s6823 + $0xb8] sm:$0xff]
  %v6848 = vld [vmem:[%s6823 + $0xc0] sm:$0xff]
  %v6849 = vld [vmem:[%s6823 + $0xc8] sm:$0xff]
  %v6850 = vld [vmem:[%s6823 + $0xd0] sm:$0xff]
  %6851 = vmatprep.subr.mxu0 0.0
  %6852 = vmatpush1.msra.mxu0 0.0
  %6853 = vmatprep.subr.mxu0 0.0
  %6854 = vmatpush1.msra.mxu0 0.0
  %6855 = vmatprep.subr.mxu0 0.0
  %6856 = vmatpush1.msra.mxu0 0.0
  %6857 = vmatprep.subr.mxu0 0.0
  %6858 = vmatpush1.msra.mxu0 0.0
  %6859 = vmatprep.subr.mxu0 0.0
  %6860 = vmatpush1.msra.mxu0 0.0
  %6861 = vmatprep.subr.mxu0 0.0
  %6862 = vmatpush1.msra.mxu0 0.0
  %6863 = vmatprep.subr.mxu0 0.0
  %6864 = vmatpush1.msra.mxu0 0.0
  %6865 = vmatprep.subr.mxu0 %v6849
  %6866 = vmatpush1.msra.mxu0 %v6848
  %6867 = vmatprep.subr.mxu0 %v6846
  %6868 = vmatpush1.msra.mxu0 %v6845
  %6869 = vmatprep.subr.mxu0 %v6843
  %6870 = vmatpush1.msra.mxu0 %v6842
  %6871 = vmatprep.subr.mxu0 %v6840
  %6872 = vmatpush1.msra.mxu0 %v6839
  %6873 = vmatprep.subr.mxu0 %v6837
  %6874 = vmatpush1.msra.mxu0 %v6836
  %6875 = vmatprep.subr.mxu0 %v6834
  %6876 = vmatpush1.msra.mxu0 %v6833
  %6877 = vmatprep.subr.mxu0 %v6831
  %6878 = vmatpush1.msra.mxu0 %v6830
  %6879 = vmatprep.subr.mxu0 %v6828
  %6880 = vmatpush1.msra.mxu0 %v6827
  %6881 = vmatprep.subr.mxu0 %v6825
  %6882 = vmatpush1.msra.mxu0 %v6824
  %6883 = vmatprep.subr.mxu0 0.0
  %6884 = vmatpush2.msra.mxu0 0.0
  %6885 = vmatprep.subr.mxu0 0.0
  %6886 = vmatpush2.msra.mxu0 0.0
  %6887 = vmatprep.subr.mxu0 0.0
  %6888 = vmatpush2.msra.mxu0 0.0
  %6889 = vmatprep.subr.mxu0 0.0
  %6890 = vmatpush2.msra.mxu0 0.0
  %6891 = vmatprep.subr.mxu0 0.0
  %6892 = vmatpush2.msra.mxu0 0.0
  %6893 = vmatprep.subr.mxu0 0.0
  %6894 = vmatpush2.msra.mxu0 0.0
  %6895 = vmatprep.subr.mxu0 0.0
  %6896 = vmatpush2.msra.mxu0 0.0
  %6897 = vmatprep.subr.mxu0 0.0
  %6898 = vmatpush2.msra.mxu0 0.0
  %6899 = vmatprep.subr.mxu0 0.0
  %6900 = vmatpush2.msra.mxu0 0.0
  %6901 = vmatprep.subr.mxu0 0.0
  %6902 = vmatpush2.msra.mxu0 0.0
  %6903 = vmatprep.subr.mxu0 0.0
  %6904 = vmatpush2.msra.mxu0 0.0
  %6905 = vmatprep.subr.mxu0 0.0
  %6906 = vmatpush2.msra.mxu0 0.0
  %6907 = vmatprep.subr.mxu0 0.0
  %6908 = vmatpush2.msra.mxu0 0.0
  %6909 = vmatprep.subr.mxu0 0.0
  %6910 = vmatpush2.msra.mxu0 0.0
  %6911 = vmatprep.subr.mxu0 0.0
  %6912 = vmatpush2.msra.mxu0 0.0
  %6913 = vmatprep.subr.mxu0 0.0
  %6914 = vmatpush2.msra.mxu0 0.0
  %6915 = vmatprep.mubr.f32.mxu0 0.0
  %6916 = vmatmul.mubr.f32.gmra.mxu0 %v6342
  %v6917 = vpop.f32.mrf.mxu0
  %v6918 = vadd.f32 0.0, %v6917
  %v6919 = vpop.f32.mrf.mxu0
  %v6920 = vadd.f32 0.0, %v6919
  %6921 = vdwg.mxu0
  %6922 = vmatprep.subr.mxu0 0.0
  %6923 = vmatpush1.msra.mxu0 0.0
  %6924 = vmatprep.subr.mxu0 0.0
  %6925 = vmatpush1.msra.mxu0 0.0
  %6926 = vmatprep.subr.mxu0 0.0
  %6927 = vmatpush1.msra.mxu0 0.0
  %6928 = vmatprep.subr.mxu0 0.0
  %6929 = vmatpush1.msra.mxu0 0.0
  %6930 = vmatprep.subr.mxu0 0.0
  %6931 = vmatpush1.msra.mxu0 0.0
  %6932 = vmatprep.subr.mxu0 0.0
  %6933 = vmatpush1.msra.mxu0 0.0
  %6934 = vmatprep.subr.mxu0 0.0
  %6935 = vmatpush1.msra.mxu0 0.0
  %6936 = vmatprep.subr.mxu0 0.0
  %6937 = vmatpush1.msra.mxu0 %v6850
  %6938 = vmatprep.subr.mxu0 0.0
  %6939 = vmatpush1.msra.mxu0 %v6847
  %6940 = vmatprep.subr.mxu0 0.0
  %6941 = vmatpush1.msra.mxu0 %v6844
  %6942 = vmatprep.subr.mxu0 0.0
  %6943 = vmatpush1.msra.mxu0 %v6841
  %6944 = vmatprep.subr.mxu0 0.0
  %6945 = vmatpush1.msra.mxu0 %v6838
  %6946 = vmatprep.subr.mxu0 0.0
  %6947 = vmatpush1.msra.mxu0 %v6835
  %6948 = vmatprep.subr.mxu0 0.0
  %6949 = vmatpush1.msra.mxu0 %v6832
  %6950 = vmatprep.subr.mxu0 0.0
  %6951 = vmatpush1.msra.mxu0 %v6829
  %6952 = vmatprep.subr.mxu0 0.0
  %6953 = vmatpush1.msra.mxu0 %v6826
  %6954 = vmatprep.subr.mxu0 0.0
  %6955 = vmatpush2.msra.mxu0 0.0
  %6956 = vmatprep.subr.mxu0 0.0
  %6957 = vmatpush2.msra.mxu0 0.0
  %6958 = vmatprep.subr.mxu0 0.0
  %6959 = vmatpush2.msra.mxu0 0.0
  %6960 = vmatprep.subr.mxu0 0.0
  %6961 = vmatpush2.msra.mxu0 0.0
  %6962 = vmatprep.subr.mxu0 0.0
  %6963 = vmatpush2.msra.mxu0 0.0
  %6964 = vmatprep.subr.mxu0 0.0
  %6965 = vmatpush2.msra.mxu0 0.0
  %6966 = vmatprep.subr.mxu0 0.0
  %6967 = vmatpush2.msra.mxu0 0.0
  %6968 = vmatprep.subr.mxu0 0.0
  %6969 = vmatpush2.msra.mxu0 0.0
  %6970 = vmatprep.subr.mxu0 0.0
  %6971 = vmatpush2.msra.mxu0 0.0
  %6972 = vmatprep.subr.mxu0 0.0
  %6973 = vmatpush2.msra.mxu0 0.0
  %6974 = vmatprep.subr.mxu0 0.0
  %6975 = vmatpush2.msra.mxu0 0.0
  %6976 = vmatprep.subr.mxu0 0.0
  %6977 = vmatpush2.msra.mxu0 0.0
  %6978 = vmatprep.subr.mxu0 0.0
  %6979 = vmatpush2.msra.mxu0 0.0
  %6980 = vmatprep.subr.mxu0 0.0
  %6981 = vmatpush2.msra.mxu0 0.0
  %6982 = vmatprep.subr.mxu0 0.0
  %6983 = vmatpush2.msra.mxu0 0.0
  %6984 = vmatprep.subr.mxu0 0.0
  %6985 = vmatpush2.msra.mxu0 0.0
  %6986 = vmatprep.mubr.f32.mxu0 0.0
  %6987 = vmatmul.mubr.f32.gmra.mxu0 %v6342
  %v6988 = vpop.f32.mrf.mxu0
  %v6989 = vadd.f32 0.0, %v6988
  %v6990 = vpop.f32.mrf.mxu0
  %6991 = vdwg.mxu0
  %s6992 = scalar_lea.vmem %s20, 864
  %v6993 = vld [vmem:[%s6992] sm:$0xff]
  %v6994 = vld [vmem:[%s6992 + $0x8] sm:$0xff]
  %v6995 = vld [vmem:[%s6992 + $0x10] sm:$0xff]
  %v6996 = vld [vmem:[%s6992 + $0x18] sm:$0xff]
  %v6997 = vld [vmem:[%s6992 + $0x20] sm:$0xff]
  %v6998 = vld [vmem:[%s6992 + $0x28] sm:$0xff]
  %v6999 = vld [vmem:[%s6992 + $0x30] sm:$0xff]
  %v7000 = vld [vmem:[%s6992 + $0x38] sm:$0xff]
  %v7001 = vld [vmem:[%s6992 + $0x40] sm:$0xff]
  %v7002 = vld [vmem:[%s6992 + $0x48] sm:$0xff]
  %v7003 = vld [vmem:[%s6992 + $0x50] sm:$0xff]
  %v7004 = vld [vmem:[%s6992 + $0x58] sm:$0xff]
  %v7005 = vld [vmem:[%s6992 + $0x60] sm:$0xff]
  %v7006 = vld [vmem:[%s6992 + $0x68] sm:$0xff]
  %v7007 = vld [vmem:[%s6992 + $0x70] sm:$0xff]
  %v7008 = vld [vmem:[%s6992 + $0x78] sm:$0xff]
  %v7009 = vld [vmem:[%s6992 + $0x80] sm:$0xff]
  %v7010 = vld [vmem:[%s6992 + $0x88] sm:$0xff]
  %v7011 = vld [vmem:[%s6992 + $0x90] sm:$0xff]
  %v7012 = vld [vmem:[%s6992 + $0x98] sm:$0xff]
  %v7013 = vld [vmem:[%s6992 + $0xa0] sm:$0xff]
  %v7014 = vld [vmem:[%s6992 + $0xa8] sm:$0xff]
  %v7015 = vld [vmem:[%s6992 + $0xb0] sm:$0xff]
  %v7016 = vld [vmem:[%s6992 + $0xb8] sm:$0xff]
  %v7017 = vld [vmem:[%s6992 + $0xc0] sm:$0xff]
  %v7018 = vld [vmem:[%s6992 + $0xc8] sm:$0xff]
  %v7019 = vld [vmem:[%s6992 + $0xd0] sm:$0xff]
  %7020 = vmatprep.subr.mxu0 0.0
  %7021 = vmatpush1.msra.mxu0 0.0
  %7022 = vmatprep.subr.mxu0 0.0
  %7023 = vmatpush1.msra.mxu0 0.0
  %7024 = vmatprep.subr.mxu0 0.0
  %7025 = vmatpush1.msra.mxu0 0.0
  %7026 = vmatprep.subr.mxu0 0.0
  %7027 = vmatpush1.msra.mxu0 0.0
  %7028 = vmatprep.subr.mxu0 0.0
  %7029 = vmatpush1.msra.mxu0 0.0
  %7030 = vmatprep.subr.mxu0 0.0
  %7031 = vmatpush1.msra.mxu0 0.0
  %7032 = vmatprep.subr.mxu0 0.0
  %7033 = vmatpush1.msra.mxu0 0.0
  %7034 = vmatprep.subr.mxu0 %v7018
  %7035 = vmatpush1.msra.mxu0 %v7017
  %7036 = vmatprep.subr.mxu0 %v7015
  %7037 = vmatpush1.msra.mxu0 %v7014
  %7038 = vmatprep.subr.mxu0 %v7012
  %7039 = vmatpush1.msra.mxu0 %v7011
  %7040 = vmatprep.subr.mxu0 %v7009
  %7041 = vmatpush1.msra.mxu0 %v7008
  %7042 = vmatprep.subr.mxu0 %v7006
  %7043 = vmatpush1.msra.mxu0 %v7005
  %7044 = vmatprep.subr.mxu0 %v7003
  %7045 = vmatpush1.msra.mxu0 %v7002
  %7046 = vmatprep.subr.mxu0 %v7000
  %7047 = vmatpush1.msra.mxu0 %v6999
  %7048 = vmatprep.subr.mxu0 %v6997
  %7049 = vmatpush1.msra.mxu0 %v6996
  %7050 = vmatprep.subr.mxu0 %v6994
  %7051 = vmatpush1.msra.mxu0 %v6993
  %7052 = vmatprep.subr.mxu0 0.0
  %7053 = vmatpush2.msra.mxu0 0.0
  %7054 = vmatprep.subr.mxu0 0.0
  %7055 = vmatpush2.msra.mxu0 0.0
  %7056 = vmatprep.subr.mxu0 0.0
  %7057 = vmatpush2.msra.mxu0 0.0
  %7058 = vmatprep.subr.mxu0 0.0
  %7059 = vmatpush2.msra.mxu0 0.0
  %7060 = vmatprep.subr.mxu0 0.0
  %7061 = vmatpush2.msra.mxu0 0.0
  %7062 = vmatprep.subr.mxu0 0.0
  %7063 = vmatpush2.msra.mxu0 0.0
  %7064 = vmatprep.subr.mxu0 0.0
  %7065 = vmatpush2.msra.mxu0 0.0
  %7066 = vmatprep.subr.mxu0 0.0
  %7067 = vmatpush2.msra.mxu0 0.0
  %7068 = vmatprep.subr.mxu0 0.0
  %7069 = vmatpush2.msra.mxu0 0.0
  %7070 = vmatprep.subr.mxu0 0.0
  %7071 = vmatpush2.msra.mxu0 0.0
  %7072 = vmatprep.subr.mxu0 0.0
  %7073 = vmatpush2.msra.mxu0 0.0
  %7074 = vmatprep.subr.mxu0 0.0
  %7075 = vmatpush2.msra.mxu0 0.0
  %7076 = vmatprep.subr.mxu0 0.0
  %7077 = vmatpush2.msra.mxu0 0.0
  %7078 = vmatprep.subr.mxu0 0.0
  %7079 = vmatpush2.msra.mxu0 0.0
  %7080 = vmatprep.subr.mxu0 0.0
  %7081 = vmatpush2.msra.mxu0 0.0
  %7082 = vmatprep.subr.mxu0 0.0
  %7083 = vmatpush2.msra.mxu0 0.0
  %7084 = vmatprep.mubr.f32.mxu0 0.0
  %7085 = vmatmul.mubr.f32.gmra.mxu0 %v6342
  %v7086 = vpop.f32.mrf.mxu0
  %v7087 = vadd.f32 0.0, %v7086
  %v7088 = vpop.f32.mrf.mxu0
  %v7089 = vadd.f32 0.0, %v7088
  %7090 = vdwg.mxu0
  %7091 = vmatprep.subr.mxu0 0.0
  %7092 = vmatpush1.msra.mxu0 0.0
  %7093 = vmatprep.subr.mxu0 0.0
  %7094 = vmatpush1.msra.mxu0 0.0
  %7095 = vmatprep.subr.mxu0 0.0
  %7096 = vmatpush1.msra.mxu0 0.0
  %7097 = vmatprep.subr.mxu0 0.0
  %7098 = vmatpush1.msra.mxu0 0.0
  %7099 = vmatprep.subr.mxu0 0.0
  %7100 = vmatpush1.msra.mxu0 0.0
  %7101 = vmatprep.subr.mxu0 0.0
  %7102 = vmatpush1.msra.mxu0 0.0
  %7103 = vmatprep.subr.mxu0 0.0
  %7104 = vmatpush1.msra.mxu0 0.0
  %7105 = vmatprep.subr.mxu0 0.0
  %7106 = vmatpush1.msra.mxu0 %v7019
  %7107 = vmatprep.subr.mxu0 0.0
  %7108 = vmatpush1.msra.mxu0 %v7016
  %7109 = vmatprep.subr.mxu0 0.0
  %7110 = vmatpush1.msra.mxu0 %v7013
  %7111 = vmatprep.subr.mxu0 0.0
  %7112 = vmatpush1.msra.mxu0 %v7010
  %7113 = vmatprep.subr.mxu0 0.0
  %7114 = vmatpush1.msra.mxu0 %v7007
  %7115 = vmatprep.subr.mxu0 0.0
  %7116 = vmatpush1.msra.mxu0 %v7004
  %7117 = vmatprep.subr.mxu0 0.0
  %7118 = vmatpush1.msra.mxu0 %v7001
  %7119 = vmatprep.subr.mxu0 0.0
  %7120 = vmatpush1.msra.mxu0 %v6998
  %7121 = vmatprep.subr.mxu0 0.0
  %7122 = vmatpush1.msra.mxu0 %v6995
  %7123 = vmatprep.subr.mxu0 0.0
  %7124 = vmatpush2.msra.mxu0 0.0
  %7125 = vmatprep.subr.mxu0 0.0
  %7126 = vmatpush2.msra.mxu0 0.0
  %7127 = vmatprep.subr.mxu0 0.0
  %7128 = vmatpush2.msra.mxu0 0.0
  %7129 = vmatprep.subr.mxu0 0.0
  %7130 = vmatpush2.msra.mxu0 0.0
  %7131 = vmatprep.subr.mxu0 0.0
  %7132 = vmatpush2.msra.mxu0 0.0
  %7133 = vmatprep.subr.mxu0 0.0
  %7134 = vmatpush2.msra.mxu0 0.0
  %7135 = vmatprep.subr.mxu0 0.0
  %7136 = vmatpush2.msra.mxu0 0.0
  %7137 = vmatprep.subr.mxu0 0.0
  %7138 = vmatpush2.msra.mxu0 0.0
  %7139 = vmatprep.subr.mxu0 0.0
  %7140 = vmatpush2.msra.mxu0 0.0
  %7141 = vmatprep.subr.mxu0 0.0
  %7142 = vmatpush2.msra.mxu0 0.0
  %7143 = vmatprep.subr.mxu0 0.0
  %7144 = vmatpush2.msra.mxu0 0.0
  %7145 = vmatprep.subr.mxu0 0.0
  %7146 = vmatpush2.msra.mxu0 0.0
  %7147 = vmatprep.subr.mxu0 0.0
  %7148 = vmatpush2.msra.mxu0 0.0
  %7149 = vmatprep.subr.mxu0 0.0
  %7150 = vmatpush2.msra.mxu0 0.0
  %7151 = vmatprep.subr.mxu0 0.0
  %7152 = vmatpush2.msra.mxu0 0.0
  %7153 = vmatprep.subr.mxu0 0.0
  %7154 = vmatpush2.msra.mxu0 0.0
  %7155 = vmatprep.mubr.f32.mxu0 0.0
  %7156 = vmatmul.mubr.f32.gmra.mxu0 %v6342
  %v7157 = vpop.f32.mrf.mxu0
  %v7158 = vadd.f32 0.0, %v7157
  %v7159 = vpop.f32.mrf.mxu0
  %7160 = vdwg.mxu0
  %s7161 = scalar_lea.vmem %s20, 1080
  %v7162 = vld [vmem:[%s7161] sm:$0xff]
  %v7163 = vld [vmem:[%s7161 + $0x8] sm:$0xff]
  %v7164 = vld [vmem:[%s7161 + $0x10] sm:$0xff]
  %v7165 = vld [vmem:[%s7161 + $0x18] sm:$0xff]
  %v7166 = vld [vmem:[%s7161 + $0x20] sm:$0xff]
  %v7167 = vld [vmem:[%s7161 + $0x28] sm:$0xff]
  %v7168 = vld [vmem:[%s7161 + $0x30] sm:$0xff]
  %v7169 = vld [vmem:[%s7161 + $0x38] sm:$0xff]
  %v7170 = vld [vmem:[%s7161 + $0x40] sm:$0xff]
  %v7171 = vld [vmem:[%s7161 + $0x48] sm:$0xff]
  %v7172 = vld [vmem:[%s7161 + $0x50] sm:$0xff]
  %v7173 = vld [vmem:[%s7161 + $0x58] sm:$0xff]
  %v7174 = vld [vmem:[%s7161 + $0x60] sm:$0xff]
  %v7175 = vld [vmem:[%s7161 + $0x68] sm:$0xff]
  %v7176 = vld [vmem:[%s7161 + $0x70] sm:$0xff]
  %v7177 = vld [vmem:[%s7161 + $0x78] sm:$0xff]
  %v7178 = vld [vmem:[%s7161 + $0x80] sm:$0xff]
  %v7179 = vld [vmem:[%s7161 + $0x88] sm:$0xff]
  %v7180 = vld [vmem:[%s7161 + $0x90] sm:$0xff]
  %v7181 = vld [vmem:[%s7161 + $0x98] sm:$0xff]
  %v7182 = vld [vmem:[%s7161 + $0xa0] sm:$0xff]
  %v7183 = vld [vmem:[%s7161 + $0xa8] sm:$0xff]
  %v7184 = vld [vmem:[%s7161 + $0xb0] sm:$0xff]
  %v7185 = vld [vmem:[%s7161 + $0xb8] sm:$0xff]
  %v7186 = vld [vmem:[%s7161 + $0xc0] sm:$0xff]
  %v7187 = vld [vmem:[%s7161 + $0xc8] sm:$0xff]
  %v7188 = vld [vmem:[%s7161 + $0xd0] sm:$0xff]
  %7189 = vmatprep.subr.mxu0 0.0
  %7190 = vmatpush1.msra.mxu0 0.0
  %7191 = vmatprep.subr.mxu0 0.0
  %7192 = vmatpush1.msra.mxu0 0.0
  %7193 = vmatprep.subr.mxu0 0.0
  %7194 = vmatpush1.msra.mxu0 0.0
  %7195 = vmatprep.subr.mxu0 0.0
  %7196 = vmatpush1.msra.mxu0 0.0
  %7197 = vmatprep.subr.mxu0 0.0
  %7198 = vmatpush1.msra.mxu0 0.0
  %7199 = vmatprep.subr.mxu0 0.0
  %7200 = vmatpush1.msra.mxu0 0.0
  %7201 = vmatprep.subr.mxu0 0.0
  %7202 = vmatpush1.msra.mxu0 0.0
  %7203 = vmatprep.subr.mxu0 %v7187
  %7204 = vmatpush1.msra.mxu0 %v7186
  %7205 = vmatprep.subr.mxu0 %v7184
  %7206 = vmatpush1.msra.mxu0 %v7183
  %7207 = vmatprep.subr.mxu0 %v7181
  %7208 = vmatpush1.msra.mxu0 %v7180
  %7209 = vmatprep.subr.mxu0 %v7178
  %7210 = vmatpush1.msra.mxu0 %v7177
  %7211 = vmatprep.subr.mxu0 %v7175
  %7212 = vmatpush1.msra.mxu0 %v7174
  %7213 = vmatprep.subr.mxu0 %v7172
  %7214 = vmatpush1.msra.mxu0 %v7171
  %7215 = vmatprep.subr.mxu0 %v7169
  %7216 = vmatpush1.msra.mxu0 %v7168
  %7217 = vmatprep.subr.mxu0 %v7166
  %7218 = vmatpush1.msra.mxu0 %v7165
  %7219 = vmatprep.subr.mxu0 %v7163
  %7220 = vmatpush1.msra.mxu0 %v7162
  %7221 = vmatprep.subr.mxu0 0.0
  %7222 = vmatpush2.msra.mxu0 0.0
  %7223 = vmatprep.subr.mxu0 0.0
  %7224 = vmatpush2.msra.mxu0 0.0
  %7225 = vmatprep.subr.mxu0 0.0
  %7226 = vmatpush2.msra.mxu0 0.0
  %7227 = vmatprep.subr.mxu0 0.0
  %7228 = vmatpush2.msra.mxu0 0.0
  %7229 = vmatprep.subr.mxu0 0.0
  %7230 = vmatpush2.msra.mxu0 0.0
  %7231 = vmatprep.subr.mxu0 0.0
  %7232 = vmatpush2.msra.mxu0 0.0
  %7233 = vmatprep.subr.mxu0 0.0
  %7234 = vmatpush2.msra.mxu0 0.0
  %7235 = vmatprep.subr.mxu0 0.0
  %7236 = vmatpush2.msra.mxu0 0.0
  %7237 = vmatprep.subr.mxu0 0.0
  %7238 = vmatpush2.msra.mxu0 0.0
  %7239 = vmatprep.subr.mxu0 0.0
  %7240 = vmatpush2.msra.mxu0 0.0
  %7241 = vmatprep.subr.mxu0 0.0
  %7242 = vmatpush2.msra.mxu0 0.0
  %7243 = vmatprep.subr.mxu0 0.0
  %7244 = vmatpush2.msra.mxu0 0.0
  %7245 = vmatprep.subr.mxu0 0.0
  %7246 = vmatpush2.msra.mxu0 0.0
  %7247 = vmatprep.subr.mxu0 0.0
  %7248 = vmatpush2.msra.mxu0 0.0
  %7249 = vmatprep.subr.mxu0 0.0
  %7250 = vmatpush2.msra.mxu0 0.0
  %7251 = vmatprep.subr.mxu0 0.0
  %7252 = vmatpush2.msra.mxu0 0.0
  %7253 = vmatprep.mubr.f32.mxu0 0.0
  %7254 = vmatmul.mubr.f32.gmra.mxu0 %v6342
  %v7255 = vpop.f32.mrf.mxu0
  %v7256 = vadd.f32 0.0, %v7255
  %v7257 = vpop.f32.mrf.mxu0
  %v7258 = vadd.f32 0.0, %v7257
  %7259 = vdwg.mxu0
  %7260 = vmatprep.subr.mxu0 0.0
  %7261 = vmatpush1.msra.mxu0 0.0
  %7262 = vmatprep.subr.mxu0 0.0
  %7263 = vmatpush1.msra.mxu0 0.0
  %7264 = vmatprep.subr.mxu0 0.0
  %7265 = vmatpush1.msra.mxu0 0.0
  %7266 = vmatprep.subr.mxu0 0.0
  %7267 = vmatpush1.msra.mxu0 0.0
  %7268 = vmatprep.subr.mxu0 0.0
  %7269 = vmatpush1.msra.mxu0 0.0
  %7270 = vmatprep.subr.mxu0 0.0
  %7271 = vmatpush1.msra.mxu0 0.0
  %7272 = vmatprep.subr.mxu0 0.0
  %7273 = vmatpush1.msra.mxu0 0.0
  %7274 = vmatprep.subr.mxu0 0.0
  %7275 = vmatpush1.msra.mxu0 %v7188
  %7276 = vmatprep.subr.mxu0 0.0
  %7277 = vmatpush1.msra.mxu0 %v7185
  %7278 = vmatprep.subr.mxu0 0.0
  %7279 = vmatpush1.msra.mxu0 %v7182
  %7280 = vmatprep.subr.mxu0 0.0
  %7281 = vmatpush1.msra.mxu0 %v7179
  %7282 = vmatprep.subr.mxu0 0.0
  %7283 = vmatpush1.msra.mxu0 %v7176
  %7284 = vmatprep.subr.mxu0 0.0
  %7285 = vmatpush1.msra.mxu0 %v7173
  %7286 = vmatprep.subr.mxu0 0.0
  %7287 = vmatpush1.msra.mxu0 %v7170
  %7288 = vmatprep.subr.mxu0 0.0
  %7289 = vmatpush1.msra.mxu0 %v7167
  %7290 = vmatprep.subr.mxu0 0.0
  %7291 = vmatpush1.msra.mxu0 %v7164
  %7292 = vmatprep.subr.mxu0 0.0
  %7293 = vmatpush2.msra.mxu0 0.0
  %7294 = vmatprep.subr.mxu0 0.0
  %7295 = vmatpush2.msra.mxu0 0.0
  %7296 = vmatprep.subr.mxu0 0.0
  %7297 = vmatpush2.msra.mxu0 0.0
  %7298 = vmatprep.subr.mxu0 0.0
  %7299 = vmatpush2.msra.mxu0 0.0
  %7300 = vmatprep.subr.mxu0 0.0
  %7301 = vmatpush2.msra.mxu0 0.0
  %7302 = vmatprep.subr.mxu0 0.0
  %7303 = vmatpush2.msra.mxu0 0.0
  %7304 = vmatprep.subr.mxu0 0.0
  %7305 = vmatpush2.msra.mxu0 0.0
  %7306 = vmatprep.subr.mxu0 0.0
  %7307 = vmatpush2.msra.mxu0 0.0
  %7308 = vmatprep.subr.mxu0 0.0
  %7309 = vmatpush2.msra.mxu0 0.0
  %7310 = vmatprep.subr.mxu0 0.0
  %7311 = vmatpush2.msra.mxu0 0.0
  %7312 = vmatprep.subr.mxu0 0.0
  %7313 = vmatpush2.msra.mxu0 0.0
  %7314 = vmatprep.subr.mxu0 0.0
  %7315 = vmatpush2.msra.mxu0 0.0
  %7316 = vmatprep.subr.mxu0 0.0
  %7317 = vmatpush2.msra.mxu0 0.0
  %7318 = vmatprep.subr.mxu0 0.0
  %7319 = vmatpush2.msra.mxu0 0.0
  %7320 = vmatprep.subr.mxu0 0.0
  %7321 = vmatpush2.msra.mxu0 0.0
  %7322 = vmatprep.subr.mxu0 0.0
  %7323 = vmatpush2.msra.mxu0 0.0
  %7324 = vmatprep.mubr.f32.mxu0 0.0
  %7325 = vmatmul.mubr.f32.gmra.mxu0 %v6342
  %v7326 = vpop.f32.mrf.mxu0
  %v7327 = vadd.f32 0.0, %v7326
  %v7328 = vpop.f32.mrf.mxu0
  %7329 = vdwg.mxu0
  %s7330 = scalar_lea.vmem %s20, 1296
  %v7331 = vld [vmem:[%s7330] sm:$0xff]
  %v7332 = vld [vmem:[%s7330 + $0x8] sm:$0xff]
  %v7333 = vld [vmem:[%s7330 + $0x10] sm:$0xff]
  %v7334 = vld [vmem:[%s7330 + $0x18] sm:$0xff]
  %v7335 = vld [vmem:[%s7330 + $0x20] sm:$0xff]
  %v7336 = vld [vmem:[%s7330 + $0x28] sm:$0xff]
  %v7337 = vld [vmem:[%s7330 + $0x30] sm:$0xff]
  %v7338 = vld [vmem:[%s7330 + $0x38] sm:$0xff]
  %v7339 = vld [vmem:[%s7330 + $0x40] sm:$0xff]
  %v7340 = vld [vmem:[%s7330 + $0x48] sm:$0xff]
  %v7341 = vld [vmem:[%s7330 + $0x50] sm:$0xff]
  %v7342 = vld [vmem:[%s7330 + $0x58] sm:$0xff]
  %v7343 = vld [vmem:[%s7330 + $0x60] sm:$0xff]
  %v7344 = vld [vmem:[%s7330 + $0x68] sm:$0xff]
  %v7345 = vld [vmem:[%s7330 + $0x70] sm:$0xff]
  %v7346 = vld [vmem:[%s7330 + $0x78] sm:$0xff]
  %v7347 = vld [vmem:[%s7330 + $0x80] sm:$0xff]
  %v7348 = vld [vmem:[%s7330 + $0x88] sm:$0xff]
  %v7349 = vld [vmem:[%s7330 + $0x90] sm:$0xff]
  %v7350 = vld [vmem:[%s7330 + $0x98] sm:$0xff]
  %v7351 = vld [vmem:[%s7330 + $0xa0] sm:$0xff]
  %v7352 = vld [vmem:[%s7330 + $0xa8] sm:$0xff]
  %v7353 = vld [vmem:[%s7330 + $0xb0] sm:$0xff]
  %v7354 = vld [vmem:[%s7330 + $0xb8] sm:$0xff]
  %v7355 = vld [vmem:[%s7330 + $0xc0] sm:$0xff]
  %v7356 = vld [vmem:[%s7330 + $0xc8] sm:$0xff]
  %v7357 = vld [vmem:[%s7330 + $0xd0] sm:$0xff]
  %7358 = vmatprep.subr.mxu0 0.0
  %7359 = vmatpush1.msra.mxu0 0.0
  %7360 = vmatprep.subr.mxu0 0.0
  %7361 = vmatpush1.msra.mxu0 0.0
  %7362 = vmatprep.subr.mxu0 0.0
  %7363 = vmatpush1.msra.mxu0 0.0
  %7364 = vmatprep.subr.mxu0 0.0
  %7365 = vmatpush1.msra.mxu0 0.0
  %7366 = vmatprep.subr.mxu0 0.0
  %7367 = vmatpush1.msra.mxu0 0.0
  %7368 = vmatprep.subr.mxu0 0.0
  %7369 = vmatpush1.msra.mxu0 0.0
  %7370 = vmatprep.subr.mxu0 0.0
  %7371 = vmatpush1.msra.mxu0 0.0
  %7372 = vmatprep.subr.mxu0 %v7356
  %7373 = vmatpush1.msra.mxu0 %v7355
  %7374 = vmatprep.subr.mxu0 %v7353
  %7375 = vmatpush1.msra.mxu0 %v7352
  %7376 = vmatprep.subr.mxu0 %v7350
  %7377 = vmatpush1.msra.mxu0 %v7349
  %7378 = vmatprep.subr.mxu0 %v7347
  %7379 = vmatpush1.msra.mxu0 %v7346
  %7380 = vmatprep.subr.mxu0 %v7344
  %7381 = vmatpush1.msra.mxu0 %v7343
  %7382 = vmatprep.subr.mxu0 %v7341
  %7383 = vmatpush1.msra.mxu0 %v7340
  %7384 = vmatprep.subr.mxu0 %v7338
  %7385 = vmatpush1.msra.mxu0 %v7337
  %7386 = vmatprep.subr.mxu0 %v7335
  %7387 = vmatpush1.msra.mxu0 %v7334
  %7388 = vmatprep.subr.mxu0 %v7332
  %7389 = vmatpush1.msra.mxu0 %v7331
  %7390 = vmatprep.subr.mxu0 0.0
  %7391 = vmatpush2.msra.mxu0 0.0
  %7392 = vmatprep.subr.mxu0 0.0
  %7393 = vmatpush2.msra.mxu0 0.0
  %7394 = vmatprep.subr.mxu0 0.0
  %7395 = vmatpush2.msra.mxu0 0.0
  %7396 = vmatprep.subr.mxu0 0.0
  %7397 = vmatpush2.msra.mxu0 0.0
  %7398 = vmatprep.subr.mxu0 0.0
  %7399 = vmatpush2.msra.mxu0 0.0
  %7400 = vmatprep.subr.mxu0 0.0
  %7401 = vmatpush2.msra.mxu0 0.0
  %7402 = vmatprep.subr.mxu0 0.0
  %7403 = vmatpush2.msra.mxu0 0.0
  %7404 = vmatprep.subr.mxu0 0.0
  %7405 = vmatpush2.msra.mxu0 0.0
  %7406 = vmatprep.subr.mxu0 0.0
  %7407 = vmatpush2.msra.mxu0 0.0
  %7408 = vmatprep.subr.mxu0 0.0
  %7409 = vmatpush2.msra.mxu0 0.0
  %7410 = vmatprep.subr.mxu0 0.0
  %7411 = vmatpush2.msra.mxu0 0.0
  %7412 = vmatprep.subr.mxu0 0.0
  %7413 = vmatpush2.msra.mxu0 0.0
  %7414 = vmatprep.subr.mxu0 0.0
  %7415 = vmatpush2.msra.mxu0 0.0
  %7416 = vmatprep.subr.mxu0 0.0
  %7417 = vmatpush2.msra.mxu0 0.0
  %7418 = vmatprep.subr.mxu0 0.0
  %7419 = vmatpush2.msra.mxu0 0.0
  %7420 = vmatprep.subr.mxu0 0.0
  %7421 = vmatpush2.msra.mxu0 0.0
  %7422 = vmatprep.mubr.f32.mxu0 0.0
  %7423 = vmatmul.mubr.f32.gmra.mxu0 %v6342
  %v7424 = vpop.f32.mrf.mxu0
  %v7425 = vadd.f32 0.0, %v7424
  %v7426 = vpop.f32.mrf.mxu0
  %v7427 = vadd.f32 0.0, %v7426
  %7428 = vdwg.mxu0
  %7429 = vmatprep.subr.mxu0 0.0
  %7430 = vmatpush1.msra.mxu0 0.0
  %7431 = vmatprep.subr.mxu0 0.0
  %7432 = vmatpush1.msra.mxu0 0.0
  %7433 = vmatprep.subr.mxu0 0.0
  %7434 = vmatpush1.msra.mxu0 0.0
  %7435 = vmatprep.subr.mxu0 0.0
  %7436 = vmatpush1.msra.mxu0 0.0
  %7437 = vmatprep.subr.mxu0 0.0
  %7438 = vmatpush1.msra.mxu0 0.0
  %7439 = vmatprep.subr.mxu0 0.0
  %7440 = vmatpush1.msra.mxu0 0.0
  %7441 = vmatprep.subr.mxu0 0.0
  %7442 = vmatpush1.msra.mxu0 0.0
  %7443 = vmatprep.subr.mxu0 0.0
  %7444 = vmatpush1.msra.mxu0 %v7357
  %7445 = vmatprep.subr.mxu0 0.0
  %7446 = vmatpush1.msra.mxu0 %v7354
  %7447 = vmatprep.subr.mxu0 0.0
  %7448 = vmatpush1.msra.mxu0 %v7351
  %7449 = vmatprep.subr.mxu0 0.0
  %7450 = vmatpush1.msra.mxu0 %v7348
  %7451 = vmatprep.subr.mxu0 0.0
  %7452 = vmatpush1.msra.mxu0 %v7345
  %7453 = vmatprep.subr.mxu0 0.0
  %7454 = vmatpush1.msra.mxu0 %v7342
  %7455 = vmatprep.subr.mxu0 0.0
  %7456 = vmatpush1.msra.mxu0 %v7339
  %7457 = vmatprep.subr.mxu0 0.0
  %7458 = vmatpush1.msra.mxu0 %v7336
  %7459 = vmatprep.subr.mxu0 0.0
  %7460 = vmatpush1.msra.mxu0 %v7333
  %7461 = vmatprep.subr.mxu0 0.0
  %7462 = vmatpush2.msra.mxu0 0.0
  %7463 = vmatprep.subr.mxu0 0.0
  %7464 = vmatpush2.msra.mxu0 0.0
  %7465 = vmatprep.subr.mxu0 0.0
  %7466 = vmatpush2.msra.mxu0 0.0
  %7467 = vmatprep.subr.mxu0 0.0
  %7468 = vmatpush2.msra.mxu0 0.0
  %7469 = vmatprep.subr.mxu0 0.0
  %7470 = vmatpush2.msra.mxu0 0.0
  %7471 = vmatprep.subr.mxu0 0.0
  %7472 = vmatpush2.msra.mxu0 0.0
  %7473 = vmatprep.subr.mxu0 0.0
  %7474 = vmatpush2.msra.mxu0 0.0
  %7475 = vmatprep.subr.mxu0 0.0
  %7476 = vmatpush2.msra.mxu0 0.0
  %7477 = vmatprep.subr.mxu0 0.0
  %7478 = vmatpush2.msra.mxu0 0.0
  %7479 = vmatprep.subr.mxu0 0.0
  %7480 = vmatpush2.msra.mxu0 0.0
  %7481 = vmatprep.subr.mxu0 0.0
  %7482 = vmatpush2.msra.mxu0 0.0
  %7483 = vmatprep.subr.mxu0 0.0
  %7484 = vmatpush2.msra.mxu0 0.0
  %7485 = vmatprep.subr.mxu0 0.0
  %7486 = vmatpush2.msra.mxu0 0.0
  %7487 = vmatprep.subr.mxu0 0.0
  %7488 = vmatpush2.msra.mxu0 0.0
  %7489 = vmatprep.subr.mxu0 0.0
  %7490 = vmatpush2.msra.mxu0 0.0
  %7491 = vmatprep.subr.mxu0 0.0
  %7492 = vmatpush2.msra.mxu0 0.0
  %7493 = vmatprep.mubr.f32.mxu0 0.0
  %7494 = vmatmul.mubr.f32.gmra.mxu0 %v6342
  %v7495 = vpop.f32.mrf.mxu0
  %v7496 = vadd.f32 0.0, %v7495
  %v7497 = vpop.f32.mrf.mxu0
  %7498 = vdwg.mxu0
  %s7499 = scalar_lea.vmem %s20, 1512
  %v7500 = vld [vmem:[%s7499] sm:$0xff]
  %v7501 = vld [vmem:[%s7499 + $0x8] sm:$0xff]
  %v7502 = vld [vmem:[%s7499 + $0x10] sm:$0xff]
  %v7503 = vld [vmem:[%s7499 + $0x18] sm:$0xff]
  %v7504 = vld [vmem:[%s7499 + $0x20] sm:$0xff]
  %v7505 = vld [vmem:[%s7499 + $0x28] sm:$0xff]
  %v7506 = vld [vmem:[%s7499 + $0x30] sm:$0xff]
  %v7507 = vld [vmem:[%s7499 + $0x38] sm:$0xff]
  %v7508 = vld [vmem:[%s7499 + $0x40] sm:$0xff]
  %v7509 = vld [vmem:[%s7499 + $0x48] sm:$0xff]
  %v7510 = vld [vmem:[%s7499 + $0x50] sm:$0xff]
  %v7511 = vld [vmem:[%s7499 + $0x58] sm:$0xff]
  %v7512 = vld [vmem:[%s7499 + $0x60] sm:$0xff]
  %v7513 = vld [vmem:[%s7499 + $0x68] sm:$0xff]
  %v7514 = vld [vmem:[%s7499 + $0x70] sm:$0xff]
  %v7515 = vld [vmem:[%s7499 + $0x78] sm:$0xff]
  %v7516 = vld [vmem:[%s7499 + $0x80] sm:$0xff]
  %v7517 = vld [vmem:[%s7499 + $0x88] sm:$0xff]
  %v7518 = vld [vmem:[%s7499 + $0x90] sm:$0xff]
  %v7519 = vld [vmem:[%s7499 + $0x98] sm:$0xff]
  %v7520 = vld [vmem:[%s7499 + $0xa0] sm:$0xff]
  %v7521 = vld [vmem:[%s7499 + $0xa8] sm:$0xff]
  %v7522 = vld [vmem:[%s7499 + $0xb0] sm:$0xff]
  %v7523 = vld [vmem:[%s7499 + $0xb8] sm:$0xff]
  %v7524 = vld [vmem:[%s7499 + $0xc0] sm:$0xff]
  %v7525 = vld [vmem:[%s7499 + $0xc8] sm:$0xff]
  %v7526 = vld [vmem:[%s7499 + $0xd0] sm:$0xff]
  %7527 = vmatprep.subr.mxu0 0.0
  %7528 = vmatpush1.msra.mxu0 0.0
  %7529 = vmatprep.subr.mxu0 0.0
  %7530 = vmatpush1.msra.mxu0 0.0
  %7531 = vmatprep.subr.mxu0 0.0
  %7532 = vmatpush1.msra.mxu0 0.0
  %7533 = vmatprep.subr.mxu0 0.0
  %7534 = vmatpush1.msra.mxu0 0.0
  %7535 = vmatprep.subr.mxu0 0.0
  %7536 = vmatpush1.msra.mxu0 0.0
  %7537 = vmatprep.subr.mxu0 0.0
  %7538 = vmatpush1.msra.mxu0 0.0
  %7539 = vmatprep.subr.mxu0 0.0
  %7540 = vmatpush1.msra.mxu0 0.0
  %7541 = vmatprep.subr.mxu0 %v7525
  %7542 = vmatpush1.msra.mxu0 %v7524
  %7543 = vmatprep.subr.mxu0 %v7522
  %7544 = vmatpush1.msra.mxu0 %v7521
  %7545 = vmatprep.subr.mxu0 %v7519
  %7546 = vmatpush1.msra.mxu0 %v7518
  %7547 = vmatprep.subr.mxu0 %v7516
  %7548 = vmatpush1.msra.mxu0 %v7515
  %7549 = vmatprep.subr.mxu0 %v7513
  %7550 = vmatpush1.msra.mxu0 %v7512
  %7551 = vmatprep.subr.mxu0 %v7510
  %7552 = vmatpush1.msra.mxu0 %v7509
  %7553 = vmatprep.subr.mxu0 %v7507
  %7554 = vmatpush1.msra.mxu0 %v7506
  %7555 = vmatprep.subr.mxu0 %v7504
  %7556 = vmatpush1.msra.mxu0 %v7503
  %7557 = vmatprep.subr.mxu0 %v7501
  %7558 = vmatpush1.msra.mxu0 %v7500
  %7559 = vmatprep.subr.mxu0 0.0
  %7560 = vmatpush2.msra.mxu0 0.0
  %7561 = vmatprep.subr.mxu0 0.0
  %7562 = vmatpush2.msra.mxu0 0.0
  %7563 = vmatprep.subr.mxu0 0.0
  %7564 = vmatpush2.msra.mxu0 0.0
  %7565 = vmatprep.subr.mxu0 0.0
  %7566 = vmatpush2.msra.mxu0 0.0
  %7567 = vmatprep.subr.mxu0 0.0
  %7568 = vmatpush2.msra.mxu0 0.0
  %7569 = vmatprep.subr.mxu0 0.0
  %7570 = vmatpush2.msra.mxu0 0.0
  %7571 = vmatprep.subr.mxu0 0.0
  %7572 = vmatpush2.msra.mxu0 0.0
  %7573 = vmatprep.subr.mxu0 0.0
  %7574 = vmatpush2.msra.mxu0 0.0
  %7575 = vmatprep.subr.mxu0 0.0
  %7576 = vmatpush2.msra.mxu0 0.0
  %7577 = vmatprep.subr.mxu0 0.0
  %7578 = vmatpush2.msra.mxu0 0.0
  %7579 = vmatprep.subr.mxu0 0.0
  %7580 = vmatpush2.msra.mxu0 0.0
  %7581 = vmatprep.subr.mxu0 0.0
  %7582 = vmatpush2.msra.mxu0 0.0
  %7583 = vmatprep.subr.mxu0 0.0
  %7584 = vmatpush2.msra.mxu0 0.0
  %7585 = vmatprep.subr.mxu0 0.0
  %7586 = vmatpush2.msra.mxu0 0.0
  %7587 = vmatprep.subr.mxu0 0.0
  %7588 = vmatpush2.msra.mxu0 0.0
  %7589 = vmatprep.subr.mxu0 0.0
  %7590 = vmatpush2.msra.mxu0 0.0
  %7591 = vmatprep.mubr.f32.mxu0 0.0
  %7592 = vmatmul.mubr.f32.gmra.mxu0 %v6342
  %v7593 = vpop.f32.mrf.mxu0
  %v7594 = vadd.f32 0.0, %v7593
  %v7595 = vpop.f32.mrf.mxu0
  %v7596 = vadd.f32 0.0, %v7595
  %7597 = vdwg.mxu0
  %7598 = vmatprep.subr.mxu0 0.0
  %7599 = vmatpush1.msra.mxu0 0.0
  %7600 = vmatprep.subr.mxu0 0.0
  %7601 = vmatpush1.msra.mxu0 0.0
  %7602 = vmatprep.subr.mxu0 0.0
  %7603 = vmatpush1.msra.mxu0 0.0
  %7604 = vmatprep.subr.mxu0 0.0
  %7605 = vmatpush1.msra.mxu0 0.0
  %7606 = vmatprep.subr.mxu0 0.0
  %7607 = vmatpush1.msra.mxu0 0.0
  %7608 = vmatprep.subr.mxu0 0.0
  %7609 = vmatpush1.msra.mxu0 0.0
  %7610 = vmatprep.subr.mxu0 0.0
  %7611 = vmatpush1.msra.mxu0 0.0
  %7612 = vmatprep.subr.mxu0 0.0
  %7613 = vmatpush1.msra.mxu0 %v7526
  %7614 = vmatprep.subr.mxu0 0.0
  %7615 = vmatpush1.msra.mxu0 %v7523
  %7616 = vmatprep.subr.mxu0 0.0
  %7617 = vmatpush1.msra.mxu0 %v7520
  %7618 = vmatprep.subr.mxu0 0.0
  %7619 = vmatpush1.msra.mxu0 %v7517
  %7620 = vmatprep.subr.mxu0 0.0
  %7621 = vmatpush1.msra.mxu0 %v7514
  %7622 = vmatprep.subr.mxu0 0.0
  %7623 = vmatpush1.msra.mxu0 %v7511
  %7624 = vmatprep.subr.mxu0 0.0
  %7625 = vmatpush1.msra.mxu0 %v7508
  %7626 = vmatprep.subr.mxu0 0.0
  %7627 = vmatpush1.msra.mxu0 %v7505
  %7628 = vmatprep.subr.mxu0 0.0
  %7629 = vmatpush1.msra.mxu0 %v7502
  %7630 = vmatprep.subr.mxu0 0.0
  %7631 = vmatpush2.msra.mxu0 0.0
  %7632 = vmatprep.subr.mxu0 0.0
  %7633 = vmatpush2.msra.mxu0 0.0
  %7634 = vmatprep.subr.mxu0 0.0
  %7635 = vmatpush2.msra.mxu0 0.0
  %7636 = vmatprep.subr.mxu0 0.0
  %7637 = vmatpush2.msra.mxu0 0.0
  %7638 = vmatprep.subr.mxu0 0.0
  %7639 = vmatpush2.msra.mxu0 0.0
  %7640 = vmatprep.subr.mxu0 0.0
  %7641 = vmatpush2.msra.mxu0 0.0
  %7642 = vmatprep.subr.mxu0 0.0
  %7643 = vmatpush2.msra.mxu0 0.0
  %7644 = vmatprep.subr.mxu0 0.0
  %7645 = vmatpush2.msra.mxu0 0.0
  %7646 = vmatprep.subr.mxu0 0.0
  %7647 = vmatpush2.msra.mxu0 0.0
  %7648 = vmatprep.subr.mxu0 0.0
  %7649 = vmatpush2.msra.mxu0 0.0
  %7650 = vmatprep.subr.mxu0 0.0
  %7651 = vmatpush2.msra.mxu0 0.0
  %7652 = vmatprep.subr.mxu0 0.0
  %7653 = vmatpush2.msra.mxu0 0.0
  %7654 = vmatprep.subr.mxu0 0.0
  %7655 = vmatpush2.msra.mxu0 0.0
  %7656 = vmatprep.subr.mxu0 0.0
  %7657 = vmatpush2.msra.mxu0 0.0
  %7658 = vmatprep.subr.mxu0 0.0
  %7659 = vmatpush2.msra.mxu0 0.0
  %7660 = vmatprep.subr.mxu0 0.0
  %7661 = vmatpush2.msra.mxu0 0.0
  %7662 = vmatprep.mubr.f32.mxu0 0.0
  %7663 = vmatmul.mubr.f32.gmra.mxu0 %v6342
  %v7664 = vpop.f32.mrf.mxu0
  %v7665 = vadd.f32 0.0, %v7664
  %v7666 = vpop.f32.mrf.mxu0
  %7667 = vdwg.mxu0
  %s7668 = scalar_lea.vmem %s20, 1728
  %v7669 = vld [vmem:[%s7668] sm:$0xff]
  %v7670 = vld [vmem:[%s7668 + $0x8] sm:$0xff]
  %v7671 = vld [vmem:[%s7668 + $0x10] sm:$0xff]
  %v7672 = vld [vmem:[%s7668 + $0x18] sm:$0xff]
  %v7673 = vld [vmem:[%s7668 + $0x20] sm:$0xff]
  %v7674 = vld [vmem:[%s7668 + $0x28] sm:$0xff]
  %v7675 = vld [vmem:[%s7668 + $0x30] sm:$0xff]
  %v7676 = vld [vmem:[%s7668 + $0x38] sm:$0xff]
  %v7677 = vld [vmem:[%s7668 + $0x40] sm:$0xff]
  %v7678 = vld [vmem:[%s7668 + $0x48] sm:$0xff]
  %v7679 = vld [vmem:[%s7668 + $0x50] sm:$0xff]
  %v7680 = vld [vmem:[%s7668 + $0x58] sm:$0xff]
  %v7681 = vld [vmem:[%s7668 + $0x60] sm:$0xff]
  %v7682 = vld [vmem:[%s7668 + $0x68] sm:$0xff]
  %v7683 = vld [vmem:[%s7668 + $0x70] sm:$0xff]
  %v7684 = vld [vmem:[%s7668 + $0x78] sm:$0xff]
  %v7685 = vld [vmem:[%s7668 + $0x80] sm:$0xff]
  %v7686 = vld [vmem:[%s7668 + $0x88] sm:$0xff]
  %v7687 = vld [vmem:[%s7668 + $0x90] sm:$0xff]
  %v7688 = vld [vmem:[%s7668 + $0x98] sm:$0xff]
  %v7689 = vld [vmem:[%s7668 + $0xa0] sm:$0xff]
  %v7690 = vld [vmem:[%s7668 + $0xa8] sm:$0xff]
  %v7691 = vld [vmem:[%s7668 + $0xb0] sm:$0xff]
  %v7692 = vld [vmem:[%s7668 + $0xb8] sm:$0xff]
  %v7693 = vld [vmem:[%s7668 + $0xc0] sm:$0xff]
  %v7694 = vld [vmem:[%s7668 + $0xc8] sm:$0xff]
  %v7695 = vld [vmem:[%s7668 + $0xd0] sm:$0xff]
  %7696 = vmatprep.subr.mxu0 0.0
  %7697 = vmatpush1.msra.mxu0 0.0
  %7698 = vmatprep.subr.mxu0 0.0
  %7699 = vmatpush1.msra.mxu0 0.0
  %7700 = vmatprep.subr.mxu0 0.0
  %7701 = vmatpush1.msra.mxu0 0.0
  %7702 = vmatprep.subr.mxu0 0.0
  %7703 = vmatpush1.msra.mxu0 0.0
  %7704 = vmatprep.subr.mxu0 0.0
  %7705 = vmatpush1.msra.mxu0 0.0
  %7706 = vmatprep.subr.mxu0 0.0
  %7707 = vmatpush1.msra.mxu0 0.0
  %7708 = vmatprep.subr.mxu0 0.0
  %7709 = vmatpush1.msra.mxu0 0.0
  %7710 = vmatprep.subr.mxu0 %v7694
  %7711 = vmatpush1.msra.mxu0 %v7693
  %7712 = vmatprep.subr.mxu0 %v7691
  %7713 = vmatpush1.msra.mxu0 %v7690
  %7714 = vmatprep.subr.mxu0 %v7688
  %7715 = vmatpush1.msra.mxu0 %v7687
  %7716 = vmatprep.subr.mxu0 %v7685
  %7717 = vmatpush1.msra.mxu0 %v7684
  %7718 = vmatprep.subr.mxu0 %v7682
  %7719 = vmatpush1.msra.mxu0 %v7681
  %7720 = vmatprep.subr.mxu0 %v7679
  %7721 = vmatpush1.msra.mxu0 %v7678
  %7722 = vmatprep.subr.mxu0 %v7676
  %7723 = vmatpush1.msra.mxu0 %v7675
  %7724 = vmatprep.subr.mxu0 %v7673
  %7725 = vmatpush1.msra.mxu0 %v7672
  %7726 = vmatprep.subr.mxu0 %v7670
  %7727 = vmatpush1.msra.mxu0 %v7669
  %7728 = vmatprep.subr.mxu0 0.0
  %7729 = vmatpush2.msra.mxu0 0.0
  %7730 = vmatprep.subr.mxu0 0.0
  %7731 = vmatpush2.msra.mxu0 0.0
  %7732 = vmatprep.subr.mxu0 0.0
  %7733 = vmatpush2.msra.mxu0 0.0
  %7734 = vmatprep.subr.mxu0 0.0
  %7735 = vmatpush2.msra.mxu0 0.0
  %7736 = vmatprep.subr.mxu0 0.0
  %7737 = vmatpush2.msra.mxu0 0.0
  %7738 = vmatprep.subr.mxu0 0.0
  %7739 = vmatpush2.msra.mxu0 0.0
  %7740 = vmatprep.subr.mxu0 0.0
  %7741 = vmatpush2.msra.mxu0 0.0
  %7742 = vmatprep.subr.mxu0 0.0
  %7743 = vmatpush2.msra.mxu0 0.0
  %7744 = vmatprep.subr.mxu0 0.0
  %7745 = vmatpush2.msra.mxu0 0.0
  %7746 = vmatprep.subr.mxu0 0.0
  %7747 = vmatpush2.msra.mxu0 0.0
  %7748 = vmatprep.subr.mxu0 0.0
  %7749 = vmatpush2.msra.mxu0 0.0
  %7750 = vmatprep.subr.mxu0 0.0
  %7751 = vmatpush2.msra.mxu0 0.0
  %7752 = vmatprep.subr.mxu0 0.0
  %7753 = vmatpush2.msra.mxu0 0.0
  %7754 = vmatprep.subr.mxu0 0.0
  %7755 = vmatpush2.msra.mxu0 0.0
  %7756 = vmatprep.subr.mxu0 0.0
  %7757 = vmatpush2.msra.mxu0 0.0
  %7758 = vmatprep.subr.mxu0 0.0
  %7759 = vmatpush2.msra.mxu0 0.0
  %7760 = vmatprep.mubr.f32.mxu0 0.0
  %7761 = vmatmul.mubr.f32.gmra.mxu0 %v6342
  %v7762 = vpop.f32.mrf.mxu0
  %v7763 = vadd.f32 0.0, %v7762
  %v7764 = vpop.f32.mrf.mxu0
  %v7765 = vadd.f32 0.0, %v7764
  %7766 = vdwg.mxu0
  %7767 = vmatprep.subr.mxu0 0.0
  %7768 = vmatpush1.msra.mxu0 0.0
  %7769 = vmatprep.subr.mxu0 0.0
  %7770 = vmatpush1.msra.mxu0 0.0
  %7771 = vmatprep.subr.mxu0 0.0
  %7772 = vmatpush1.msra.mxu0 0.0
  %7773 = vmatprep.subr.mxu0 0.0
  %7774 = vmatpush1.msra.mxu0 0.0
  %7775 = vmatprep.subr.mxu0 0.0
  %7776 = vmatpush1.msra.mxu0 0.0
  %7777 = vmatprep.subr.mxu0 0.0
  %7778 = vmatpush1.msra.mxu0 0.0
  %7779 = vmatprep.subr.mxu0 0.0
  %7780 = vmatpush1.msra.mxu0 0.0
  %7781 = vmatprep.subr.mxu0 0.0
  %7782 = vmatpush1.msra.mxu0 %v7695
  %7783 = vmatprep.subr.mxu0 0.0
  %7784 = vmatpush1.msra.mxu0 %v7692
  %7785 = vmatprep.subr.mxu0 0.0
  %7786 = vmatpush1.msra.mxu0 %v7689
  %7787 = vmatprep.subr.mxu0 0.0
  %7788 = vmatpush1.msra.mxu0 %v7686
  %7789 = vmatprep.subr.mxu0 0.0
  %7790 = vmatpush1.msra.mxu0 %v7683
  %7791 = vmatprep.subr.mxu0 0.0
  %7792 = vmatpush1.msra.mxu0 %v7680
  %7793 = vmatprep.subr.mxu0 0.0
  %7794 = vmatpush1.msra.mxu0 %v7677
  %7795 = vmatprep.subr.mxu0 0.0
  %7796 = vmatpush1.msra.mxu0 %v7674
  %7797 = vmatprep.subr.mxu0 0.0
  %7798 = vmatpush1.msra.mxu0 %v7671
  %7799 = vmatprep.subr.mxu0 0.0
  %7800 = vmatpush2.msra.mxu0 0.0
  %7801 = vmatprep.subr.mxu0 0.0
  %7802 = vmatpush2.msra.mxu0 0.0
  %7803 = vmatprep.subr.mxu0 0.0
  %7804 = vmatpush2.msra.mxu0 0.0
  %7805 = vmatprep.subr.mxu0 0.0
  %7806 = vmatpush2.msra.mxu0 0.0
  %7807 = vmatprep.subr.mxu0 0.0
  %7808 = vmatpush2.msra.mxu0 0.0
  %7809 = vmatprep.subr.mxu0 0.0
  %7810 = vmatpush2.msra.mxu0 0.0
  %7811 = vmatprep.subr.mxu0 0.0
  %7812 = vmatpush2.msra.mxu0 0.0
  %7813 = vmatprep.subr.mxu0 0.0
  %7814 = vmatpush2.msra.mxu0 0.0
  %7815 = vmatprep.subr.mxu0 0.0
  %7816 = vmatpush2.msra.mxu0 0.0
  %7817 = vmatprep.subr.mxu0 0.0
  %7818 = vmatpush2.msra.mxu0 0.0
  %7819 = vmatprep.subr.mxu0 0.0
  %7820 = vmatpush2.msra.mxu0 0.0
  %7821 = vmatprep.subr.mxu0 0.0
  %7822 = vmatpush2.msra.mxu0 0.0
  %7823 = vmatprep.subr.mxu0 0.0
  %7824 = vmatpush2.msra.mxu0 0.0
  %7825 = vmatprep.subr.mxu0 0.0
  %7826 = vmatpush2.msra.mxu0 0.0
  %7827 = vmatprep.subr.mxu0 0.0
  %7828 = vmatpush2.msra.mxu0 0.0
  %7829 = vmatprep.subr.mxu0 0.0
  %7830 = vmatpush2.msra.mxu0 0.0
  %7831 = vmatprep.mubr.f32.mxu0 0.0
  %7832 = vmatmul.mubr.f32.gmra.mxu0 %v6342
  %v7833 = vpop.f32.mrf.mxu0
  %v7834 = vadd.f32 0.0, %v7833
  %v7835 = vpop.f32.mrf.mxu0
  %7836 = vdwg.mxu0
  %v7837 = vld [vmem:[%s21] sm:$0xff]
  %v7838 = vld [vmem:[%s22] sm:$0xff]
  %7840 = vset.pattern.permute.xlu0 0
  %7841 = vperm.xlu0 %7840, %v7838
  %v7842 = vpop.permute.xlu0 %7841
  %v7845 = vsel %vm3474, %v7837, 0
  %7847 = vmatprep.subr.mxu0 0.0
  %7848 = vmatpush1.msra.mxu0 0.0
  %7849 = vmatprep.subr.mxu0 0.0
  %7850 = vmatpush1.msra.mxu0 0.0
  %7851 = vmatprep.subr.mxu0 0.0
  %7852 = vmatpush1.msra.mxu0 0.0
  %7853 = vmatprep.subr.mxu0 0.0
  %7854 = vmatpush1.msra.mxu0 0.0
  %7855 = vmatprep.subr.mxu0 0.0
  %7856 = vmatpush1.msra.mxu0 0.0
  %7857 = vmatprep.subr.mxu0 0.0
  %7858 = vmatpush1.msra.mxu0 0.0
  %7859 = vmatprep.subr.mxu0 0.0
  %7860 = vmatpush1.msra.mxu0 0.0
  %7861 = vmatprep.subr.mxu0 %v7765
  %7862 = vmatpush1.msra.mxu0 %v7763
  %7863 = vmatprep.subr.mxu0 %v7596
  %7864 = vmatpush1.msra.mxu0 %v7594
  %7865 = vmatprep.subr.mxu0 %v7427
  %7866 = vmatpush1.msra.mxu0 %v7425
  %7867 = vmatprep.subr.mxu0 %v7258
  %7868 = vmatpush1.msra.mxu0 %v7256
  %7869 = vmatprep.subr.mxu0 %v7089
  %7870 = vmatpush1.msra.mxu0 %v7087
  %7871 = vmatprep.subr.mxu0 %v6920
  %7872 = vmatpush1.msra.mxu0 %v6918
  %7873 = vmatprep.subr.mxu0 %v6751
  %7874 = vmatpush1.msra.mxu0 %v6749
  %7875 = vmatprep.subr.mxu0 %v6582
  %7876 = vmatpush1.msra.mxu0 %v6580
  %7877 = vmatprep.subr.mxu0 %v6413
  %7878 = vmatpush1.msra.mxu0 %v6411
  %7879 = vmatprep.subr.mxu0 0.0
  %7880 = vmatpush2.msra.mxu0 0.0
  %7881 = vmatprep.subr.mxu0 0.0
  %7882 = vmatpush2.msra.mxu0 0.0
  %7883 = vmatprep.subr.mxu0 0.0
  %7884 = vmatpush2.msra.mxu0 0.0
  %7885 = vmatprep.subr.mxu0 0.0
  %7886 = vmatpush2.msra.mxu0 0.0
  %7887 = vmatprep.subr.mxu0 0.0
  %7888 = vmatpush2.msra.mxu0 0.0
  %7889 = vmatprep.subr.mxu0 0.0
  %7890 = vmatpush2.msra.mxu0 0.0
  %7891 = vmatprep.subr.mxu0 0.0
  %7892 = vmatpush2.msra.mxu0 0.0
  %7893 = vmatprep.subr.mxu0 0.0
  %7894 = vmatpush2.msra.mxu0 0.0
  %7895 = vmatprep.subr.mxu0 0.0
  %7896 = vmatpush2.msra.mxu0 0.0
  %7897 = vmatprep.subr.mxu0 0.0
  %7898 = vmatpush2.msra.mxu0 0.0
  %7899 = vmatprep.subr.mxu0 0.0
  %7900 = vmatpush2.msra.mxu0 0.0
  %7901 = vmatprep.subr.mxu0 0.0
  %7902 = vmatpush2.msra.mxu0 0.0
  %7903 = vmatprep.subr.mxu0 0.0
  %7904 = vmatpush2.msra.mxu0 0.0
  %7905 = vmatprep.subr.mxu0 0.0
  %7906 = vmatpush2.msra.mxu0 0.0
  %7907 = vmatprep.subr.mxu0 0.0
  %7908 = vmatpush2.msra.mxu0 0.0
  %7909 = vmatprep.subr.mxu0 0.0
  %7910 = vmatpush2.msra.mxu0 0.0
  %7911 = vmatprep.mubr.f32.mxu0 0.0
  %7912 = vmatmul.mubr.f32.gmra.mxu0 %v7845
  %v7913 = vpop.f32.mrf.mxu0
  %v7914 = vadd.f32 %v7842, %v7913
  %v7915 = vpop.f32.mrf.mxu0
  %v7916 = vadd.f32 %v7842, %v7915
  %7917 = vdwg.mxu0
  %7918 = vmatprep.subr.mxu0 0.0
  %7919 = vmatpush1.msra.mxu0 0.0
  %7920 = vmatprep.subr.mxu0 0.0
  %7921 = vmatpush1.msra.mxu0 0.0
  %7922 = vmatprep.subr.mxu0 0.0
  %7923 = vmatpush1.msra.mxu0 0.0
  %7924 = vmatprep.subr.mxu0 0.0
  %7925 = vmatpush1.msra.mxu0 0.0
  %7926 = vmatprep.subr.mxu0 0.0
  %7927 = vmatpush1.msra.mxu0 0.0
  %7928 = vmatprep.subr.mxu0 0.0
  %7929 = vmatpush1.msra.mxu0 0.0
  %7930 = vmatprep.subr.mxu0 0.0
  %7931 = vmatpush1.msra.mxu0 0.0
  %7932 = vmatprep.subr.mxu0 0.0
  %7933 = vmatpush1.msra.mxu0 %v7834
  %7934 = vmatprep.subr.mxu0 0.0
  %7935 = vmatpush1.msra.mxu0 %v7665
  %7936 = vmatprep.subr.mxu0 0.0
  %7937 = vmatpush1.msra.mxu0 %v7496
  %7938 = vmatprep.subr.mxu0 0.0
  %7939 = vmatpush1.msra.mxu0 %v7327
  %7940 = vmatprep.subr.mxu0 0.0
  %7941 = vmatpush1.msra.mxu0 %v7158
  %7942 = vmatprep.subr.mxu0 0.0
  %7943 = vmatpush1.msra.mxu0 %v6989
  %7944 = vmatprep.subr.mxu0 0.0
  %7945 = vmatpush1.msra.mxu0 %v6820
  %7946 = vmatprep.subr.mxu0 0.0
  %7947 = vmatpush1.msra.mxu0 %v6651
  %7948 = vmatprep.subr.mxu0 0.0
  %7949 = vmatpush1.msra.mxu0 %v6482
  %7950 = vmatprep.subr.mxu0 0.0
  %7951 = vmatpush2.msra.mxu0 0.0
  %7952 = vmatprep.subr.mxu0 0.0
  %7953 = vmatpush2.msra.mxu0 0.0
  %7954 = vmatprep.subr.mxu0 0.0
  %7955 = vmatpush2.msra.mxu0 0.0
  %7956 = vmatprep.subr.mxu0 0.0
  %7957 = vmatpush2.msra.mxu0 0.0
  %7958 = vmatprep.subr.mxu0 0.0
  %7959 = vmatpush2.msra.mxu0 0.0
  %7960 = vmatprep.subr.mxu0 0.0
  %7961 = vmatpush2.msra.mxu0 0.0
  %7962 = vmatprep.subr.mxu0 0.0
  %7963 = vmatpush2.msra.mxu0 0.0
  %7964 = vmatprep.subr.mxu0 0.0
  %7965 = vmatpush2.msra.mxu0 0.0
  %7966 = vmatprep.subr.mxu0 0.0
  %7967 = vmatpush2.msra.mxu0 0.0
  %7968 = vmatprep.subr.mxu0 0.0
  %7969 = vmatpush2.msra.mxu0 0.0
  %7970 = vmatprep.subr.mxu0 0.0
  %7971 = vmatpush2.msra.mxu0 0.0
  %7972 = vmatprep.subr.mxu0 0.0
  %7973 = vmatpush2.msra.mxu0 0.0
  %7974 = vmatprep.subr.mxu0 0.0
  %7975 = vmatpush2.msra.mxu0 0.0
  %7976 = vmatprep.subr.mxu0 0.0
  %7977 = vmatpush2.msra.mxu0 0.0
  %7978 = vmatprep.subr.mxu0 0.0
  %7979 = vmatpush2.msra.mxu0 0.0
  %7980 = vmatprep.subr.mxu0 0.0
  %7981 = vmatpush2.msra.mxu0 0.0
  %7982 = vmatprep.mubr.f32.mxu0 0.0
  %7983 = vmatmul.mubr.f32.gmra.mxu0 %v7845
  %v7984 = vpop.f32.mrf.mxu0
  %v7985 = vadd.f32 %v7842, %v7984
  %v7986 = vpop.f32.mrf.mxu0
  %7987 = vdwg.mxu0
  %v7988 = vmul.f32 %v7914, 0.5
  %v7989 = vmul.f32 %v7916, 0.5
  %v7990 = vmul.f32 %v7985, 0.5
  %v7991 = vmul.f32 %v7914, 0.70710677
  %v7992 = vmul.f32 %v7916, 0.70710677
  %v7993 = vmul.f32 %v7985, 0.70710677
  %vm7994 = vcmp.ge.f32.partialorder %v7991, 0.0
  %vm7995 = vcmp.ge.f32.partialorder %v7992, 0.0
  %vm7996 = vcmp.ge.f32.partialorder %v7993, 0.0
  %v7997 = vsub.f32 0.0, %v7991
  %v7998 = vsub.f32 0.0, %v7992
  %v7999 = vsub.f32 0.0, %v7993
  %v8000 = vsel %vm7994, %v7991, %v7997
  %v8001 = vsel %vm7995, %v7992, %v7998
  %v8002 = vsel %vm7996, %v7993, %v7999
  %v8003 = vmul.f32 %v8000, 0.3275911
  %v8004 = vmul.f32 %v8001, 0.3275911
  %v8005 = vmul.f32 %v8002, 0.3275911
  %v8006 = vadd.f32 %v8003, 1.0
  %v8007 = vadd.f32 %v8004, 1.0
  %v8008 = vadd.f32 %v8005, 1.0
  %v8009 = vrcp.pop %v8006
  %v8010 = vmul.f32 1.0, %v8009
  %v8011 = vrcp.pop %v8007
  %v8012 = vmul.f32 1.0, %v8011
  %v8013 = vrcp.pop %v8008
  %v8014 = vmul.f32 1.0, %v8013
  %v8015 = vmul.f32 %v8010, 1.0614054
  %v8016 = vmul.f32 %v8012, 1.0614054
  %v8017 = vmul.f32 %v8014, 1.0614054
  %v8018 = vadd.f32 %v8015, -1.4531521
  %v8019 = vadd.f32 %v8016, -1.4531521
  %v8020 = vadd.f32 %v8017, -1.4531521
  %v8021 = vmul.f32 %v8018, %v8010
  %v8022 = vmul.f32 %v8019, %v8012
  %v8023 = vmul.f32 %v8020, %v8014
  %v8024 = vadd.f32 %v8021, 1.4214138
  %v8025 = vadd.f32 %v8022, 1.4214138
  %v8026 = vadd.f32 %v8023, 1.4214138
  %v8027 = vmul.f32 %v8024, %v8010
  %v8028 = vmul.f32 %v8025, %v8012
  %v8029 = vmul.f32 %v8026, %v8014
  %v8030 = vadd.f32 %v8027, -0.28449672
  %v8031 = vadd.f32 %v8028, -0.28449672
  %v8032 = vadd.f32 %v8029, -0.28449672
  %v8033 = vmul.f32 %v8030, %v8010
  %v8034 = vmul.f32 %v8031, %v8012
  %v8035 = vmul.f32 %v8032, %v8014
  %v8036 = vadd.f32 %v8033, 0.2548296
  %v8037 = vadd.f32 %v8034, 0.2548296
  %v8038 = vadd.f32 %v8035, 0.2548296
  %v8039 = vmul.f32 %v8036, %v8010
  %v8040 = vmul.f32 %v8037, %v8012
  %v8041 = vmul.f32 %v8038, %v8014
  %v8042 = vsub.f32 0.0, %v8000
  %v8043 = vsub.f32 0.0, %v8001
  %v8044 = vsub.f32 0.0, %v8002
  %v8045 = vmul.f32 %v8042, %v8000
  %v8046 = vmul.f32 %v8043, %v8001
  %v8047 = vmul.f32 %v8044, %v8002
  %v8048 = vmul.f32 %v8045, 1.442695
  %v8049 = vpow.pop %v8048
  %v8050 = vmul.f32 %v8046, 1.442695
  %v8051 = vpow.pop %v8050
  %v8052 = vmul.f32 %v8047, 1.442695
  %v8053 = vpow.pop %v8052
  %v8054 = vmul.f32 %v8039, %v8049
  %v8055 = vmul.f32 %v8040, %v8051
  %v8056 = vmul.f32 %v8041, %v8053
  %v8057 = vsub.f32 1.0, %v8054
  %v8058 = vsub.f32 1.0, %v8055
  %v8059 = vsub.f32 1.0, %v8056
  %v8060 = vsub.f32 0.0, %v8057
  %v8061 = vsub.f32 0.0, %v8058
  %v8062 = vsub.f32 0.0, %v8059
  %v8063 = vsel %vm7994, %v8057, %v8060
  %v8064 = vsel %vm7995, %v8058, %v8061
  %v8065 = vsel %vm7996, %v8059, %v8062
  %v8066 = vadd.f32 %v8063, 1.0
  %v8067 = vadd.f32 %v8064, 1.0
  %v8068 = vadd.f32 %v8065, 1.0
  %v8069 = vmul.f32 %v7988, %v8066
  %v8070 = vmul.f32 %v7989, %v8067
  %v8071 = vmul.f32 %v7990, %v8068
  %v8072 = vld [vmem:[%s23] sm:$0x7]
  %v8073 = vld [vmem:[%s24] sm:$0x7]
  %8075 = vset.pattern.permute.xlu0 0
  %8076 = vperm.xlu0 %8075, %v8073
  %v8077 = vpop.permute.xlu0 %8076
  %vm8079 = vcmask 64512
  %v8081 = vsel %vm8079, %v8072, 0
  %8083 = vmatprep.subr.mxu0 0.0
  %8084 = vmatpush1.msra.mxu0 0.0
  %8085 = vmatprep.subr.mxu0 0.0
  %8086 = vmatpush1.msra.mxu0 0.0
  %8087 = vmatprep.subr.mxu0 0.0
  %8088 = vmatpush1.msra.mxu0 0.0
  %8089 = vmatprep.subr.mxu0 0.0
  %8090 = vmatpush1.msra.mxu0 0.0
  %8091 = vmatprep.subr.mxu0 0.0
  %8092 = vmatpush1.msra.mxu0 0.0
  %8093 = vmatprep.subr.mxu0 0.0
  %8094 = vmatpush1.msra.mxu0 0.0
  %8095 = vmatprep.subr.mxu0 0.0
  %8096 = vmatpush1.msra.mxu0 0.0
  %8097 = vmatprep.subr.mxu0 0.0
  %8098 = vmatpush1.msra.mxu0 0.0
  %8099 = vmatprep.subr.mxu0 0.0
  %8100 = vmatpush1.msra.mxu0 0.0
  %8101 = vmatprep.subr.mxu0 0.0
  %8102 = vmatpush1.msra.mxu0 0.0
  %8103 = vmatprep.subr.mxu0 0.0
  %8104 = vmatpush1.msra.mxu0 0.0
  %8105 = vmatprep.subr.mxu0 0.0
  %8106 = vmatpush1.msra.mxu0 0.0
  %8107 = vmatprep.subr.mxu0 0.0
  %8108 = vmatpush1.msra.mxu0 0.0
  %8109 = vmatprep.subr.mxu0 0.0
  %8110 = vmatpush1.msra.mxu0 0.0
  %8111 = vmatprep.subr.mxu0 0.0
  %8112 = vmatpush1.msra.mxu0 0.0
  %8113 = vmatprep.subr.mxu0 %v8070
  %8114 = vmatpush1.msra.mxu0 %v8069
  %8115 = vmatprep.subr.mxu0 0.0
  %8116 = vmatpush2.msra.mxu0 0.0
  %8117 = vmatprep.subr.mxu0 0.0
  %8118 = vmatpush2.msra.mxu0 0.0
  %8119 = vmatprep.subr.mxu0 0.0
  %8120 = vmatpush2.msra.mxu0 0.0
  %8121 = vmatprep.subr.mxu0 0.0
  %8122 = vmatpush2.msra.mxu0 0.0
  %8123 = vmatprep.subr.mxu0 0.0
  %8124 = vmatpush2.msra.mxu0 0.0
  %8125 = vmatprep.subr.mxu0 0.0
  %8126 = vmatpush2.msra.mxu0 0.0
  %8127 = vmatprep.subr.mxu0 0.0
  %8128 = vmatpush2.msra.mxu0 0.0
  %8129 = vmatprep.subr.mxu0 0.0
  %8130 = vmatpush2.msra.mxu0 0.0
  %8131 = vmatprep.subr.mxu0 0.0
  %8132 = vmatpush2.msra.mxu0 0.0
  %8133 = vmatprep.subr.mxu0 0.0
  %8134 = vmatpush2.msra.mxu0 0.0
  %8135 = vmatprep.subr.mxu0 0.0
  %8136 = vmatpush2.msra.mxu0 0.0
  %8137 = vmatprep.subr.mxu0 0.0
  %8138 = vmatpush2.msra.mxu0 0.0
  %8139 = vmatprep.subr.mxu0 0.0
  %8140 = vmatpush2.msra.mxu0 0.0
  %8141 = vmatprep.subr.mxu0 0.0
  %8142 = vmatpush2.msra.mxu0 0.0
  %8143 = vmatprep.subr.mxu0 0.0
  %8144 = vmatpush2.msra.mxu0 0.0
  %8145 = vmatprep.subr.mxu0 0.0
  %8146 = vmatpush2.msra.mxu0 0.0
  %8147 = vmatprep.mubr.f32.mxu0 0.0
  %8148 = vmatmul.mubr.f32.gmra.mxu0 %v8081
  %v8149 = vpop.f32.mrf.mxu0
  %v8150 = vadd.f32 %v8077, %v8149
  %v8151 = vpop.f32.mrf.mxu0
  %v8152 = vadd.f32 %v8077, %v8151
  %8153 = vdwg.mxu0
  %8154 = vmatprep.subr.mxu0 0.0
  %8155 = vmatpush1.msra.mxu0 0.0
  %8156 = vmatprep.subr.mxu0 0.0
  %8157 = vmatpush1.msra.mxu0 0.0
  %8158 = vmatprep.subr.mxu0 0.0
  %8159 = vmatpush1.msra.mxu0 0.0
  %8160 = vmatprep.subr.mxu0 0.0
  %8161 = vmatpush1.msra.mxu0 0.0
  %8162 = vmatprep.subr.mxu0 0.0
  %8163 = vmatpush1.msra.mxu0 0.0
  %8164 = vmatprep.subr.mxu0 0.0
  %8165 = vmatpush1.msra.mxu0 0.0
  %8166 = vmatprep.subr.mxu0 0.0
  %8167 = vmatpush1.msra.mxu0 0.0
  %8168 = vmatprep.subr.mxu0 0.0
  %8169 = vmatpush1.msra.mxu0 0.0
  %8170 = vmatprep.subr.mxu0 0.0
  %8171 = vmatpush1.msra.mxu0 0.0
  %8172 = vmatprep.subr.mxu0 0.0
  %8173 = vmatpush1.msra.mxu0 0.0
  %8174 = vmatprep.subr.mxu0 0.0
  %8175 = vmatpush1.msra.mxu0 0.0
  %8176 = vmatprep.subr.mxu0 0.0
  %8177 = vmatpush1.msra.mxu0 0.0
  %8178 = vmatprep.subr.mxu0 0.0
  %8179 = vmatpush1.msra.mxu0 0.0
  %8180 = vmatprep.subr.mxu0 0.0
  %8181 = vmatpush1.msra.mxu0 0.0
  %8182 = vmatprep.subr.mxu0 0.0
  %8183 = vmatpush1.msra.mxu0 0.0
  %8184 = vmatprep.subr.mxu0 0.0
  %8185 = vmatpush1.msra.mxu0 %v8071
  %8186 = vmatprep.subr.mxu0 0.0
  %8187 = vmatpush2.msra.mxu0 0.0
  %8188 = vmatprep.subr.mxu0 0.0
  %8189 = vmatpush2.msra.mxu0 0.0
  %8190 = vmatprep.subr.mxu0 0.0
  %8191 = vmatpush2.msra.mxu0 0.0
  %8192 = vmatprep.subr.mxu0 0.0
  %8193 = vmatpush2.msra.mxu0 0.0
  %8194 = vmatprep.subr.mxu0 0.0
  %8195 = vmatpush2.msra.mxu0 0.0
  %8196 = vmatprep.subr.mxu0 0.0
  %8197 = vmatpush2.msra.mxu0 0.0
  %8198 = vmatprep.subr.mxu0 0.0
  %8199 = vmatpush2.msra.mxu0 0.0
  %8200 = vmatprep.subr.mxu0 0.0
  %8201 = vmatpush2.msra.mxu0 0.0
  %8202 = vmatprep.subr.mxu0 0.0
  %8203 = vmatpush2.msra.mxu0 0.0
  %8204 = vmatprep.subr.mxu0 0.0
  %8205 = vmatpush2.msra.mxu0 0.0
  %8206 = vmatprep.subr.mxu0 0.0
  %8207 = vmatpush2.msra.mxu0 0.0
  %8208 = vmatprep.subr.mxu0 0.0
  %8209 = vmatpush2.msra.mxu0 0.0
  %8210 = vmatprep.subr.mxu0 0.0
  %8211 = vmatpush2.msra.mxu0 0.0
  %8212 = vmatprep.subr.mxu0 0.0
  %8213 = vmatpush2.msra.mxu0 0.0
  %8214 = vmatprep.subr.mxu0 0.0
  %8215 = vmatpush2.msra.mxu0 0.0
  %8216 = vmatprep.subr.mxu0 0.0
  %8217 = vmatpush2.msra.mxu0 0.0
  %8218 = vmatprep.mubr.f32.mxu0 0.0
  %8219 = vmatmul.mubr.f32.gmra.mxu0 %v8081
  %v8220 = vpop.f32.mrf.mxu0
  %v8221 = vadd.f32 %v8077, %v8220
  %v8222 = vpop.f32.mrf.mxu0
  %8223 = vdwg.mxu0
  %v8226 = vcombine.low %v8150, %v8152
  %8228 = vst [vmem:[%s25] sm:$0x77] %v8226
  %vm8229 = vcmask 256000
  %8230 = vst.msk [vmem:[%s25 + $0x8] sm:$0x7] %vm8229, %v8221
  // Predicated region
  $region102: #{conv_ed_forward.1} parent=0 // pred_check
    _
  $region103: #{conv_ed_forward.1} parent=0 // pred_check_branch
    %8232 = sbr.rel (0) target = $region105
  $region104: #{conv_ed_forward.1} parent=0 // pred_region
    _
  $region105: #{conv_ed_forward.1} parent=0 // pred_fallthru
    _
  // Predicated region
  $region106: #{conv_ed_forward.1} parent=0 // pred_check
    _
  $region107: #{conv_ed_forward.1} parent=0 // pred_check_branch
    %8234 = sbr.rel (0) target = $region109
  $region108: #{conv_ed_forward.1} parent=0 // pred_region
    _
  $region109: #{conv_ed_forward.1} parent=0 // pred_fallthru
    _
  // Predicated region
  $region110: #{conv_ed_forward.1} parent=0 // pred_check
    _
  $region111: #{conv_ed_forward.1} parent=0 // pred_check_branch
    %8236 = sbr.rel (0) target = $region113
  $region112: #{conv_ed_forward.1} parent=0 // pred_region
    _
  $region113: #{conv_ed_forward.1} parent=0 // pred_fallthru
    _
  // Predicated region
  $region114: #{conv_ed_forward.1} parent=0 // pred_check
    _
  $region115: #{conv_ed_forward.1} parent=0 // pred_check_branch
    %8238 = sbr.rel (0) target = $region117
  $region116: #{conv_ed_forward.1} parent=0 // pred_region
    _
  $region117: #{conv_ed_forward.1} parent=0 // pred_fallthru
    _

</llo_original>
